<compile_context>
chip_gen: v7x
topology: tpu7x:2x2x1
jax: 0.10.0
libtpu: 0.0.40
codegen_flags: <defaults>
</compile_context>

<pallas_src>
import jax
import jax.numpy as jnp
import numpy as np
from jax.experimental import pallas as pl
from jax.experimental.pallas import tpu as pltpu


# ----------------------------- fused Pallas kernel --------------------------

def _lenet_kernel(a1_ref, w1_ref, b1_ref, w2_ref, b2_ref,
                  wf1_ref, bf1_ref, wf2_ref, bf2_ref, wf3_ref, bf3_ref,
                  out_ref, p1_ref, p1s_ref):
    f32 = jnp.float32
    BB = a1_ref.shape[0]                                   # batch block

    # ---- conv1 + bias + relu + maxpool#1, fused on the MXU -----------------
    # A1 rows are ordered (dy, dx, ph, pw); the four (dy, dx) pool taps are
    # contiguous 192-row blocks and bias/relu commute with the max, so pool1
    # is a running max of four (BB*192, 32) @ (32, 128) matmuls.
    def conv1_block(d):
        lhs = a1_ref[:, d * 192:(d + 1) * 192, :].reshape(BB * 192, 32)
        return jnp.dot(lhs, w1_ref[...], preferred_element_type=f32)

    m = conv1_block(0)
    for d in range(1, 4):
        m = jnp.maximum(m, conv1_block(d))
    p1 = jnp.maximum(m + b1_ref[...], 0.0)                 # (BB*192, 128)
    # channels-last pooled map [b, ph, pw (12 real of 16), c]; pw 12..15 is
    # never read by conv2 (kw + wo <= 11).
    p1_ref[...] = p1.reshape(BB, 12, 16, 128)

    # ---- conv2 + bias + relu: 25 taps, kw shift hoisted out of the loop ----
    acc2 = jnp.zeros((BB * 64, 128), f32)
    for kw in range(5):
        # one sublane-shifted copy per kw (5 shuffles instead of 25)
        p1s_ref[...] = p1_ref[:, :, kw:kw + 8, :]          # (BB, 12, 8, 128)
        for kh in range(5):
            lhs = p1s_ref[:, kh:kh + 8].reshape(BB * 64, 128)   # tile-aligned
            acc2 = acc2 + jnp.dot(lhs, w2_ref[kh * 5 + kw],
                                  preferred_element_type=f32)
    h2 = jnp.maximum(acc2 + b2_ref[...], 0.0)              # rows = (b, ho, wo)

    # ---- maxpool#2 + flatten folded into fc1 (no VMEM round trip) ----------
    h2r = h2.reshape(BB, 8, 8, 128)                        # (b, ho, wo, c)
    accf = jnp.zeros((BB, 128), f32)
    for qh in range(4):
        rowmax = jnp.maximum(h2r[:, 2 * qh], h2r[:, 2 * qh + 1])   # (BB, 8, 128)
        for qw in range(4):
            v = jnp.maximum(rowmax[:, 2 * qw, :],
                            rowmax[:, 2 * qw + 1, :])      # (BB, 128)
            accf = accf + jnp.dot(v, wf1_ref[qh * 4 + qw],
                                  preferred_element_type=f32)
    hf1 = jnp.maximum(accf + bf1_ref[...], 0.0)            # (BB, 128)

    # ---- fc2 (relu) and fc3, all VMEM/vreg resident -------------------------
    hf2 = jnp.maximum(jnp.dot(hf1, wf2_ref[...], preferred_element_type=f32)
                      + bf2_ref[...], 0.0)
    out = jnp.dot(hf2, wf3_ref[...], preferred_element_type=f32) + bf3_ref[...]
    out_ref[0] = out                                       # (BB, 128)


# ------------------------------- host-side glue ------------------------------

def _im2col_pool_ordered(img):
    """(N, 28, 28) clamped image -> (N, 768, 32) conv1 patches.

    Row order is (dy, dx, ph, pw) with conv output pixel (h, w) = (2ph+dy,
    2pw+dx), pw padded 12->16, so maxpool#1 in-kernel is a max of 4 contiguous
    192-row blocks.  Tap axis (25) is zero-padded to 32.
    """
    N = img.shape[0]
    imgp = jnp.pad(img, ((0, 0), (0, 0), (0, 8)))                  # (N, 28, 36)
    taps = jnp.stack([imgp[:, kh:kh + 24, kw:kw + 32]
                      for kh in range(5) for kw in range(5)], axis=1)  # (N,25,24,32)
    t = taps.reshape(N, 25, 12, 2, 16, 2)                          # (N,K,ph,dy,pw,dx)
    t = t.transpose(0, 3, 5, 2, 4, 1)                              # (N,dy,dx,ph,pw,K)
    A = t.reshape(N, 768, 25)
    return jnp.pad(A, ((0, 0), (0, 0), (0, 7)))                    # K 25 -> 32


def prepare_params(p):
    """One-time padding / permutation of the torch parameters into lane-dense slabs."""
    f32 = jnp.float32
    W1 = jnp.zeros((32, 128), f32).at[:25, :6].set(p["w1"].reshape(6, 25).T)
    b1 = jnp.zeros((1, 128), f32).at[0, :6].set(p["b1"])
    W2 = jnp.zeros((25, 128, 128), f32).at[:, :6, :16].set(
        p["w2"].transpose(2, 3, 1, 0).reshape(25, 6, 16))
    b2 = jnp.zeros((1, 128), f32).at[0, :16].set(p["b2"])
    # fc1: fold torch's channel-major flatten (idx = c*16 + qh*4 + qw) into
    # per-spatial-position weight slabs Wfc1[s, c, j] = fc1_w[j, c*16 + s].
    wf1 = p["fc1_w"].reshape(120, 16, 16).transpose(2, 1, 0)       # (s, c, j)
    Wfc1 = jnp.zeros((16, 128, 128), f32).at[:, :16, :120].set(wf1)
    bfc1 = jnp.zeros((1, 128), f32).at[0, :120].set(p["fc1_b"])
    Wfc2 = jnp.zeros((128, 128), f32).at[:120, :84].set(p["fc2_w"].T)
    bfc2 = jnp.zeros((1, 128), f32).at[0, :84].set(p["fc2_b"])
    Wfc3 = jnp.zeros((128, 128), f32).at[:84, :10].set(p["fc3_w"].T)
    bfc3 = jnp.zeros((1, 128), f32).at[0, :10].set(p["fc3_b"])
    return dict(r=p["r"], W1=W1, b1=b1, W2=W2, b2=b2, Wfc1=Wfc1, bfc1=bfc1,
                Wfc2=Wfc2, bfc2=bfc2, Wfc3=Wfc3, bfc3=bfc3)


def lenet_forward_pallas(x, prep, *, block_batch=2):
    N = x.shape[0]
    # adversarial perturbation + clamp on the raw image (cheap XLA glue, exact)
    img = jnp.clip(x.reshape(N, 28, 28) + prep["r"][None], 0.0, 1.0)
    A1 = _im2col_pool_ordered(img)                                 # (N, 768, 32)

    BB = min(block_batch, N)
    G = pl.cdiv(N, BB)
    Npad = G * BB
    if Npad != N:
        A1 = jnp.pad(A1, ((0, Npad - N), (0, 0), (0, 0)))

    in_specs = [
        pl.BlockSpec((BB, 768, 32), lambda n: (n, 0, 0)),          # batch-blocked patches
        pl.BlockSpec((32, 128), lambda n: (0, 0)),                 # conv1 W
        pl.BlockSpec((1, 128), lambda n: (0, 0)),                  # conv1 b
        pl.BlockSpec((25, 128, 128), lambda n: (0, 0, 0)),         # conv2 W (per tap)
        pl.BlockSpec((1, 128), lambda n: (0, 0)),                  # conv2 b
        pl.BlockSpec((16, 128, 128), lambda n: (0, 0, 0)),         # fc1 W (per position)
        pl.BlockSpec((1, 128), lambda n: (0, 0)),                  # fc1 b
        pl.BlockSpec((128, 128), lambda n: (0, 0)),                # fc2 W
        pl.BlockSpec((1, 128), lambda n: (0, 0)),                  # fc2 b
        pl.BlockSpec((128, 128), lambda n: (0, 0)),                # fc3 W
        pl.BlockSpec((1, 128), lambda n: (0, 0)),                  # fc3 b
    ]
    out = pl.pallas_call(
        _lenet_kernel,
        grid=(G,),
        in_specs=in_specs,
        out_specs=pl.BlockSpec((1, BB, 128), lambda n: (n, 0, 0)),
        out_shape=jax.ShapeDtypeStruct((G, BB, 128), jnp.float32),
        scratch_shapes=[pltpu.VMEM((BB, 12, 16, 128), jnp.float32),  # pool1 map
                        pltpu.VMEM((BB, 12, 8, 128), jnp.float32)],  # kw-shifted copy
        compiler_params=pltpu.CompilerParams(
            dimension_semantics=("parallel",),
            vmem_limit_bytes=32 * 1024 * 1024),                    # fits v5e/v6e/v7x
    )(A1, prep["W1"], prep["b1"], prep["W2"], prep["b2"],
      prep["Wfc1"], prep["bfc1"], prep["Wfc2"], prep["bfc2"],
      prep["Wfc3"], prep["bfc3"])
    return out.reshape(Npad, 128)[:N, :10]


# ------------------------------ the network ---------------------------------

def init_params(key):
    ks = jax.random.split(key, 11)

    def unif(k, shape, fan_in):
        bound = 1.0 / np.sqrt(fan_in)
        return jax.random.uniform(k, shape, jnp.float32, -bound, bound)

    return {
        # small nonzero perturbation so the add+clamp path is exercised
        "r":     0.2 * jax.random.uniform(ks[10], (28, 28), jnp.float32, -1.0, 1.0),
        "w1":    unif(ks[0], (6, 1, 5, 5), 1 * 5 * 5),
        "b1":    unif(ks[1], (6,), 1 * 5 * 5),
        "w2":    unif(ks[2], (16, 6, 5, 5), 6 * 5 * 5),
        "b2":    unif(ks[3], (16,), 6 * 5 * 5),
        "fc1_w": unif(ks[4], (120, 256), 256),
        "fc1_b": unif(ks[5], (120,), 256),
        "fc2_w": unif(ks[6], (84, 120), 120),
        "fc2_b": unif(ks[7], (84,), 120),
        "fc3_w": unif(ks[8], (10, 84), 84),
        "fc3_b": unif(ks[9], (10,), 84),
    }


@jax.jit
def net_forward(x, prep):
    return lenet_forward_pallas(x, prep, block_batch=2)


def reference_forward(x, p):
    """Pure-JAX reference for a correctness sanity check."""
    x = jnp.clip(x + p["r"][None, None], 0.0, 1.0)

    def conv(x, w, b):
        y = jax.lax.conv_general_dilated(
            x, w, (1, 1), "VALID", dimension_numbers=("NCHW", "OIHW", "NCHW"))
        return jax.nn.relu(y + b[None, :, None, None])

    def pool(x):
        return jax.lax.reduce_window(x, -jnp.inf, jax.lax.max,
                                     (1, 1, 2, 2), (1, 1, 2, 2), "VALID")

    x = pool(conv(x, p["w1"], p["b1"]))
    x = pool(conv(x, p["w2"], p["b2"]))
    x = x.reshape(x.shape[0], -1)
    x = jax.nn.relu(x @ p["fc1_w"].T + p["fc1_b"])
    x = jax.nn.relu(x @ p["fc2_w"].T + p["fc2_b"])
    return x @ p["fc3_w"].T + p["fc3_b"]


if __name__ == "__main__":
    root = jax.random.PRNGKey(0)
    kparam, kx = jax.random.split(root)

    params = init_params(kparam)
    prep = prepare_params(params)             # one-time weight padding/permutation

    x = jax.random.uniform(kx, (4, 1, 28, 28), jnp.float32)   # MNIST-like input

    out = jax.block_until_ready(net_forward(x, prep))
    assert out.shape == (4, 10) and out.dtype == jnp.float32

    ref = jax.block_until_ready(reference_forward(x, params))
    np.testing.assert_allclose(np.asarray(out), np.asarray(ref),
                               rtol=1e-2, atol=1e-2)

    print("KERNEL_OK")
</pallas_src>

<mosaic_0001>
module attributes {stable_mosaic.version = 11 : i64} {
  func.func @_lenet_kernel(%arg0: i32, %arg1: memref<2x768x32xf32, #tpu.memory_space<vmem>>, %arg2: memref<32x128xf32, #tpu.memory_space<vmem>>, %arg3: memref<1x128xf32, #tpu.memory_space<vmem>>, %arg4: memref<25x128x128xf32, #tpu.memory_space<vmem>>, %arg5: memref<1x128xf32, #tpu.memory_space<vmem>>, %arg6: memref<16x128x128xf32, #tpu.memory_space<vmem>>, %arg7: memref<1x128xf32, #tpu.memory_space<vmem>>, %arg8: memref<128x128xf32, #tpu.memory_space<vmem>>, %arg9: memref<1x128xf32, #tpu.memory_space<vmem>>, %arg10: memref<128x128xf32, #tpu.memory_space<vmem>>, %arg11: memref<1x128xf32, #tpu.memory_space<vmem>>, %arg12: memref<1x2x128xf32, #tpu.memory_space<vmem>>, %arg13: memref<2x12x16x128xf32, #tpu.memory_space<vmem>>, %arg14: memref<2x12x8x128xf32, #tpu.memory_space<vmem>>) attributes {dimension_semantics = [#tpu.dimension_semantics<parallel>], iteration_bounds = array<i64: 2>, scalar_prefetch = 0 : i64, scratch_operands = 2 : i64, tpu.core_type = #tpu.core_type<tc>, window_params = [{transform_indices = @transform_0, window_bounds = array<i64: 2, 768, 32>}, {pipeline_mode = #tpu.pipeline_mode<synchronous>, transform_indices = @transform_1, window_bounds = array<i64: 32, 128>}, {pipeline_mode = #tpu.pipeline_mode<synchronous>, transform_indices = @transform_2, window_bounds = array<i64: 1, 128>}, {pipeline_mode = #tpu.pipeline_mode<synchronous>, transform_indices = @transform_3, window_bounds = array<i64: 25, 128, 128>}, {pipeline_mode = #tpu.pipeline_mode<synchronous>, transform_indices = @transform_4, window_bounds = array<i64: 1, 128>}, {pipeline_mode = #tpu.pipeline_mode<synchronous>, transform_indices = @transform_5, window_bounds = array<i64: 16, 128, 128>}, {pipeline_mode = #tpu.pipeline_mode<synchronous>, transform_indices = @transform_6, window_bounds = array<i64: 1, 128>}, {pipeline_mode = #tpu.pipeline_mode<synchronous>, transform_indices = @transform_7, window_bounds = array<i64: 128, 128>}, {pipeline_mode = #tpu.pipeline_mode<synchronous>, transform_indices = @transform_8, window_bounds = array<i64: 1, 128>}, {pipeline_mode = #tpu.pipeline_mode<synchronous>, transform_indices = @transform_9, window_bounds = array<i64: 128, 128>}, {pipeline_mode = #tpu.pipeline_mode<synchronous>, transform_indices = @transform_10, window_bounds = array<i64: 1, 128>}, {transform_indices = @transform_11, window_bounds = array<i64: 1, 2, 128>}]} {
    %c0 = arith.constant 0 : index
    %c0_0 = arith.constant 0 : index
    %c0_1 = arith.constant 0 : index
    %0 = vector.load %arg1[%c0, %c0_0, %c0_1] : memref<2x768x32xf32, #tpu.memory_space<vmem>>, vector<2x192x32xf32>
    %1 = vector.shape_cast %0 : vector<2x192x32xf32> to vector<384x32xf32>
    %c0_2 = arith.constant 0 : index
    %c0_3 = arith.constant 0 : index
    %2 = vector.load %arg2[%c0_2, %c0_3] : memref<32x128xf32, #tpu.memory_space<vmem>>, vector<32x128xf32>
    %cst = arith.constant dense<0.000000e+00> : vector<384x128xf32>
    %3 = tpu.matmul %1, %2, %cst {dimension_numbers = #tpu.dot_dimension_numbers<[1], [0], [0], [1], [0, 0, 1, 1], [], []>} : vector<384x32xf32>, vector<32x128xf32>, vector<384x128xf32> -> vector<384x128xf32>
    %c0_4 = arith.constant 0 : index
    %c192 = arith.constant 192 : index
    %c0_5 = arith.constant 0 : index
    %4 = vector.load %arg1[%c0_4, %c192, %c0_5] : memref<2x768x32xf32, #tpu.memory_space<vmem>>, vector<2x192x32xf32>
    %5 = vector.shape_cast %4 : vector<2x192x32xf32> to vector<384x32xf32>
    %c0_6 = arith.constant 0 : index
    %c0_7 = arith.constant 0 : index
    %6 = vector.load %arg2[%c0_6, %c0_7] : memref<32x128xf32, #tpu.memory_space<vmem>>, vector<32x128xf32>
    %cst_8 = arith.constant dense<0.000000e+00> : vector<384x128xf32>
    %7 = tpu.matmul %5, %6, %cst_8 {dimension_numbers = #tpu.dot_dimension_numbers<[1], [0], [0], [1], [0, 0, 1, 1], [], []>} : vector<384x32xf32>, vector<32x128xf32>, vector<384x128xf32> -> vector<384x128xf32>
    %8 = arith.maximumf %3, %7 : vector<384x128xf32>
    %c0_9 = arith.constant 0 : index
    %c384 = arith.constant 384 : index
    %c0_10 = arith.constant 0 : index
    %9 = vector.load %arg1[%c0_9, %c384, %c0_10] : memref<2x768x32xf32, #tpu.memory_space<vmem>>, vector<2x192x32xf32>
    %10 = vector.shape_cast %9 : vector<2x192x32xf32> to vector<384x32xf32>
    %c0_11 = arith.constant 0 : index
    %c0_12 = arith.constant 0 : index
    %11 = vector.load %arg2[%c0_11, %c0_12] : memref<32x128xf32, #tpu.memory_space<vmem>>, vector<32x128xf32>
    %cst_13 = arith.constant dense<0.000000e+00> : vector<384x128xf32>
    %12 = tpu.matmul %10, %11, %cst_13 {dimension_numbers = #tpu.dot_dimension_numbers<[1], [0], [0], [1], [0, 0, 1, 1], [], []>} : vector<384x32xf32>, vector<32x128xf32>, vector<384x128xf32> -> vector<384x128xf32>
    %13 = arith.maximumf %8, %12 : vector<384x128xf32>
    %c0_14 = arith.constant 0 : index
    %c576 = arith.constant 576 : index
    %c0_15 = arith.constant 0 : index
    %14 = vector.load %arg1[%c0_14, %c576, %c0_15] : memref<2x768x32xf32, #tpu.memory_space<vmem>>, vector<2x192x32xf32>
    %15 = vector.shape_cast %14 : vector<2x192x32xf32> to vector<384x32xf32>
    %c0_16 = arith.constant 0 : index
    %c0_17 = arith.constant 0 : index
    %16 = vector.load %arg2[%c0_16, %c0_17] : memref<32x128xf32, #tpu.memory_space<vmem>>, vector<32x128xf32>
    %cst_18 = arith.constant dense<0.000000e+00> : vector<384x128xf32>
    %17 = tpu.matmul %15, %16, %cst_18 {dimension_numbers = #tpu.dot_dimension_numbers<[1], [0], [0], [1], [0, 0, 1, 1], [], []>} : vector<384x32xf32>, vector<32x128xf32>, vector<384x128xf32> -> vector<384x128xf32>
    %18 = arith.maximumf %13, %17 : vector<384x128xf32>
    %c0_19 = arith.constant 0 : index
    %c0_20 = arith.constant 0 : index
    %19 = vector.load %arg3[%c0_19, %c0_20] : memref<1x128xf32, #tpu.memory_space<vmem>>, vector<1x128xf32>
    %20 = vector.broadcast %19 : vector<1x128xf32> to vector<384x128xf32>
    %21 = arith.addf %18, %20 : vector<384x128xf32>
    %cst_21 = arith.constant 0.000000e+00 : f32
    %22 = vector.broadcast %cst_21 : f32 to vector<384x128xf32>
    %23 = arith.maximumf %21, %22 : vector<384x128xf32>
    %24 = vector.shape_cast %23 : vector<384x128xf32> to vector<2x12x16x128xf32>
    %c0_22 = arith.constant 0 : index
    %c0_23 = arith.constant 0 : index
    %c0_24 = arith.constant 0 : index
    %c0_25 = arith.constant 0 : index
    %25 = vector.load %arg13[%c0_22, %c0_23, %c0_24, %c0_25] : memref<2x12x16x128xf32, #tpu.memory_space<vmem>>, vector<2x12x16x128xf32>
    tpu.vector_store %arg13[%c0_22, %c0_23, %c0_24, %c0_25], %24 {strides = array<i32>} : memref<2x12x16x128xf32, #tpu.memory_space<vmem>>, vector<2x12x16x128xf32>,
    %cst_26 = arith.constant 0.000000e+00 : f32
    %26 = vector.broadcast %cst_26 : f32 to vector<128x128xf32>
    %c0_27 = arith.constant 0 : index
    %c0_28 = arith.constant 0 : index
    %c0_29 = arith.constant 0 : index
    %c0_30 = arith.constant 0 : index
    %27 = vector.load %arg13[%c0_27, %c0_28, %c0_29, %c0_30] : memref<2x12x16x128xf32, #tpu.memory_space<vmem>>, vector<2x12x8x128xf32>
    %c0_31 = arith.constant 0 : index
    %c0_32 = arith.constant 0 : index
    %c0_33 = arith.constant 0 : index
    %c0_34 = arith.constant 0 : index
    %28 = vector.load %arg14[%c0_31, %c0_32, %c0_33, %c0_34] : memref<2x12x8x128xf32, #tpu.memory_space<vmem>>, vector<2x12x8x128xf32>
    tpu.vector_store %arg14[%c0_31, %c0_32, %c0_33, %c0_34], %27 {strides = array<i32>} : memref<2x12x8x128xf32, #tpu.memory_space<vmem>>, vector<2x12x8x128xf32>,
    %c0_35 = arith.constant 0 : index
    %c0_36 = arith.constant 0 : index
    %c0_37 = arith.constant 0 : index
    %c0_38 = arith.constant 0 : index
    %29 = vector.load %arg14[%c0_35, %c0_36, %c0_37, %c0_38] : memref<2x12x8x128xf32, #tpu.memory_space<vmem>>, vector<2x8x8x128xf32>
    %30 = vector.shape_cast %29 : vector<2x8x8x128xf32> to vector<128x128xf32>
    %c0_39 = arith.constant 0 : index
    %c0_40 = arith.constant 0 : index
    %c0_41 = arith.constant 0 : index
    %31 = vector.load %arg4[%c0_39, %c0_40, %c0_41] : memref<25x128x128xf32, #tpu.memory_space<vmem>>, vector<1x128x128xf32>
    %32 = vector.shape_cast %31 : vector<1x128x128xf32> to vector<128x128xf32>
    %cst_42 = arith.constant dense<0.000000e+00> : vector<128x128xf32>
    %33 = tpu.matmul %30, %32, %cst_42 {dimension_numbers = #tpu.dot_dimension_numbers<[1], [0], [0], [1], [0, 0, 1, 1], [], []>} : vector<128x128xf32>, vector<128x128xf32>, vector<128x128xf32> -> vector<128x128xf32>
    %34 = arith.addf %26, %33 : vector<128x128xf32>
    %c0_43 = arith.constant 0 : index
    %c1 = arith.constant 1 : index
    %c0_44 = arith.constant 0 : index
    %c0_45 = arith.constant 0 : index
    %35 = vector.load %arg14[%c0_43, %c1, %c0_44, %c0_45] : memref<2x12x8x128xf32, #tpu.memory_space<vmem>>, vector<2x8x8x128xf32>
    %36 = vector.shape_cast %35 : vector<2x8x8x128xf32> to vector<128x128xf32>
    %c5 = arith.constant 5 : index
    %c0_46 = arith.constant 0 : index
    %c0_47 = arith.constant 0 : index
    %37 = vector.load %arg4[%c5, %c0_46, %c0_47] : memref<25x128x128xf32, #tpu.memory_space<vmem>>, vector<1x128x128xf32>
    %38 = vector.shape_cast %37 : vector<1x128x128xf32> to vector<128x128xf32>
    %cst_48 = arith.constant dense<0.000000e+00> : vector<128x128xf32>
    %39 = tpu.matmul %36, %38, %cst_48 {dimension_numbers = #tpu.dot_dimension_numbers<[1], [0], [0], [1], [0, 0, 1, 1], [], []>} : vector<128x128xf32>, vector<128x128xf32>, vector<128x128xf32> -> vector<128x128xf32>
    %40 = arith.addf %34, %39 : vector<128x128xf32>
    %c0_49 = arith.constant 0 : index
    %c2 = arith.constant 2 : index
    %c0_50 = arith.constant 0 : index
    %c0_51 = arith.constant 0 : index
    %41 = vector.load %arg14[%c0_49, %c2, %c0_50, %c0_51] : memref<2x12x8x128xf32, #tpu.memory_space<vmem>>, vector<2x8x8x128xf32>
    %42 = vector.shape_cast %41 : vector<2x8x8x128xf32> to vector<128x128xf32>
    %c10 = arith.constant 10 : index
    %c0_52 = arith.constant 0 : index
    %c0_53 = arith.constant 0 : index
    %43 = vector.load %arg4[%c10, %c0_52, %c0_53] : memref<25x128x128xf32, #tpu.memory_space<vmem>>, vector<1x128x128xf32>
    %44 = vector.shape_cast %43 : vector<1x128x128xf32> to vector<128x128xf32>
    %cst_54 = arith.constant dense<0.000000e+00> : vector<128x128xf32>
    %45 = tpu.matmul %42, %44, %cst_54 {dimension_numbers = #tpu.dot_dimension_numbers<[1], [0], [0], [1], [0, 0, 1, 1], [], []>} : vector<128x128xf32>, vector<128x128xf32>, vector<128x128xf32> -> vector<128x128xf32>
    %46 = arith.addf %40, %45 : vector<128x128xf32>
    %c0_55 = arith.constant 0 : index
    %c3 = arith.constant 3 : index
    %c0_56 = arith.constant 0 : index
    %c0_57 = arith.constant 0 : index
    %47 = vector.load %arg14[%c0_55, %c3, %c0_56, %c0_57] : memref<2x12x8x128xf32, #tpu.memory_space<vmem>>, vector<2x8x8x128xf32>
    %48 = vector.shape_cast %47 : vector<2x8x8x128xf32> to vector<128x128xf32>
    %c15 = arith.constant 15 : index
    %c0_58 = arith.constant 0 : index
    %c0_59 = arith.constant 0 : index
    %49 = vector.load %arg4[%c15, %c0_58, %c0_59] : memref<25x128x128xf32, #tpu.memory_space<vmem>>, vector<1x128x128xf32>
    %50 = vector.shape_cast %49 : vector<1x128x128xf32> to vector<128x128xf32>
    %cst_60 = arith.constant dense<0.000000e+00> : vector<128x128xf32>
    %51 = tpu.matmul %48, %50, %cst_60 {dimension_numbers = #tpu.dot_dimension_numbers<[1], [0], [0], [1], [0, 0, 1, 1], [], []>} : vector<128x128xf32>, vector<128x128xf32>, vector<128x128xf32> -> vector<128x128xf32>
    %52 = arith.addf %46, %51 : vector<128x128xf32>
    %c0_61 = arith.constant 0 : index
    %c4 = arith.constant 4 : index
    %c0_62 = arith.constant 0 : index
    %c0_63 = arith.constant 0 : index
    %53 = vector.load %arg14[%c0_61, %c4, %c0_62, %c0_63] : memref<2x12x8x128xf32, #tpu.memory_space<vmem>>, vector<2x8x8x128xf32>
    %54 = vector.shape_cast %53 : vector<2x8x8x128xf32> to vector<128x128xf32>
    %c20 = arith.constant 20 : index
    %c0_64 = arith.constant 0 : index
    %c0_65 = arith.constant 0 : index
    %55 = vector.load %arg4[%c20, %c0_64, %c0_65] : memref<25x128x128xf32, #tpu.memory_space<vmem>>, vector<1x128x128xf32>
    %56 = vector.shape_cast %55 : vector<1x128x128xf32> to vector<128x128xf32>
    %cst_66 = arith.constant dense<0.000000e+00> : vector<128x128xf32>
    %57 = tpu.matmul %54, %56, %cst_66 {dimension_numbers = #tpu.dot_dimension_numbers<[1], [0], [0], [1], [0, 0, 1, 1], [], []>} : vector<128x128xf32>, vector<128x128xf32>, vector<128x128xf32> -> vector<128x128xf32>
    %58 = arith.addf %52, %57 : vector<128x128xf32>
    %c0_67 = arith.constant 0 : index
    %c0_68 = arith.constant 0 : index
    %c1_69 = arith.constant 1 : index
    %c0_70 = arith.constant 0 : index
    %59 = vector.load %arg13[%c0_67, %c0_68, %c1_69, %c0_70] : memref<2x12x16x128xf32, #tpu.memory_space<vmem>>, vector<2x12x8x128xf32>
    %c0_71 = arith.constant 0 : index
    %c0_72 = arith.constant 0 : index
    %c0_73 = arith.constant 0 : index
    %c0_74 = arith.constant 0 : index
    %60 = vector.load %arg14[%c0_71, %c0_72, %c0_73, %c0_74] : memref<2x12x8x128xf32, #tpu.memory_space<vmem>>, vector<2x12x8x128xf32>
    tpu.vector_store %arg14[%c0_71, %c0_72, %c0_73, %c0_74], %59 {strides = array<i32>} : memref<2x12x8x128xf32, #tpu.memory_space<vmem>>, vector<2x12x8x128xf32>,
    %c0_75 = arith.constant 0 : index
    %c0_76 = arith.constant 0 : index
    %c0_77 = arith.constant 0 : index
    %c0_78 = arith.constant 0 : index
    %61 = vector.load %arg14[%c0_75, %c0_76, %c0_77, %c0_78] : memref<2x12x8x128xf32, #tpu.memory_space<vmem>>, vector<2x8x8x128xf32>
    %62 = vector.shape_cast %61 : vector<2x8x8x128xf32> to vector<128x128xf32>
    %c1_79 = arith.constant 1 : index
    %c0_80 = arith.constant 0 : index
    %c0_81 = arith.constant 0 : index
    %63 = vector.load %arg4[%c1_79, %c0_80, %c0_81] : memref<25x128x128xf32, #tpu.memory_space<vmem>>, vector<1x128x128xf32>
    %64 = vector.shape_cast %63 : vector<1x128x128xf32> to vector<128x128xf32>
    %cst_82 = arith.constant dense<0.000000e+00> : vector<128x128xf32>
    %65 = tpu.matmul %62, %64, %cst_82 {dimension_numbers = #tpu.dot_dimension_numbers<[1], [0], [0], [1], [0, 0, 1, 1], [], []>} : vector<128x128xf32>, vector<128x128xf32>, vector<128x128xf32> -> vector<128x128xf32>
    %66 = arith.addf %58, %65 : vector<128x128xf32>
    %c0_83 = arith.constant 0 : index
    %c1_84 = arith.constant 1 : index
    %c0_85 = arith.constant 0 : index
    %c0_86 = arith.constant 0 : index
    %67 = vector.load %arg14[%c0_83, %c1_84, %c0_85, %c0_86] : memref<2x12x8x128xf32, #tpu.memory_space<vmem>>, vector<2x8x8x128xf32>
    %68 = vector.shape_cast %67 : vector<2x8x8x128xf32> to vector<128x128xf32>
    %c6 = arith.constant 6 : index
    %c0_87 = arith.constant 0 : index
    %c0_88 = arith.constant 0 : index
    %69 = vector.load %arg4[%c6, %c0_87, %c0_88] : memref<25x128x128xf32, #tpu.memory_space<vmem>>, vector<1x128x128xf32>
    %70 = vector.shape_cast %69 : vector<1x128x128xf32> to vector<128x128xf32>
    %cst_89 = arith.constant dense<0.000000e+00> : vector<128x128xf32>
    %71 = tpu.matmul %68, %70, %cst_89 {dimension_numbers = #tpu.dot_dimension_numbers<[1], [0], [0], [1], [0, 0, 1, 1], [], []>} : vector<128x128xf32>, vector<128x128xf32>, vector<128x128xf32> -> vector<128x128xf32>
    %72 = arith.addf %66, %71 : vector<128x128xf32>
    %c0_90 = arith.constant 0 : index
    %c2_91 = arith.constant 2 : index
    %c0_92 = arith.constant 0 : index
    %c0_93 = arith.constant 0 : index
    %73 = vector.load %arg14[%c0_90, %c2_91, %c0_92, %c0_93] : memref<2x12x8x128xf32, #tpu.memory_space<vmem>>, vector<2x8x8x128xf32>
    %74 = vector.shape_cast %73 : vector<2x8x8x128xf32> to vector<128x128xf32>
    %c11 = arith.constant 11 : index
    %c0_94 = arith.constant 0 : index
    %c0_95 = arith.constant 0 : index
    %75 = vector.load %arg4[%c11, %c0_94, %c0_95] : memref<25x128x128xf32, #tpu.memory_space<vmem>>, vector<1x128x128xf32>
    %76 = vector.shape_cast %75 : vector<1x128x128xf32> to vector<128x128xf32>
    %cst_96 = arith.constant dense<0.000000e+00> : vector<128x128xf32>
    %77 = tpu.matmul %74, %76, %cst_96 {dimension_numbers = #tpu.dot_dimension_numbers<[1], [0], [0], [1], [0, 0, 1, 1], [], []>} : vector<128x128xf32>, vector<128x128xf32>, vector<128x128xf32> -> vector<128x128xf32>
    %78 = arith.addf %72, %77 : vector<128x128xf32>
    %c0_97 = arith.constant 0 : index
    %c3_98 = arith.constant 3 : index
    %c0_99 = arith.constant 0 : index
    %c0_100 = arith.constant 0 : index
    %79 = vector.load %arg14[%c0_97, %c3_98, %c0_99, %c0_100] : memref<2x12x8x128xf32, #tpu.memory_space<vmem>>, vector<2x8x8x128xf32>
    %80 = vector.shape_cast %79 : vector<2x8x8x128xf32> to vector<128x128xf32>
    %c16 = arith.constant 16 : index
    %c0_101 = arith.constant 0 : index
    %c0_102 = arith.constant 0 : index
    %81 = vector.load %arg4[%c16, %c0_101, %c0_102] : memref<25x128x128xf32, #tpu.memory_space<vmem>>, vector<1x128x128xf32>
    %82 = vector.shape_cast %81 : vector<1x128x128xf32> to vector<128x128xf32>
    %cst_103 = arith.constant dense<0.000000e+00> : vector<128x128xf32>
    %83 = tpu.matmul %80, %82, %cst_103 {dimension_numbers = #tpu.dot_dimension_numbers<[1], [0], [0], [1], [0, 0, 1, 1], [], []>} : vector<128x128xf32>, vector<128x128xf32>, vector<128x128xf32> -> vector<128x128xf32>
    %84 = arith.addf %78, %83 : vector<128x128xf32>
    %c0_104 = arith.constant 0 : index
    %c4_105 = arith.constant 4 : index
    %c0_106 = arith.constant 0 : index
    %c0_107 = arith.constant 0 : index
    %85 = vector.load %arg14[%c0_104, %c4_105, %c0_106, %c0_107] : memref<2x12x8x128xf32, #tpu.memory_space<vmem>>, vector<2x8x8x128xf32>
    %86 = vector.shape_cast %85 : vector<2x8x8x128xf32> to vector<128x128xf32>
    %c21 = arith.constant 21 : index
    %c0_108 = arith.constant 0 : index
    %c0_109 = arith.constant 0 : index
    %87 = vector.load %arg4[%c21, %c0_108, %c0_109] : memref<25x128x128xf32, #tpu.memory_space<vmem>>, vector<1x128x128xf32>
    %88 = vector.shape_cast %87 : vector<1x128x128xf32> to vector<128x128xf32>
    %cst_110 = arith.constant dense<0.000000e+00> : vector<128x128xf32>
    %89 = tpu.matmul %86, %88, %cst_110 {dimension_numbers = #tpu.dot_dimension_numbers<[1], [0], [0], [1], [0, 0, 1, 1], [], []>} : vector<128x128xf32>, vector<128x128xf32>, vector<128x128xf32> -> vector<128x128xf32>
    %90 = arith.addf %84, %89 : vector<128x128xf32>
    %c0_111 = arith.constant 0 : index
    %c0_112 = arith.constant 0 : index
    %c2_113 = arith.constant 2 : index
    %c0_114 = arith.constant 0 : index
    %91 = vector.load %arg13[%c0_111, %c0_112, %c2_113, %c0_114] : memref<2x12x16x128xf32, #tpu.memory_space<vmem>>, vector<2x12x8x128xf32>
    %c0_115 = arith.constant 0 : index
    %c0_116 = arith.constant 0 : index
    %c0_117 = arith.constant 0 : index
    %c0_118 = arith.constant 0 : index
    %92 = vector.load %arg14[%c0_115, %c0_116, %c0_117, %c0_118] : memref<2x12x8x128xf32, #tpu.memory_space<vmem>>, vector<2x12x8x128xf32>
    tpu.vector_store %arg14[%c0_115, %c0_116, %c0_117, %c0_118], %91 {strides = array<i32>} : memref<2x12x8x128xf32, #tpu.memory_space<vmem>>, vector<2x12x8x128xf32>,
    %c0_119 = arith.constant 0 : index
    %c0_120 = arith.constant 0 : index
    %c0_121 = arith.constant 0 : index
    %c0_122 = arith.constant 0 : index
    %93 = vector.load %arg14[%c0_119, %c0_120, %c0_121, %c0_122] : memref<2x12x8x128xf32, #tpu.memory_space<vmem>>, vector<2x8x8x128xf32>
    %94 = vector.shape_cast %93 : vector<2x8x8x128xf32> to vector<128x128xf32>
    %c2_123 = arith.constant 2 : index
    %c0_124 = arith.constant 0 : index
    %c0_125 = arith.constant 0 : index
    %95 = vector.load %arg4[%c2_123, %c0_124, %c0_125] : memref<25x128x128xf32, #tpu.memory_space<vmem>>, vector<1x128x128xf32>
    %96 = vector.shape_cast %95 : vector<1x128x128xf32> to vector<128x128xf32>
    %cst_126 = arith.constant dense<0.000000e+00> : vector<128x128xf32>
    %97 = tpu.matmul %94, %96, %cst_126 {dimension_numbers = #tpu.dot_dimension_numbers<[1], [0], [0], [1], [0, 0, 1, 1], [], []>} : vector<128x128xf32>, vector<128x128xf32>, vector<128x128xf32> -> vector<128x128xf32>
    %98 = arith.addf %90, %97 : vector<128x128xf32>
    %c0_127 = arith.constant 0 : index
    %c1_128 = arith.constant 1 : index
    %c0_129 = arith.constant 0 : index
    %c0_130 = arith.constant 0 : index
    %99 = vector.load %arg14[%c0_127, %c1_128, %c0_129, %c0_130] : memref<2x12x8x128xf32, #tpu.memory_space<vmem>>, vector<2x8x8x128xf32>
    %100 = vector.shape_cast %99 : vector<2x8x8x128xf32> to vector<128x128xf32>
    %c7 = arith.constant 7 : index
    %c0_131 = arith.constant 0 : index
    %c0_132 = arith.constant 0 : index
    %101 = vector.load %arg4[%c7, %c0_131, %c0_132] : memref<25x128x128xf32, #tpu.memory_space<vmem>>, vector<1x128x128xf32>
    %102 = vector.shape_cast %101 : vector<1x128x128xf32> to vector<128x128xf32>
    %cst_133 = arith.constant dense<0.000000e+00> : vector<128x128xf32>
    %103 = tpu.matmul %100, %102, %cst_133 {dimension_numbers = #tpu.dot_dimension_numbers<[1], [0], [0], [1], [0, 0, 1, 1], [], []>} : vector<128x128xf32>, vector<128x128xf32>, vector<128x128xf32> -> vector<128x128xf32>
    %104 = arith.addf %98, %103 : vector<128x128xf32>
    %c0_134 = arith.constant 0 : index
    %c2_135 = arith.constant 2 : index
    %c0_136 = arith.constant 0 : index
    %c0_137 = arith.constant 0 : index
    %105 = vector.load %arg14[%c0_134, %c2_135, %c0_136, %c0_137] : memref<2x12x8x128xf32, #tpu.memory_space<vmem>>, vector<2x8x8x128xf32>
    %106 = vector.shape_cast %105 : vector<2x8x8x128xf32> to vector<128x128xf32>
    %c12 = arith.constant 12 : index
    %c0_138 = arith.constant 0 : index
    %c0_139 = arith.constant 0 : index
    %107 = vector.load %arg4[%c12, %c0_138, %c0_139] : memref<25x128x128xf32, #tpu.memory_space<vmem>>, vector<1x128x128xf32>
    %108 = vector.shape_cast %107 : vector<1x128x128xf32> to vector<128x128xf32>
    %cst_140 = arith.constant dense<0.000000e+00> : vector<128x128xf32>
    %109 = tpu.matmul %106, %108, %cst_140 {dimension_numbers = #tpu.dot_dimension_numbers<[1], [0], [0], [1], [0, 0, 1, 1], [], []>} : vector<128x128xf32>, vector<128x128xf32>, vector<128x128xf32> -> vector<128x128xf32>
    %110 = arith.addf %104, %109 : vector<128x128xf32>
    %c0_141 = arith.constant 0 : index
    %c3_142 = arith.constant 3 : index
    %c0_143 = arith.constant 0 : index
    %c0_144 = arith.constant 0 : index
    %111 = vector.load %arg14[%c0_141, %c3_142, %c0_143, %c0_144] : memref<2x12x8x128xf32, #tpu.memory_space<vmem>>, vector<2x8x8x128xf32>
    %112 = vector.shape_cast %111 : vector<2x8x8x128xf32> to vector<128x128xf32>
    %c17 = arith.constant 17 : index
    %c0_145 = arith.constant 0 : index
    %c0_146 = arith.constant 0 : index
    %113 = vector.load %arg4[%c17, %c0_145, %c0_146] : memref<25x128x128xf32, #tpu.memory_space<vmem>>, vector<1x128x128xf32>
    %114 = vector.shape_cast %113 : vector<1x128x128xf32> to vector<128x128xf32>
    %cst_147 = arith.constant dense<0.000000e+00> : vector<128x128xf32>
    %115 = tpu.matmul %112, %114, %cst_147 {dimension_numbers = #tpu.dot_dimension_numbers<[1], [0], [0], [1], [0, 0, 1, 1], [], []>} : vector<128x128xf32>, vector<128x128xf32>, vector<128x128xf32> -> vector<128x128xf32>
    %116 = arith.addf %110, %115 : vector<128x128xf32>
    %c0_148 = arith.constant 0 : index
    %c4_149 = arith.constant 4 : index
    %c0_150 = arith.constant 0 : index
    %c0_151 = arith.constant 0 : index
    %117 = vector.load %arg14[%c0_148, %c4_149, %c0_150, %c0_151] : memref<2x12x8x128xf32, #tpu.memory_space<vmem>>, vector<2x8x8x128xf32>
    %118 = vector.shape_cast %117 : vector<2x8x8x128xf32> to vector<128x128xf32>
    %c22 = arith.constant 22 : index
    %c0_152 = arith.constant 0 : index
    %c0_153 = arith.constant 0 : index
    %119 = vector.load %arg4[%c22, %c0_152, %c0_153] : memref<25x128x128xf32, #tpu.memory_space<vmem>>, vector<1x128x128xf32>
    %120 = vector.shape_cast %119 : vector<1x128x128xf32> to vector<128x128xf32>
    %cst_154 = arith.constant dense<0.000000e+00> : vector<128x128xf32>
    %121 = tpu.matmul %118, %120, %cst_154 {dimension_numbers = #tpu.dot_dimension_numbers<[1], [0], [0], [1], [0, 0, 1, 1], [], []>} : vector<128x128xf32>, vector<128x128xf32>, vector<128x128xf32> -> vector<128x128xf32>
    %122 = arith.addf %116, %121 : vector<128x128xf32>
    %c0_155 = arith.constant 0 : index
    %c0_156 = arith.constant 0 : index
    %c3_157 = arith.constant 3 : index
    %c0_158 = arith.constant 0 : index
    %123 = vector.load %arg13[%c0_155, %c0_156, %c3_157, %c0_158] : memref<2x12x16x128xf32, #tpu.memory_space<vmem>>, vector<2x12x8x128xf32>
    %c0_159 = arith.constant 0 : index
    %c0_160 = arith.constant 0 : index
    %c0_161 = arith.constant 0 : index
    %c0_162 = arith.constant 0 : index
    %124 = vector.load %arg14[%c0_159, %c0_160, %c0_161, %c0_162] : memref<2x12x8x128xf32, #tpu.memory_space<vmem>>, vector<2x12x8x128xf32>
    tpu.vector_store %arg14[%c0_159, %c0_160, %c0_161, %c0_162], %123 {strides = array<i32>} : memref<2x12x8x128xf32, #tpu.memory_space<vmem>>, vector<2x12x8x128xf32>,
    %c0_163 = arith.constant 0 : index
    %c0_164 = arith.constant 0 : index
    %c0_165 = arith.constant 0 : index
    %c0_166 = arith.constant 0 : index
    %125 = vector.load %arg14[%c0_163, %c0_164, %c0_165, %c0_166] : memref<2x12x8x128xf32, #tpu.memory_space<vmem>>, vector<2x8x8x128xf32>
    %126 = vector.shape_cast %125 : vector<2x8x8x128xf32> to vector<128x128xf32>
    %c3_167 = arith.constant 3 : index
    %c0_168 = arith.constant 0 : index
    %c0_169 = arith.constant 0 : index
    %127 = vector.load %arg4[%c3_167, %c0_168, %c0_169] : memref<25x128x128xf32, #tpu.memory_space<vmem>>, vector<1x128x128xf32>
    %128 = vector.shape_cast %127 : vector<1x128x128xf32> to vector<128x128xf32>
    %cst_170 = arith.constant dense<0.000000e+00> : vector<128x128xf32>
    %129 = tpu.matmul %126, %128, %cst_170 {dimension_numbers = #tpu.dot_dimension_numbers<[1], [0], [0], [1], [0, 0, 1, 1], [], []>} : vector<128x128xf32>, vector<128x128xf32>, vector<128x128xf32> -> vector<128x128xf32>
    %130 = arith.addf %122, %129 : vector<128x128xf32>
    %c0_171 = arith.constant 0 : index
    %c1_172 = arith.constant 1 : index
    %c0_173 = arith.constant 0 : index
    %c0_174 = arith.constant 0 : index
    %131 = vector.load %arg14[%c0_171, %c1_172, %c0_173, %c0_174] : memref<2x12x8x128xf32, #tpu.memory_space<vmem>>, vector<2x8x8x128xf32>
    %132 = vector.shape_cast %131 : vector<2x8x8x128xf32> to vector<128x128xf32>
    %c8 = arith.constant 8 : index
    %c0_175 = arith.constant 0 : index
    %c0_176 = arith.constant 0 : index
    %133 = vector.load %arg4[%c8, %c0_175, %c0_176] : memref<25x128x128xf32, #tpu.memory_space<vmem>>, vector<1x128x128xf32>
    %134 = vector.shape_cast %133 : vector<1x128x128xf32> to vector<128x128xf32>
    %cst_177 = arith.constant dense<0.000000e+00> : vector<128x128xf32>
    %135 = tpu.matmul %132, %134, %cst_177 {dimension_numbers = #tpu.dot_dimension_numbers<[1], [0], [0], [1], [0, 0, 1, 1], [], []>} : vector<128x128xf32>, vector<128x128xf32>, vector<128x128xf32> -> vector<128x128xf32>
    %136 = arith.addf %130, %135 : vector<128x128xf32>
    %c0_178 = arith.constant 0 : index
    %c2_179 = arith.constant 2 : index
    %c0_180 = arith.constant 0 : index
    %c0_181 = arith.constant 0 : index
    %137 = vector.load %arg14[%c0_178, %c2_179, %c0_180, %c0_181] : memref<2x12x8x128xf32, #tpu.memory_space<vmem>>, vector<2x8x8x128xf32>
    %138 = vector.shape_cast %137 : vector<2x8x8x128xf32> to vector<128x128xf32>
    %c13 = arith.constant 13 : index
    %c0_182 = arith.constant 0 : index
    %c0_183 = arith.constant 0 : index
    %139 = vector.load %arg4[%c13, %c0_182, %c0_183] : memref<25x128x128xf32, #tpu.memory_space<vmem>>, vector<1x128x128xf32>
    %140 = vector.shape_cast %139 : vector<1x128x128xf32> to vector<128x128xf32>
    %cst_184 = arith.constant dense<0.000000e+00> : vector<128x128xf32>
    %141 = tpu.matmul %138, %140, %cst_184 {dimension_numbers = #tpu.dot_dimension_numbers<[1], [0], [0], [1], [0, 0, 1, 1], [], []>} : vector<128x128xf32>, vector<128x128xf32>, vector<128x128xf32> -> vector<128x128xf32>
    %142 = arith.addf %136, %141 : vector<128x128xf32>
    %c0_185 = arith.constant 0 : index
    %c3_186 = arith.constant 3 : index
    %c0_187 = arith.constant 0 : index
    %c0_188 = arith.constant 0 : index
    %143 = vector.load %arg14[%c0_185, %c3_186, %c0_187, %c0_188] : memref<2x12x8x128xf32, #tpu.memory_space<vmem>>, vector<2x8x8x128xf32>
    %144 = vector.shape_cast %143 : vector<2x8x8x128xf32> to vector<128x128xf32>
    %c18 = arith.constant 18 : index
    %c0_189 = arith.constant 0 : index
    %c0_190 = arith.constant 0 : index
    %145 = vector.load %arg4[%c18, %c0_189, %c0_190] : memref<25x128x128xf32, #tpu.memory_space<vmem>>, vector<1x128x128xf32>
    %146 = vector.shape_cast %145 : vector<1x128x128xf32> to vector<128x128xf32>
    %cst_191 = arith.constant dense<0.000000e+00> : vector<128x128xf32>
    %147 = tpu.matmul %144, %146, %cst_191 {dimension_numbers = #tpu.dot_dimension_numbers<[1], [0], [0], [1], [0, 0, 1, 1], [], []>} : vector<128x128xf32>, vector<128x128xf32>, vector<128x128xf32> -> vector<128x128xf32>
    %148 = arith.addf %142, %147 : vector<128x128xf32>
    %c0_192 = arith.constant 0 : index
    %c4_193 = arith.constant 4 : index
    %c0_194 = arith.constant 0 : index
    %c0_195 = arith.constant 0 : index
    %149 = vector.load %arg14[%c0_192, %c4_193, %c0_194, %c0_195] : memref<2x12x8x128xf32, #tpu.memory_space<vmem>>, vector<2x8x8x128xf32>
    %150 = vector.shape_cast %149 : vector<2x8x8x128xf32> to vector<128x128xf32>
    %c23 = arith.constant 23 : index
    %c0_196 = arith.constant 0 : index
    %c0_197 = arith.constant 0 : index
    %151 = vector.load %arg4[%c23, %c0_196, %c0_197] : memref<25x128x128xf32, #tpu.memory_space<vmem>>, vector<1x128x128xf32>
    %152 = vector.shape_cast %151 : vector<1x128x128xf32> to vector<128x128xf32>
    %cst_198 = arith.constant dense<0.000000e+00> : vector<128x128xf32>
    %153 = tpu.matmul %150, %152, %cst_198 {dimension_numbers = #tpu.dot_dimension_numbers<[1], [0], [0], [1], [0, 0, 1, 1], [], []>} : vector<128x128xf32>, vector<128x128xf32>, vector<128x128xf32> -> vector<128x128xf32>
    %154 = arith.addf %148, %153 : vector<128x128xf32>
    %c0_199 = arith.constant 0 : index
    %c0_200 = arith.constant 0 : index
    %c4_201 = arith.constant 4 : index
    %c0_202 = arith.constant 0 : index
    %155 = vector.load %arg13[%c0_199, %c0_200, %c4_201, %c0_202] : memref<2x12x16x128xf32, #tpu.memory_space<vmem>>, vector<2x12x8x128xf32>
    %c0_203 = arith.constant 0 : index
    %c0_204 = arith.constant 0 : index
    %c0_205 = arith.constant 0 : index
    %c0_206 = arith.constant 0 : index
    %156 = vector.load %arg14[%c0_203, %c0_204, %c0_205, %c0_206] : memref<2x12x8x128xf32, #tpu.memory_space<vmem>>, vector<2x12x8x128xf32>
    tpu.vector_store %arg14[%c0_203, %c0_204, %c0_205, %c0_206], %155 {strides = array<i32>} : memref<2x12x8x128xf32, #tpu.memory_space<vmem>>, vector<2x12x8x128xf32>,
    %c0_207 = arith.constant 0 : index
    %c0_208 = arith.constant 0 : index
    %c0_209 = arith.constant 0 : index
    %c0_210 = arith.constant 0 : index
    %157 = vector.load %arg14[%c0_207, %c0_208, %c0_209, %c0_210] : memref<2x12x8x128xf32, #tpu.memory_space<vmem>>, vector<2x8x8x128xf32>
    %158 = vector.shape_cast %157 : vector<2x8x8x128xf32> to vector<128x128xf32>
    %c4_211 = arith.constant 4 : index
    %c0_212 = arith.constant 0 : index
    %c0_213 = arith.constant 0 : index
    %159 = vector.load %arg4[%c4_211, %c0_212, %c0_213] : memref<25x128x128xf32, #tpu.memory_space<vmem>>, vector<1x128x128xf32>
    %160 = vector.shape_cast %159 : vector<1x128x128xf32> to vector<128x128xf32>
    %cst_214 = arith.constant dense<0.000000e+00> : vector<128x128xf32>
    %161 = tpu.matmul %158, %160, %cst_214 {dimension_numbers = #tpu.dot_dimension_numbers<[1], [0], [0], [1], [0, 0, 1, 1], [], []>} : vector<128x128xf32>, vector<128x128xf32>, vector<128x128xf32> -> vector<128x128xf32>
    %162 = arith.addf %154, %161 : vector<128x128xf32>
    %c0_215 = arith.constant 0 : index
    %c1_216 = arith.constant 1 : index
    %c0_217 = arith.constant 0 : index
    %c0_218 = arith.constant 0 : index
    %163 = vector.load %arg14[%c0_215, %c1_216, %c0_217, %c0_218] : memref<2x12x8x128xf32, #tpu.memory_space<vmem>>, vector<2x8x8x128xf32>
    %164 = vector.shape_cast %163 : vector<2x8x8x128xf32> to vector<128x128xf32>
    %c9 = arith.constant 9 : index
    %c0_219 = arith.constant 0 : index
    %c0_220 = arith.constant 0 : index
    %165 = vector.load %arg4[%c9, %c0_219, %c0_220] : memref<25x128x128xf32, #tpu.memory_space<vmem>>, vector<1x128x128xf32>
    %166 = vector.shape_cast %165 : vector<1x128x128xf32> to vector<128x128xf32>
    %cst_221 = arith.constant dense<0.000000e+00> : vector<128x128xf32>
    %167 = tpu.matmul %164, %166, %cst_221 {dimension_numbers = #tpu.dot_dimension_numbers<[1], [0], [0], [1], [0, 0, 1, 1], [], []>} : vector<128x128xf32>, vector<128x128xf32>, vector<128x128xf32> -> vector<128x128xf32>
    %168 = arith.addf %162, %167 : vector<128x128xf32>
    %c0_222 = arith.constant 0 : index
    %c2_223 = arith.constant 2 : index
    %c0_224 = arith.constant 0 : index
    %c0_225 = arith.constant 0 : index
    %169 = vector.load %arg14[%c0_222, %c2_223, %c0_224, %c0_225] : memref<2x12x8x128xf32, #tpu.memory_space<vmem>>, vector<2x8x8x128xf32>
    %170 = vector.shape_cast %169 : vector<2x8x8x128xf32> to vector<128x128xf32>
    %c14 = arith.constant 14 : index
    %c0_226 = arith.constant 0 : index
    %c0_227 = arith.constant 0 : index
    %171 = vector.load %arg4[%c14, %c0_226, %c0_227] : memref<25x128x128xf32, #tpu.memory_space<vmem>>, vector<1x128x128xf32>
    %172 = vector.shape_cast %171 : vector<1x128x128xf32> to vector<128x128xf32>
    %cst_228 = arith.constant dense<0.000000e+00> : vector<128x128xf32>
    %173 = tpu.matmul %170, %172, %cst_228 {dimension_numbers = #tpu.dot_dimension_numbers<[1], [0], [0], [1], [0, 0, 1, 1], [], []>} : vector<128x128xf32>, vector<128x128xf32>, vector<128x128xf32> -> vector<128x128xf32>
    %174 = arith.addf %168, %173 : vector<128x128xf32>
    %c0_229 = arith.constant 0 : index
    %c3_230 = arith.constant 3 : index
    %c0_231 = arith.constant 0 : index
    %c0_232 = arith.constant 0 : index
    %175 = vector.load %arg14[%c0_229, %c3_230, %c0_231, %c0_232] : memref<2x12x8x128xf32, #tpu.memory_space<vmem>>, vector<2x8x8x128xf32>
    %176 = vector.shape_cast %175 : vector<2x8x8x128xf32> to vector<128x128xf32>
    %c19 = arith.constant 19 : index
    %c0_233 = arith.constant 0 : index
    %c0_234 = arith.constant 0 : index
    %177 = vector.load %arg4[%c19, %c0_233, %c0_234] : memref<25x128x128xf32, #tpu.memory_space<vmem>>, vector<1x128x128xf32>
    %178 = vector.shape_cast %177 : vector<1x128x128xf32> to vector<128x128xf32>
    %cst_235 = arith.constant dense<0.000000e+00> : vector<128x128xf32>
    %179 = tpu.matmul %176, %178, %cst_235 {dimension_numbers = #tpu.dot_dimension_numbers<[1], [0], [0], [1], [0, 0, 1, 1], [], []>} : vector<128x128xf32>, vector<128x128xf32>, vector<128x128xf32> -> vector<128x128xf32>
    %180 = arith.addf %174, %179 : vector<128x128xf32>
    %c0_236 = arith.constant 0 : index
    %c4_237 = arith.constant 4 : index
    %c0_238 = arith.constant 0 : index
    %c0_239 = arith.constant 0 : index
    %181 = vector.load %arg14[%c0_236, %c4_237, %c0_238, %c0_239] : memref<2x12x8x128xf32, #tpu.memory_space<vmem>>, vector<2x8x8x128xf32>
    %182 = vector.shape_cast %181 : vector<2x8x8x128xf32> to vector<128x128xf32>
    %c24 = arith.constant 24 : index
    %c0_240 = arith.constant 0 : index
    %c0_241 = arith.constant 0 : index
    %183 = vector.load %arg4[%c24, %c0_240, %c0_241] : memref<25x128x128xf32, #tpu.memory_space<vmem>>, vector<1x128x128xf32>
    %184 = vector.shape_cast %183 : vector<1x128x128xf32> to vector<128x128xf32>
    %cst_242 = arith.constant dense<0.000000e+00> : vector<128x128xf32>
    %185 = tpu.matmul %182, %184, %cst_242 {dimension_numbers = #tpu.dot_dimension_numbers<[1], [0], [0], [1], [0, 0, 1, 1], [], []>} : vector<128x128xf32>, vector<128x128xf32>, vector<128x128xf32> -> vector<128x128xf32>
    %186 = arith.addf %180, %185 : vector<128x128xf32>
    %c0_243 = arith.constant 0 : index
    %c0_244 = arith.constant 0 : index
    %187 = vector.load %arg5[%c0_243, %c0_244] : memref<1x128xf32, #tpu.memory_space<vmem>>, vector<1x128xf32>
    %188 = vector.broadcast %187 : vector<1x128xf32> to vector<128x128xf32>
    %189 = arith.addf %186, %188 : vector<128x128xf32>
    %cst_245 = arith.constant 0.000000e+00 : f32
    %190 = vector.broadcast %cst_245 : f32 to vector<128x128xf32>
    %191 = arith.maximumf %189, %190 : vector<128x128xf32>
    %192 = vector.shape_cast %191 : vector<128x128xf32> to vector<2x8x8x128xf32>
    %cst_246 = arith.constant 0.000000e+00 : f32
    %193 = vector.broadcast %cst_246 : f32 to vector<2x128xf32>
    %194 = vector.extract_strided_slice %192 {offsets = [0, 0, 0, 0], sizes = [2, 1, 8, 128], strides = [1, 1, 1, 1]} : vector<2x8x8x128xf32> to vector<2x1x8x128xf32>
    %195 = vector.shape_cast %194 : vector<2x1x8x128xf32> to vector<2x8x128xf32>
    %196 = vector.extract_strided_slice %192 {offsets = [0, 1, 0, 0], sizes = [2, 1, 8, 128], strides = [1, 1, 1, 1]} : vector<2x8x8x128xf32> to vector<2x1x8x128xf32>
    %197 = vector.shape_cast %196 : vector<2x1x8x128xf32> to vector<2x8x128xf32>
    %198 = arith.maximumf %195, %197 : vector<2x8x128xf32>
    %199 = vector.extract_strided_slice %198 {offsets = [0, 0, 0], sizes = [2, 1, 128], strides = [1, 1, 1]} : vector<2x8x128xf32> to vector<2x1x128xf32>
    %200 = vector.shape_cast %199 : vector<2x1x128xf32> to vector<2x128xf32>
    %201 = vector.extract_strided_slice %198 {offsets = [0, 1, 0], sizes = [2, 1, 128], strides = [1, 1, 1]} : vector<2x8x128xf32> to vector<2x1x128xf32>
    %202 = vector.shape_cast %201 : vector<2x1x128xf32> to vector<2x128xf32>
    %203 = arith.maximumf %200, %202 : vector<2x128xf32>
    %c0_247 = arith.constant 0 : index
    %c0_248 = arith.constant 0 : index
    %c0_249 = arith.constant 0 : index
    %204 = vector.load %arg6[%c0_247, %c0_248, %c0_249] : memref<16x128x128xf32, #tpu.memory_space<vmem>>, vector<1x128x128xf32>
    %205 = vector.shape_cast %204 : vector<1x128x128xf32> to vector<128x128xf32>
    %cst_250 = arith.constant dense<0.000000e+00> : vector<2x128xf32>
    %206 = tpu.matmul %203, %205, %cst_250 {dimension_numbers = #tpu.dot_dimension_numbers<[1], [0], [0], [1], [0, 0, 1, 1], [], []>} : vector<2x128xf32>, vector<128x128xf32>, vector<2x128xf32> -> vector<2x128xf32>
    %207 = arith.addf %193, %206 : vector<2x128xf32>
    %208 = vector.extract_strided_slice %198 {offsets = [0, 2, 0], sizes = [2, 1, 128], strides = [1, 1, 1]} : vector<2x8x128xf32> to vector<2x1x128xf32>
    %209 = vector.shape_cast %208 : vector<2x1x128xf32> to vector<2x128xf32>
    %210 = vector.extract_strided_slice %198 {offsets = [0, 3, 0], sizes = [2, 1, 128], strides = [1, 1, 1]} : vector<2x8x128xf32> to vector<2x1x128xf32>
    %211 = vector.shape_cast %210 : vector<2x1x128xf32> to vector<2x128xf32>
    %212 = arith.maximumf %209, %211 : vector<2x128xf32>
    %c1_251 = arith.constant 1 : index
    %c0_252 = arith.constant 0 : index
    %c0_253 = arith.constant 0 : index
    %213 = vector.load %arg6[%c1_251, %c0_252, %c0_253] : memref<16x128x128xf32, #tpu.memory_space<vmem>>, vector<1x128x128xf32>
    %214 = vector.shape_cast %213 : vector<1x128x128xf32> to vector<128x128xf32>
    %cst_254 = arith.constant dense<0.000000e+00> : vector<2x128xf32>
    %215 = tpu.matmul %212, %214, %cst_254 {dimension_numbers = #tpu.dot_dimension_numbers<[1], [0], [0], [1], [0, 0, 1, 1], [], []>} : vector<2x128xf32>, vector<128x128xf32>, vector<2x128xf32> -> vector<2x128xf32>
    %216 = arith.addf %207, %215 : vector<2x128xf32>
    %217 = vector.extract_strided_slice %198 {offsets = [0, 4, 0], sizes = [2, 1, 128], strides = [1, 1, 1]} : vector<2x8x128xf32> to vector<2x1x128xf32>
    %218 = vector.shape_cast %217 : vector<2x1x128xf32> to vector<2x128xf32>
    %219 = vector.extract_strided_slice %198 {offsets = [0, 5, 0], sizes = [2, 1, 128], strides = [1, 1, 1]} : vector<2x8x128xf32> to vector<2x1x128xf32>
    %220 = vector.shape_cast %219 : vector<2x1x128xf32> to vector<2x128xf32>
    %221 = arith.maximumf %218, %220 : vector<2x128xf32>
    %c2_255 = arith.constant 2 : index
    %c0_256 = arith.constant 0 : index
    %c0_257 = arith.constant 0 : index
    %222 = vector.load %arg6[%c2_255, %c0_256, %c0_257] : memref<16x128x128xf32, #tpu.memory_space<vmem>>, vector<1x128x128xf32>
    %223 = vector.shape_cast %222 : vector<1x128x128xf32> to vector<128x128xf32>
    %cst_258 = arith.constant dense<0.000000e+00> : vector<2x128xf32>
    %224 = tpu.matmul %221, %223, %cst_258 {dimension_numbers = #tpu.dot_dimension_numbers<[1], [0], [0], [1], [0, 0, 1, 1], [], []>} : vector<2x128xf32>, vector<128x128xf32>, vector<2x128xf32> -> vector<2x128xf32>
    %225 = arith.addf %216, %224 : vector<2x128xf32>
    %226 = vector.extract_strided_slice %198 {offsets = [0, 6, 0], sizes = [2, 1, 128], strides = [1, 1, 1]} : vector<2x8x128xf32> to vector<2x1x128xf32>
    %227 = vector.shape_cast %226 : vector<2x1x128xf32> to vector<2x128xf32>
    %228 = vector.extract_strided_slice %198 {offsets = [0, 7, 0], sizes = [2, 1, 128], strides = [1, 1, 1]} : vector<2x8x128xf32> to vector<2x1x128xf32>
    %229 = vector.shape_cast %228 : vector<2x1x128xf32> to vector<2x128xf32>
    %230 = arith.maximumf %227, %229 : vector<2x128xf32>
    %c3_259 = arith.constant 3 : index
    %c0_260 = arith.constant 0 : index
    %c0_261 = arith.constant 0 : index
    %231 = vector.load %arg6[%c3_259, %c0_260, %c0_261] : memref<16x128x128xf32, #tpu.memory_space<vmem>>, vector<1x128x128xf32>
    %232 = vector.shape_cast %231 : vector<1x128x128xf32> to vector<128x128xf32>
    %cst_262 = arith.constant dense<0.000000e+00> : vector<2x128xf32>
    %233 = tpu.matmul %230, %232, %cst_262 {dimension_numbers = #tpu.dot_dimension_numbers<[1], [0], [0], [1], [0, 0, 1, 1], [], []>} : vector<2x128xf32>, vector<128x128xf32>, vector<2x128xf32> -> vector<2x128xf32>
    %234 = arith.addf %225, %233 : vector<2x128xf32>
    %235 = vector.extract_strided_slice %192 {offsets = [0, 2, 0, 0], sizes = [2, 1, 8, 128], strides = [1, 1, 1, 1]} : vector<2x8x8x128xf32> to vector<2x1x8x128xf32>
    %236 = vector.shape_cast %235 : vector<2x1x8x128xf32> to vector<2x8x128xf32>
    %237 = vector.extract_strided_slice %192 {offsets = [0, 3, 0, 0], sizes = [2, 1, 8, 128], strides = [1, 1, 1, 1]} : vector<2x8x8x128xf32> to vector<2x1x8x128xf32>
    %238 = vector.shape_cast %237 : vector<2x1x8x128xf32> to vector<2x8x128xf32>
    %239 = arith.maximumf %236, %238 : vector<2x8x128xf32>
    %240 = vector.extract_strided_slice %239 {offsets = [0, 0, 0], sizes = [2, 1, 128], strides = [1, 1, 1]} : vector<2x8x128xf32> to vector<2x1x128xf32>
    %241 = vector.shape_cast %240 : vector<2x1x128xf32> to vector<2x128xf32>
    %242 = vector.extract_strided_slice %239 {offsets = [0, 1, 0], sizes = [2, 1, 128], strides = [1, 1, 1]} : vector<2x8x128xf32> to vector<2x1x128xf32>
    %243 = vector.shape_cast %242 : vector<2x1x128xf32> to vector<2x128xf32>
    %244 = arith.maximumf %241, %243 : vector<2x128xf32>
    %c4_263 = arith.constant 4 : index
    %c0_264 = arith.constant 0 : index
    %c0_265 = arith.constant 0 : index
    %245 = vector.load %arg6[%c4_263, %c0_264, %c0_265] : memref<16x128x128xf32, #tpu.memory_space<vmem>>, vector<1x128x128xf32>
    %246 = vector.shape_cast %245 : vector<1x128x128xf32> to vector<128x128xf32>
    %cst_266 = arith.constant dense<0.000000e+00> : vector<2x128xf32>
    %247 = tpu.matmul %244, %246, %cst_266 {dimension_numbers = #tpu.dot_dimension_numbers<[1], [0], [0], [1], [0, 0, 1, 1], [], []>} : vector<2x128xf32>, vector<128x128xf32>, vector<2x128xf32> -> vector<2x128xf32>
    %248 = arith.addf %234, %247 : vector<2x128xf32>
    %249 = vector.extract_strided_slice %239 {offsets = [0, 2, 0], sizes = [2, 1, 128], strides = [1, 1, 1]} : vector<2x8x128xf32> to vector<2x1x128xf32>
    %250 = vector.shape_cast %249 : vector<2x1x128xf32> to vector<2x128xf32>
    %251 = vector.extract_strided_slice %239 {offsets = [0, 3, 0], sizes = [2, 1, 128], strides = [1, 1, 1]} : vector<2x8x128xf32> to vector<2x1x128xf32>
    %252 = vector.shape_cast %251 : vector<2x1x128xf32> to vector<2x128xf32>
    %253 = arith.maximumf %250, %252 : vector<2x128xf32>
    %c5_267 = arith.constant 5 : index
    %c0_268 = arith.constant 0 : index
    %c0_269 = arith.constant 0 : index
    %254 = vector.load %arg6[%c5_267, %c0_268, %c0_269] : memref<16x128x128xf32, #tpu.memory_space<vmem>>, vector<1x128x128xf32>
    %255 = vector.shape_cast %254 : vector<1x128x128xf32> to vector<128x128xf32>
    %cst_270 = arith.constant dense<0.000000e+00> : vector<2x128xf32>
    %256 = tpu.matmul %253, %255, %cst_270 {dimension_numbers = #tpu.dot_dimension_numbers<[1], [0], [0], [1], [0, 0, 1, 1], [], []>} : vector<2x128xf32>, vector<128x128xf32>, vector<2x128xf32> -> vector<2x128xf32>
    %257 = arith.addf %248, %256 : vector<2x128xf32>
    %258 = vector.extract_strided_slice %239 {offsets = [0, 4, 0], sizes = [2, 1, 128], strides = [1, 1, 1]} : vector<2x8x128xf32> to vector<2x1x128xf32>
    %259 = vector.shape_cast %258 : vector<2x1x128xf32> to vector<2x128xf32>
    %260 = vector.extract_strided_slice %239 {offsets = [0, 5, 0], sizes = [2, 1, 128], strides = [1, 1, 1]} : vector<2x8x128xf32> to vector<2x1x128xf32>
    %261 = vector.shape_cast %260 : vector<2x1x128xf32> to vector<2x128xf32>
    %262 = arith.maximumf %259, %261 : vector<2x128xf32>
    %c6_271 = arith.constant 6 : index
    %c0_272 = arith.constant 0 : index
    %c0_273 = arith.constant 0 : index
    %263 = vector.load %arg6[%c6_271, %c0_272, %c0_273] : memref<16x128x128xf32, #tpu.memory_space<vmem>>, vector<1x128x128xf32>
    %264 = vector.shape_cast %263 : vector<1x128x128xf32> to vector<128x128xf32>
    %cst_274 = arith.constant dense<0.000000e+00> : vector<2x128xf32>
    %265 = tpu.matmul %262, %264, %cst_274 {dimension_numbers = #tpu.dot_dimension_numbers<[1], [0], [0], [1], [0, 0, 1, 1], [], []>} : vector<2x128xf32>, vector<128x128xf32>, vector<2x128xf32> -> vector<2x128xf32>
    %266 = arith.addf %257, %265 : vector<2x128xf32>
    %267 = vector.extract_strided_slice %239 {offsets = [0, 6, 0], sizes = [2, 1, 128], strides = [1, 1, 1]} : vector<2x8x128xf32> to vector<2x1x128xf32>
    %268 = vector.shape_cast %267 : vector<2x1x128xf32> to vector<2x128xf32>
    %269 = vector.extract_strided_slice %239 {offsets = [0, 7, 0], sizes = [2, 1, 128], strides = [1, 1, 1]} : vector<2x8x128xf32> to vector<2x1x128xf32>
    %270 = vector.shape_cast %269 : vector<2x1x128xf32> to vector<2x128xf32>
    %271 = arith.maximumf %268, %270 : vector<2x128xf32>
    %c7_275 = arith.constant 7 : index
    %c0_276 = arith.constant 0 : index
    %c0_277 = arith.constant 0 : index
    %272 = vector.load %arg6[%c7_275, %c0_276, %c0_277] : memref<16x128x128xf32, #tpu.memory_space<vmem>>, vector<1x128x128xf32>
    %273 = vector.shape_cast %272 : vector<1x128x128xf32> to vector<128x128xf32>
    %cst_278 = arith.constant dense<0.000000e+00> : vector<2x128xf32>
    %274 = tpu.matmul %271, %273, %cst_278 {dimension_numbers = #tpu.dot_dimension_numbers<[1], [0], [0], [1], [0, 0, 1, 1], [], []>} : vector<2x128xf32>, vector<128x128xf32>, vector<2x128xf32> -> vector<2x128xf32>
    %275 = arith.addf %266, %274 : vector<2x128xf32>
    %276 = vector.extract_strided_slice %192 {offsets = [0, 4, 0, 0], sizes = [2, 1, 8, 128], strides = [1, 1, 1, 1]} : vector<2x8x8x128xf32> to vector<2x1x8x128xf32>
    %277 = vector.shape_cast %276 : vector<2x1x8x128xf32> to vector<2x8x128xf32>
    %278 = vector.extract_strided_slice %192 {offsets = [0, 5, 0, 0], sizes = [2, 1, 8, 128], strides = [1, 1, 1, 1]} : vector<2x8x8x128xf32> to vector<2x1x8x128xf32>
    %279 = vector.shape_cast %278 : vector<2x1x8x128xf32> to vector<2x8x128xf32>
    %280 = arith.maximumf %277, %279 : vector<2x8x128xf32>
    %281 = vector.extract_strided_slice %280 {offsets = [0, 0, 0], sizes = [2, 1, 128], strides = [1, 1, 1]} : vector<2x8x128xf32> to vector<2x1x128xf32>
    %282 = vector.shape_cast %281 : vector<2x1x128xf32> to vector<2x128xf32>
    %283 = vector.extract_strided_slice %280 {offsets = [0, 1, 0], sizes = [2, 1, 128], strides = [1, 1, 1]} : vector<2x8x128xf32> to vector<2x1x128xf32>
    %284 = vector.shape_cast %283 : vector<2x1x128xf32> to vector<2x128xf32>
    %285 = arith.maximumf %282, %284 : vector<2x128xf32>
    %c8_279 = arith.constant 8 : index
    %c0_280 = arith.constant 0 : index
    %c0_281 = arith.constant 0 : index
    %286 = vector.load %arg6[%c8_279, %c0_280, %c0_281] : memref<16x128x128xf32, #tpu.memory_space<vmem>>, vector<1x128x128xf32>
    %287 = vector.shape_cast %286 : vector<1x128x128xf32> to vector<128x128xf32>
    %cst_282 = arith.constant dense<0.000000e+00> : vector<2x128xf32>
    %288 = tpu.matmul %285, %287, %cst_282 {dimension_numbers = #tpu.dot_dimension_numbers<[1], [0], [0], [1], [0, 0, 1, 1], [], []>} : vector<2x128xf32>, vector<128x128xf32>, vector<2x128xf32> -> vector<2x128xf32>
    %289 = arith.addf %275, %288 : vector<2x128xf32>
    %290 = vector.extract_strided_slice %280 {offsets = [0, 2, 0], sizes = [2, 1, 128], strides = [1, 1, 1]} : vector<2x8x128xf32> to vector<2x1x128xf32>
    %291 = vector.shape_cast %290 : vector<2x1x128xf32> to vector<2x128xf32>
    %292 = vector.extract_strided_slice %280 {offsets = [0, 3, 0], sizes = [2, 1, 128], strides = [1, 1, 1]} : vector<2x8x128xf32> to vector<2x1x128xf32>
    %293 = vector.shape_cast %292 : vector<2x1x128xf32> to vector<2x128xf32>
    %294 = arith.maximumf %291, %293 : vector<2x128xf32>
    %c9_283 = arith.constant 9 : index
    %c0_284 = arith.constant 0 : index
    %c0_285 = arith.constant 0 : index
    %295 = vector.load %arg6[%c9_283, %c0_284, %c0_285] : memref<16x128x128xf32, #tpu.memory_space<vmem>>, vector<1x128x128xf32>
    %296 = vector.shape_cast %295 : vector<1x128x128xf32> to vector<128x128xf32>
    %cst_286 = arith.constant dense<0.000000e+00> : vector<2x128xf32>
    %297 = tpu.matmul %294, %296, %cst_286 {dimension_numbers = #tpu.dot_dimension_numbers<[1], [0], [0], [1], [0, 0, 1, 1], [], []>} : vector<2x128xf32>, vector<128x128xf32>, vector<2x128xf32> -> vector<2x128xf32>
    %298 = arith.addf %289, %297 : vector<2x128xf32>
    %299 = vector.extract_strided_slice %280 {offsets = [0, 4, 0], sizes = [2, 1, 128], strides = [1, 1, 1]} : vector<2x8x128xf32> to vector<2x1x128xf32>
    %300 = vector.shape_cast %299 : vector<2x1x128xf32> to vector<2x128xf32>
    %301 = vector.extract_strided_slice %280 {offsets = [0, 5, 0], sizes = [2, 1, 128], strides = [1, 1, 1]} : vector<2x8x128xf32> to vector<2x1x128xf32>
    %302 = vector.shape_cast %301 : vector<2x1x128xf32> to vector<2x128xf32>
    %303 = arith.maximumf %300, %302 : vector<2x128xf32>
    %c10_287 = arith.constant 10 : index
    %c0_288 = arith.constant 0 : index
    %c0_289 = arith.constant 0 : index
    %304 = vector.load %arg6[%c10_287, %c0_288, %c0_289] : memref<16x128x128xf32, #tpu.memory_space<vmem>>, vector<1x128x128xf32>
    %305 = vector.shape_cast %304 : vector<1x128x128xf32> to vector<128x128xf32>
    %cst_290 = arith.constant dense<0.000000e+00> : vector<2x128xf32>
    %306 = tpu.matmul %303, %305, %cst_290 {dimension_numbers = #tpu.dot_dimension_numbers<[1], [0], [0], [1], [0, 0, 1, 1], [], []>} : vector<2x128xf32>, vector<128x128xf32>, vector<2x128xf32> -> vector<2x128xf32>
    %307 = arith.addf %298, %306 : vector<2x128xf32>
    %308 = vector.extract_strided_slice %280 {offsets = [0, 6, 0], sizes = [2, 1, 128], strides = [1, 1, 1]} : vector<2x8x128xf32> to vector<2x1x128xf32>
    %309 = vector.shape_cast %308 : vector<2x1x128xf32> to vector<2x128xf32>
    %310 = vector.extract_strided_slice %280 {offsets = [0, 7, 0], sizes = [2, 1, 128], strides = [1, 1, 1]} : vector<2x8x128xf32> to vector<2x1x128xf32>
    %311 = vector.shape_cast %310 : vector<2x1x128xf32> to vector<2x128xf32>
    %312 = arith.maximumf %309, %311 : vector<2x128xf32>
    %c11_291 = arith.constant 11 : index
    %c0_292 = arith.constant 0 : index
    %c0_293 = arith.constant 0 : index
    %313 = vector.load %arg6[%c11_291, %c0_292, %c0_293] : memref<16x128x128xf32, #tpu.memory_space<vmem>>, vector<1x128x128xf32>
    %314 = vector.shape_cast %313 : vector<1x128x128xf32> to vector<128x128xf32>
    %cst_294 = arith.constant dense<0.000000e+00> : vector<2x128xf32>
    %315 = tpu.matmul %312, %314, %cst_294 {dimension_numbers = #tpu.dot_dimension_numbers<[1], [0], [0], [1], [0, 0, 1, 1], [], []>} : vector<2x128xf32>, vector<128x128xf32>, vector<2x128xf32> -> vector<2x128xf32>
    %316 = arith.addf %307, %315 : vector<2x128xf32>
    %317 = vector.extract_strided_slice %192 {offsets = [0, 6, 0, 0], sizes = [2, 1, 8, 128], strides = [1, 1, 1, 1]} : vector<2x8x8x128xf32> to vector<2x1x8x128xf32>
    %318 = vector.shape_cast %317 : vector<2x1x8x128xf32> to vector<2x8x128xf32>
    %319 = vector.extract_strided_slice %192 {offsets = [0, 7, 0, 0], sizes = [2, 1, 8, 128], strides = [1, 1, 1, 1]} : vector<2x8x8x128xf32> to vector<2x1x8x128xf32>
    %320 = vector.shape_cast %319 : vector<2x1x8x128xf32> to vector<2x8x128xf32>
    %321 = arith.maximumf %318, %320 : vector<2x8x128xf32>
    %322 = vector.extract_strided_slice %321 {offsets = [0, 0, 0], sizes = [2, 1, 128], strides = [1, 1, 1]} : vector<2x8x128xf32> to vector<2x1x128xf32>
    %323 = vector.shape_cast %322 : vector<2x1x128xf32> to vector<2x128xf32>
    %324 = vector.extract_strided_slice %321 {offsets = [0, 1, 0], sizes = [2, 1, 128], strides = [1, 1, 1]} : vector<2x8x128xf32> to vector<2x1x128xf32>
    %325 = vector.shape_cast %324 : vector<2x1x128xf32> to vector<2x128xf32>
    %326 = arith.maximumf %323, %325 : vector<2x128xf32>
    %c12_295 = arith.constant 12 : index
    %c0_296 = arith.constant 0 : index
    %c0_297 = arith.constant 0 : index
    %327 = vector.load %arg6[%c12_295, %c0_296, %c0_297] : memref<16x128x128xf32, #tpu.memory_space<vmem>>, vector<1x128x128xf32>
    %328 = vector.shape_cast %327 : vector<1x128x128xf32> to vector<128x128xf32>
    %cst_298 = arith.constant dense<0.000000e+00> : vector<2x128xf32>
    %329 = tpu.matmul %326, %328, %cst_298 {dimension_numbers = #tpu.dot_dimension_numbers<[1], [0], [0], [1], [0, 0, 1, 1], [], []>} : vector<2x128xf32>, vector<128x128xf32>, vector<2x128xf32> -> vector<2x128xf32>
    %330 = arith.addf %316, %329 : vector<2x128xf32>
    %331 = vector.extract_strided_slice %321 {offsets = [0, 2, 0], sizes = [2, 1, 128], strides = [1, 1, 1]} : vector<2x8x128xf32> to vector<2x1x128xf32>
    %332 = vector.shape_cast %331 : vector<2x1x128xf32> to vector<2x128xf32>
    %333 = vector.extract_strided_slice %321 {offsets = [0, 3, 0], sizes = [2, 1, 128], strides = [1, 1, 1]} : vector<2x8x128xf32> to vector<2x1x128xf32>
    %334 = vector.shape_cast %333 : vector<2x1x128xf32> to vector<2x128xf32>
    %335 = arith.maximumf %332, %334 : vector<2x128xf32>
    %c13_299 = arith.constant 13 : index
    %c0_300 = arith.constant 0 : index
    %c0_301 = arith.constant 0 : index
    %336 = vector.load %arg6[%c13_299, %c0_300, %c0_301] : memref<16x128x128xf32, #tpu.memory_space<vmem>>, vector<1x128x128xf32>
    %337 = vector.shape_cast %336 : vector<1x128x128xf32> to vector<128x128xf32>
    %cst_302 = arith.constant dense<0.000000e+00> : vector<2x128xf32>
    %338 = tpu.matmul %335, %337, %cst_302 {dimension_numbers = #tpu.dot_dimension_numbers<[1], [0], [0], [1], [0, 0, 1, 1], [], []>} : vector<2x128xf32>, vector<128x128xf32>, vector<2x128xf32> -> vector<2x128xf32>
    %339 = arith.addf %330, %338 : vector<2x128xf32>
    %340 = vector.extract_strided_slice %321 {offsets = [0, 4, 0], sizes = [2, 1, 128], strides = [1, 1, 1]} : vector<2x8x128xf32> to vector<2x1x128xf32>
    %341 = vector.shape_cast %340 : vector<2x1x128xf32> to vector<2x128xf32>
    %342 = vector.extract_strided_slice %321 {offsets = [0, 5, 0], sizes = [2, 1, 128], strides = [1, 1, 1]} : vector<2x8x128xf32> to vector<2x1x128xf32>
    %343 = vector.shape_cast %342 : vector<2x1x128xf32> to vector<2x128xf32>
    %344 = arith.maximumf %341, %343 : vector<2x128xf32>
    %c14_303 = arith.constant 14 : index
    %c0_304 = arith.constant 0 : index
    %c0_305 = arith.constant 0 : index
    %345 = vector.load %arg6[%c14_303, %c0_304, %c0_305] : memref<16x128x128xf32, #tpu.memory_space<vmem>>, vector<1x128x128xf32>
    %346 = vector.shape_cast %345 : vector<1x128x128xf32> to vector<128x128xf32>
    %cst_306 = arith.constant dense<0.000000e+00> : vector<2x128xf32>
    %347 = tpu.matmul %344, %346, %cst_306 {dimension_numbers = #tpu.dot_dimension_numbers<[1], [0], [0], [1], [0, 0, 1, 1], [], []>} : vector<2x128xf32>, vector<128x128xf32>, vector<2x128xf32> -> vector<2x128xf32>
    %348 = arith.addf %339, %347 : vector<2x128xf32>
    %349 = vector.extract_strided_slice %321 {offsets = [0, 6, 0], sizes = [2, 1, 128], strides = [1, 1, 1]} : vector<2x8x128xf32> to vector<2x1x128xf32>
    %350 = vector.shape_cast %349 : vector<2x1x128xf32> to vector<2x128xf32>
    %351 = vector.extract_strided_slice %321 {offsets = [0, 7, 0], sizes = [2, 1, 128], strides = [1, 1, 1]} : vector<2x8x128xf32> to vector<2x1x128xf32>
    %352 = vector.shape_cast %351 : vector<2x1x128xf32> to vector<2x128xf32>
    %353 = arith.maximumf %350, %352 : vector<2x128xf32>
    %c15_307 = arith.constant 15 : index
    %c0_308 = arith.constant 0 : index
    %c0_309 = arith.constant 0 : index
    %354 = vector.load %arg6[%c15_307, %c0_308, %c0_309] : memref<16x128x128xf32, #tpu.memory_space<vmem>>, vector<1x128x128xf32>
    %355 = vector.shape_cast %354 : vector<1x128x128xf32> to vector<128x128xf32>
    %cst_310 = arith.constant dense<0.000000e+00> : vector<2x128xf32>
    %356 = tpu.matmul %353, %355, %cst_310 {dimension_numbers = #tpu.dot_dimension_numbers<[1], [0], [0], [1], [0, 0, 1, 1], [], []>} : vector<2x128xf32>, vector<128x128xf32>, vector<2x128xf32> -> vector<2x128xf32>
    %357 = arith.addf %348, %356 : vector<2x128xf32>
    %c0_311 = arith.constant 0 : index
    %c0_312 = arith.constant 0 : index
    %358 = vector.load %arg7[%c0_311, %c0_312] : memref<1x128xf32, #tpu.memory_space<vmem>>, vector<1x128xf32>
    %359 = vector.broadcast %358 : vector<1x128xf32> to vector<2x128xf32>
    %360 = arith.addf %357, %359 : vector<2x128xf32>
    %cst_313 = arith.constant 0.000000e+00 : f32
    %361 = vector.broadcast %cst_313 : f32 to vector<2x128xf32>
    %362 = arith.maximumf %360, %361 : vector<2x128xf32>
    %c0_314 = arith.constant 0 : index
    %c0_315 = arith.constant 0 : index
    %363 = vector.load %arg8[%c0_314, %c0_315] : memref<128x128xf32, #tpu.memory_space<vmem>>, vector<128x128xf32>
    %cst_316 = arith.constant dense<0.000000e+00> : vector<2x128xf32>
    %364 = tpu.matmul %362, %363, %cst_316 {dimension_numbers = #tpu.dot_dimension_numbers<[1], [0], [0], [1], [0, 0, 1, 1], [], []>} : vector<2x128xf32>, vector<128x128xf32>, vector<2x128xf32> -> vector<2x128xf32>
    %c0_317 = arith.constant 0 : index
    %c0_318 = arith.constant 0 : index
    %365 = vector.load %arg9[%c0_317, %c0_318] : memref<1x128xf32, #tpu.memory_space<vmem>>, vector<1x128xf32>
    %366 = vector.broadcast %365 : vector<1x128xf32> to vector<2x128xf32>
    %367 = arith.addf %364, %366 : vector<2x128xf32>
    %cst_319 = arith.constant 0.000000e+00 : f32
    %368 = vector.broadcast %cst_319 : f32 to vector<2x128xf32>
    %369 = arith.maximumf %367, %368 : vector<2x128xf32>
    %c0_320 = arith.constant 0 : index
    %c0_321 = arith.constant 0 : index
    %370 = vector.load %arg10[%c0_320, %c0_321] : memref<128x128xf32, #tpu.memory_space<vmem>>, vector<128x128xf32>
    %cst_322 = arith.constant dense<0.000000e+00> : vector<2x128xf32>
    %371 = tpu.matmul %369, %370, %cst_322 {dimension_numbers = #tpu.dot_dimension_numbers<[1], [0], [0], [1], [0, 0, 1, 1], [], []>} : vector<2x128xf32>, vector<128x128xf32>, vector<2x128xf32> -> vector<2x128xf32>
    %c0_323 = arith.constant 0 : index
    %c0_324 = arith.constant 0 : index
    %372 = vector.load %arg11[%c0_323, %c0_324] : memref<1x128xf32, #tpu.memory_space<vmem>>, vector<1x128xf32>
    %373 = vector.broadcast %372 : vector<1x128xf32> to vector<2x128xf32>
    %374 = arith.addf %371, %373 : vector<2x128xf32>
    %c0_325 = arith.constant 0 : index
    %c0_326 = arith.constant 0 : index
    %c0_327 = arith.constant 0 : index
    %375 = vector.load %arg12[%c0_325, %c0_326, %c0_327] : memref<1x2x128xf32, #tpu.memory_space<vmem>>, vector<1x2x128xf32>
    %376 = vector.shape_cast %375 : vector<1x2x128xf32> to vector<2x128xf32>
    %377 = vector.shape_cast %374 : vector<2x128xf32> to vector<1x2x128xf32>
    tpu.vector_store %arg12[%c0_325, %c0_326, %c0_327], %377 {strides = array<i32>} : memref<1x2x128xf32, #tpu.memory_space<vmem>>, vector<1x2x128xf32>,
    return
  }
  func.func @transform_0(%arg0: i32) -> (i32, i32, i32) {
    %c0_i32 = arith.constant 0 : i32
    %c0_i32_0 = arith.constant 0 : i32
    %c0_i32_1 = arith.constant 0 : i32
    return %arg0, %c0_i32, %c0_i32_0 : i32, i32, i32
  }
  func.func @transform_1(%arg0: i32) -> (i32, i32) {
    %c0_i32 = arith.constant 0 : i32
    %c0_i32_0 = arith.constant 0 : i32
    %c0_i32_1 = arith.constant 0 : i32
    return %c0_i32, %c0_i32_0 : i32, i32
  }
  func.func @transform_2(%arg0: i32) -> (i32, i32) {
    %c0_i32 = arith.constant 0 : i32
    %c0_i32_0 = arith.constant 0 : i32
    %c0_i32_1 = arith.constant 0 : i32
    return %c0_i32, %c0_i32_0 : i32, i32
  }
  func.func @transform_3(%arg0: i32) -> (i32, i32, i32) {
    %c0_i32 = arith.constant 0 : i32
    %c0_i32_0 = arith.constant 0 : i32
    %c0_i32_1 = arith.constant 0 : i32
    %c0_i32_2 = arith.constant 0 : i32
    return %c0_i32, %c0_i32_0, %c0_i32_1 : i32, i32, i32
  }
  func.func @transform_4(%arg0: i32) -> (i32, i32) {
    %c0_i32 = arith.constant 0 : i32
    %c0_i32_0 = arith.constant 0 : i32
    %c0_i32_1 = arith.constant 0 : i32
    return %c0_i32, %c0_i32_0 : i32, i32
  }
  func.func @transform_5(%arg0: i32) -> (i32, i32, i32) {
    %c0_i32 = arith.constant 0 : i32
    %c0_i32_0 = arith.constant 0 : i32
    %c0_i32_1 = arith.constant 0 : i32
    %c0_i32_2 = arith.constant 0 : i32
    return %c0_i32, %c0_i32_0, %c0_i32_1 : i32, i32, i32
  }
  func.func @transform_6(%arg0: i32) -> (i32, i32) {
    %c0_i32 = arith.constant 0 : i32
    %c0_i32_0 = arith.constant 0 : i32
    %c0_i32_1 = arith.constant 0 : i32
    return %c0_i32, %c0_i32_0 : i32, i32
  }
  func.func @transform_7(%arg0: i32) -> (i32, i32) {
    %c0_i32 = arith.constant 0 : i32
    %c0_i32_0 = arith.constant 0 : i32
    %c0_i32_1 = arith.constant 0 : i32
    return %c0_i32, %c0_i32_0 : i32, i32
  }
  func.func @transform_8(%arg0: i32) -> (i32, i32) {
    %c0_i32 = arith.constant 0 : i32
    %c0_i32_0 = arith.constant 0 : i32
    %c0_i32_1 = arith.constant 0 : i32
    return %c0_i32, %c0_i32_0 : i32, i32
  }
  func.func @transform_9(%arg0: i32) -> (i32, i32) {
    %c0_i32 = arith.constant 0 : i32
    %c0_i32_0 = arith.constant 0 : i32
    %c0_i32_1 = arith.constant 0 : i32
    return %c0_i32, %c0_i32_0 : i32, i32
  }
  func.func @transform_10(%arg0: i32) -> (i32, i32) {
    %c0_i32 = arith.constant 0 : i32
    %c0_i32_0 = arith.constant 0 : i32
    %c0_i32_1 = arith.constant 0 : i32
    return %c0_i32, %c0_i32_0 : i32, i32
  }
  func.func @transform_11(%arg0: i32) -> (i32, i32, i32) {
    %c0_i32 = arith.constant 0 : i32
    %c0_i32_0 = arith.constant 0 : i32
    %c0_i32_1 = arith.constant 0 : i32
    return %arg0, %c0_i32, %c0_i32_0 : i32, i32, i32
  }
}

</mosaic_0001>

<llo_original>
// kernel: net_forward.1
$region0: #{net_forward.1}
  #allocation0 [shape = 'u32[]', space=smem, size = 0x4, offset = 0x4, fixed_abs, tag = 'smem constant byte address 0x4 - core index']
  #allocation1 [shape = 'u32[144,128]{1,0:T(1,128)}', space=vmem, size = 0x12000, scoped, tag = 'internal scratch']
  #allocation2 [shape = 'f32[2,12,16,128]{3,2,1,0:T(8,128)}', space=vmem, size = 0x30000, scoped, tag = 'scratch operand']
  #allocation3 [shape = 'f32[2,12,8,128]{3,2,1,0:T(8,128)}', space=vmem, size = 0x18000, scoped, tag = 'scratch operand']
  %s0 = inlined_call_operand.vmem [shape: f32[4,768,32], index: 0, kind: input, shape index: {}]
  %s1 = inlined_call_operand.vmem [shape: f32[32,128], index: 1, kind: input, shape index: {}]
  %s2 = inlined_call_operand.vmem [shape: f32[1,128], index: 2, kind: input, shape index: {}]
  %s3 = inlined_call_operand.vmem [shape: f32[25,128,128], index: 3, kind: input, shape index: {}]
  %s4 = inlined_call_operand.vmem [shape: f32[1,128], index: 4, kind: input, shape index: {}]
  %s5 = inlined_call_operand.vmem [shape: f32[16,128,128], index: 5, kind: input, shape index: {}]
  %s6 = inlined_call_operand.vmem [shape: f32[1,128], index: 6, kind: input, shape index: {}]
  %s7 = inlined_call_operand.vmem [shape: f32[128,128], index: 7, kind: input, shape index: {}]
  %s8 = inlined_call_operand.vmem [shape: f32[1,128], index: 8, kind: input, shape index: {}]
  %s9 = inlined_call_operand.vmem [shape: f32[128,128], index: 9, kind: input, shape index: {}]
  %s10 = inlined_call_operand.vmem [shape: f32[1,128], index: 10, kind: input, shape index: {}]
  %s11 = inlined_call_operand.hbm [shape: f32[2,2,128], index: 11, kind: output, shape index: {}]
  %s12 = sld [smem:[#allocation0]]
  $region77: #{net_forward.1} parent=0
    _
  %s14 = ssub.s32 1, %s12
  %s15 = scalar_select 0, %s14, %s12
  $region1: #{net_forward.1} parent=0
    #allocation4 [shape = 'u8[2048]{0}', space=vmem, size = 0x800, scoped, tag = 'output window, operand 0']
    #allocation5 [shape = 's32[2]{0}', space=sflag, size = 0x8, scoped, tag = 'scoped memory for net_forward.1']
    %16 = vsyncpa [#allocation5], 0
    %s17 = scalar_lea.sflag [#allocation5], 1
    %18 = vsyncpa %s17, 0
    loop: start=0, step=1, limit=4
    $region2: #{net_forward.1} parent=1 // loop_pre_header
      _
    $region3: #{net_forward.1} parent=1 // loop_header
      %s20 = sphi 0, %s24
      %p21 = scmp.ge.s32.totalorder %s20, 4
      %s30 = sphi 0, %s32
      %s33 = sphi 0, %s30
      %s34 = sphi 0, %s33
      %s50 = sphi 0, %s34
      %s54 = sphi 0, %s54
      %s56 = sphi 0, %s54
      %s57 = sphi 0, %s56
      %s71 = sphi 0, %s57
      %s75 = sphi 0, %s75
      %s77 = sphi 0, %s75
      %s78 = sphi 0, %s77
      %s92 = sphi 0, %s78
      %s96 = sphi 0, %s96
      %s98 = sphi 0, %s96
      %s99 = sphi 0, %s98
      %s113 = sphi 0, %s99
      %s117 = sphi 0, %s117
      %s119 = sphi 0, %s117
      %s120 = sphi 0, %s119
      %s134 = sphi 0, %s120
      %s138 = sphi 0, %s138
      %s140 = sphi 0, %s138
      %s141 = sphi 0, %s140
      %s155 = sphi 0, %s141
      %s159 = sphi 0, %s159
      %s161 = sphi 0, %s159
      %s162 = sphi 0, %s161
      %s176 = sphi 0, %s162
      %s180 = sphi 0, %s180
      %s182 = sphi 0, %s180
      %s183 = sphi 0, %s182
      %s197 = sphi 0, %s183
      %s201 = sphi 0, %s201
      %s203 = sphi 0, %s201
      %s204 = sphi 0, %s203
      %s218 = sphi 0, %s204
      %s222 = sphi 0, %s222
      %s224 = sphi 0, %s222
      %s225 = sphi 0, %s224
      %s239 = sphi 0, %s225
      %s243 = sphi 0, %s243
      %s245 = sphi 0, %s243
      %s246 = sphi 0, %s245
      %s260 = sphi 0, %s246
      %s266 = sphi 0, %s268
      %s269 = sphi 0, %s266
      %s270 = sphi 0, %s269
      %s286 = sphi 0, %s270
    $region4: #{net_forward.1} parent=1 // loop_header_branch
      %23 = sbr.rel (%p21) target = $region8
    $region5: #{net_forward.1} parent=1 // loop_body
      %s25 = ssub.s32 %s20, 1
      %s26 = ssub.s32 %s20, 2
      %s27 = sadd.s32 %s20, 1
      %s28 = ssub.s32 %s20, %s27
      %p29 = scmp.eq.s32.totalorder %s28, 0
      %s31 = sadd.s32 %s30, 1
      %s32 = scalar_select %p29, %s30, %s31
      %p35 = pneg %p29
      %p36 = scmp.eq.s32.totalorder %s20, 1
      %p37 = por %p35, %p36
      %p38 = scmp.ne.s32.totalorder %s30, %s33
      %p39 = scmp.eq.s32.totalorder %s20, 0
      %p40 = por %p38, %p39
      %p41 = scmp.ne.s32.totalorder %s30, %s33
      %p42 = scmp.eq.s32.totalorder %s25, 1
      %p43 = por %p41, %p42
      %p44 = scmp.ne.s32.totalorder %s33, %s34
      %p45 = scmp.eq.s32.totalorder %s25, 0
      %p46 = por %p44, %p45
      %p47 = scmp.ne.s32.totalorder %s33, %s34
      %p48 = scmp.eq.s32.totalorder %s26, 1
      %p49 = por %p47, %p48
      %p51 = scmp.ne.s32.totalorder %s34, %s50
      %p52 = scmp.eq.s32.totalorder %s26, 0
      %p53 = por %p51, %p52
      %s55 = sadd.s32 %s54, 1
      %p58 = scmp.eq.s32.totalorder %s20, 1
      %p59 = scmp.ne.s32.totalorder %s54, %s56
      %p60 = scmp.eq.s32.totalorder %s20, 0
      %p61 = por %p59, %p60
      %p62 = scmp.ne.s32.totalorder %s54, %s56
      %p63 = scmp.eq.s32.totalorder %s25, 1
      %p64 = por %p62, %p63
      %p65 = scmp.ne.s32.totalorder %s56, %s57
      %p66 = scmp.eq.s32.totalorder %s25, 0
      %p67 = por %p65, %p66
      %p68 = scmp.ne.s32.totalorder %s56, %s57
      %p69 = scmp.eq.s32.totalorder %s26, 1
      %p70 = por %p68, %p69
      %p72 = scmp.ne.s32.totalorder %s57, %s71
      %p73 = scmp.eq.s32.totalorder %s26, 0
      %p74 = por %p72, %p73
      %s76 = sadd.s32 %s75, 1
      %p79 = scmp.eq.s32.totalorder %s20, 1
      %p80 = scmp.ne.s32.totalorder %s75, %s77
      %p81 = scmp.eq.s32.totalorder %s20, 0
      %p82 = por %p80, %p81
      %p83 = scmp.ne.s32.totalorder %s75, %s77
      %p84 = scmp.eq.s32.totalorder %s25, 1
      %p85 = por %p83, %p84
      %p86 = scmp.ne.s32.totalorder %s77, %s78
      %p87 = scmp.eq.s32.totalorder %s25, 0
      %p88 = por %p86, %p87
      %p89 = scmp.ne.s32.totalorder %s77, %s78
      %p90 = scmp.eq.s32.totalorder %s26, 1
      %p91 = por %p89, %p90
      %p93 = scmp.ne.s32.totalorder %s78, %s92
      %p94 = scmp.eq.s32.totalorder %s26, 0
      %p95 = por %p93, %p94
      %s97 = sadd.s32 %s96, 1
      %p100 = scmp.eq.s32.totalorder %s20, 1
      %p101 = scmp.ne.s32.totalorder %s96, %s98
      %p102 = scmp.eq.s32.totalorder %s20, 0
      %p103 = por %p101, %p102
      %p104 = scmp.ne.s32.totalorder %s96, %s98
      %p105 = scmp.eq.s32.totalorder %s25, 1
      %p106 = por %p104, %p105
      %p107 = scmp.ne.s32.totalorder %s98, %s99
      %p108 = scmp.eq.s32.totalorder %s25, 0
      %p109 = por %p107, %p108
      %p110 = scmp.ne.s32.totalorder %s98, %s99
      %p111 = scmp.eq.s32.totalorder %s26, 1
      %p112 = por %p110, %p111
      %p114 = scmp.ne.s32.totalorder %s99, %s113
      %p115 = scmp.eq.s32.totalorder %s26, 0
      %p116 = por %p114, %p115
      %s118 = sadd.s32 %s117, 1
      %p121 = scmp.eq.s32.totalorder %s20, 1
      %p122 = scmp.ne.s32.totalorder %s117, %s119
      %p123 = scmp.eq.s32.totalorder %s20, 0
      %p124 = por %p122, %p123
      %p125 = scmp.ne.s32.totalorder %s117, %s119
      %p126 = scmp.eq.s32.totalorder %s25, 1
      %p127 = por %p125, %p126
      %p128 = scmp.ne.s32.totalorder %s119, %s120
      %p129 = scmp.eq.s32.totalorder %s25, 0
      %p130 = por %p128, %p129
      %p131 = scmp.ne.s32.totalorder %s119, %s120
      %p132 = scmp.eq.s32.totalorder %s26, 1
      %p133 = por %p131, %p132
      %p135 = scmp.ne.s32.totalorder %s120, %s134
      %p136 = scmp.eq.s32.totalorder %s26, 0
      %p137 = por %p135, %p136
      %s139 = sadd.s32 %s138, 1
      %p142 = scmp.eq.s32.totalorder %s20, 1
      %p143 = scmp.ne.s32.totalorder %s138, %s140
      %p144 = scmp.eq.s32.totalorder %s20, 0
      %p145 = por %p143, %p144
      %p146 = scmp.ne.s32.totalorder %s138, %s140
      %p147 = scmp.eq.s32.totalorder %s25, 1
      %p148 = por %p146, %p147
      %p149 = scmp.ne.s32.totalorder %s140, %s141
      %p150 = scmp.eq.s32.totalorder %s25, 0
      %p151 = por %p149, %p150
      %p152 = scmp.ne.s32.totalorder %s140, %s141
      %p153 = scmp.eq.s32.totalorder %s26, 1
      %p154 = por %p152, %p153
      %p156 = scmp.ne.s32.totalorder %s141, %s155
      %p157 = scmp.eq.s32.totalorder %s26, 0
      %p158 = por %p156, %p157
      %s160 = sadd.s32 %s159, 1
      %p163 = scmp.eq.s32.totalorder %s20, 1
      %p164 = scmp.ne.s32.totalorder %s159, %s161
      %p165 = scmp.eq.s32.totalorder %s20, 0
      %p166 = por %p164, %p165
      %p167 = scmp.ne.s32.totalorder %s159, %s161
      %p168 = scmp.eq.s32.totalorder %s25, 1
      %p169 = por %p167, %p168
      %p170 = scmp.ne.s32.totalorder %s161, %s162
      %p171 = scmp.eq.s32.totalorder %s25, 0
      %p172 = por %p170, %p171
      %p173 = scmp.ne.s32.totalorder %s161, %s162
      %p174 = scmp.eq.s32.totalorder %s26, 1
      %p175 = por %p173, %p174
      %p177 = scmp.ne.s32.totalorder %s162, %s176
      %p178 = scmp.eq.s32.totalorder %s26, 0
      %p179 = por %p177, %p178
      %s181 = sadd.s32 %s180, 1
      %p184 = scmp.eq.s32.totalorder %s20, 1
      %p185 = scmp.ne.s32.totalorder %s180, %s182
      %p186 = scmp.eq.s32.totalorder %s20, 0
      %p187 = por %p185, %p186
      %p188 = scmp.ne.s32.totalorder %s180, %s182
      %p189 = scmp.eq.s32.totalorder %s25, 1
      %p190 = por %p188, %p189
      %p191 = scmp.ne.s32.totalorder %s182, %s183
      %p192 = scmp.eq.s32.totalorder %s25, 0
      %p193 = por %p191, %p192
      %p194 = scmp.ne.s32.totalorder %s182, %s183
      %p195 = scmp.eq.s32.totalorder %s26, 1
      %p196 = por %p194, %p195
      %p198 = scmp.ne.s32.totalorder %s183, %s197
      %p199 = scmp.eq.s32.totalorder %s26, 0
      %p200 = por %p198, %p199
      %s202 = sadd.s32 %s201, 1
      %p205 = scmp.eq.s32.totalorder %s20, 1
      %p206 = scmp.ne.s32.totalorder %s201, %s203
      %p207 = scmp.eq.s32.totalorder %s20, 0
      %p208 = por %p206, %p207
      %p209 = scmp.ne.s32.totalorder %s201, %s203
      %p210 = scmp.eq.s32.totalorder %s25, 1
      %p211 = por %p209, %p210
      %p212 = scmp.ne.s32.totalorder %s203, %s204
      %p213 = scmp.eq.s32.totalorder %s25, 0
      %p214 = por %p212, %p213
      %p215 = scmp.ne.s32.totalorder %s203, %s204
      %p216 = scmp.eq.s32.totalorder %s26, 1
      %p217 = por %p215, %p216
      %p219 = scmp.ne.s32.totalorder %s204, %s218
      %p220 = scmp.eq.s32.totalorder %s26, 0
      %p221 = por %p219, %p220
      %s223 = sadd.s32 %s222, 1
      %p226 = scmp.eq.s32.totalorder %s20, 1
      %p227 = scmp.ne.s32.totalorder %s222, %s224
      %p228 = scmp.eq.s32.totalorder %s20, 0
      %p229 = por %p227, %p228
      %p230 = scmp.ne.s32.totalorder %s222, %s224
      %p231 = scmp.eq.s32.totalorder %s25, 1
      %p232 = por %p230, %p231
      %p233 = scmp.ne.s32.totalorder %s224, %s225
      %p234 = scmp.eq.s32.totalorder %s25, 0
      %p235 = por %p233, %p234
      %p236 = scmp.ne.s32.totalorder %s224, %s225
      %p237 = scmp.eq.s32.totalorder %s26, 1
      %p238 = por %p236, %p237
      %p240 = scmp.ne.s32.totalorder %s225, %s239
      %p241 = scmp.eq.s32.totalorder %s26, 0
      %p242 = por %p240, %p241
      %s244 = sadd.s32 %s243, 1
      %p247 = scmp.eq.s32.totalorder %s20, 1
      %p248 = scmp.ne.s32.totalorder %s243, %s245
      %p249 = scmp.eq.s32.totalorder %s20, 0
      %p250 = por %p248, %p249
      %p251 = scmp.ne.s32.totalorder %s243, %s245
      %p252 = scmp.eq.s32.totalorder %s25, 1
      %p253 = por %p251, %p252
      %p254 = scmp.ne.s32.totalorder %s245, %s246
      %p255 = scmp.eq.s32.totalorder %s25, 0
      %p256 = por %p254, %p255
      %p257 = scmp.ne.s32.totalorder %s245, %s246
      %p258 = scmp.eq.s32.totalorder %s26, 1
      %p259 = por %p257, %p258
      %p261 = scmp.ne.s32.totalorder %s246, %s260
      %p262 = scmp.eq.s32.totalorder %s26, 0
      %p263 = por %p261, %p262
      %s264 = ssub.s32 %s20, %s27
      %p265 = scmp.eq.s32.totalorder %s264, 0
      %s267 = sadd.s32 %s266, 1
      %s268 = scalar_select %p265, %s266, %s267
      %p271 = pneg %p265
      %p272 = scmp.eq.s32.totalorder %s20, 1
      %p273 = por %p271, %p272
      %p274 = scmp.ne.s32.totalorder %s266, %s269
      %p275 = scmp.eq.s32.totalorder %s20, 0
      %p276 = por %p274, %p275
      %p277 = scmp.ne.s32.totalorder %s266, %s269
      %p278 = scmp.eq.s32.totalorder %s25, 1
      %p279 = por %p277, %p278
      %p280 = scmp.ne.s32.totalorder %s269, %s270
      %p281 = scmp.eq.s32.totalorder %s25, 0
      %p282 = por %p280, %p281
      %p283 = scmp.ne.s32.totalorder %s269, %s270
      %p284 = scmp.eq.s32.totalorder %s26, 1
      %p285 = por %p283, %p284
      %p287 = scmp.ne.s32.totalorder %s270, %s286
      %p288 = scmp.eq.s32.totalorder %s26, 0
      %p289 = por %p287, %p288
      %p290 = scmp.le.s32.totalorder 1, %s20
      %p291 = scmp.lt.s32.totalorder %s20, 3
      %p292 = pnand %p290, %p291
      %p293 = pneg %p292
      // Predicated region
      $region9: #{net_forward.1} parent=5 // pred_check
        _
      $region10: #{net_forward.1} parent=5 // pred_check_branch
        %295 = sbr.rel (%p292) target = $region12
      $region11: #{net_forward.1} parent=5 // pred_region
        %s296 = ssub.s32 %s20, 1
        // Predicated region
        $region13: #{net_forward.1} parent=11 // pred_check
          %p297 = pneg %p67
        $region14: #{net_forward.1} parent=11 // pred_check_branch
          %299 = sbr.rel (%p297) target = $region16
        $region15: #{net_forward.1} parent=11 // pred_region
          _
        $region16: #{net_forward.1} parent=11 // pred_fallthru
          _
        // Predicated region
        $region17: #{net_forward.1} parent=11 // pred_check
          %p300 = pneg %p88
        $region18: #{net_forward.1} parent=11 // pred_check_branch
          %302 = sbr.rel (%p300) target = $region20
        $region19: #{net_forward.1} parent=11 // pred_region
          _
        $region20: #{net_forward.1} parent=11 // pred_fallthru
          _
        // Predicated region
        $region21: #{net_forward.1} parent=11 // pred_check
          %p303 = pneg %p109
        $region22: #{net_forward.1} parent=11 // pred_check_branch
          %305 = sbr.rel (%p303) target = $region24
        $region23: #{net_forward.1} parent=11 // pred_region
          _
        $region24: #{net_forward.1} parent=11 // pred_fallthru
          _
        // Predicated region
        $region25: #{net_forward.1} parent=11 // pred_check
          %p306 = pneg %p130
        $region26: #{net_forward.1} parent=11 // pred_check_branch
          %308 = sbr.rel (%p306) target = $region28
        $region27: #{net_forward.1} parent=11 // pred_region
          _
        $region28: #{net_forward.1} parent=11 // pred_fallthru
          _
        // Predicated region
        $region29: #{net_forward.1} parent=11 // pred_check
          %p309 = pneg %p151
        $region30: #{net_forward.1} parent=11 // pred_check_branch
          %311 = sbr.rel (%p309) target = $region32
        $region31: #{net_forward.1} parent=11 // pred_region
          _
        $region32: #{net_forward.1} parent=11 // pred_fallthru
          _
        // Predicated region
        $region33: #{net_forward.1} parent=11 // pred_check
          %p312 = pneg %p172
        $region34: #{net_forward.1} parent=11 // pred_check_branch
          %314 = sbr.rel (%p312) target = $region36
        $region35: #{net_forward.1} parent=11 // pred_region
          _
        $region36: #{net_forward.1} parent=11 // pred_fallthru
          _
        // Predicated region
        $region37: #{net_forward.1} parent=11 // pred_check
          %p315 = pneg %p193
        $region38: #{net_forward.1} parent=11 // pred_check_branch
          %317 = sbr.rel (%p315) target = $region40
        $region39: #{net_forward.1} parent=11 // pred_region
          _
        $region40: #{net_forward.1} parent=11 // pred_fallthru
          _
        // Predicated region
        $region41: #{net_forward.1} parent=11 // pred_check
          %p318 = pneg %p214
        $region42: #{net_forward.1} parent=11 // pred_check_branch
          %320 = sbr.rel (%p318) target = $region44
        $region43: #{net_forward.1} parent=11 // pred_region
          _
        $region44: #{net_forward.1} parent=11 // pred_fallthru
          _
        // Predicated region
        $region45: #{net_forward.1} parent=11 // pred_check
          %p321 = pneg %p235
        $region46: #{net_forward.1} parent=11 // pred_check_branch
          %323 = sbr.rel (%p321) target = $region48
        $region47: #{net_forward.1} parent=11 // pred_region
          _
        $region48: #{net_forward.1} parent=11 // pred_fallthru
          _
        // Predicated region
        $region49: #{net_forward.1} parent=11 // pred_check
          %p324 = pneg %p256
        $region50: #{net_forward.1} parent=11 // pred_check_branch
          %326 = sbr.rel (%p324) target = $region52
        $region51: #{net_forward.1} parent=11 // pred_region
          _
        $region52: #{net_forward.1} parent=11 // pred_fallthru
          _
      $region12: #{net_forward.1} parent=5 // pred_fallthru
        _
      %p327 = scmp.lt.s32.totalorder %s20, 2
      // Predicated region
      $region53: #{net_forward.1} parent=5 // pred_check
        %p328 = pneg %p327
      $region54: #{net_forward.1} parent=5 // pred_check_branch
        %330 = sbr.rel (%p328) target = $region56
      $region55: #{net_forward.1} parent=5 // pred_region
        // Predicated region
        $region57: #{net_forward.1} parent=55 // pred_check
          %p331 = pneg %p40
        $region58: #{net_forward.1} parent=55 // pred_check_branch
          %333 = sbr.rel (%p331) target = $region60
        $region59: #{net_forward.1} parent=55 // pred_region
          %s334 = smul.u32 2, %s20
          %p335 = scmp.lt.s32.totalorder %s334, 3
          %s336 = scalar_select %p335, %s334, 3
          %s337 = smul.addr %s336, 96
          %s338 = smul.addr %s337, 8
          %s339 = scalar_lea.vmem %s0, %s338
          %s340 = smul.u32 2, %s20
        $region60: #{net_forward.1} parent=55 // pred_fallthru
          _
      $region56: #{net_forward.1} parent=5 // pred_fallthru
        _
      %p341 = scmp.le.s32.totalorder 1, %s20
      %p342 = scmp.lt.s32.totalorder %s20, 3
      %p343 = pnand %p341, %p342
      %p344 = pneg %p343
      // Predicated region
      $region61: #{net_forward.1} parent=5 // pred_check
        _
      $region62: #{net_forward.1} parent=5 // pred_check_branch
        %346 = sbr.rel (%p343) target = $region64
      $region63: #{net_forward.1} parent=5 // pred_region
        %s347 = ssub.s32 %s20, 1
        %s348 = smul.u32 2, %s25
        %p349 = scmp.lt.s32.totalorder %s348, 3
        %s350 = scalar_select %p349, %s348, 3
        %s351 = smul.addr %s350, 96
        %s352 = smul.addr %s351, 8
        %s353 = scalar_lea.vmem %s0, %s352
        %p354 = pneg %p46
        %p355 = pneg %p43
        %p356 = pneg %p67
        %p357 = pneg %p64
        %p358 = pneg %p88
        %p359 = pneg %p85
        %p360 = pneg %p109
        %p361 = pneg %p106
        %p362 = pneg %p130
        %p363 = pneg %p127
        %p364 = pneg %p151
        %p365 = pneg %p148
        %p366 = pneg %p172
        %p367 = pneg %p169
        %p368 = pneg %p193
        %p369 = pneg %p190
        %p370 = pneg %p214
        %p371 = pneg %p211
        %p372 = pneg %p235
        %p373 = pneg %p232
        %p374 = pneg %p256
        %p375 = pneg %p253
        %p376 = pneg %p282
        %p377 = pneg %p279
        %s378 = sand.u32 %s269, 1
        %s379 = scalar_lea.sflag [#allocation5], %s378
        %s380 = sand.u32 %s269, 1
        %s381 = smul.addr %s380, 2
        %s382 = scalar_lea.vmem [#allocation4], %s381
        %s383 = smul.u32 2, %s25
        %p384 = scmp.lt.s32.totalorder %s383, 3
        %s385 = scalar_select %p384, %s383, 3
        %s386 = smul.addr %s385, 96
        %s387 = smul.addr %s386, 8
        %s388 = scalar_lea.vmem %s0, %s387
        %s389 = smul.u32 2, %s25
        %v390 = vld [vmem:[%s388] sm:$0xff]
        %v391 = vld [vmem:[%s388 + $0x8] sm:$0xff]
        %v392 = vld [vmem:[%s388 + $0x10] sm:$0xff]
        %v393 = vld [vmem:[%s388 + $0x18] sm:$0xff]
        %v394 = vld [vmem:[%s388 + $0x20] sm:$0xff]
        %v395 = vld [vmem:[%s388 + $0x28] sm:$0xff]
        %v396 = vld [vmem:[%s388 + $0x30] sm:$0xff]
        %v397 = vld [vmem:[%s388 + $0x38] sm:$0xff]
        %v398 = vld [vmem:[%s388 + $0x40] sm:$0xff]
        %v399 = vld [vmem:[%s388 + $0x48] sm:$0xff]
        %v400 = vld [vmem:[%s388 + $0x50] sm:$0xff]
        %v401 = vld [vmem:[%s388 + $0x58] sm:$0xff]
        %v402 = vld [vmem:[%s388 + $0x60] sm:$0xff]
        %v403 = vld [vmem:[%s388 + $0x68] sm:$0xff]
        %v404 = vld [vmem:[%s388 + $0x70] sm:$0xff]
        %v405 = vld [vmem:[%s388 + $0x78] sm:$0xff]
        %v406 = vld [vmem:[%s388 + $0x80] sm:$0xff]
        %v407 = vld [vmem:[%s388 + $0x88] sm:$0xff]
        %v408 = vld [vmem:[%s388 + $0x90] sm:$0xff]
        %v409 = vld [vmem:[%s388 + $0x98] sm:$0xff]
        %v410 = vld [vmem:[%s388 + $0xa0] sm:$0xff]
        %v411 = vld [vmem:[%s388 + $0xa8] sm:$0xff]
        %v412 = vld [vmem:[%s388 + $0xb0] sm:$0xff]
        %v413 = vld [vmem:[%s388 + $0xb8] sm:$0xff]
        %v414 = vld [vmem:[%s388 + $0x300] sm:$0xff]
        %v415 = vld [vmem:[%s388 + $0x308] sm:$0xff]
        %v416 = vld [vmem:[%s388 + $0x310] sm:$0xff]
        %v417 = vld [vmem:[%s388 + $0x318] sm:$0xff]
        %v418 = vld [vmem:[%s388 + $0x320] sm:$0xff]
        %v419 = vld [vmem:[%s388 + $0x328] sm:$0xff]
        %v420 = vld [vmem:[%s388 + $0x330] sm:$0xff]
        %v421 = vld [vmem:[%s388 + $0x338] sm:$0xff]
        %v422 = vld [vmem:[%s388 + $0x340] sm:$0xff]
        %v423 = vld [vmem:[%s388 + $0x348] sm:$0xff]
        %v424 = vld [vmem:[%s388 + $0x350] sm:$0xff]
        %v425 = vld [vmem:[%s388 + $0x358] sm:$0xff]
        %v426 = vld [vmem:[%s388 + $0x360] sm:$0xff]
        %v427 = vld [vmem:[%s388 + $0x368] sm:$0xff]
        %v428 = vld [vmem:[%s388 + $0x370] sm:$0xff]
        %v429 = vld [vmem:[%s388 + $0x378] sm:$0xff]
        %v430 = vld [vmem:[%s388 + $0x380] sm:$0xff]
        %v431 = vld [vmem:[%s388 + $0x388] sm:$0xff]
        %v432 = vld [vmem:[%s388 + $0x390] sm:$0xff]
        %v433 = vld [vmem:[%s388 + $0x398] sm:$0xff]
        %v434 = vld [vmem:[%s388 + $0x3a0] sm:$0xff]
        %v435 = vld [vmem:[%s388 + $0x3a8] sm:$0xff]
        %v436 = vld [vmem:[%s388 + $0x3b0] sm:$0xff]
        %v437 = vld [vmem:[%s388 + $0x3b8] sm:$0xff]
        %v438 = vld [vmem:[%s1] sm:$0xff]
        %v439 = vld [vmem:[%s1 + $0x8] sm:$0xff]
        %v440 = vld [vmem:[%s1 + $0x10] sm:$0xff]
        %v441 = vld [vmem:[%s1 + $0x18] sm:$0xff]
        %vm442 = vcmask 261120
        %v444 = vsel %vm442, %v390, 0
        %v447 = vsel %vm442, %v391, 0
        %v450 = vsel %vm442, %v392, 0
        %v453 = vsel %vm442, %v393, 0
        %v456 = vsel %vm442, %v394, 0
        %v459 = vsel %vm442, %v395, 0
        %v462 = vsel %vm442, %v396, 0
        %v465 = vsel %vm442, %v397, 0
        %v468 = vsel %vm442, %v398, 0
        %v471 = vsel %vm442, %v399, 0
        %v474 = vsel %vm442, %v400, 0
        %v477 = vsel %vm442, %v401, 0
        %v480 = vsel %vm442, %v402, 0
        %v483 = vsel %vm442, %v403, 0
        %v486 = vsel %vm442, %v404, 0
        %v489 = vsel %vm442, %v405, 0
        %v492 = vsel %vm442, %v406, 0
        %v495 = vsel %vm442, %v407, 0
        %v498 = vsel %vm442, %v408, 0
        %v501 = vsel %vm442, %v409, 0
        %v504 = vsel %vm442, %v410, 0
        %v507 = vsel %vm442, %v411, 0
        %v510 = vsel %vm442, %v412, 0
        %v513 = vsel %vm442, %v413, 0
        %v516 = vsel %vm442, %v414, 0
        %v519 = vsel %vm442, %v415, 0
        %v522 = vsel %vm442, %v416, 0
        %v525 = vsel %vm442, %v417, 0
        %v528 = vsel %vm442, %v418, 0
        %v531 = vsel %vm442, %v419, 0
        %v534 = vsel %vm442, %v420, 0
        %v537 = vsel %vm442, %v421, 0
        %v540 = vsel %vm442, %v422, 0
        %v543 = vsel %vm442, %v423, 0
        %v546 = vsel %vm442, %v424, 0
        %v549 = vsel %vm442, %v425, 0
        %v552 = vsel %vm442, %v426, 0
        %v555 = vsel %vm442, %v427, 0
        %v558 = vsel %vm442, %v428, 0
        %v561 = vsel %vm442, %v429, 0
        %v564 = vsel %vm442, %v430, 0
        %v567 = vsel %vm442, %v431, 0
        %v570 = vsel %vm442, %v432, 0
        %v573 = vsel %vm442, %v433, 0
        %v576 = vsel %vm442, %v434, 0
        %v579 = vsel %vm442, %v435, 0
        %v582 = vsel %vm442, %v436, 0
        %v585 = vsel %vm442, %v437, 0
        %587 = vmatprep.subr.mxu0 0.0
        %588 = vmatpush1.msra.mxu0 %v438
        %589 = vmatprep.subr.mxu0 0.0
        %590 = vmatpush1.msra.mxu0 %v439
        %591 = vmatprep.subr.mxu0 0.0
        %592 = vmatpush1.msra.mxu0 %v440
        %593 = vmatprep.subr.mxu0 0.0
        %594 = vmatpush1.msra.mxu0 %v441
        %595 = vmatprep.subr.mxu0 0.0
        %596 = vmatpush1.msra.mxu0 0.0
        %597 = vmatprep.subr.mxu0 0.0
        %598 = vmatpush1.msra.mxu0 0.0
        %599 = vmatprep.subr.mxu0 0.0
        %600 = vmatpush1.msra.mxu0 0.0
        %601 = vmatprep.subr.mxu0 0.0
        %602 = vmatpush1.msra.mxu0 0.0
        %603 = vmatprep.subr.mxu0 0.0
        %604 = vmatpush1.msra.mxu0 0.0
        %605 = vmatprep.subr.mxu0 0.0
        %606 = vmatpush1.msra.mxu0 0.0
        %607 = vmatprep.subr.mxu0 0.0
        %608 = vmatpush1.msra.mxu0 0.0
        %609 = vmatprep.subr.mxu0 0.0
        %610 = vmatpush1.msra.mxu0 0.0
        %611 = vmatprep.subr.mxu0 0.0
        %612 = vmatpush1.msra.mxu0 0.0
        %613 = vmatprep.subr.mxu0 0.0
        %614 = vmatpush1.msra.mxu0 0.0
        %615 = vmatprep.subr.mxu0 0.0
        %616 = vmatpush1.msra.mxu0 0.0
        %617 = vmatprep.subr.mxu0 0.0
        %618 = vmatpush1.msra.mxu0 0.0
        %619 = vmatprep.subr.mxu0 0.0
        %620 = vmatpush1.msra.mxu0 0.0
        %621 = vmatprep.subr.mxu0 0.0
        %622 = vmatpush1.msra.mxu0 0.0
        %623 = vmatprep.subr.mxu0 0.0
        %624 = vmatpush1.msra.mxu0 0.0
        %625 = vmatprep.subr.mxu0 0.0
        %626 = vmatpush1.msra.mxu0 0.0
        %627 = vmatprep.subr.mxu0 0.0
        %628 = vmatpush1.msra.mxu0 0.0
        %629 = vmatprep.subr.mxu0 0.0
        %630 = vmatpush1.msra.mxu0 0.0
        %631 = vmatprep.subr.mxu0 0.0
        %632 = vmatpush1.msra.mxu0 0.0
        %633 = vmatprep.subr.mxu0 0.0
        %634 = vmatpush1.msra.mxu0 0.0
        %635 = vmatprep.subr.mxu0 0.0
        %636 = vmatpush1.msra.mxu0 0.0
        %637 = vmatprep.subr.mxu0 0.0
        %638 = vmatpush1.msra.mxu0 0.0
        %639 = vmatprep.subr.mxu0 0.0
        %640 = vmatpush1.msra.mxu0 0.0
        %641 = vmatprep.subr.mxu0 0.0
        %642 = vmatpush1.msra.mxu0 0.0
        %643 = vmatprep.subr.mxu0 0.0
        %644 = vmatpush1.msra.mxu0 0.0
        %645 = vmatprep.subr.mxu0 0.0
        %646 = vmatpush1.msra.mxu0 0.0
        %647 = vmatprep.subr.mxu0 0.0
        %648 = vmatpush1.msra.mxu0 0.0
        %649 = vmatprep.subr.mxu0 0.0
        %650 = vmatpush1.msra.mxu0 0.0
        %651 = vmatprep.mubr.f32.mxu0 0.0
        %652 = vmatmul.mubr.f32.gmra.mrb[0].mxu0 %v444
        %v653 = vpop.f32.mrb[0].mxu0
        %v654 = vadd.f32 0.0, %v653
        %v655 = vpop.f32.mrb[0].mxu0
        %656 = vmatprep.mubr.f32.mxu0 0.0
        %657 = vmatmul.mubr.f32.gmra.mrb[0].mxu0 %v447
        %v658 = vpop.f32.mrb[0].mxu0
        %v659 = vadd.f32 0.0, %v658
        %v660 = vpop.f32.mrb[0].mxu0
        %661 = vmatprep.mubr.f32.mxu0 0.0
        %662 = vmatmul.mubr.f32.gmra.mrb[0].mxu0 %v450
        %v663 = vpop.f32.mrb[0].mxu0
        %v664 = vadd.f32 0.0, %v663
        %v665 = vpop.f32.mrb[0].mxu0
        %666 = vmatprep.mubr.f32.mxu0 0.0
        %667 = vmatmul.mubr.f32.gmra.mrb[0].mxu0 %v453
        %v668 = vpop.f32.mrb[0].mxu0
        %v669 = vadd.f32 0.0, %v668
        %v670 = vpop.f32.mrb[0].mxu0
        %671 = vmatprep.mubr.f32.mxu0 0.0
        %672 = vmatmul.mubr.f32.gmra.mrb[0].mxu0 %v456
        %v673 = vpop.f32.mrb[0].mxu0
        %v674 = vadd.f32 0.0, %v673
        %v675 = vpop.f32.mrb[0].mxu0
        %676 = vmatprep.mubr.f32.mxu0 0.0
        %677 = vmatmul.mubr.f32.gmra.mrb[0].mxu0 %v459
        %v678 = vpop.f32.mrb[0].mxu0
        %v679 = vadd.f32 0.0, %v678
        %v680 = vpop.f32.mrb[0].mxu0
        %681 = vmatprep.mubr.f32.mxu0 0.0
        %682 = vmatmul.mubr.f32.gmra.mrb[0].mxu0 %v462
        %v683 = vpop.f32.mrb[0].mxu0
        %v684 = vadd.f32 0.0, %v683
        %v685 = vpop.f32.mrb[0].mxu0
        %686 = vmatprep.mubr.f32.mxu0 0.0
        %687 = vmatmul.mubr.f32.gmra.mrb[0].mxu0 %v465
        %v688 = vpop.f32.mrb[0].mxu0
        %v689 = vadd.f32 0.0, %v688
        %v690 = vpop.f32.mrb[0].mxu0
        %691 = vmatprep.mubr.f32.mxu0 0.0
        %692 = vmatmul.mubr.f32.gmra.mrb[0].mxu0 %v468
        %v693 = vpop.f32.mrb[0].mxu0
        %v694 = vadd.f32 0.0, %v693
        %v695 = vpop.f32.mrb[0].mxu0
        %696 = vmatprep.mubr.f32.mxu0 0.0
        %697 = vmatmul.mubr.f32.gmra.mrb[0].mxu0 %v471
        %v698 = vpop.f32.mrb[0].mxu0
        %v699 = vadd.f32 0.0, %v698
        %v700 = vpop.f32.mrb[0].mxu0
        %701 = vmatprep.mubr.f32.mxu0 0.0
        %702 = vmatmul.mubr.f32.gmra.mrb[0].mxu0 %v474
        %v703 = vpop.f32.mrb[0].mxu0
        %v704 = vadd.f32 0.0, %v703
        %v705 = vpop.f32.mrb[0].mxu0
        %706 = vmatprep.mubr.f32.mxu0 0.0
        %707 = vmatmul.mubr.f32.gmra.mrb[0].mxu0 %v477
        %v708 = vpop.f32.mrb[0].mxu0
        %v709 = vadd.f32 0.0, %v708
        %v710 = vpop.f32.mrb[0].mxu0
        %711 = vmatprep.mubr.f32.mxu0 0.0
        %712 = vmatmul.mubr.f32.gmra.mrb[0].mxu0 %v480
        %v713 = vpop.f32.mrb[0].mxu0
        %v714 = vadd.f32 0.0, %v713
        %v715 = vpop.f32.mrb[0].mxu0
        %716 = vmatprep.mubr.f32.mxu0 0.0
        %717 = vmatmul.mubr.f32.gmra.mrb[0].mxu0 %v483
        %v718 = vpop.f32.mrb[0].mxu0
        %v719 = vadd.f32 0.0, %v718
        %v720 = vpop.f32.mrb[0].mxu0
        %721 = vmatprep.mubr.f32.mxu0 0.0
        %722 = vmatmul.mubr.f32.gmra.mrb[0].mxu0 %v486
        %v723 = vpop.f32.mrb[0].mxu0
        %v724 = vadd.f32 0.0, %v723
        %v725 = vpop.f32.mrb[0].mxu0
        %726 = vmatprep.mubr.f32.mxu0 0.0
        %727 = vmatmul.mubr.f32.gmra.mrb[0].mxu0 %v489
        %v728 = vpop.f32.mrb[0].mxu0
        %v729 = vadd.f32 0.0, %v728
        %v730 = vpop.f32.mrb[0].mxu0
        %731 = vmatprep.mubr.f32.mxu0 0.0
        %732 = vmatmul.mubr.f32.gmra.mrb[0].mxu0 %v492
        %v733 = vpop.f32.mrb[0].mxu0
        %v734 = vadd.f32 0.0, %v733
        %v735 = vpop.f32.mrb[0].mxu0
        %736 = vmatprep.mubr.f32.mxu0 0.0
        %737 = vmatmul.mubr.f32.gmra.mrb[0].mxu0 %v495
        %v738 = vpop.f32.mrb[0].mxu0
        %v739 = vadd.f32 0.0, %v738
        %v740 = vpop.f32.mrb[0].mxu0
        %741 = vmatprep.mubr.f32.mxu0 0.0
        %742 = vmatmul.mubr.f32.gmra.mrb[0].mxu0 %v498
        %v743 = vpop.f32.mrb[0].mxu0
        %v744 = vadd.f32 0.0, %v743
        %v745 = vpop.f32.mrb[0].mxu0
        %746 = vmatprep.mubr.f32.mxu0 0.0
        %747 = vmatmul.mubr.f32.gmra.mrb[0].mxu0 %v501
        %v748 = vpop.f32.mrb[0].mxu0
        %v749 = vadd.f32 0.0, %v748
        %v750 = vpop.f32.mrb[0].mxu0
        %751 = vmatprep.mubr.f32.mxu0 0.0
        %752 = vmatmul.mubr.f32.gmra.mrb[0].mxu0 %v504
        %v753 = vpop.f32.mrb[0].mxu0
        %v754 = vadd.f32 0.0, %v753
        %v755 = vpop.f32.mrb[0].mxu0
        %756 = vmatprep.mubr.f32.mxu0 0.0
        %757 = vmatmul.mubr.f32.gmra.mrb[0].mxu0 %v507
        %v758 = vpop.f32.mrb[0].mxu0
        %v759 = vadd.f32 0.0, %v758
        %v760 = vpop.f32.mrb[0].mxu0
        %761 = vmatprep.mubr.f32.mxu0 0.0
        %762 = vmatmul.mubr.f32.gmra.mrb[0].mxu0 %v510
        %v763 = vpop.f32.mrb[0].mxu0
        %v764 = vadd.f32 0.0, %v763
        %v765 = vpop.f32.mrb[0].mxu0
        %766 = vmatprep.mubr.f32.mxu0 0.0
        %767 = vmatmul.mubr.f32.gmra.mrb[0].mxu0 %v513
        %v768 = vpop.f32.mrb[0].mxu0
        %v769 = vadd.f32 0.0, %v768
        %v770 = vpop.f32.mrb[0].mxu0
        %771 = vmatprep.mubr.f32.mxu0 0.0
        %772 = vmatmul.mubr.f32.gmra.mrb[0].mxu0 %v516
        %v773 = vpop.f32.mrb[0].mxu0
        %v774 = vadd.f32 0.0, %v773
        %v775 = vpop.f32.mrb[0].mxu0
        %776 = vmatprep.mubr.f32.mxu0 0.0
        %777 = vmatmul.mubr.f32.gmra.mrb[0].mxu0 %v519
        %v778 = vpop.f32.mrb[0].mxu0
        %v779 = vadd.f32 0.0, %v778
        %v780 = vpop.f32.mrb[0].mxu0
        %781 = vmatprep.mubr.f32.mxu0 0.0
        %782 = vmatmul.mubr.f32.gmra.mrb[0].mxu0 %v522
        %v783 = vpop.f32.mrb[0].mxu0
        %v784 = vadd.f32 0.0, %v783
        %v785 = vpop.f32.mrb[0].mxu0
        %786 = vmatprep.mubr.f32.mxu0 0.0
        %787 = vmatmul.mubr.f32.gmra.mrb[0].mxu0 %v525
        %v788 = vpop.f32.mrb[0].mxu0
        %v789 = vadd.f32 0.0, %v788
        %v790 = vpop.f32.mrb[0].mxu0
        %791 = vmatprep.mubr.f32.mxu0 0.0
        %792 = vmatmul.mubr.f32.gmra.mrb[0].mxu0 %v528
        %v793 = vpop.f32.mrb[0].mxu0
        %v794 = vadd.f32 0.0, %v793
        %v795 = vpop.f32.mrb[0].mxu0
        %796 = vmatprep.mubr.f32.mxu0 0.0
        %797 = vmatmul.mubr.f32.gmra.mrb[0].mxu0 %v531
        %v798 = vpop.f32.mrb[0].mxu0
        %v799 = vadd.f32 0.0, %v798
        %v800 = vpop.f32.mrb[0].mxu0
        %801 = vmatprep.mubr.f32.mxu0 0.0
        %802 = vmatmul.mubr.f32.gmra.mrb[0].mxu0 %v534
        %v803 = vpop.f32.mrb[0].mxu0
        %v804 = vadd.f32 0.0, %v803
        %v805 = vpop.f32.mrb[0].mxu0
        %806 = vmatprep.mubr.f32.mxu0 0.0
        %807 = vmatmul.mubr.f32.gmra.mrb[0].mxu0 %v537
        %v808 = vpop.f32.mrb[0].mxu0
        %v809 = vadd.f32 0.0, %v808
        %v810 = vpop.f32.mrb[0].mxu0
        %811 = vmatprep.mubr.f32.mxu0 0.0
        %812 = vmatmul.mubr.f32.gmra.mrb[0].mxu0 %v540
        %v813 = vpop.f32.mrb[0].mxu0
        %v814 = vadd.f32 0.0, %v813
        %v815 = vpop.f32.mrb[0].mxu0
        %816 = vmatprep.mubr.f32.mxu0 0.0
        %817 = vmatmul.mubr.f32.gmra.mrb[0].mxu0 %v543
        %v818 = vpop.f32.mrb[0].mxu0
        %v819 = vadd.f32 0.0, %v818
        %v820 = vpop.f32.mrb[0].mxu0
        %821 = vmatprep.mubr.f32.mxu0 0.0
        %822 = vmatmul.mubr.f32.gmra.mrb[0].mxu0 %v546
        %v823 = vpop.f32.mrb[0].mxu0
        %v824 = vadd.f32 0.0, %v823
        %v825 = vpop.f32.mrb[0].mxu0
        %826 = vmatprep.mubr.f32.mxu0 0.0
        %827 = vmatmul.mubr.f32.gmra.mrb[0].mxu0 %v549
        %v828 = vpop.f32.mrb[0].mxu0
        %v829 = vadd.f32 0.0, %v828
        %v830 = vpop.f32.mrb[0].mxu0
        %831 = vmatprep.mubr.f32.mxu0 0.0
        %832 = vmatmul.mubr.f32.gmra.mrb[0].mxu0 %v552
        %v833 = vpop.f32.mrb[0].mxu0
        %v834 = vadd.f32 0.0, %v833
        %v835 = vpop.f32.mrb[0].mxu0
        %836 = vmatprep.mubr.f32.mxu0 0.0
        %837 = vmatmul.mubr.f32.gmra.mrb[0].mxu0 %v555
        %v838 = vpop.f32.mrb[0].mxu0
        %v839 = vadd.f32 0.0, %v838
        %v840 = vpop.f32.mrb[0].mxu0
        %841 = vmatprep.mubr.f32.mxu0 0.0
        %842 = vmatmul.mubr.f32.gmra.mrb[0].mxu0 %v558
        %v843 = vpop.f32.mrb[0].mxu0
        %v844 = vadd.f32 0.0, %v843
        %v845 = vpop.f32.mrb[0].mxu0
        %846 = vmatprep.mubr.f32.mxu0 0.0
        %847 = vmatmul.mubr.f32.gmra.mrb[0].mxu0 %v561
        %v848 = vpop.f32.mrb[0].mxu0
        %v849 = vadd.f32 0.0, %v848
        %v850 = vpop.f32.mrb[0].mxu0
        %851 = vmatprep.mubr.f32.mxu0 0.0
        %852 = vmatmul.mubr.f32.gmra.mrb[0].mxu0 %v564
        %v853 = vpop.f32.mrb[0].mxu0
        %v854 = vadd.f32 0.0, %v853
        %v855 = vpop.f32.mrb[0].mxu0
        %856 = vmatprep.mubr.f32.mxu0 0.0
        %857 = vmatmul.mubr.f32.gmra.mrb[0].mxu0 %v567
        %v858 = vpop.f32.mrb[0].mxu0
        %v859 = vadd.f32 0.0, %v858
        %v860 = vpop.f32.mrb[0].mxu0
        %861 = vmatprep.mubr.f32.mxu0 0.0
        %862 = vmatmul.mubr.f32.gmra.mrb[0].mxu0 %v570
        %v863 = vpop.f32.mrb[0].mxu0
        %v864 = vadd.f32 0.0, %v863
        %v865 = vpop.f32.mrb[0].mxu0
        %866 = vmatprep.mubr.f32.mxu0 0.0
        %867 = vmatmul.mubr.f32.gmra.mrb[0].mxu0 %v573
        %v868 = vpop.f32.mrb[0].mxu0
        %v869 = vadd.f32 0.0, %v868
        %v870 = vpop.f32.mrb[0].mxu0
        %871 = vmatprep.mubr.f32.mxu0 0.0
        %872 = vmatmul.mubr.f32.gmra.mrb[0].mxu0 %v576
        %v873 = vpop.f32.mrb[0].mxu0
        %v874 = vadd.f32 0.0, %v873
        %v875 = vpop.f32.mrb[0].mxu0
        %876 = vmatprep.mubr.f32.mxu0 0.0
        %877 = vmatmul.mubr.f32.gmra.mrb[0].mxu0 %v579
        %v878 = vpop.f32.mrb[0].mxu0
        %v879 = vadd.f32 0.0, %v878
        %v880 = vpop.f32.mrb[0].mxu0
        %881 = vmatprep.mubr.f32.mxu0 0.0
        %882 = vmatmul.mubr.f32.gmra.mrb[0].mxu0 %v582
        %v883 = vpop.f32.mrb[0].mxu0
        %v884 = vadd.f32 0.0, %v883
        %v885 = vpop.f32.mrb[0].mxu0
        %886 = vmatprep.mubr.f32.mxu0 0.0
        %887 = vmatmul.mubr.f32.gmra.mrb[0].mxu0 %v585
        %v888 = vpop.f32.mrb[0].mxu0
        %v889 = vadd.f32 0.0, %v888
        %v890 = vpop.f32.mrb[0].mxu0
        %891 = vdwg.mxu0
        %v892 = vld [vmem:[%s388 + $0xc0] sm:$0xff]
        %v893 = vld [vmem:[%s388 + $0xc8] sm:$0xff]
        %v894 = vld [vmem:[%s388 + $0xd0] sm:$0xff]
        %v895 = vld [vmem:[%s388 + $0xd8] sm:$0xff]
        %v896 = vld [vmem:[%s388 + $0xe0] sm:$0xff]
        %v897 = vld [vmem:[%s388 + $0xe8] sm:$0xff]
        %v898 = vld [vmem:[%s388 + $0xf0] sm:$0xff]
        %v899 = vld [vmem:[%s388 + $0xf8] sm:$0xff]
        %v900 = vld [vmem:[%s388 + $0x100] sm:$0xff]
        %v901 = vld [vmem:[%s388 + $0x108] sm:$0xff]
        %v902 = vld [vmem:[%s388 + $0x110] sm:$0xff]
        %v903 = vld [vmem:[%s388 + $0x118] sm:$0xff]
        %v904 = vld [vmem:[%s388 + $0x120] sm:$0xff]
        %v905 = vld [vmem:[%s388 + $0x128] sm:$0xff]
        %v906 = vld [vmem:[%s388 + $0x130] sm:$0xff]
        %v907 = vld [vmem:[%s388 + $0x138] sm:$0xff]
        %v908 = vld [vmem:[%s388 + $0x140] sm:$0xff]
        %v909 = vld [vmem:[%s388 + $0x148] sm:$0xff]
        %v910 = vld [vmem:[%s388 + $0x150] sm:$0xff]
        %v911 = vld [vmem:[%s388 + $0x158] sm:$0xff]
        %v912 = vld [vmem:[%s388 + $0x160] sm:$0xff]
        %v913 = vld [vmem:[%s388 + $0x168] sm:$0xff]
        %v914 = vld [vmem:[%s388 + $0x170] sm:$0xff]
        %v915 = vld [vmem:[%s388 + $0x178] sm:$0xff]
        %v916 = vld [vmem:[%s388 + $0x3c0] sm:$0xff]
        %v917 = vld [vmem:[%s388 + $0x3c8] sm:$0xff]
        %v918 = vld [vmem:[%s388 + $0x3d0] sm:$0xff]
        %v919 = vld [vmem:[%s388 + $0x3d8] sm:$0xff]
        %v920 = vld [vmem:[%s388 + $0x3e0] sm:$0xff]
        %v921 = vld [vmem:[%s388 + $0x3e8] sm:$0xff]
        %v922 = vld [vmem:[%s388 + $0x3f0] sm:$0xff]
        %v923 = vld [vmem:[%s388 + $0x3f8] sm:$0xff]
        %v924 = vld [vmem:[%s388 + $0x400] sm:$0xff]
        %v925 = vld [vmem:[%s388 + $0x408] sm:$0xff]
        %v926 = vld [vmem:[%s388 + $0x410] sm:$0xff]
        %v927 = vld [vmem:[%s388 + $0x418] sm:$0xff]
        %v928 = vld [vmem:[%s388 + $0x420] sm:$0xff]
        %v929 = vld [vmem:[%s388 + $0x428] sm:$0xff]
        %v930 = vld [vmem:[%s388 + $0x430] sm:$0xff]
        %v931 = vld [vmem:[%s388 + $0x438] sm:$0xff]
        %v932 = vld [vmem:[%s388 + $0x440] sm:$0xff]
        %v933 = vld [vmem:[%s388 + $0x448] sm:$0xff]
        %v934 = vld [vmem:[%s388 + $0x450] sm:$0xff]
        %v935 = vld [vmem:[%s388 + $0x458] sm:$0xff]
        %v936 = vld [vmem:[%s388 + $0x460] sm:$0xff]
        %v937 = vld [vmem:[%s388 + $0x468] sm:$0xff]
        %v938 = vld [vmem:[%s388 + $0x470] sm:$0xff]
        %v939 = vld [vmem:[%s388 + $0x478] sm:$0xff]
        %v941 = vsel %vm442, %v892, 0
        %v944 = vsel %vm442, %v893, 0
        %v947 = vsel %vm442, %v894, 0
        %v950 = vsel %vm442, %v895, 0
        %v953 = vsel %vm442, %v896, 0
        %v956 = vsel %vm442, %v897, 0
        %v959 = vsel %vm442, %v898, 0
        %v962 = vsel %vm442, %v899, 0
        %v965 = vsel %vm442, %v900, 0
        %v968 = vsel %vm442, %v901, 0
        %v971 = vsel %vm442, %v902, 0
        %v974 = vsel %vm442, %v903, 0
        %v977 = vsel %vm442, %v904, 0
        %v980 = vsel %vm442, %v905, 0
        %v983 = vsel %vm442, %v906, 0
        %v986 = vsel %vm442, %v907, 0
        %v989 = vsel %vm442, %v908, 0
        %v992 = vsel %vm442, %v909, 0
        %v995 = vsel %vm442, %v910, 0
        %v998 = vsel %vm442, %v911, 0
        %v1001 = vsel %vm442, %v912, 0
        %v1004 = vsel %vm442, %v913, 0
        %v1007 = vsel %vm442, %v914, 0
        %v1010 = vsel %vm442, %v915, 0
        %v1013 = vsel %vm442, %v916, 0
        %v1016 = vsel %vm442, %v917, 0
        %v1019 = vsel %vm442, %v918, 0
        %v1022 = vsel %vm442, %v919, 0
        %v1025 = vsel %vm442, %v920, 0
        %v1028 = vsel %vm442, %v921, 0
        %v1031 = vsel %vm442, %v922, 0
        %v1034 = vsel %vm442, %v923, 0
        %v1037 = vsel %vm442, %v924, 0
        %v1040 = vsel %vm442, %v925, 0
        %v1043 = vsel %vm442, %v926, 0
        %v1046 = vsel %vm442, %v927, 0
        %v1049 = vsel %vm442, %v928, 0
        %v1052 = vsel %vm442, %v929, 0
        %v1055 = vsel %vm442, %v930, 0
        %v1058 = vsel %vm442, %v931, 0
        %v1061 = vsel %vm442, %v932, 0
        %v1064 = vsel %vm442, %v933, 0
        %v1067 = vsel %vm442, %v934, 0
        %v1070 = vsel %vm442, %v935, 0
        %v1073 = vsel %vm442, %v936, 0
        %v1076 = vsel %vm442, %v937, 0
        %v1079 = vsel %vm442, %v938, 0
        %v1082 = vsel %vm442, %v939, 0
        %1084 = vmatprep.subr.mxu0 0.0
        %1085 = vmatpush1.msra.mxu0 %v438
        %1086 = vmatprep.subr.mxu0 0.0
        %1087 = vmatpush1.msra.mxu0 %v439
        %1088 = vmatprep.subr.mxu0 0.0
        %1089 = vmatpush1.msra.mxu0 %v440
        %1090 = vmatprep.subr.mxu0 0.0
        %1091 = vmatpush1.msra.mxu0 %v441
        %1092 = vmatprep.subr.mxu0 0.0
        %1093 = vmatpush1.msra.mxu0 0.0
        %1094 = vmatprep.subr.mxu0 0.0
        %1095 = vmatpush1.msra.mxu0 0.0
        %1096 = vmatprep.subr.mxu0 0.0
        %1097 = vmatpush1.msra.mxu0 0.0
        %1098 = vmatprep.subr.mxu0 0.0
        %1099 = vmatpush1.msra.mxu0 0.0
        %1100 = vmatprep.subr.mxu0 0.0
        %1101 = vmatpush1.msra.mxu0 0.0
        %1102 = vmatprep.subr.mxu0 0.0
        %1103 = vmatpush1.msra.mxu0 0.0
        %1104 = vmatprep.subr.mxu0 0.0
        %1105 = vmatpush1.msra.mxu0 0.0
        %1106 = vmatprep.subr.mxu0 0.0
        %1107 = vmatpush1.msra.mxu0 0.0
        %1108 = vmatprep.subr.mxu0 0.0
        %1109 = vmatpush1.msra.mxu0 0.0
        %1110 = vmatprep.subr.mxu0 0.0
        %1111 = vmatpush1.msra.mxu0 0.0
        %1112 = vmatprep.subr.mxu0 0.0
        %1113 = vmatpush1.msra.mxu0 0.0
        %1114 = vmatprep.subr.mxu0 0.0
        %1115 = vmatpush1.msra.mxu0 0.0
        %1116 = vmatprep.subr.mxu0 0.0
        %1117 = vmatpush1.msra.mxu0 0.0
        %1118 = vmatprep.subr.mxu0 0.0
        %1119 = vmatpush1.msra.mxu0 0.0
        %1120 = vmatprep.subr.mxu0 0.0
        %1121 = vmatpush1.msra.mxu0 0.0
        %1122 = vmatprep.subr.mxu0 0.0
        %1123 = vmatpush1.msra.mxu0 0.0
        %1124 = vmatprep.subr.mxu0 0.0
        %1125 = vmatpush1.msra.mxu0 0.0
        %1126 = vmatprep.subr.mxu0 0.0
        %1127 = vmatpush1.msra.mxu0 0.0
        %1128 = vmatprep.subr.mxu0 0.0
        %1129 = vmatpush1.msra.mxu0 0.0
        %1130 = vmatprep.subr.mxu0 0.0
        %1131 = vmatpush1.msra.mxu0 0.0
        %1132 = vmatprep.subr.mxu0 0.0
        %1133 = vmatpush1.msra.mxu0 0.0
        %1134 = vmatprep.subr.mxu0 0.0
        %1135 = vmatpush1.msra.mxu0 0.0
        %1136 = vmatprep.subr.mxu0 0.0
        %1137 = vmatpush1.msra.mxu0 0.0
        %1138 = vmatprep.subr.mxu0 0.0
        %1139 = vmatpush1.msra.mxu0 0.0
        %1140 = vmatprep.subr.mxu0 0.0
        %1141 = vmatpush1.msra.mxu0 0.0
        %1142 = vmatprep.subr.mxu0 0.0
        %1143 = vmatpush1.msra.mxu0 0.0
        %1144 = vmatprep.subr.mxu0 0.0
        %1145 = vmatpush1.msra.mxu0 0.0
        %1146 = vmatprep.subr.mxu0 0.0
        %1147 = vmatpush1.msra.mxu0 0.0
        %1148 = vmatprep.mubr.f32.mxu0 0.0
        %1149 = vmatmul.mubr.f32.gmra.mrb[0].mxu0 %v941
        %v1150 = vpop.f32.mrb[0].mxu0
        %v1151 = vadd.f32 0.0, %v1150
        %v1152 = vpop.f32.mrb[0].mxu0
        %1153 = vmatprep.mubr.f32.mxu0 0.0
        %1154 = vmatmul.mubr.f32.gmra.mrb[0].mxu0 %v944
        %v1155 = vpop.f32.mrb[0].mxu0
        %v1156 = vadd.f32 0.0, %v1155
        %v1157 = vpop.f32.mrb[0].mxu0
        %1158 = vmatprep.mubr.f32.mxu0 0.0
        %1159 = vmatmul.mubr.f32.gmra.mrb[0].mxu0 %v947
        %v1160 = vpop.f32.mrb[0].mxu0
        %v1161 = vadd.f32 0.0, %v1160
        %v1162 = vpop.f32.mrb[0].mxu0
        %1163 = vmatprep.mubr.f32.mxu0 0.0
        %1164 = vmatmul.mubr.f32.gmra.mrb[0].mxu0 %v950
        %v1165 = vpop.f32.mrb[0].mxu0
        %v1166 = vadd.f32 0.0, %v1165
        %v1167 = vpop.f32.mrb[0].mxu0
        %1168 = vmatprep.mubr.f32.mxu0 0.0
        %1169 = vmatmul.mubr.f32.gmra.mrb[0].mxu0 %v953
        %v1170 = vpop.f32.mrb[0].mxu0
        %v1171 = vadd.f32 0.0, %v1170
        %v1172 = vpop.f32.mrb[0].mxu0
        %1173 = vmatprep.mubr.f32.mxu0 0.0
        %1174 = vmatmul.mubr.f32.gmra.mrb[0].mxu0 %v956
        %v1175 = vpop.f32.mrb[0].mxu0
        %v1176 = vadd.f32 0.0, %v1175
        %v1177 = vpop.f32.mrb[0].mxu0
        %1178 = vmatprep.mubr.f32.mxu0 0.0
        %1179 = vmatmul.mubr.f32.gmra.mrb[0].mxu0 %v959
        %v1180 = vpop.f32.mrb[0].mxu0
        %v1181 = vadd.f32 0.0, %v1180
        %v1182 = vpop.f32.mrb[0].mxu0
        %1183 = vmatprep.mubr.f32.mxu0 0.0
        %1184 = vmatmul.mubr.f32.gmra.mrb[0].mxu0 %v962
        %v1185 = vpop.f32.mrb[0].mxu0
        %v1186 = vadd.f32 0.0, %v1185
        %v1187 = vpop.f32.mrb[0].mxu0
        %1188 = vmatprep.mubr.f32.mxu0 0.0
        %1189 = vmatmul.mubr.f32.gmra.mrb[0].mxu0 %v965
        %v1190 = vpop.f32.mrb[0].mxu0
        %v1191 = vadd.f32 0.0, %v1190
        %v1192 = vpop.f32.mrb[0].mxu0
        %1193 = vmatprep.mubr.f32.mxu0 0.0
        %1194 = vmatmul.mubr.f32.gmra.mrb[0].mxu0 %v968
        %v1195 = vpop.f32.mrb[0].mxu0
        %v1196 = vadd.f32 0.0, %v1195
        %v1197 = vpop.f32.mrb[0].mxu0
        %1198 = vmatprep.mubr.f32.mxu0 0.0
        %1199 = vmatmul.mubr.f32.gmra.mrb[0].mxu0 %v971
        %v1200 = vpop.f32.mrb[0].mxu0
        %v1201 = vadd.f32 0.0, %v1200
        %v1202 = vpop.f32.mrb[0].mxu0
        %1203 = vmatprep.mubr.f32.mxu0 0.0
        %1204 = vmatmul.mubr.f32.gmra.mrb[0].mxu0 %v974
        %v1205 = vpop.f32.mrb[0].mxu0
        %v1206 = vadd.f32 0.0, %v1205
        %v1207 = vpop.f32.mrb[0].mxu0
        %1208 = vmatprep.mubr.f32.mxu0 0.0
        %1209 = vmatmul.mubr.f32.gmra.mrb[0].mxu0 %v977
        %v1210 = vpop.f32.mrb[0].mxu0
        %v1211 = vadd.f32 0.0, %v1210
        %v1212 = vpop.f32.mrb[0].mxu0
        %1213 = vmatprep.mubr.f32.mxu0 0.0
        %1214 = vmatmul.mubr.f32.gmra.mrb[0].mxu0 %v980
        %v1215 = vpop.f32.mrb[0].mxu0
        %v1216 = vadd.f32 0.0, %v1215
        %v1217 = vpop.f32.mrb[0].mxu0
        %1218 = vmatprep.mubr.f32.mxu0 0.0
        %1219 = vmatmul.mubr.f32.gmra.mrb[0].mxu0 %v983
        %v1220 = vpop.f32.mrb[0].mxu0
        %v1221 = vadd.f32 0.0, %v1220
        %v1222 = vpop.f32.mrb[0].mxu0
        %1223 = vmatprep.mubr.f32.mxu0 0.0
        %1224 = vmatmul.mubr.f32.gmra.mrb[0].mxu0 %v986
        %v1225 = vpop.f32.mrb[0].mxu0
        %v1226 = vadd.f32 0.0, %v1225
        %v1227 = vpop.f32.mrb[0].mxu0
        %1228 = vmatprep.mubr.f32.mxu0 0.0
        %1229 = vmatmul.mubr.f32.gmra.mrb[0].mxu0 %v989
        %v1230 = vpop.f32.mrb[0].mxu0
        %v1231 = vadd.f32 0.0, %v1230
        %v1232 = vpop.f32.mrb[0].mxu0
        %1233 = vmatprep.mubr.f32.mxu0 0.0
        %1234 = vmatmul.mubr.f32.gmra.mrb[0].mxu0 %v992
        %v1235 = vpop.f32.mrb[0].mxu0
        %v1236 = vadd.f32 0.0, %v1235
        %v1237 = vpop.f32.mrb[0].mxu0
        %1238 = vmatprep.mubr.f32.mxu0 0.0
        %1239 = vmatmul.mubr.f32.gmra.mrb[0].mxu0 %v995
        %v1240 = vpop.f32.mrb[0].mxu0
        %v1241 = vadd.f32 0.0, %v1240
        %v1242 = vpop.f32.mrb[0].mxu0
        %1243 = vmatprep.mubr.f32.mxu0 0.0
        %1244 = vmatmul.mubr.f32.gmra.mrb[0].mxu0 %v998
        %v1245 = vpop.f32.mrb[0].mxu0
        %v1246 = vadd.f32 0.0, %v1245
        %v1247 = vpop.f32.mrb[0].mxu0
        %1248 = vmatprep.mubr.f32.mxu0 0.0
        %1249 = vmatmul.mubr.f32.gmra.mrb[0].mxu0 %v1001
        %v1250 = vpop.f32.mrb[0].mxu0
        %v1251 = vadd.f32 0.0, %v1250
        %v1252 = vpop.f32.mrb[0].mxu0
        %1253 = vmatprep.mubr.f32.mxu0 0.0
        %1254 = vmatmul.mubr.f32.gmra.mrb[0].mxu0 %v1004
        %v1255 = vpop.f32.mrb[0].mxu0
        %v1256 = vadd.f32 0.0, %v1255
        %v1257 = vpop.f32.mrb[0].mxu0
        %1258 = vmatprep.mubr.f32.mxu0 0.0
        %1259 = vmatmul.mubr.f32.gmra.mrb[0].mxu0 %v1007
        %v1260 = vpop.f32.mrb[0].mxu0
        %v1261 = vadd.f32 0.0, %v1260
        %v1262 = vpop.f32.mrb[0].mxu0
        %1263 = vmatprep.mubr.f32.mxu0 0.0
        %1264 = vmatmul.mubr.f32.gmra.mrb[0].mxu0 %v1010
        %v1265 = vpop.f32.mrb[0].mxu0
        %v1266 = vadd.f32 0.0, %v1265
        %v1267 = vpop.f32.mrb[0].mxu0
        %1268 = vmatprep.mubr.f32.mxu0 0.0
        %1269 = vmatmul.mubr.f32.gmra.mrb[0].mxu0 %v1013
        %v1270 = vpop.f32.mrb[0].mxu0
        %v1271 = vadd.f32 0.0, %v1270
        %v1272 = vpop.f32.mrb[0].mxu0
        %1273 = vmatprep.mubr.f32.mxu0 0.0
        %1274 = vmatmul.mubr.f32.gmra.mrb[0].mxu0 %v1016
        %v1275 = vpop.f32.mrb[0].mxu0
        %v1276 = vadd.f32 0.0, %v1275
        %v1277 = vpop.f32.mrb[0].mxu0
        %1278 = vmatprep.mubr.f32.mxu0 0.0
        %1279 = vmatmul.mubr.f32.gmra.mrb[0].mxu0 %v1019
        %v1280 = vpop.f32.mrb[0].mxu0
        %v1281 = vadd.f32 0.0, %v1280
        %v1282 = vpop.f32.mrb[0].mxu0
        %1283 = vmatprep.mubr.f32.mxu0 0.0
        %1284 = vmatmul.mubr.f32.gmra.mrb[0].mxu0 %v1022
        %v1285 = vpop.f32.mrb[0].mxu0
        %v1286 = vadd.f32 0.0, %v1285
        %v1287 = vpop.f32.mrb[0].mxu0
        %1288 = vmatprep.mubr.f32.mxu0 0.0
        %1289 = vmatmul.mubr.f32.gmra.mrb[0].mxu0 %v1025
        %v1290 = vpop.f32.mrb[0].mxu0
        %v1291 = vadd.f32 0.0, %v1290
        %v1292 = vpop.f32.mrb[0].mxu0
        %1293 = vmatprep.mubr.f32.mxu0 0.0
        %1294 = vmatmul.mubr.f32.gmra.mrb[0].mxu0 %v1028
        %v1295 = vpop.f32.mrb[0].mxu0
        %v1296 = vadd.f32 0.0, %v1295
        %v1297 = vpop.f32.mrb[0].mxu0
        %1298 = vmatprep.mubr.f32.mxu0 0.0
        %1299 = vmatmul.mubr.f32.gmra.mrb[0].mxu0 %v1031
        %v1300 = vpop.f32.mrb[0].mxu0
        %v1301 = vadd.f32 0.0, %v1300
        %v1302 = vpop.f32.mrb[0].mxu0
        %1303 = vmatprep.mubr.f32.mxu0 0.0
        %1304 = vmatmul.mubr.f32.gmra.mrb[0].mxu0 %v1034
        %v1305 = vpop.f32.mrb[0].mxu0
        %v1306 = vadd.f32 0.0, %v1305
        %v1307 = vpop.f32.mrb[0].mxu0
        %1308 = vmatprep.mubr.f32.mxu0 0.0
        %1309 = vmatmul.mubr.f32.gmra.mrb[0].mxu0 %v1037
        %v1310 = vpop.f32.mrb[0].mxu0
        %v1311 = vadd.f32 0.0, %v1310
        %v1312 = vpop.f32.mrb[0].mxu0
        %1313 = vmatprep.mubr.f32.mxu0 0.0
        %1314 = vmatmul.mubr.f32.gmra.mrb[0].mxu0 %v1040
        %v1315 = vpop.f32.mrb[0].mxu0
        %v1316 = vadd.f32 0.0, %v1315
        %v1317 = vpop.f32.mrb[0].mxu0
        %1318 = vmatprep.mubr.f32.mxu0 0.0
        %1319 = vmatmul.mubr.f32.gmra.mrb[0].mxu0 %v1043
        %v1320 = vpop.f32.mrb[0].mxu0
        %v1321 = vadd.f32 0.0, %v1320
        %v1322 = vpop.f32.mrb[0].mxu0
        %1323 = vmatprep.mubr.f32.mxu0 0.0
        %1324 = vmatmul.mubr.f32.gmra.mrb[0].mxu0 %v1046
        %v1325 = vpop.f32.mrb[0].mxu0
        %v1326 = vadd.f32 0.0, %v1325
        %v1327 = vpop.f32.mrb[0].mxu0
        %1328 = vmatprep.mubr.f32.mxu0 0.0
        %1329 = vmatmul.mubr.f32.gmra.mrb[0].mxu0 %v1049
        %v1330 = vpop.f32.mrb[0].mxu0
        %v1331 = vadd.f32 0.0, %v1330
        %v1332 = vpop.f32.mrb[0].mxu0
        %1333 = vmatprep.mubr.f32.mxu0 0.0
        %1334 = vmatmul.mubr.f32.gmra.mrb[0].mxu0 %v1052
        %v1335 = vpop.f32.mrb[0].mxu0
        %v1336 = vadd.f32 0.0, %v1335
        %v1337 = vpop.f32.mrb[0].mxu0
        %1338 = vmatprep.mubr.f32.mxu0 0.0
        %1339 = vmatmul.mubr.f32.gmra.mrb[0].mxu0 %v1055
        %v1340 = vpop.f32.mrb[0].mxu0
        %v1341 = vadd.f32 0.0, %v1340
        %v1342 = vpop.f32.mrb[0].mxu0
        %1343 = vmatprep.mubr.f32.mxu0 0.0
        %1344 = vmatmul.mubr.f32.gmra.mrb[0].mxu0 %v1058
        %v1345 = vpop.f32.mrb[0].mxu0
        %v1346 = vadd.f32 0.0, %v1345
        %v1347 = vpop.f32.mrb[0].mxu0
        %1348 = vmatprep.mubr.f32.mxu0 0.0
        %1349 = vmatmul.mubr.f32.gmra.mrb[0].mxu0 %v1061
        %v1350 = vpop.f32.mrb[0].mxu0
        %v1351 = vadd.f32 0.0, %v1350
        %v1352 = vpop.f32.mrb[0].mxu0
        %1353 = vmatprep.mubr.f32.mxu0 0.0
        %1354 = vmatmul.mubr.f32.gmra.mrb[0].mxu0 %v1064
        %v1355 = vpop.f32.mrb[0].mxu0
        %v1356 = vadd.f32 0.0, %v1355
        %v1357 = vpop.f32.mrb[0].mxu0
        %1358 = vmatprep.mubr.f32.mxu0 0.0
        %1359 = vmatmul.mubr.f32.gmra.mrb[0].mxu0 %v1067
        %v1360 = vpop.f32.mrb[0].mxu0
        %v1361 = vadd.f32 0.0, %v1360
        %v1362 = vpop.f32.mrb[0].mxu0
        %1363 = vmatprep.mubr.f32.mxu0 0.0
        %1364 = vmatmul.mubr.f32.gmra.mrb[0].mxu0 %v1070
        %v1365 = vpop.f32.mrb[0].mxu0
        %v1366 = vadd.f32 0.0, %v1365
        %v1367 = vpop.f32.mrb[0].mxu0
        %1368 = vmatprep.mubr.f32.mxu0 0.0
        %1369 = vmatmul.mubr.f32.gmra.mrb[0].mxu0 %v1073
        %v1370 = vpop.f32.mrb[0].mxu0
        %v1371 = vadd.f32 0.0, %v1370
        %v1372 = vpop.f32.mrb[0].mxu0
        %1373 = vmatprep.mubr.f32.mxu0 0.0
        %1374 = vmatmul.mubr.f32.gmra.mrb[0].mxu0 %v1076
        %v1375 = vpop.f32.mrb[0].mxu0
        %v1376 = vadd.f32 0.0, %v1375
        %v1377 = vpop.f32.mrb[0].mxu0
        %1378 = vmatprep.mubr.f32.mxu0 0.0
        %1379 = vmatmul.mubr.f32.gmra.mrb[0].mxu0 %v1079
        %v1380 = vpop.f32.mrb[0].mxu0
        %v1381 = vadd.f32 0.0, %v1380
        %v1382 = vpop.f32.mrb[0].mxu0
        %1383 = vmatprep.mubr.f32.mxu0 0.0
        %1384 = vmatmul.mubr.f32.gmra.mrb[0].mxu0 %v1082
        %v1385 = vpop.f32.mrb[0].mxu0
        %v1386 = vadd.f32 0.0, %v1385
        %v1387 = vpop.f32.mrb[0].mxu0
        %1388 = vdwg.mxu0
        %v1389 = vmax.f32 %v654, %v1151
        %v1390 = vmax.f32 %v659, %v1156
        %v1391 = vmax.f32 %v664, %v1161
        %v1392 = vmax.f32 %v669, %v1166
        %v1393 = vmax.f32 %v674, %v1171
        %v1394 = vmax.f32 %v679, %v1176
        %v1395 = vmax.f32 %v684, %v1181
        %v1396 = vmax.f32 %v689, %v1186
        %v1397 = vmax.f32 %v694, %v1191
        %v1398 = vmax.f32 %v699, %v1196
        %v1399 = vmax.f32 %v704, %v1201
        %v1400 = vmax.f32 %v709, %v1206
        %v1401 = vmax.f32 %v714, %v1211
        %v1402 = vmax.f32 %v719, %v1216
        %v1403 = vmax.f32 %v724, %v1221
        %v1404 = vmax.f32 %v729, %v1226
        %v1405 = vmax.f32 %v734, %v1231
        %v1406 = vmax.f32 %v739, %v1236
        %v1407 = vmax.f32 %v744, %v1241
        %v1408 = vmax.f32 %v749, %v1246
        %v1409 = vmax.f32 %v754, %v1251
        %v1410 = vmax.f32 %v759, %v1256
        %v1411 = vmax.f32 %v764, %v1261
        %v1412 = vmax.f32 %v769, %v1266
        %v1413 = vmax.f32 %v774, %v1271
        %v1414 = vmax.f32 %v779, %v1276
        %v1415 = vmax.f32 %v784, %v1281
        %v1416 = vmax.f32 %v789, %v1286
        %v1417 = vmax.f32 %v794, %v1291
        %v1418 = vmax.f32 %v799, %v1296
        %v1419 = vmax.f32 %v804, %v1301
        %v1420 = vmax.f32 %v809, %v1306
        %v1421 = vmax.f32 %v814, %v1311
        %v1422 = vmax.f32 %v819, %v1316
        %v1423 = vmax.f32 %v824, %v1321
        %v1424 = vmax.f32 %v829, %v1326
        %v1425 = vmax.f32 %v834, %v1331
        %v1426 = vmax.f32 %v839, %v1336
        %v1427 = vmax.f32 %v844, %v1341
        %v1428 = vmax.f32 %v849, %v1346
        %v1429 = vmax.f32 %v854, %v1351
        %v1430 = vmax.f32 %v859, %v1356
        %v1431 = vmax.f32 %v864, %v1361
        %v1432 = vmax.f32 %v869, %v1366
        %v1433 = vmax.f32 %v874, %v1371
        %v1434 = vmax.f32 %v879, %v1376
        %v1435 = vmax.f32 %v884, %v1381
        %v1436 = vmax.f32 %v889, %v1386
        %v1437 = vld [vmem:[%s388 + $0x180] sm:$0xff]
        %v1438 = vld [vmem:[%s388 + $0x188] sm:$0xff]
        %v1439 = vld [vmem:[%s388 + $0x190] sm:$0xff]
        %v1440 = vld [vmem:[%s388 + $0x198] sm:$0xff]
        %v1441 = vld [vmem:[%s388 + $0x1a0] sm:$0xff]
        %v1442 = vld [vmem:[%s388 + $0x1a8] sm:$0xff]
        %v1443 = vld [vmem:[%s388 + $0x1b0] sm:$0xff]
        %v1444 = vld [vmem:[%s388 + $0x1b8] sm:$0xff]
        %v1445 = vld [vmem:[%s388 + $0x1c0] sm:$0xff]
        %v1446 = vld [vmem:[%s388 + $0x1c8] sm:$0xff]
        %v1447 = vld [vmem:[%s388 + $0x1d0] sm:$0xff]
        %v1448 = vld [vmem:[%s388 + $0x1d8] sm:$0xff]
        %v1449 = vld [vmem:[%s388 + $0x1e0] sm:$0xff]
        %v1450 = vld [vmem:[%s388 + $0x1e8] sm:$0xff]
        %v1451 = vld [vmem:[%s388 + $0x1f0] sm:$0xff]
        %v1452 = vld [vmem:[%s388 + $0x1f8] sm:$0xff]
        %v1453 = vld [vmem:[%s388 + $0x200] sm:$0xff]
        %v1454 = vld [vmem:[%s388 + $0x208] sm:$0xff]
        %v1455 = vld [vmem:[%s388 + $0x210] sm:$0xff]
        %v1456 = vld [vmem:[%s388 + $0x218] sm:$0xff]
        %v1457 = vld [vmem:[%s388 + $0x220] sm:$0xff]
        %v1458 = vld [vmem:[%s388 + $0x228] sm:$0xff]
        %v1459 = vld [vmem:[%s388 + $0x230] sm:$0xff]
        %v1460 = vld [vmem:[%s388 + $0x238] sm:$0xff]
        %v1461 = vld [vmem:[%s388 + $0x480] sm:$0xff]
        %v1462 = vld [vmem:[%s388 + $0x488] sm:$0xff]
        %v1463 = vld [vmem:[%s388 + $0x490] sm:$0xff]
        %v1464 = vld [vmem:[%s388 + $0x498] sm:$0xff]
        %v1465 = vld [vmem:[%s388 + $0x4a0] sm:$0xff]
        %v1466 = vld [vmem:[%s388 + $0x4a8] sm:$0xff]
        %v1467 = vld [vmem:[%s388 + $0x4b0] sm:$0xff]
        %v1468 = vld [vmem:[%s388 + $0x4b8] sm:$0xff]
        %v1469 = vld [vmem:[%s388 + $0x4c0] sm:$0xff]
        %v1470 = vld [vmem:[%s388 + $0x4c8] sm:$0xff]
        %v1471 = vld [vmem:[%s388 + $0x4d0] sm:$0xff]
        %v1472 = vld [vmem:[%s388 + $0x4d8] sm:$0xff]
        %v1473 = vld [vmem:[%s388 + $0x4e0] sm:$0xff]
        %v1474 = vld [vmem:[%s388 + $0x4e8] sm:$0xff]
        %v1475 = vld [vmem:[%s388 + $0x4f0] sm:$0xff]
        %v1476 = vld [vmem:[%s388 + $0x4f8] sm:$0xff]
        %v1477 = vld [vmem:[%s388 + $0x500] sm:$0xff]
        %v1478 = vld [vmem:[%s388 + $0x508] sm:$0xff]
        %v1479 = vld [vmem:[%s388 + $0x510] sm:$0xff]
        %v1480 = vld [vmem:[%s388 + $0x518] sm:$0xff]
        %v1481 = vld [vmem:[%s388 + $0x520] sm:$0xff]
        %v1482 = vld [vmem:[%s388 + $0x528] sm:$0xff]
        %v1483 = vld [vmem:[%s388 + $0x530] sm:$0xff]
        %v1484 = vld [vmem:[%s388 + $0x538] sm:$0xff]
        %v1486 = vsel %vm442, %v1437, 0
        %v1489 = vsel %vm442, %v1438, 0
        %v1492 = vsel %vm442, %v1439, 0
        %v1495 = vsel %vm442, %v1440, 0
        %v1498 = vsel %vm442, %v1441, 0
        %v1501 = vsel %vm442, %v1442, 0
        %v1504 = vsel %vm442, %v1443, 0
        %v1507 = vsel %vm442, %v1444, 0
        %v1510 = vsel %vm442, %v1445, 0
        %v1513 = vsel %vm442, %v1446, 0
        %v1516 = vsel %vm442, %v1447, 0
        %v1519 = vsel %vm442, %v1448, 0
        %v1522 = vsel %vm442, %v1449, 0
        %v1525 = vsel %vm442, %v1450, 0
        %v1528 = vsel %vm442, %v1451, 0
        %v1531 = vsel %vm442, %v1452, 0
        %v1534 = vsel %vm442, %v1453, 0
        %v1537 = vsel %vm442, %v1454, 0
        %v1540 = vsel %vm442, %v1455, 0
        %v1543 = vsel %vm442, %v1456, 0
        %v1546 = vsel %vm442, %v1457, 0
        %v1549 = vsel %vm442, %v1458, 0
        %v1552 = vsel %vm442, %v1459, 0
        %v1555 = vsel %vm442, %v1460, 0
        %v1558 = vsel %vm442, %v1461, 0
        %v1561 = vsel %vm442, %v1462, 0
        %v1564 = vsel %vm442, %v1463, 0
        %v1567 = vsel %vm442, %v1464, 0
        %v1570 = vsel %vm442, %v1465, 0
        %v1573 = vsel %vm442, %v1466, 0
        %v1576 = vsel %vm442, %v1467, 0
        %v1579 = vsel %vm442, %v1468, 0
        %v1582 = vsel %vm442, %v1469, 0
        %v1585 = vsel %vm442, %v1470, 0
        %v1588 = vsel %vm442, %v1471, 0
        %v1591 = vsel %vm442, %v1472, 0
        %v1594 = vsel %vm442, %v1473, 0
        %v1597 = vsel %vm442, %v1474, 0
        %v1600 = vsel %vm442, %v1475, 0
        %v1603 = vsel %vm442, %v1476, 0
        %v1606 = vsel %vm442, %v1477, 0
        %v1609 = vsel %vm442, %v1478, 0
        %v1612 = vsel %vm442, %v1479, 0
        %v1615 = vsel %vm442, %v1480, 0
        %v1618 = vsel %vm442, %v1481, 0
        %v1621 = vsel %vm442, %v1482, 0
        %v1624 = vsel %vm442, %v1483, 0
        %v1627 = vsel %vm442, %v1484, 0
        %1629 = vmatprep.subr.mxu0 0.0
        %1630 = vmatpush1.msra.mxu0 %v438
        %1631 = vmatprep.subr.mxu0 0.0
        %1632 = vmatpush1.msra.mxu0 %v439
        %1633 = vmatprep.subr.mxu0 0.0
        %1634 = vmatpush1.msra.mxu0 %v440
        %1635 = vmatprep.subr.mxu0 0.0
        %1636 = vmatpush1.msra.mxu0 %v441
        %1637 = vmatprep.subr.mxu0 0.0
        %1638 = vmatpush1.msra.mxu0 0.0
        %1639 = vmatprep.subr.mxu0 0.0
        %1640 = vmatpush1.msra.mxu0 0.0
        %1641 = vmatprep.subr.mxu0 0.0
        %1642 = vmatpush1.msra.mxu0 0.0
        %1643 = vmatprep.subr.mxu0 0.0
        %1644 = vmatpush1.msra.mxu0 0.0
        %1645 = vmatprep.subr.mxu0 0.0
        %1646 = vmatpush1.msra.mxu0 0.0
        %1647 = vmatprep.subr.mxu0 0.0
        %1648 = vmatpush1.msra.mxu0 0.0
        %1649 = vmatprep.subr.mxu0 0.0
        %1650 = vmatpush1.msra.mxu0 0.0
        %1651 = vmatprep.subr.mxu0 0.0
        %1652 = vmatpush1.msra.mxu0 0.0
        %1653 = vmatprep.subr.mxu0 0.0
        %1654 = vmatpush1.msra.mxu0 0.0
        %1655 = vmatprep.subr.mxu0 0.0
        %1656 = vmatpush1.msra.mxu0 0.0
        %1657 = vmatprep.subr.mxu0 0.0
        %1658 = vmatpush1.msra.mxu0 0.0
        %1659 = vmatprep.subr.mxu0 0.0
        %1660 = vmatpush1.msra.mxu0 0.0
        %1661 = vmatprep.subr.mxu0 0.0
        %1662 = vmatpush1.msra.mxu0 0.0
        %1663 = vmatprep.subr.mxu0 0.0
        %1664 = vmatpush1.msra.mxu0 0.0
        %1665 = vmatprep.subr.mxu0 0.0
        %1666 = vmatpush1.msra.mxu0 0.0
        %1667 = vmatprep.subr.mxu0 0.0
        %1668 = vmatpush1.msra.mxu0 0.0
        %1669 = vmatprep.subr.mxu0 0.0
        %1670 = vmatpush1.msra.mxu0 0.0
        %1671 = vmatprep.subr.mxu0 0.0
        %1672 = vmatpush1.msra.mxu0 0.0
        %1673 = vmatprep.subr.mxu0 0.0
        %1674 = vmatpush1.msra.mxu0 0.0
        %1675 = vmatprep.subr.mxu0 0.0
        %1676 = vmatpush1.msra.mxu0 0.0
        %1677 = vmatprep.subr.mxu0 0.0
        %1678 = vmatpush1.msra.mxu0 0.0
        %1679 = vmatprep.subr.mxu0 0.0
        %1680 = vmatpush1.msra.mxu0 0.0
        %1681 = vmatprep.subr.mxu0 0.0
        %1682 = vmatpush1.msra.mxu0 0.0
        %1683 = vmatprep.subr.mxu0 0.0
        %1684 = vmatpush1.msra.mxu0 0.0
        %1685 = vmatprep.subr.mxu0 0.0
        %1686 = vmatpush1.msra.mxu0 0.0
        %1687 = vmatprep.subr.mxu0 0.0
        %1688 = vmatpush1.msra.mxu0 0.0
        %1689 = vmatprep.subr.mxu0 0.0
        %1690 = vmatpush1.msra.mxu0 0.0
        %1691 = vmatprep.subr.mxu0 0.0
        %1692 = vmatpush1.msra.mxu0 0.0
        %1693 = vmatprep.mubr.f32.mxu0 0.0
        %1694 = vmatmul.mubr.f32.gmra.mrb[0].mxu0 %v1486
        %v1695 = vpop.f32.mrb[0].mxu0
        %v1696 = vadd.f32 0.0, %v1695
        %v1697 = vpop.f32.mrb[0].mxu0
        %1698 = vmatprep.mubr.f32.mxu0 0.0
        %1699 = vmatmul.mubr.f32.gmra.mrb[0].mxu0 %v1489
        %v1700 = vpop.f32.mrb[0].mxu0
        %v1701 = vadd.f32 0.0, %v1700
        %v1702 = vpop.f32.mrb[0].mxu0
        %1703 = vmatprep.mubr.f32.mxu0 0.0
        %1704 = vmatmul.mubr.f32.gmra.mrb[0].mxu0 %v1492
        %v1705 = vpop.f32.mrb[0].mxu0
        %v1706 = vadd.f32 0.0, %v1705
        %v1707 = vpop.f32.mrb[0].mxu0
        %1708 = vmatprep.mubr.f32.mxu0 0.0
        %1709 = vmatmul.mubr.f32.gmra.mrb[0].mxu0 %v1495
        %v1710 = vpop.f32.mrb[0].mxu0
        %v1711 = vadd.f32 0.0, %v1710
        %v1712 = vpop.f32.mrb[0].mxu0
        %1713 = vmatprep.mubr.f32.mxu0 0.0
        %1714 = vmatmul.mubr.f32.gmra.mrb[0].mxu0 %v1498
        %v1715 = vpop.f32.mrb[0].mxu0
        %v1716 = vadd.f32 0.0, %v1715
        %v1717 = vpop.f32.mrb[0].mxu0
        %1718 = vmatprep.mubr.f32.mxu0 0.0
        %1719 = vmatmul.mubr.f32.gmra.mrb[0].mxu0 %v1501
        %v1720 = vpop.f32.mrb[0].mxu0
        %v1721 = vadd.f32 0.0, %v1720
        %v1722 = vpop.f32.mrb[0].mxu0
        %1723 = vmatprep.mubr.f32.mxu0 0.0
        %1724 = vmatmul.mubr.f32.gmra.mrb[0].mxu0 %v1504
        %v1725 = vpop.f32.mrb[0].mxu0
        %v1726 = vadd.f32 0.0, %v1725
        %v1727 = vpop.f32.mrb[0].mxu0
        %1728 = vmatprep.mubr.f32.mxu0 0.0
        %1729 = vmatmul.mubr.f32.gmra.mrb[0].mxu0 %v1507
        %v1730 = vpop.f32.mrb[0].mxu0
        %v1731 = vadd.f32 0.0, %v1730
        %v1732 = vpop.f32.mrb[0].mxu0
        %1733 = vmatprep.mubr.f32.mxu0 0.0
        %1734 = vmatmul.mubr.f32.gmra.mrb[0].mxu0 %v1510
        %v1735 = vpop.f32.mrb[0].mxu0
        %v1736 = vadd.f32 0.0, %v1735
        %v1737 = vpop.f32.mrb[0].mxu0
        %1738 = vmatprep.mubr.f32.mxu0 0.0
        %1739 = vmatmul.mubr.f32.gmra.mrb[0].mxu0 %v1513
        %v1740 = vpop.f32.mrb[0].mxu0
        %v1741 = vadd.f32 0.0, %v1740
        %v1742 = vpop.f32.mrb[0].mxu0
        %1743 = vmatprep.mubr.f32.mxu0 0.0
        %1744 = vmatmul.mubr.f32.gmra.mrb[0].mxu0 %v1516
        %v1745 = vpop.f32.mrb[0].mxu0
        %v1746 = vadd.f32 0.0, %v1745
        %v1747 = vpop.f32.mrb[0].mxu0
        %1748 = vmatprep.mubr.f32.mxu0 0.0
        %1749 = vmatmul.mubr.f32.gmra.mrb[0].mxu0 %v1519
        %v1750 = vpop.f32.mrb[0].mxu0
        %v1751 = vadd.f32 0.0, %v1750
        %v1752 = vpop.f32.mrb[0].mxu0
        %1753 = vmatprep.mubr.f32.mxu0 0.0
        %1754 = vmatmul.mubr.f32.gmra.mrb[0].mxu0 %v1522
        %v1755 = vpop.f32.mrb[0].mxu0
        %v1756 = vadd.f32 0.0, %v1755
        %v1757 = vpop.f32.mrb[0].mxu0
        %1758 = vmatprep.mubr.f32.mxu0 0.0
        %1759 = vmatmul.mubr.f32.gmra.mrb[0].mxu0 %v1525
        %v1760 = vpop.f32.mrb[0].mxu0
        %v1761 = vadd.f32 0.0, %v1760
        %v1762 = vpop.f32.mrb[0].mxu0
        %1763 = vmatprep.mubr.f32.mxu0 0.0
        %1764 = vmatmul.mubr.f32.gmra.mrb[0].mxu0 %v1528
        %v1765 = vpop.f32.mrb[0].mxu0
        %v1766 = vadd.f32 0.0, %v1765
        %v1767 = vpop.f32.mrb[0].mxu0
        %1768 = vmatprep.mubr.f32.mxu0 0.0
        %1769 = vmatmul.mubr.f32.gmra.mrb[0].mxu0 %v1531
        %v1770 = vpop.f32.mrb[0].mxu0
        %v1771 = vadd.f32 0.0, %v1770
        %v1772 = vpop.f32.mrb[0].mxu0
        %1773 = vmatprep.mubr.f32.mxu0 0.0
        %1774 = vmatmul.mubr.f32.gmra.mrb[0].mxu0 %v1534
        %v1775 = vpop.f32.mrb[0].mxu0
        %v1776 = vadd.f32 0.0, %v1775
        %v1777 = vpop.f32.mrb[0].mxu0
        %1778 = vmatprep.mubr.f32.mxu0 0.0
        %1779 = vmatmul.mubr.f32.gmra.mrb[0].mxu0 %v1537
        %v1780 = vpop.f32.mrb[0].mxu0
        %v1781 = vadd.f32 0.0, %v1780
        %v1782 = vpop.f32.mrb[0].mxu0
        %1783 = vmatprep.mubr.f32.mxu0 0.0
        %1784 = vmatmul.mubr.f32.gmra.mrb[0].mxu0 %v1540
        %v1785 = vpop.f32.mrb[0].mxu0
        %v1786 = vadd.f32 0.0, %v1785
        %v1787 = vpop.f32.mrb[0].mxu0
        %1788 = vmatprep.mubr.f32.mxu0 0.0
        %1789 = vmatmul.mubr.f32.gmra.mrb[0].mxu0 %v1543
        %v1790 = vpop.f32.mrb[0].mxu0
        %v1791 = vadd.f32 0.0, %v1790
        %v1792 = vpop.f32.mrb[0].mxu0
        %1793 = vmatprep.mubr.f32.mxu0 0.0
        %1794 = vmatmul.mubr.f32.gmra.mrb[0].mxu0 %v1546
        %v1795 = vpop.f32.mrb[0].mxu0
        %v1796 = vadd.f32 0.0, %v1795
        %v1797 = vpop.f32.mrb[0].mxu0
        %1798 = vmatprep.mubr.f32.mxu0 0.0
        %1799 = vmatmul.mubr.f32.gmra.mrb[0].mxu0 %v1549
        %v1800 = vpop.f32.mrb[0].mxu0
        %v1801 = vadd.f32 0.0, %v1800
        %v1802 = vpop.f32.mrb[0].mxu0
        %1803 = vmatprep.mubr.f32.mxu0 0.0
        %1804 = vmatmul.mubr.f32.gmra.mrb[0].mxu0 %v1552
        %v1805 = vpop.f32.mrb[0].mxu0
        %v1806 = vadd.f32 0.0, %v1805
        %v1807 = vpop.f32.mrb[0].mxu0
        %1808 = vmatprep.mubr.f32.mxu0 0.0
        %1809 = vmatmul.mubr.f32.gmra.mrb[0].mxu0 %v1555
        %v1810 = vpop.f32.mrb[0].mxu0
        %v1811 = vadd.f32 0.0, %v1810
        %v1812 = vpop.f32.mrb[0].mxu0
        %1813 = vmatprep.mubr.f32.mxu0 0.0
        %1814 = vmatmul.mubr.f32.gmra.mrb[0].mxu0 %v1558
        %v1815 = vpop.f32.mrb[0].mxu0
        %v1816 = vadd.f32 0.0, %v1815
        %v1817 = vpop.f32.mrb[0].mxu0
        %1818 = vmatprep.mubr.f32.mxu0 0.0
        %1819 = vmatmul.mubr.f32.gmra.mrb[0].mxu0 %v1561
        %v1820 = vpop.f32.mrb[0].mxu0
        %v1821 = vadd.f32 0.0, %v1820
        %v1822 = vpop.f32.mrb[0].mxu0
        %1823 = vmatprep.mubr.f32.mxu0 0.0
        %1824 = vmatmul.mubr.f32.gmra.mrb[0].mxu0 %v1564
        %v1825 = vpop.f32.mrb[0].mxu0
        %v1826 = vadd.f32 0.0, %v1825
        %v1827 = vpop.f32.mrb[0].mxu0
        %1828 = vmatprep.mubr.f32.mxu0 0.0
        %1829 = vmatmul.mubr.f32.gmra.mrb[0].mxu0 %v1567
        %v1830 = vpop.f32.mrb[0].mxu0
        %v1831 = vadd.f32 0.0, %v1830
        %v1832 = vpop.f32.mrb[0].mxu0
        %1833 = vmatprep.mubr.f32.mxu0 0.0
        %1834 = vmatmul.mubr.f32.gmra.mrb[0].mxu0 %v1570
        %v1835 = vpop.f32.mrb[0].mxu0
        %v1836 = vadd.f32 0.0, %v1835
        %v1837 = vpop.f32.mrb[0].mxu0
        %1838 = vmatprep.mubr.f32.mxu0 0.0
        %1839 = vmatmul.mubr.f32.gmra.mrb[0].mxu0 %v1573
        %v1840 = vpop.f32.mrb[0].mxu0
        %v1841 = vadd.f32 0.0, %v1840
        %v1842 = vpop.f32.mrb[0].mxu0
        %1843 = vmatprep.mubr.f32.mxu0 0.0
        %1844 = vmatmul.mubr.f32.gmra.mrb[0].mxu0 %v1576
        %v1845 = vpop.f32.mrb[0].mxu0
        %v1846 = vadd.f32 0.0, %v1845
        %v1847 = vpop.f32.mrb[0].mxu0
        %1848 = vmatprep.mubr.f32.mxu0 0.0
        %1849 = vmatmul.mubr.f32.gmra.mrb[0].mxu0 %v1579
        %v1850 = vpop.f32.mrb[0].mxu0
        %v1851 = vadd.f32 0.0, %v1850
        %v1852 = vpop.f32.mrb[0].mxu0
        %1853 = vmatprep.mubr.f32.mxu0 0.0
        %1854 = vmatmul.mubr.f32.gmra.mrb[0].mxu0 %v1582
        %v1855 = vpop.f32.mrb[0].mxu0
        %v1856 = vadd.f32 0.0, %v1855
        %v1857 = vpop.f32.mrb[0].mxu0
        %1858 = vmatprep.mubr.f32.mxu0 0.0
        %1859 = vmatmul.mubr.f32.gmra.mrb[0].mxu0 %v1585
        %v1860 = vpop.f32.mrb[0].mxu0
        %v1861 = vadd.f32 0.0, %v1860
        %v1862 = vpop.f32.mrb[0].mxu0
        %1863 = vmatprep.mubr.f32.mxu0 0.0
        %1864 = vmatmul.mubr.f32.gmra.mrb[0].mxu0 %v1588
        %v1865 = vpop.f32.mrb[0].mxu0
        %v1866 = vadd.f32 0.0, %v1865
        %v1867 = vpop.f32.mrb[0].mxu0
        %1868 = vmatprep.mubr.f32.mxu0 0.0
        %1869 = vmatmul.mubr.f32.gmra.mrb[0].mxu0 %v1591
        %v1870 = vpop.f32.mrb[0].mxu0
        %v1871 = vadd.f32 0.0, %v1870
        %v1872 = vpop.f32.mrb[0].mxu0
        %1873 = vmatprep.mubr.f32.mxu0 0.0
        %1874 = vmatmul.mubr.f32.gmra.mrb[0].mxu0 %v1594
        %v1875 = vpop.f32.mrb[0].mxu0
        %v1876 = vadd.f32 0.0, %v1875
        %v1877 = vpop.f32.mrb[0].mxu0
        %1878 = vmatprep.mubr.f32.mxu0 0.0
        %1879 = vmatmul.mubr.f32.gmra.mrb[0].mxu0 %v1597
        %v1880 = vpop.f32.mrb[0].mxu0
        %v1881 = vadd.f32 0.0, %v1880
        %v1882 = vpop.f32.mrb[0].mxu0
        %1883 = vmatprep.mubr.f32.mxu0 0.0
        %1884 = vmatmul.mubr.f32.gmra.mrb[0].mxu0 %v1600
        %v1885 = vpop.f32.mrb[0].mxu0
        %v1886 = vadd.f32 0.0, %v1885
        %v1887 = vpop.f32.mrb[0].mxu0
        %1888 = vmatprep.mubr.f32.mxu0 0.0
        %1889 = vmatmul.mubr.f32.gmra.mrb[0].mxu0 %v1603
        %v1890 = vpop.f32.mrb[0].mxu0
        %v1891 = vadd.f32 0.0, %v1890
        %v1892 = vpop.f32.mrb[0].mxu0
        %1893 = vmatprep.mubr.f32.mxu0 0.0
        %1894 = vmatmul.mubr.f32.gmra.mrb[0].mxu0 %v1606
        %v1895 = vpop.f32.mrb[0].mxu0
        %v1896 = vadd.f32 0.0, %v1895
        %v1897 = vpop.f32.mrb[0].mxu0
        %1898 = vmatprep.mubr.f32.mxu0 0.0
        %1899 = vmatmul.mubr.f32.gmra.mrb[0].mxu0 %v1609
        %v1900 = vpop.f32.mrb[0].mxu0
        %v1901 = vadd.f32 0.0, %v1900
        %v1902 = vpop.f32.mrb[0].mxu0
        %1903 = vmatprep.mubr.f32.mxu0 0.0
        %1904 = vmatmul.mubr.f32.gmra.mrb[0].mxu0 %v1612
        %v1905 = vpop.f32.mrb[0].mxu0
        %v1906 = vadd.f32 0.0, %v1905
        %v1907 = vpop.f32.mrb[0].mxu0
        %1908 = vmatprep.mubr.f32.mxu0 0.0
        %1909 = vmatmul.mubr.f32.gmra.mrb[0].mxu0 %v1615
        %v1910 = vpop.f32.mrb[0].mxu0
        %v1911 = vadd.f32 0.0, %v1910
        %v1912 = vpop.f32.mrb[0].mxu0
        %1913 = vmatprep.mubr.f32.mxu0 0.0
        %1914 = vmatmul.mubr.f32.gmra.mrb[0].mxu0 %v1618
        %v1915 = vpop.f32.mrb[0].mxu0
        %v1916 = vadd.f32 0.0, %v1915
        %v1917 = vpop.f32.mrb[0].mxu0
        %1918 = vmatprep.mubr.f32.mxu0 0.0
        %1919 = vmatmul.mubr.f32.gmra.mrb[0].mxu0 %v1621
        %v1920 = vpop.f32.mrb[0].mxu0
        %v1921 = vadd.f32 0.0, %v1920
        %v1922 = vpop.f32.mrb[0].mxu0
        %1923 = vmatprep.mubr.f32.mxu0 0.0
        %1924 = vmatmul.mubr.f32.gmra.mrb[0].mxu0 %v1624
        %v1925 = vpop.f32.mrb[0].mxu0
        %v1926 = vadd.f32 0.0, %v1925
        %v1927 = vpop.f32.mrb[0].mxu0
        %1928 = vmatprep.mubr.f32.mxu0 0.0
        %1929 = vmatmul.mubr.f32.gmra.mrb[0].mxu0 %v1627
        %v1930 = vpop.f32.mrb[0].mxu0
        %v1931 = vadd.f32 0.0, %v1930
        %v1932 = vpop.f32.mrb[0].mxu0
        %1933 = vdwg.mxu0
        %v1934 = vmax.f32 %v1389, %v1696
        %v1935 = vmax.f32 %v1390, %v1701
        %v1936 = vmax.f32 %v1391, %v1706
        %v1937 = vmax.f32 %v1392, %v1711
        %v1938 = vmax.f32 %v1393, %v1716
        %v1939 = vmax.f32 %v1394, %v1721
        %v1940 = vmax.f32 %v1395, %v1726
        %v1941 = vmax.f32 %v1396, %v1731
        %v1942 = vmax.f32 %v1397, %v1736
        %v1943 = vmax.f32 %v1398, %v1741
        %v1944 = vmax.f32 %v1399, %v1746
        %v1945 = vmax.f32 %v1400, %v1751
        %v1946 = vmax.f32 %v1401, %v1756
        %v1947 = vmax.f32 %v1402, %v1761
        %v1948 = vmax.f32 %v1403, %v1766
        %v1949 = vmax.f32 %v1404, %v1771
        %v1950 = vmax.f32 %v1405, %v1776
        %v1951 = vmax.f32 %v1406, %v1781
        %v1952 = vmax.f32 %v1407, %v1786
        %v1953 = vmax.f32 %v1408, %v1791
        %v1954 = vmax.f32 %v1409, %v1796
        %v1955 = vmax.f32 %v1410, %v1801
        %v1956 = vmax.f32 %v1411, %v1806
        %v1957 = vmax.f32 %v1412, %v1811
        %v1958 = vmax.f32 %v1413, %v1816
        %v1959 = vmax.f32 %v1414, %v1821
        %v1960 = vmax.f32 %v1415, %v1826
        %v1961 = vmax.f32 %v1416, %v1831
        %v1962 = vmax.f32 %v1417, %v1836
        %v1963 = vmax.f32 %v1418, %v1841
        %v1964 = vmax.f32 %v1419, %v1846
        %v1965 = vmax.f32 %v1420, %v1851
        %v1966 = vmax.f32 %v1421, %v1856
        %v1967 = vmax.f32 %v1422, %v1861
        %v1968 = vmax.f32 %v1423, %v1866
        %v1969 = vmax.f32 %v1424, %v1871
        %v1970 = vmax.f32 %v1425, %v1876
        %v1971 = vmax.f32 %v1426, %v1881
        %v1972 = vmax.f32 %v1427, %v1886
        %v1973 = vmax.f32 %v1428, %v1891
        %v1974 = vmax.f32 %v1429, %v1896
        %v1975 = vmax.f32 %v1430, %v1901
        %v1976 = vmax.f32 %v1431, %v1906
        %v1977 = vmax.f32 %v1432, %v1911
        %v1978 = vmax.f32 %v1433, %v1916
        %v1979 = vmax.f32 %v1434, %v1921
        %v1980 = vmax.f32 %v1435, %v1926
        %v1981 = vmax.f32 %v1436, %v1931
        %v1982 = vld [vmem:[%s388 + $0x240] sm:$0xff]
        %v1983 = vld [vmem:[%s388 + $0x248] sm:$0xff]
        %v1984 = vld [vmem:[%s388 + $0x250] sm:$0xff]
        %v1985 = vld [vmem:[%s388 + $0x258] sm:$0xff]
        %v1986 = vld [vmem:[%s388 + $0x260] sm:$0xff]
        %v1987 = vld [vmem:[%s388 + $0x268] sm:$0xff]
        %v1988 = vld [vmem:[%s388 + $0x270] sm:$0xff]
        %v1989 = vld [vmem:[%s388 + $0x278] sm:$0xff]
        %v1990 = vld [vmem:[%s388 + $0x280] sm:$0xff]
        %v1991 = vld [vmem:[%s388 + $0x288] sm:$0xff]
        %v1992 = vld [vmem:[%s388 + $0x290] sm:$0xff]
        %v1993 = vld [vmem:[%s388 + $0x298] sm:$0xff]
        %v1994 = vld [vmem:[%s388 + $0x2a0] sm:$0xff]
        %v1995 = vld [vmem:[%s388 + $0x2a8] sm:$0xff]
        %v1996 = vld [vmem:[%s388 + $0x2b0] sm:$0xff]
        %v1997 = vld [vmem:[%s388 + $0x2b8] sm:$0xff]
        %v1998 = vld [vmem:[%s388 + $0x2c0] sm:$0xff]
        %v1999 = vld [vmem:[%s388 + $0x2c8] sm:$0xff]
        %v2000 = vld [vmem:[%s388 + $0x2d0] sm:$0xff]
        %v2001 = vld [vmem:[%s388 + $0x2d8] sm:$0xff]
        %v2002 = vld [vmem:[%s388 + $0x2e0] sm:$0xff]
        %v2003 = vld [vmem:[%s388 + $0x2e8] sm:$0xff]
        %v2004 = vld [vmem:[%s388 + $0x2f0] sm:$0xff]
        %v2005 = vld [vmem:[%s388 + $0x2f8] sm:$0xff]
        %v2006 = vld [vmem:[%s388 + $0x540] sm:$0xff]
        %v2007 = vld [vmem:[%s388 + $0x548] sm:$0xff]
        %v2008 = vld [vmem:[%s388 + $0x550] sm:$0xff]
        %v2009 = vld [vmem:[%s388 + $0x558] sm:$0xff]
        %v2010 = vld [vmem:[%s388 + $0x560] sm:$0xff]
        %v2011 = vld [vmem:[%s388 + $0x568] sm:$0xff]
        %v2012 = vld [vmem:[%s388 + $0x570] sm:$0xff]
        %v2013 = vld [vmem:[%s388 + $0x578] sm:$0xff]
        %v2014 = vld [vmem:[%s388 + $0x580] sm:$0xff]
        %v2015 = vld [vmem:[%s388 + $0x588] sm:$0xff]
        %v2016 = vld [vmem:[%s388 + $0x590] sm:$0xff]
        %v2017 = vld [vmem:[%s388 + $0x598] sm:$0xff]
        %v2018 = vld [vmem:[%s388 + $0x5a0] sm:$0xff]
        %v2019 = vld [vmem:[%s388 + $0x5a8] sm:$0xff]
        %v2020 = vld [vmem:[%s388 + $0x5b0] sm:$0xff]
        %v2021 = vld [vmem:[%s388 + $0x5b8] sm:$0xff]
        %v2022 = vld [vmem:[%s388 + $0x5c0] sm:$0xff]
        %v2023 = vld [vmem:[%s388 + $0x5c8] sm:$0xff]
        %v2024 = vld [vmem:[%s388 + $0x5d0] sm:$0xff]
        %v2025 = vld [vmem:[%s388 + $0x5d8] sm:$0xff]
        %v2026 = vld [vmem:[%s388 + $0x5e0] sm:$0xff]
        %v2027 = vld [vmem:[%s388 + $0x5e8] sm:$0xff]
        %v2028 = vld [vmem:[%s388 + $0x5f0] sm:$0xff]
        %v2029 = vld [vmem:[%s388 + $0x5f8] sm:$0xff]
        %v2031 = vsel %vm442, %v1982, 0
        %v2034 = vsel %vm442, %v1983, 0
        %v2037 = vsel %vm442, %v1984, 0
        %v2040 = vsel %vm442, %v1985, 0
        %v2043 = vsel %vm442, %v1986, 0
        %v2046 = vsel %vm442, %v1987, 0
        %v2049 = vsel %vm442, %v1988, 0
        %v2052 = vsel %vm442, %v1989, 0
        %v2055 = vsel %vm442, %v1990, 0
        %v2058 = vsel %vm442, %v1991, 0
        %v2061 = vsel %vm442, %v1992, 0
        %v2064 = vsel %vm442, %v1993, 0
        %v2067 = vsel %vm442, %v1994, 0
        %v2070 = vsel %vm442, %v1995, 0
        %v2073 = vsel %vm442, %v1996, 0
        %v2076 = vsel %vm442, %v1997, 0
        %v2079 = vsel %vm442, %v1998, 0
        %v2082 = vsel %vm442, %v1999, 0
        %v2085 = vsel %vm442, %v2000, 0
        %v2088 = vsel %vm442, %v2001, 0
        %v2091 = vsel %vm442, %v2002, 0
        %v2094 = vsel %vm442, %v2003, 0
        %v2097 = vsel %vm442, %v2004, 0
        %v2100 = vsel %vm442, %v2005, 0
        %v2103 = vsel %vm442, %v2006, 0
        %v2106 = vsel %vm442, %v2007, 0
        %v2109 = vsel %vm442, %v2008, 0
        %v2112 = vsel %vm442, %v2009, 0
        %v2115 = vsel %vm442, %v2010, 0
        %v2118 = vsel %vm442, %v2011, 0
        %v2121 = vsel %vm442, %v2012, 0
        %v2124 = vsel %vm442, %v2013, 0
        %v2127 = vsel %vm442, %v2014, 0
        %v2130 = vsel %vm442, %v2015, 0
        %v2133 = vsel %vm442, %v2016, 0
        %v2136 = vsel %vm442, %v2017, 0
        %v2139 = vsel %vm442, %v2018, 0
        %v2142 = vsel %vm442, %v2019, 0
        %v2145 = vsel %vm442, %v2020, 0
        %v2148 = vsel %vm442, %v2021, 0
        %v2151 = vsel %vm442, %v2022, 0
        %v2154 = vsel %vm442, %v2023, 0
        %v2157 = vsel %vm442, %v2024, 0
        %v2160 = vsel %vm442, %v2025, 0
        %v2163 = vsel %vm442, %v2026, 0
        %v2166 = vsel %vm442, %v2027, 0
        %v2169 = vsel %vm442, %v2028, 0
        %v2172 = vsel %vm442, %v2029, 0
        %2174 = vmatprep.subr.mxu0 0.0
        %2175 = vmatpush1.msra.mxu0 %v438
        %2176 = vmatprep.subr.mxu0 0.0
        %2177 = vmatpush1.msra.mxu0 %v439
        %2178 = vmatprep.subr.mxu0 0.0
        %2179 = vmatpush1.msra.mxu0 %v440
        %2180 = vmatprep.subr.mxu0 0.0
        %2181 = vmatpush1.msra.mxu0 %v441
        %2182 = vmatprep.subr.mxu0 0.0
        %2183 = vmatpush1.msra.mxu0 0.0
        %2184 = vmatprep.subr.mxu0 0.0
        %2185 = vmatpush1.msra.mxu0 0.0
        %2186 = vmatprep.subr.mxu0 0.0
        %2187 = vmatpush1.msra.mxu0 0.0
        %2188 = vmatprep.subr.mxu0 0.0
        %2189 = vmatpush1.msra.mxu0 0.0
        %2190 = vmatprep.subr.mxu0 0.0
        %2191 = vmatpush1.msra.mxu0 0.0
        %2192 = vmatprep.subr.mxu0 0.0
        %2193 = vmatpush1.msra.mxu0 0.0
        %2194 = vmatprep.subr.mxu0 0.0
        %2195 = vmatpush1.msra.mxu0 0.0
        %2196 = vmatprep.subr.mxu0 0.0
        %2197 = vmatpush1.msra.mxu0 0.0
        %2198 = vmatprep.subr.mxu0 0.0
        %2199 = vmatpush1.msra.mxu0 0.0
        %2200 = vmatprep.subr.mxu0 0.0
        %2201 = vmatpush1.msra.mxu0 0.0
        %2202 = vmatprep.subr.mxu0 0.0
        %2203 = vmatpush1.msra.mxu0 0.0
        %2204 = vmatprep.subr.mxu0 0.0
        %2205 = vmatpush1.msra.mxu0 0.0
        %2206 = vmatprep.subr.mxu0 0.0
        %2207 = vmatpush1.msra.mxu0 0.0
        %2208 = vmatprep.subr.mxu0 0.0
        %2209 = vmatpush1.msra.mxu0 0.0
        %2210 = vmatprep.subr.mxu0 0.0
        %2211 = vmatpush1.msra.mxu0 0.0
        %2212 = vmatprep.subr.mxu0 0.0
        %2213 = vmatpush1.msra.mxu0 0.0
        %2214 = vmatprep.subr.mxu0 0.0
        %2215 = vmatpush1.msra.mxu0 0.0
        %2216 = vmatprep.subr.mxu0 0.0
        %2217 = vmatpush1.msra.mxu0 0.0
        %2218 = vmatprep.subr.mxu0 0.0
        %2219 = vmatpush1.msra.mxu0 0.0
        %2220 = vmatprep.subr.mxu0 0.0
        %2221 = vmatpush1.msra.mxu0 0.0
        %2222 = vmatprep.subr.mxu0 0.0
        %2223 = vmatpush1.msra.mxu0 0.0
        %2224 = vmatprep.subr.mxu0 0.0
        %2225 = vmatpush1.msra.mxu0 0.0
        %2226 = vmatprep.subr.mxu0 0.0
        %2227 = vmatpush1.msra.mxu0 0.0
        %2228 = vmatprep.subr.mxu0 0.0
        %2229 = vmatpush1.msra.mxu0 0.0
        %2230 = vmatprep.subr.mxu0 0.0
        %2231 = vmatpush1.msra.mxu0 0.0
        %2232 = vmatprep.subr.mxu0 0.0
        %2233 = vmatpush1.msra.mxu0 0.0
        %2234 = vmatprep.subr.mxu0 0.0
        %2235 = vmatpush1.msra.mxu0 0.0
        %2236 = vmatprep.subr.mxu0 0.0
        %2237 = vmatpush1.msra.mxu0 0.0
        %2238 = vmatprep.mubr.f32.mxu0 0.0
        %2239 = vmatmul.mubr.f32.gmra.mrb[0].mxu0 %v2031
        %v2240 = vpop.f32.mrb[0].mxu0
        %v2241 = vadd.f32 0.0, %v2240
        %v2242 = vpop.f32.mrb[0].mxu0
        %2243 = vmatprep.mubr.f32.mxu0 0.0
        %2244 = vmatmul.mubr.f32.gmra.mrb[0].mxu0 %v2034
        %v2245 = vpop.f32.mrb[0].mxu0
        %v2246 = vadd.f32 0.0, %v2245
        %v2247 = vpop.f32.mrb[0].mxu0
        %2248 = vmatprep.mubr.f32.mxu0 0.0
        %2249 = vmatmul.mubr.f32.gmra.mrb[0].mxu0 %v2037
        %v2250 = vpop.f32.mrb[0].mxu0
        %v2251 = vadd.f32 0.0, %v2250
        %v2252 = vpop.f32.mrb[0].mxu0
        %2253 = vmatprep.mubr.f32.mxu0 0.0
        %2254 = vmatmul.mubr.f32.gmra.mrb[0].mxu0 %v2040
        %v2255 = vpop.f32.mrb[0].mxu0
        %v2256 = vadd.f32 0.0, %v2255
        %v2257 = vpop.f32.mrb[0].mxu0
        %2258 = vmatprep.mubr.f32.mxu0 0.0
        %2259 = vmatmul.mubr.f32.gmra.mrb[0].mxu0 %v2043
        %v2260 = vpop.f32.mrb[0].mxu0
        %v2261 = vadd.f32 0.0, %v2260
        %v2262 = vpop.f32.mrb[0].mxu0
        %2263 = vmatprep.mubr.f32.mxu0 0.0
        %2264 = vmatmul.mubr.f32.gmra.mrb[0].mxu0 %v2046
        %v2265 = vpop.f32.mrb[0].mxu0
        %v2266 = vadd.f32 0.0, %v2265
        %v2267 = vpop.f32.mrb[0].mxu0
        %2268 = vmatprep.mubr.f32.mxu0 0.0
        %2269 = vmatmul.mubr.f32.gmra.mrb[0].mxu0 %v2049
        %v2270 = vpop.f32.mrb[0].mxu0
        %v2271 = vadd.f32 0.0, %v2270
        %v2272 = vpop.f32.mrb[0].mxu0
        %2273 = vmatprep.mubr.f32.mxu0 0.0
        %2274 = vmatmul.mubr.f32.gmra.mrb[0].mxu0 %v2052
        %v2275 = vpop.f32.mrb[0].mxu0
        %v2276 = vadd.f32 0.0, %v2275
        %v2277 = vpop.f32.mrb[0].mxu0
        %2278 = vmatprep.mubr.f32.mxu0 0.0
        %2279 = vmatmul.mubr.f32.gmra.mrb[0].mxu0 %v2055
        %v2280 = vpop.f32.mrb[0].mxu0
        %v2281 = vadd.f32 0.0, %v2280
        %v2282 = vpop.f32.mrb[0].mxu0
        %2283 = vmatprep.mubr.f32.mxu0 0.0
        %2284 = vmatmul.mubr.f32.gmra.mrb[0].mxu0 %v2058
        %v2285 = vpop.f32.mrb[0].mxu0
        %v2286 = vadd.f32 0.0, %v2285
        %v2287 = vpop.f32.mrb[0].mxu0
        %2288 = vmatprep.mubr.f32.mxu0 0.0
        %2289 = vmatmul.mubr.f32.gmra.mrb[0].mxu0 %v2061
        %v2290 = vpop.f32.mrb[0].mxu0
        %v2291 = vadd.f32 0.0, %v2290
        %v2292 = vpop.f32.mrb[0].mxu0
        %2293 = vmatprep.mubr.f32.mxu0 0.0
        %2294 = vmatmul.mubr.f32.gmra.mrb[0].mxu0 %v2064
        %v2295 = vpop.f32.mrb[0].mxu0
        %v2296 = vadd.f32 0.0, %v2295
        %v2297 = vpop.f32.mrb[0].mxu0
        %2298 = vmatprep.mubr.f32.mxu0 0.0
        %2299 = vmatmul.mubr.f32.gmra.mrb[0].mxu0 %v2067
        %v2300 = vpop.f32.mrb[0].mxu0
        %v2301 = vadd.f32 0.0, %v2300
        %v2302 = vpop.f32.mrb[0].mxu0
        %2303 = vmatprep.mubr.f32.mxu0 0.0
        %2304 = vmatmul.mubr.f32.gmra.mrb[0].mxu0 %v2070
        %v2305 = vpop.f32.mrb[0].mxu0
        %v2306 = vadd.f32 0.0, %v2305
        %v2307 = vpop.f32.mrb[0].mxu0
        %2308 = vmatprep.mubr.f32.mxu0 0.0
        %2309 = vmatmul.mubr.f32.gmra.mrb[0].mxu0 %v2073
        %v2310 = vpop.f32.mrb[0].mxu0
        %v2311 = vadd.f32 0.0, %v2310
        %v2312 = vpop.f32.mrb[0].mxu0
        %2313 = vmatprep.mubr.f32.mxu0 0.0
        %2314 = vmatmul.mubr.f32.gmra.mrb[0].mxu0 %v2076
        %v2315 = vpop.f32.mrb[0].mxu0
        %v2316 = vadd.f32 0.0, %v2315
        %v2317 = vpop.f32.mrb[0].mxu0
        %2318 = vmatprep.mubr.f32.mxu0 0.0
        %2319 = vmatmul.mubr.f32.gmra.mrb[0].mxu0 %v2079
        %v2320 = vpop.f32.mrb[0].mxu0
        %v2321 = vadd.f32 0.0, %v2320
        %v2322 = vpop.f32.mrb[0].mxu0
        %2323 = vmatprep.mubr.f32.mxu0 0.0
        %2324 = vmatmul.mubr.f32.gmra.mrb[0].mxu0 %v2082
        %v2325 = vpop.f32.mrb[0].mxu0
        %v2326 = vadd.f32 0.0, %v2325
        %v2327 = vpop.f32.mrb[0].mxu0
        %2328 = vmatprep.mubr.f32.mxu0 0.0
        %2329 = vmatmul.mubr.f32.gmra.mrb[0].mxu0 %v2085
        %v2330 = vpop.f32.mrb[0].mxu0
        %v2331 = vadd.f32 0.0, %v2330
        %v2332 = vpop.f32.mrb[0].mxu0
        %2333 = vmatprep.mubr.f32.mxu0 0.0
        %2334 = vmatmul.mubr.f32.gmra.mrb[0].mxu0 %v2088
        %v2335 = vpop.f32.mrb[0].mxu0
        %v2336 = vadd.f32 0.0, %v2335
        %v2337 = vpop.f32.mrb[0].mxu0
        %2338 = vmatprep.mubr.f32.mxu0 0.0
        %2339 = vmatmul.mubr.f32.gmra.mrb[0].mxu0 %v2091
        %v2340 = vpop.f32.mrb[0].mxu0
        %v2341 = vadd.f32 0.0, %v2340
        %v2342 = vpop.f32.mrb[0].mxu0
        %2343 = vmatprep.mubr.f32.mxu0 0.0
        %2344 = vmatmul.mubr.f32.gmra.mrb[0].mxu0 %v2094
        %v2345 = vpop.f32.mrb[0].mxu0
        %v2346 = vadd.f32 0.0, %v2345
        %v2347 = vpop.f32.mrb[0].mxu0
        %2348 = vmatprep.mubr.f32.mxu0 0.0
        %2349 = vmatmul.mubr.f32.gmra.mrb[0].mxu0 %v2097
        %v2350 = vpop.f32.mrb[0].mxu0
        %v2351 = vadd.f32 0.0, %v2350
        %v2352 = vpop.f32.mrb[0].mxu0
        %2353 = vmatprep.mubr.f32.mxu0 0.0
        %2354 = vmatmul.mubr.f32.gmra.mrb[0].mxu0 %v2100
        %v2355 = vpop.f32.mrb[0].mxu0
        %v2356 = vadd.f32 0.0, %v2355
        %v2357 = vpop.f32.mrb[0].mxu0
        %2358 = vmatprep.mubr.f32.mxu0 0.0
        %2359 = vmatmul.mubr.f32.gmra.mrb[0].mxu0 %v2103
        %v2360 = vpop.f32.mrb[0].mxu0
        %v2361 = vadd.f32 0.0, %v2360
        %v2362 = vpop.f32.mrb[0].mxu0
        %2363 = vmatprep.mubr.f32.mxu0 0.0
        %2364 = vmatmul.mubr.f32.gmra.mrb[0].mxu0 %v2106
        %v2365 = vpop.f32.mrb[0].mxu0
        %v2366 = vadd.f32 0.0, %v2365
        %v2367 = vpop.f32.mrb[0].mxu0
        %2368 = vmatprep.mubr.f32.mxu0 0.0
        %2369 = vmatmul.mubr.f32.gmra.mrb[0].mxu0 %v2109
        %v2370 = vpop.f32.mrb[0].mxu0
        %v2371 = vadd.f32 0.0, %v2370
        %v2372 = vpop.f32.mrb[0].mxu0
        %2373 = vmatprep.mubr.f32.mxu0 0.0
        %2374 = vmatmul.mubr.f32.gmra.mrb[0].mxu0 %v2112
        %v2375 = vpop.f32.mrb[0].mxu0
        %v2376 = vadd.f32 0.0, %v2375
        %v2377 = vpop.f32.mrb[0].mxu0
        %2378 = vmatprep.mubr.f32.mxu0 0.0
        %2379 = vmatmul.mubr.f32.gmra.mrb[0].mxu0 %v2115
        %v2380 = vpop.f32.mrb[0].mxu0
        %v2381 = vadd.f32 0.0, %v2380
        %v2382 = vpop.f32.mrb[0].mxu0
        %2383 = vmatprep.mubr.f32.mxu0 0.0
        %2384 = vmatmul.mubr.f32.gmra.mrb[0].mxu0 %v2118
        %v2385 = vpop.f32.mrb[0].mxu0
        %v2386 = vadd.f32 0.0, %v2385
        %v2387 = vpop.f32.mrb[0].mxu0
        %2388 = vmatprep.mubr.f32.mxu0 0.0
        %2389 = vmatmul.mubr.f32.gmra.mrb[0].mxu0 %v2121
        %v2390 = vpop.f32.mrb[0].mxu0
        %v2391 = vadd.f32 0.0, %v2390
        %v2392 = vpop.f32.mrb[0].mxu0
        %2393 = vmatprep.mubr.f32.mxu0 0.0
        %2394 = vmatmul.mubr.f32.gmra.mrb[0].mxu0 %v2124
        %v2395 = vpop.f32.mrb[0].mxu0
        %v2396 = vadd.f32 0.0, %v2395
        %v2397 = vpop.f32.mrb[0].mxu0
        %2398 = vmatprep.mubr.f32.mxu0 0.0
        %2399 = vmatmul.mubr.f32.gmra.mrb[0].mxu0 %v2127
        %v2400 = vpop.f32.mrb[0].mxu0
        %v2401 = vadd.f32 0.0, %v2400
        %v2402 = vpop.f32.mrb[0].mxu0
        %2403 = vmatprep.mubr.f32.mxu0 0.0
        %2404 = vmatmul.mubr.f32.gmra.mrb[0].mxu0 %v2130
        %v2405 = vpop.f32.mrb[0].mxu0
        %v2406 = vadd.f32 0.0, %v2405
        %v2407 = vpop.f32.mrb[0].mxu0
        %2408 = vmatprep.mubr.f32.mxu0 0.0
        %2409 = vmatmul.mubr.f32.gmra.mrb[0].mxu0 %v2133
        %v2410 = vpop.f32.mrb[0].mxu0
        %v2411 = vadd.f32 0.0, %v2410
        %v2412 = vpop.f32.mrb[0].mxu0
        %2413 = vmatprep.mubr.f32.mxu0 0.0
        %2414 = vmatmul.mubr.f32.gmra.mrb[0].mxu0 %v2136
        %v2415 = vpop.f32.mrb[0].mxu0
        %v2416 = vadd.f32 0.0, %v2415
        %v2417 = vpop.f32.mrb[0].mxu0
        %2418 = vmatprep.mubr.f32.mxu0 0.0
        %2419 = vmatmul.mubr.f32.gmra.mrb[0].mxu0 %v2139
        %v2420 = vpop.f32.mrb[0].mxu0
        %v2421 = vadd.f32 0.0, %v2420
        %v2422 = vpop.f32.mrb[0].mxu0
        %2423 = vmatprep.mubr.f32.mxu0 0.0
        %2424 = vmatmul.mubr.f32.gmra.mrb[0].mxu0 %v2142
        %v2425 = vpop.f32.mrb[0].mxu0
        %v2426 = vadd.f32 0.0, %v2425
        %v2427 = vpop.f32.mrb[0].mxu0
        %2428 = vmatprep.mubr.f32.mxu0 0.0
        %2429 = vmatmul.mubr.f32.gmra.mrb[0].mxu0 %v2145
        %v2430 = vpop.f32.mrb[0].mxu0
        %v2431 = vadd.f32 0.0, %v2430
        %v2432 = vpop.f32.mrb[0].mxu0
        %2433 = vmatprep.mubr.f32.mxu0 0.0
        %2434 = vmatmul.mubr.f32.gmra.mrb[0].mxu0 %v2148
        %v2435 = vpop.f32.mrb[0].mxu0
        %v2436 = vadd.f32 0.0, %v2435
        %v2437 = vpop.f32.mrb[0].mxu0
        %2438 = vmatprep.mubr.f32.mxu0 0.0
        %2439 = vmatmul.mubr.f32.gmra.mrb[0].mxu0 %v2151
        %v2440 = vpop.f32.mrb[0].mxu0
        %v2441 = vadd.f32 0.0, %v2440
        %v2442 = vpop.f32.mrb[0].mxu0
        %2443 = vmatprep.mubr.f32.mxu0 0.0
        %2444 = vmatmul.mubr.f32.gmra.mrb[0].mxu0 %v2154
        %v2445 = vpop.f32.mrb[0].mxu0
        %v2446 = vadd.f32 0.0, %v2445
        %v2447 = vpop.f32.mrb[0].mxu0
        %2448 = vmatprep.mubr.f32.mxu0 0.0
        %2449 = vmatmul.mubr.f32.gmra.mrb[0].mxu0 %v2157
        %v2450 = vpop.f32.mrb[0].mxu0
        %v2451 = vadd.f32 0.0, %v2450
        %v2452 = vpop.f32.mrb[0].mxu0
        %2453 = vmatprep.mubr.f32.mxu0 0.0
        %2454 = vmatmul.mubr.f32.gmra.mrb[0].mxu0 %v2160
        %v2455 = vpop.f32.mrb[0].mxu0
        %v2456 = vadd.f32 0.0, %v2455
        %v2457 = vpop.f32.mrb[0].mxu0
        %2458 = vmatprep.mubr.f32.mxu0 0.0
        %2459 = vmatmul.mubr.f32.gmra.mrb[0].mxu0 %v2163
        %v2460 = vpop.f32.mrb[0].mxu0
        %v2461 = vadd.f32 0.0, %v2460
        %v2462 = vpop.f32.mrb[0].mxu0
        %2463 = vmatprep.mubr.f32.mxu0 0.0
        %2464 = vmatmul.mubr.f32.gmra.mrb[0].mxu0 %v2166
        %v2465 = vpop.f32.mrb[0].mxu0
        %v2466 = vadd.f32 0.0, %v2465
        %v2467 = vpop.f32.mrb[0].mxu0
        %2468 = vmatprep.mubr.f32.mxu0 0.0
        %2469 = vmatmul.mubr.f32.gmra.mrb[0].mxu0 %v2169
        %v2470 = vpop.f32.mrb[0].mxu0
        %v2471 = vadd.f32 0.0, %v2470
        %v2472 = vpop.f32.mrb[0].mxu0
        %2473 = vmatprep.mubr.f32.mxu0 0.0
        %2474 = vmatmul.mubr.f32.gmra.mrb[0].mxu0 %v2172
        %v2475 = vpop.f32.mrb[0].mxu0
        %v2476 = vadd.f32 0.0, %v2475
        %v2477 = vpop.f32.mrb[0].mxu0
        %2478 = vdwg.mxu0
        %v2479 = vmax.f32 %v1934, %v2241
        %v2480 = vmax.f32 %v1935, %v2246
        %v2481 = vmax.f32 %v1936, %v2251
        %v2482 = vmax.f32 %v1937, %v2256
        %v2483 = vmax.f32 %v1938, %v2261
        %v2484 = vmax.f32 %v1939, %v2266
        %v2485 = vmax.f32 %v1940, %v2271
        %v2486 = vmax.f32 %v1941, %v2276
        %v2487 = vmax.f32 %v1942, %v2281
        %v2488 = vmax.f32 %v1943, %v2286
        %v2489 = vmax.f32 %v1944, %v2291
        %v2490 = vmax.f32 %v1945, %v2296
        %v2491 = vmax.f32 %v1946, %v2301
        %v2492 = vmax.f32 %v1947, %v2306
        %v2493 = vmax.f32 %v1948, %v2311
        %v2494 = vmax.f32 %v1949, %v2316
        %v2495 = vmax.f32 %v1950, %v2321
        %v2496 = vmax.f32 %v1951, %v2326
        %v2497 = vmax.f32 %v1952, %v2331
        %v2498 = vmax.f32 %v1953, %v2336
        %v2499 = vmax.f32 %v1954, %v2341
        %v2500 = vmax.f32 %v1955, %v2346
        %v2501 = vmax.f32 %v1956, %v2351
        %v2502 = vmax.f32 %v1957, %v2356
        %v2503 = vmax.f32 %v1958, %v2361
        %v2504 = vmax.f32 %v1959, %v2366
        %v2505 = vmax.f32 %v1960, %v2371
        %v2506 = vmax.f32 %v1961, %v2376
        %v2507 = vmax.f32 %v1962, %v2381
        %v2508 = vmax.f32 %v1963, %v2386
        %v2509 = vmax.f32 %v1964, %v2391
        %v2510 = vmax.f32 %v1965, %v2396
        %v2511 = vmax.f32 %v1966, %v2401
        %v2512 = vmax.f32 %v1967, %v2406
        %v2513 = vmax.f32 %v1968, %v2411
        %v2514 = vmax.f32 %v1969, %v2416
        %v2515 = vmax.f32 %v1970, %v2421
        %v2516 = vmax.f32 %v1971, %v2426
        %v2517 = vmax.f32 %v1972, %v2431
        %v2518 = vmax.f32 %v1973, %v2436
        %v2519 = vmax.f32 %v1974, %v2441
        %v2520 = vmax.f32 %v1975, %v2446
        %v2521 = vmax.f32 %v1976, %v2451
        %v2522 = vmax.f32 %v1977, %v2456
        %v2523 = vmax.f32 %v1978, %v2461
        %v2524 = vmax.f32 %v1979, %v2466
        %v2525 = vmax.f32 %v1980, %v2471
        %v2526 = vmax.f32 %v1981, %v2476
        %v2527 = vld [vmem:[%s2] sm:$0x1]
        %v2529 = vlaneseq
        %v2530 = vshrl.u32 %v2529, 7
        %v2531 = vsub.s32 0, %v2530
        %v2532 = vrot.slane %v2527, %v2531
        %v2534 = vadd.f32 %v2479, %v2532
        %v2535 = vadd.f32 %v2480, %v2532
        %v2536 = vadd.f32 %v2481, %v2532
        %v2537 = vadd.f32 %v2482, %v2532
        %v2538 = vadd.f32 %v2483, %v2532
        %v2539 = vadd.f32 %v2484, %v2532
        %v2540 = vadd.f32 %v2485, %v2532
        %v2541 = vadd.f32 %v2486, %v2532
        %v2542 = vadd.f32 %v2487, %v2532
        %v2543 = vadd.f32 %v2488, %v2532
        %v2544 = vadd.f32 %v2489, %v2532
        %v2545 = vadd.f32 %v2490, %v2532
        %v2546 = vadd.f32 %v2491, %v2532
        %v2547 = vadd.f32 %v2492, %v2532
        %v2548 = vadd.f32 %v2493, %v2532
        %v2549 = vadd.f32 %v2494, %v2532
        %v2550 = vadd.f32 %v2495, %v2532
        %v2551 = vadd.f32 %v2496, %v2532
        %v2552 = vadd.f32 %v2497, %v2532
        %v2553 = vadd.f32 %v2498, %v2532
        %v2554 = vadd.f32 %v2499, %v2532
        %v2555 = vadd.f32 %v2500, %v2532
        %v2556 = vadd.f32 %v2501, %v2532
        %v2557 = vadd.f32 %v2502, %v2532
        %v2558 = vadd.f32 %v2503, %v2532
        %v2559 = vadd.f32 %v2504, %v2532
        %v2560 = vadd.f32 %v2505, %v2532
        %v2561 = vadd.f32 %v2506, %v2532
        %v2562 = vadd.f32 %v2507, %v2532
        %v2563 = vadd.f32 %v2508, %v2532
        %v2564 = vadd.f32 %v2509, %v2532
        %v2565 = vadd.f32 %v2510, %v2532
        %v2566 = vadd.f32 %v2511, %v2532
        %v2567 = vadd.f32 %v2512, %v2532
        %v2568 = vadd.f32 %v2513, %v2532
        %v2569 = vadd.f32 %v2514, %v2532
        %v2570 = vadd.f32 %v2515, %v2532
        %v2571 = vadd.f32 %v2516, %v2532
        %v2572 = vadd.f32 %v2517, %v2532
        %v2573 = vadd.f32 %v2518, %v2532
        %v2574 = vadd.f32 %v2519, %v2532
        %v2575 = vadd.f32 %v2520, %v2532
        %v2576 = vadd.f32 %v2521, %v2532
        %v2577 = vadd.f32 %v2522, %v2532
        %v2578 = vadd.f32 %v2523, %v2532
        %v2579 = vadd.f32 %v2524, %v2532
        %v2580 = vadd.f32 %v2525, %v2532
        %v2581 = vadd.f32 %v2526, %v2532
        %v2582 = vmax.f32 %v2534, 0.0
        %v2583 = vmax.f32 %v2535, 0.0
        %v2584 = vmax.f32 %v2536, 0.0
        %v2585 = vmax.f32 %v2537, 0.0
        %v2586 = vmax.f32 %v2538, 0.0
        %v2587 = vmax.f32 %v2539, 0.0
        %v2588 = vmax.f32 %v2540, 0.0
        %v2589 = vmax.f32 %v2541, 0.0
        %v2590 = vmax.f32 %v2542, 0.0
        %v2591 = vmax.f32 %v2543, 0.0
        %v2592 = vmax.f32 %v2544, 0.0
        %v2593 = vmax.f32 %v2545, 0.0
        %v2594 = vmax.f32 %v2546, 0.0
        %v2595 = vmax.f32 %v2547, 0.0
        %v2596 = vmax.f32 %v2548, 0.0
        %v2597 = vmax.f32 %v2549, 0.0
        %v2598 = vmax.f32 %v2550, 0.0
        %v2599 = vmax.f32 %v2551, 0.0
        %v2600 = vmax.f32 %v2552, 0.0
        %v2601 = vmax.f32 %v2553, 0.0
        %v2602 = vmax.f32 %v2554, 0.0
        %v2603 = vmax.f32 %v2555, 0.0
        %v2604 = vmax.f32 %v2556, 0.0
        %v2605 = vmax.f32 %v2557, 0.0
        %v2606 = vmax.f32 %v2558, 0.0
        %v2607 = vmax.f32 %v2559, 0.0
        %v2608 = vmax.f32 %v2560, 0.0
        %v2609 = vmax.f32 %v2561, 0.0
        %v2610 = vmax.f32 %v2562, 0.0
        %v2611 = vmax.f32 %v2563, 0.0
        %v2612 = vmax.f32 %v2564, 0.0
        %v2613 = vmax.f32 %v2565, 0.0
        %v2614 = vmax.f32 %v2566, 0.0
        %v2615 = vmax.f32 %v2567, 0.0
        %v2616 = vmax.f32 %v2568, 0.0
        %v2617 = vmax.f32 %v2569, 0.0
        %v2618 = vmax.f32 %v2570, 0.0
        %v2619 = vmax.f32 %v2571, 0.0
        %v2620 = vmax.f32 %v2572, 0.0
        %v2621 = vmax.f32 %v2573, 0.0
        %v2622 = vmax.f32 %v2574, 0.0
        %v2623 = vmax.f32 %v2575, 0.0
        %v2624 = vmax.f32 %v2576, 0.0
        %v2625 = vmax.f32 %v2577, 0.0
        %v2626 = vmax.f32 %v2578, 0.0
        %v2627 = vmax.f32 %v2579, 0.0
        %v2628 = vmax.f32 %v2580, 0.0
        %v2629 = vmax.f32 %v2581, 0.0
        %2630 = vst [vmem:[#allocation2] sm:$0xff] %v2582
        %2631 = vst [vmem:[#allocation2 + $0x8] sm:$0xff] %v2583
        %2632 = vst [vmem:[#allocation2 + $0x10] sm:$0xff] %v2584
        %2633 = vst [vmem:[#allocation2 + $0x18] sm:$0xff] %v2585
        %2634 = vst [vmem:[#allocation2 + $0x20] sm:$0xff] %v2586
        %2635 = vst [vmem:[#allocation2 + $0x28] sm:$0xff] %v2587
        %2636 = vst [vmem:[#allocation2 + $0x30] sm:$0xff] %v2588
        %2637 = vst [vmem:[#allocation2 + $0x38] sm:$0xff] %v2589
        %2638 = vst [vmem:[#allocation2 + $0x40] sm:$0xff] %v2590
        %2639 = vst [vmem:[#allocation2 + $0x48] sm:$0xff] %v2591
        %2640 = vst [vmem:[#allocation2 + $0x50] sm:$0xff] %v2592
        %2641 = vst [vmem:[#allocation2 + $0x58] sm:$0xff] %v2593
        %2642 = vst [vmem:[#allocation2 + $0x60] sm:$0xff] %v2594
        %2643 = vst [vmem:[#allocation2 + $0x68] sm:$0xff] %v2595
        %2644 = vst [vmem:[#allocation2 + $0x70] sm:$0xff] %v2596
        %2645 = vst [vmem:[#allocation2 + $0x78] sm:$0xff] %v2597
        %2646 = vst [vmem:[#allocation2 + $0x80] sm:$0xff] %v2598
        %2647 = vst [vmem:[#allocation2 + $0x88] sm:$0xff] %v2599
        %2648 = vst [vmem:[#allocation2 + $0x90] sm:$0xff] %v2600
        %2649 = vst [vmem:[#allocation2 + $0x98] sm:$0xff] %v2601
        %2650 = vst [vmem:[#allocation2 + $0xa0] sm:$0xff] %v2602
        %2651 = vst [vmem:[#allocation2 + $0xa8] sm:$0xff] %v2603
        %2652 = vst [vmem:[#allocation2 + $0xb0] sm:$0xff] %v2604
        %2653 = vst [vmem:[#allocation2 + $0xb8] sm:$0xff] %v2605
        %2654 = vst [vmem:[#allocation2 + $0xc0] sm:$0xff] %v2606
        %2655 = vst [vmem:[#allocation2 + $0xc8] sm:$0xff] %v2607
        %2656 = vst [vmem:[#allocation2 + $0xd0] sm:$0xff] %v2608
        %2657 = vst [vmem:[#allocation2 + $0xd8] sm:$0xff] %v2609
        %2658 = vst [vmem:[#allocation2 + $0xe0] sm:$0xff] %v2610
        %2659 = vst [vmem:[#allocation2 + $0xe8] sm:$0xff] %v2611
        %2660 = vst [vmem:[#allocation2 + $0xf0] sm:$0xff] %v2612
        %2661 = vst [vmem:[#allocation2 + $0xf8] sm:$0xff] %v2613
        %2662 = vst [vmem:[#allocation2 + $0x100] sm:$0xff] %v2614
        %2663 = vst [vmem:[#allocation2 + $0x108] sm:$0xff] %v2615
        %2664 = vst [vmem:[#allocation2 + $0x110] sm:$0xff] %v2616
        %2665 = vst [vmem:[#allocation2 + $0x118] sm:$0xff] %v2617
        %2666 = vst [vmem:[#allocation2 + $0x120] sm:$0xff] %v2618
        %2667 = vst [vmem:[#allocation2 + $0x128] sm:$0xff] %v2619
        %2668 = vst [vmem:[#allocation2 + $0x130] sm:$0xff] %v2620
        %2669 = vst [vmem:[#allocation2 + $0x138] sm:$0xff] %v2621
        %2670 = vst [vmem:[#allocation2 + $0x140] sm:$0xff] %v2622
        %2671 = vst [vmem:[#allocation2 + $0x148] sm:$0xff] %v2623
        %2672 = vst [vmem:[#allocation2 + $0x150] sm:$0xff] %v2624
        %2673 = vst [vmem:[#allocation2 + $0x158] sm:$0xff] %v2625
        %2674 = vst [vmem:[#allocation2 + $0x160] sm:$0xff] %v2626
        %2675 = vst [vmem:[#allocation2 + $0x168] sm:$0xff] %v2627
        %2676 = vst [vmem:[#allocation2 + $0x170] sm:$0xff] %v2628
        %2677 = vst [vmem:[#allocation2 + $0x178] sm:$0xff] %v2629
        %v2678 = vld [vmem:[#allocation2] sm:$0xff]
        %v2679 = vld [vmem:[#allocation2 + $0x10] sm:$0xff]
        %v2680 = vld [vmem:[#allocation2 + $0x20] sm:$0xff]
        %v2681 = vld [vmem:[#allocation2 + $0x30] sm:$0xff]
        %v2682 = vld [vmem:[#allocation2 + $0x40] sm:$0xff]
        %v2683 = vld [vmem:[#allocation2 + $0x50] sm:$0xff]
        %v2684 = vld [vmem:[#allocation2 + $0x60] sm:$0xff]
        %v2685 = vld [vmem:[#allocation2 + $0x70] sm:$0xff]
        %v2686 = vld [vmem:[#allocation2 + $0x80] sm:$0xff]
        %v2687 = vld [vmem:[#allocation2 + $0x90] sm:$0xff]
        %v2688 = vld [vmem:[#allocation2 + $0xa0] sm:$0xff]
        %v2689 = vld [vmem:[#allocation2 + $0xb0] sm:$0xff]
        %v2690 = vld [vmem:[#allocation2 + $0xc0] sm:$0xff]
        %v2691 = vld [vmem:[#allocation2 + $0xd0] sm:$0xff]
        %v2692 = vld [vmem:[#allocation2 + $0xe0] sm:$0xff]
        %v2693 = vld [vmem:[#allocation2 + $0xf0] sm:$0xff]
        %v2694 = vld [vmem:[#allocation2 + $0x100] sm:$0xff]
        %v2695 = vld [vmem:[#allocation2 + $0x110] sm:$0xff]
        %v2696 = vld [vmem:[#allocation2 + $0x120] sm:$0xff]
        %v2697 = vld [vmem:[#allocation2 + $0x130] sm:$0xff]
        %v2698 = vld [vmem:[#allocation2 + $0x140] sm:$0xff]
        %v2699 = vld [vmem:[#allocation2 + $0x150] sm:$0xff]
        %v2700 = vld [vmem:[#allocation2 + $0x160] sm:$0xff]
        %v2701 = vld [vmem:[#allocation2 + $0x170] sm:$0xff]
        %2702 = vst [vmem:[#allocation3] sm:$0xff] %v2678
        %2703 = vst [vmem:[#allocation3 + $0x8] sm:$0xff] %v2679
        %2704 = vst [vmem:[#allocation3 + $0x10] sm:$0xff] %v2680
        %2705 = vst [vmem:[#allocation3 + $0x18] sm:$0xff] %v2681
        %2706 = vst [vmem:[#allocation3 + $0x20] sm:$0xff] %v2682
        %2707 = vst [vmem:[#allocation3 + $0x28] sm:$0xff] %v2683
        %2708 = vst [vmem:[#allocation3 + $0x30] sm:$0xff] %v2684
        %2709 = vst [vmem:[#allocation3 + $0x38] sm:$0xff] %v2685
        %2710 = vst [vmem:[#allocation3 + $0x40] sm:$0xff] %v2686
        %2711 = vst [vmem:[#allocation3 + $0x48] sm:$0xff] %v2687
        %2712 = vst [vmem:[#allocation3 + $0x50] sm:$0xff] %v2688
        %2713 = vst [vmem:[#allocation3 + $0x58] sm:$0xff] %v2689
        %2714 = vst [vmem:[#allocation3 + $0x60] sm:$0xff] %v2690
        %2715 = vst [vmem:[#allocation3 + $0x68] sm:$0xff] %v2691
        %2716 = vst [vmem:[#allocation3 + $0x70] sm:$0xff] %v2692
        %2717 = vst [vmem:[#allocation3 + $0x78] sm:$0xff] %v2693
        %2718 = vst [vmem:[#allocation3 + $0x80] sm:$0xff] %v2694
        %2719 = vst [vmem:[#allocation3 + $0x88] sm:$0xff] %v2695
        %2720 = vst [vmem:[#allocation3 + $0x90] sm:$0xff] %v2696
        %2721 = vst [vmem:[#allocation3 + $0x98] sm:$0xff] %v2697
        %2722 = vst [vmem:[#allocation3 + $0xa0] sm:$0xff] %v2698
        %2723 = vst [vmem:[#allocation3 + $0xa8] sm:$0xff] %v2699
        %2724 = vst [vmem:[#allocation3 + $0xb0] sm:$0xff] %v2700
        %2725 = vst [vmem:[#allocation3 + $0xb8] sm:$0xff] %v2701
        %v2726 = vld [vmem:[#allocation3] sm:$0xff]
        %v2727 = vld [vmem:[#allocation3 + $0x8] sm:$0xff]
        %v2728 = vld [vmem:[#allocation3 + $0x10] sm:$0xff]
        %v2729 = vld [vmem:[#allocation3 + $0x18] sm:$0xff]
        %v2730 = vld [vmem:[#allocation3 + $0x20] sm:$0xff]
        %v2731 = vld [vmem:[#allocation3 + $0x28] sm:$0xff]
        %v2732 = vld [vmem:[#allocation3 + $0x30] sm:$0xff]
        %v2733 = vld [vmem:[#allocation3 + $0x38] sm:$0xff]
        %v2734 = vld [vmem:[#allocation3 + $0x60] sm:$0xff]
        %v2735 = vld [vmem:[#allocation3 + $0x68] sm:$0xff]
        %v2736 = vld [vmem:[#allocation3 + $0x70] sm:$0xff]
        %v2737 = vld [vmem:[#allocation3 + $0x78] sm:$0xff]
        %v2738 = vld [vmem:[#allocation3 + $0x80] sm:$0xff]
        %v2739 = vld [vmem:[#allocation3 + $0x88] sm:$0xff]
        %v2740 = vld [vmem:[#allocation3 + $0x90] sm:$0xff]
        %v2741 = vld [vmem:[#allocation3 + $0x98] sm:$0xff]
        %v2742 = vld [vmem:[%s3] sm:$0xff]
        %v2743 = vld [vmem:[%s3 + $0x8] sm:$0xff]
        %v2744 = vld [vmem:[%s3 + $0x10] sm:$0xff]
        %v2745 = vld [vmem:[%s3 + $0x18] sm:$0xff]
        %v2746 = vld [vmem:[%s3 + $0x20] sm:$0xff]
        %v2747 = vld [vmem:[%s3 + $0x28] sm:$0xff]
        %v2748 = vld [vmem:[%s3 + $0x30] sm:$0xff]
        %v2749 = vld [vmem:[%s3 + $0x38] sm:$0xff]
        %v2750 = vld [vmem:[%s3 + $0x40] sm:$0xff]
        %v2751 = vld [vmem:[%s3 + $0x48] sm:$0xff]
        %v2752 = vld [vmem:[%s3 + $0x50] sm:$0xff]
        %v2753 = vld [vmem:[%s3 + $0x58] sm:$0xff]
        %v2754 = vld [vmem:[%s3 + $0x60] sm:$0xff]
        %v2755 = vld [vmem:[%s3 + $0x68] sm:$0xff]
        %v2756 = vld [vmem:[%s3 + $0x70] sm:$0xff]
        %v2757 = vld [vmem:[%s3 + $0x78] sm:$0xff]
        %s2758 = scalar_lea.vmem [#allocation3], 8
        %v2759 = vld [vmem:[%s2758] sm:$0xff]
        %v2760 = vld [vmem:[%s2758 + $0x8] sm:$0xff]
        %v2761 = vld [vmem:[%s2758 + $0x10] sm:$0xff]
        %v2762 = vld [vmem:[%s2758 + $0x18] sm:$0xff]
        %v2763 = vld [vmem:[%s2758 + $0x20] sm:$0xff]
        %v2764 = vld [vmem:[%s2758 + $0x28] sm:$0xff]
        %v2765 = vld [vmem:[%s2758 + $0x30] sm:$0xff]
        %v2766 = vld [vmem:[%s2758 + $0x38] sm:$0xff]
        %v2767 = vld [vmem:[%s2758 + $0x60] sm:$0xff]
        %v2768 = vld [vmem:[%s2758 + $0x68] sm:$0xff]
        %v2769 = vld [vmem:[%s2758 + $0x70] sm:$0xff]
        %v2770 = vld [vmem:[%s2758 + $0x78] sm:$0xff]
        %v2771 = vld [vmem:[%s2758 + $0x80] sm:$0xff]
        %v2772 = vld [vmem:[%s2758 + $0x88] sm:$0xff]
        %v2773 = vld [vmem:[%s2758 + $0x90] sm:$0xff]
        %v2774 = vld [vmem:[%s2758 + $0x98] sm:$0xff]
        %s2775 = scalar_lea.vmem %s3, 640
        %v2776 = vld [vmem:[%s2775] sm:$0xff]
        %v2777 = vld [vmem:[%s2775 + $0x8] sm:$0xff]
        %v2778 = vld [vmem:[%s2775 + $0x10] sm:$0xff]
        %v2779 = vld [vmem:[%s2775 + $0x18] sm:$0xff]
        %v2780 = vld [vmem:[%s2775 + $0x20] sm:$0xff]
        %v2781 = vld [vmem:[%s2775 + $0x28] sm:$0xff]
        %v2782 = vld [vmem:[%s2775 + $0x30] sm:$0xff]
        %v2783 = vld [vmem:[%s2775 + $0x38] sm:$0xff]
        %v2784 = vld [vmem:[%s2775 + $0x40] sm:$0xff]
        %v2785 = vld [vmem:[%s2775 + $0x48] sm:$0xff]
        %v2786 = vld [vmem:[%s2775 + $0x50] sm:$0xff]
        %v2787 = vld [vmem:[%s2775 + $0x58] sm:$0xff]
        %v2788 = vld [vmem:[%s2775 + $0x60] sm:$0xff]
        %v2789 = vld [vmem:[%s2775 + $0x68] sm:$0xff]
        %v2790 = vld [vmem:[%s2775 + $0x70] sm:$0xff]
        %v2791 = vld [vmem:[%s2775 + $0x78] sm:$0xff]
        %2792 = vmatprep.subr.mxu0 0.0
        %2793 = vmatpush1.msra.mxu0 %v2776
        %2794 = vmatprep.subr.mxu0 0.0
        %2795 = vmatpush1.msra.mxu0 %v2777
        %2796 = vmatprep.subr.mxu0 0.0
        %2797 = vmatpush1.msra.mxu0 %v2778
        %2798 = vmatprep.subr.mxu0 0.0
        %2799 = vmatpush1.msra.mxu0 %v2779
        %2800 = vmatprep.subr.mxu0 0.0
        %2801 = vmatpush1.msra.mxu0 %v2780
        %2802 = vmatprep.subr.mxu0 0.0
        %2803 = vmatpush1.msra.mxu0 %v2781
        %2804 = vmatprep.subr.mxu0 0.0
        %2805 = vmatpush1.msra.mxu0 %v2782
        %2806 = vmatprep.subr.mxu0 0.0
        %2807 = vmatpush1.msra.mxu0 %v2783
        %2808 = vmatprep.subr.mxu0 0.0
        %2809 = vmatpush1.msra.mxu0 %v2784
        %2810 = vmatprep.subr.mxu0 0.0
        %2811 = vmatpush1.msra.mxu0 %v2785
        %2812 = vmatprep.subr.mxu0 0.0
        %2813 = vmatpush1.msra.mxu0 %v2786
        %2814 = vmatprep.subr.mxu0 0.0
        %2815 = vmatpush1.msra.mxu0 %v2787
        %2816 = vmatprep.subr.mxu0 0.0
        %2817 = vmatpush1.msra.mxu0 %v2788
        %2818 = vmatprep.subr.mxu0 0.0
        %2819 = vmatpush1.msra.mxu0 %v2789
        %2820 = vmatprep.subr.mxu0 0.0
        %2821 = vmatpush1.msra.mxu0 %v2790
        %2822 = vmatprep.subr.mxu0 0.0
        %2823 = vmatpush1.msra.mxu0 %v2791
        %2824 = vmatprep.subr.mxu0 0.0
        %2825 = vmatpush1.msra.mxu0 0.0
        %2826 = vmatprep.subr.mxu0 0.0
        %2827 = vmatpush1.msra.mxu0 0.0
        %2828 = vmatprep.subr.mxu0 0.0
        %2829 = vmatpush1.msra.mxu0 0.0
        %2830 = vmatprep.subr.mxu0 0.0
        %2831 = vmatpush1.msra.mxu0 0.0
        %2832 = vmatprep.subr.mxu0 0.0
        %2833 = vmatpush1.msra.mxu0 0.0
        %2834 = vmatprep.subr.mxu0 0.0
        %2835 = vmatpush1.msra.mxu0 0.0
        %2836 = vmatprep.subr.mxu0 0.0
        %2837 = vmatpush1.msra.mxu0 0.0
        %2838 = vmatprep.subr.mxu0 0.0
        %2839 = vmatpush1.msra.mxu0 0.0
        %2840 = vmatprep.subr.mxu0 0.0
        %2841 = vmatpush1.msra.mxu0 0.0
        %2842 = vmatprep.subr.mxu0 0.0
        %2843 = vmatpush1.msra.mxu0 0.0
        %2844 = vmatprep.subr.mxu0 0.0
        %2845 = vmatpush1.msra.mxu0 0.0
        %2846 = vmatprep.subr.mxu0 0.0
        %2847 = vmatpush1.msra.mxu0 0.0
        %2848 = vmatprep.subr.mxu0 0.0
        %2849 = vmatpush1.msra.mxu0 0.0
        %2850 = vmatprep.subr.mxu0 0.0
        %2851 = vmatpush1.msra.mxu0 0.0
        %2852 = vmatprep.subr.mxu0 0.0
        %2853 = vmatpush1.msra.mxu0 0.0
        %2854 = vmatprep.subr.mxu0 0.0
        %2855 = vmatpush1.msra.mxu0 0.0
        %2856 = vmatprep.mubr.f32.mxu0 0.0
        %2857 = vmatmul.mubr.f32.gmra.mrb[0].mxu0 %v2759
        %v2858 = vpop.f32.mrb[0].mxu0
        %v2859 = vadd.f32 0.0, %v2858
        %v2860 = vpop.f32.mrb[0].mxu0
        %2861 = vmatprep.mubr.f32.mxu0 0.0
        %2862 = vmatmul.mubr.f32.gmra.mrb[0].mxu0 %v2760
        %v2863 = vpop.f32.mrb[0].mxu0
        %v2864 = vadd.f32 0.0, %v2863
        %v2865 = vpop.f32.mrb[0].mxu0
        %2866 = vmatprep.mubr.f32.mxu0 0.0
        %2867 = vmatmul.mubr.f32.gmra.mrb[0].mxu0 %v2761
        %v2868 = vpop.f32.mrb[0].mxu0
        %v2869 = vadd.f32 0.0, %v2868
        %v2870 = vpop.f32.mrb[0].mxu0
        %2871 = vmatprep.mubr.f32.mxu0 0.0
        %2872 = vmatmul.mubr.f32.gmra.mrb[0].mxu0 %v2762
        %v2873 = vpop.f32.mrb[0].mxu0
        %v2874 = vadd.f32 0.0, %v2873
        %v2875 = vpop.f32.mrb[0].mxu0
        %2876 = vmatprep.mubr.f32.mxu0 0.0
        %2877 = vmatmul.mubr.f32.gmra.mrb[0].mxu0 %v2763
        %v2878 = vpop.f32.mrb[0].mxu0
        %v2879 = vadd.f32 0.0, %v2878
        %v2880 = vpop.f32.mrb[0].mxu0
        %2881 = vmatprep.mubr.f32.mxu0 0.0
        %2882 = vmatmul.mubr.f32.gmra.mrb[0].mxu0 %v2764
        %v2883 = vpop.f32.mrb[0].mxu0
        %v2884 = vadd.f32 0.0, %v2883
        %v2885 = vpop.f32.mrb[0].mxu0
        %2886 = vmatprep.mubr.f32.mxu0 0.0
        %2887 = vmatmul.mubr.f32.gmra.mrb[0].mxu0 %v2765
        %v2888 = vpop.f32.mrb[0].mxu0
        %v2889 = vadd.f32 0.0, %v2888
        %v2890 = vpop.f32.mrb[0].mxu0
        %2891 = vmatprep.mubr.f32.mxu0 0.0
        %2892 = vmatmul.mubr.f32.gmra.mrb[0].mxu0 %v2766
        %v2893 = vpop.f32.mrb[0].mxu0
        %v2894 = vadd.f32 0.0, %v2893
        %v2895 = vpop.f32.mrb[0].mxu0
        %2896 = vmatprep.mubr.f32.mxu0 0.0
        %2897 = vmatmul.mubr.f32.gmra.mrb[0].mxu0 %v2767
        %v2898 = vpop.f32.mrb[0].mxu0
        %v2899 = vadd.f32 0.0, %v2898
        %v2900 = vpop.f32.mrb[0].mxu0
        %2901 = vmatprep.mubr.f32.mxu0 0.0
        %2902 = vmatmul.mubr.f32.gmra.mrb[0].mxu0 %v2768
        %v2903 = vpop.f32.mrb[0].mxu0
        %v2904 = vadd.f32 0.0, %v2903
        %v2905 = vpop.f32.mrb[0].mxu0
        %2906 = vmatprep.mubr.f32.mxu0 0.0
        %2907 = vmatmul.mubr.f32.gmra.mrb[0].mxu0 %v2769
        %v2908 = vpop.f32.mrb[0].mxu0
        %v2909 = vadd.f32 0.0, %v2908
        %v2910 = vpop.f32.mrb[0].mxu0
        %2911 = vmatprep.mubr.f32.mxu0 0.0
        %2912 = vmatmul.mubr.f32.gmra.mrb[0].mxu0 %v2770
        %v2913 = vpop.f32.mrb[0].mxu0
        %v2914 = vadd.f32 0.0, %v2913
        %v2915 = vpop.f32.mrb[0].mxu0
        %2916 = vmatprep.mubr.f32.mxu0 0.0
        %2917 = vmatmul.mubr.f32.gmra.mrb[0].mxu0 %v2771
        %v2918 = vpop.f32.mrb[0].mxu0
        %v2919 = vadd.f32 0.0, %v2918
        %v2920 = vpop.f32.mrb[0].mxu0
        %2921 = vmatprep.mubr.f32.mxu0 0.0
        %2922 = vmatmul.mubr.f32.gmra.mrb[0].mxu0 %v2772
        %v2923 = vpop.f32.mrb[0].mxu0
        %v2924 = vadd.f32 0.0, %v2923
        %v2925 = vpop.f32.mrb[0].mxu0
        %2926 = vmatprep.mubr.f32.mxu0 0.0
        %2927 = vmatmul.mubr.f32.gmra.mrb[0].mxu0 %v2773
        %v2928 = vpop.f32.mrb[0].mxu0
        %v2929 = vadd.f32 0.0, %v2928
        %v2930 = vpop.f32.mrb[0].mxu0
        %2931 = vmatprep.mubr.f32.mxu0 0.0
        %2932 = vmatmul.mubr.f32.gmra.mrb[0].mxu0 %v2774
        %v2933 = vpop.f32.mrb[0].mxu0
        %v2934 = vadd.f32 0.0, %v2933
        %v2935 = vpop.f32.mrb[0].mxu0
        %2936 = vdwg.mxu0
        %2937 = vmatprep.subr.mxu0 0.0
        %2938 = vmatpush1.msra.mxu0 %v2742
        %2939 = vmatprep.subr.mxu0 0.0
        %2940 = vmatpush1.msra.mxu0 %v2743
        %2941 = vmatprep.subr.mxu0 0.0
        %2942 = vmatpush1.msra.mxu0 %v2744
        %2943 = vmatprep.subr.mxu0 0.0
        %2944 = vmatpush1.msra.mxu0 %v2745
        %2945 = vmatprep.subr.mxu0 0.0
        %2946 = vmatpush1.msra.mxu0 %v2746
        %2947 = vmatprep.subr.mxu0 0.0
        %2948 = vmatpush1.msra.mxu0 %v2747
        %2949 = vmatprep.subr.mxu0 0.0
        %2950 = vmatpush1.msra.mxu0 %v2748
        %2951 = vmatprep.subr.mxu0 0.0
        %2952 = vmatpush1.msra.mxu0 %v2749
        %2953 = vmatprep.subr.mxu0 0.0
        %2954 = vmatpush1.msra.mxu0 %v2750
        %2955 = vmatprep.subr.mxu0 0.0
        %2956 = vmatpush1.msra.mxu0 %v2751
        %2957 = vmatprep.subr.mxu0 0.0
        %2958 = vmatpush1.msra.mxu0 %v2752
        %2959 = vmatprep.subr.mxu0 0.0
        %2960 = vmatpush1.msra.mxu0 %v2753
        %2961 = vmatprep.subr.mxu0 0.0
        %2962 = vmatpush1.msra.mxu0 %v2754
        %2963 = vmatprep.subr.mxu0 0.0
        %2964 = vmatpush1.msra.mxu0 %v2755
        %2965 = vmatprep.subr.mxu0 0.0
        %2966 = vmatpush1.msra.mxu0 %v2756
        %2967 = vmatprep.subr.mxu0 0.0
        %2968 = vmatpush1.msra.mxu0 %v2757
        %2969 = vmatprep.subr.mxu0 0.0
        %2970 = vmatpush1.msra.mxu0 0.0
        %2971 = vmatprep.subr.mxu0 0.0
        %2972 = vmatpush1.msra.mxu0 0.0
        %2973 = vmatprep.subr.mxu0 0.0
        %2974 = vmatpush1.msra.mxu0 0.0
        %2975 = vmatprep.subr.mxu0 0.0
        %2976 = vmatpush1.msra.mxu0 0.0
        %2977 = vmatprep.subr.mxu0 0.0
        %2978 = vmatpush1.msra.mxu0 0.0
        %2979 = vmatprep.subr.mxu0 0.0
        %2980 = vmatpush1.msra.mxu0 0.0
        %2981 = vmatprep.subr.mxu0 0.0
        %2982 = vmatpush1.msra.mxu0 0.0
        %2983 = vmatprep.subr.mxu0 0.0
        %2984 = vmatpush1.msra.mxu0 0.0
        %2985 = vmatprep.subr.mxu0 0.0
        %2986 = vmatpush1.msra.mxu0 0.0
        %2987 = vmatprep.subr.mxu0 0.0
        %2988 = vmatpush1.msra.mxu0 0.0
        %2989 = vmatprep.subr.mxu0 0.0
        %2990 = vmatpush1.msra.mxu0 0.0
        %2991 = vmatprep.subr.mxu0 0.0
        %2992 = vmatpush1.msra.mxu0 0.0
        %2993 = vmatprep.subr.mxu0 0.0
        %2994 = vmatpush1.msra.mxu0 0.0
        %2995 = vmatprep.subr.mxu0 0.0
        %2996 = vmatpush1.msra.mxu0 0.0
        %2997 = vmatprep.subr.mxu0 0.0
        %2998 = vmatpush1.msra.mxu0 0.0
        %2999 = vmatprep.subr.mxu0 0.0
        %3000 = vmatpush1.msra.mxu0 0.0
        %3001 = vmatprep.mubr.f32.mxu0 0.0
        %3002 = vmatmul.mubr.f32.gmra.mrb[0].mxu0 %v2726
        %v3003 = vpop.f32.mrb[0].mxu0
        %v3004 = vadd.f32 %v2859, %v3003
        %v3005 = vpop.f32.mrb[0].mxu0
        %3006 = vmatprep.mubr.f32.mxu0 0.0
        %3007 = vmatmul.mubr.f32.gmra.mrb[0].mxu0 %v2727
        %v3008 = vpop.f32.mrb[0].mxu0
        %v3009 = vadd.f32 %v2864, %v3008
        %v3010 = vpop.f32.mrb[0].mxu0
        %3011 = vmatprep.mubr.f32.mxu0 0.0
        %3012 = vmatmul.mubr.f32.gmra.mrb[0].mxu0 %v2728
        %v3013 = vpop.f32.mrb[0].mxu0
        %v3014 = vadd.f32 %v2869, %v3013
        %v3015 = vpop.f32.mrb[0].mxu0
        %3016 = vmatprep.mubr.f32.mxu0 0.0
        %3017 = vmatmul.mubr.f32.gmra.mrb[0].mxu0 %v2729
        %v3018 = vpop.f32.mrb[0].mxu0
        %v3019 = vadd.f32 %v2874, %v3018
        %v3020 = vpop.f32.mrb[0].mxu0
        %3021 = vmatprep.mubr.f32.mxu0 0.0
        %3022 = vmatmul.mubr.f32.gmra.mrb[0].mxu0 %v2730
        %v3023 = vpop.f32.mrb[0].mxu0
        %v3024 = vadd.f32 %v2879, %v3023
        %v3025 = vpop.f32.mrb[0].mxu0
        %3026 = vmatprep.mubr.f32.mxu0 0.0
        %3027 = vmatmul.mubr.f32.gmra.mrb[0].mxu0 %v2731
        %v3028 = vpop.f32.mrb[0].mxu0
        %v3029 = vadd.f32 %v2884, %v3028
        %v3030 = vpop.f32.mrb[0].mxu0
        %3031 = vmatprep.mubr.f32.mxu0 0.0
        %3032 = vmatmul.mubr.f32.gmra.mrb[0].mxu0 %v2732
        %v3033 = vpop.f32.mrb[0].mxu0
        %v3034 = vadd.f32 %v2889, %v3033
        %v3035 = vpop.f32.mrb[0].mxu0
        %3036 = vmatprep.mubr.f32.mxu0 0.0
        %3037 = vmatmul.mubr.f32.gmra.mrb[0].mxu0 %v2733
        %v3038 = vpop.f32.mrb[0].mxu0
        %v3039 = vadd.f32 %v2894, %v3038
        %v3040 = vpop.f32.mrb[0].mxu0
        %3041 = vmatprep.mubr.f32.mxu0 0.0
        %3042 = vmatmul.mubr.f32.gmra.mrb[0].mxu0 %v2734
        %v3043 = vpop.f32.mrb[0].mxu0
        %v3044 = vadd.f32 %v2899, %v3043
        %v3045 = vpop.f32.mrb[0].mxu0
        %3046 = vmatprep.mubr.f32.mxu0 0.0
        %3047 = vmatmul.mubr.f32.gmra.mrb[0].mxu0 %v2735
        %v3048 = vpop.f32.mrb[0].mxu0
        %v3049 = vadd.f32 %v2904, %v3048
        %v3050 = vpop.f32.mrb[0].mxu0
        %3051 = vmatprep.mubr.f32.mxu0 0.0
        %3052 = vmatmul.mubr.f32.gmra.mrb[0].mxu0 %v2736
        %v3053 = vpop.f32.mrb[0].mxu0
        %v3054 = vadd.f32 %v2909, %v3053
        %v3055 = vpop.f32.mrb[0].mxu0
        %3056 = vmatprep.mubr.f32.mxu0 0.0
        %3057 = vmatmul.mubr.f32.gmra.mrb[0].mxu0 %v2737
        %v3058 = vpop.f32.mrb[0].mxu0
        %v3059 = vadd.f32 %v2914, %v3058
        %v3060 = vpop.f32.mrb[0].mxu0
        %3061 = vmatprep.mubr.f32.mxu0 0.0
        %3062 = vmatmul.mubr.f32.gmra.mrb[0].mxu0 %v2738
        %v3063 = vpop.f32.mrb[0].mxu0
        %v3064 = vadd.f32 %v2919, %v3063
        %v3065 = vpop.f32.mrb[0].mxu0
        %3066 = vmatprep.mubr.f32.mxu0 0.0
        %3067 = vmatmul.mubr.f32.gmra.mrb[0].mxu0 %v2739
        %v3068 = vpop.f32.mrb[0].mxu0
        %v3069 = vadd.f32 %v2924, %v3068
        %v3070 = vpop.f32.mrb[0].mxu0
        %3071 = vmatprep.mubr.f32.mxu0 0.0
        %3072 = vmatmul.mubr.f32.gmra.mrb[0].mxu0 %v2740
        %v3073 = vpop.f32.mrb[0].mxu0
        %v3074 = vadd.f32 %v2929, %v3073
        %v3075 = vpop.f32.mrb[0].mxu0
        %3076 = vmatprep.mubr.f32.mxu0 0.0
        %3077 = vmatmul.mubr.f32.gmra.mrb[0].mxu0 %v2741
        %v3078 = vpop.f32.mrb[0].mxu0
        %v3079 = vadd.f32 %v2934, %v3078
        %v3080 = vpop.f32.mrb[0].mxu0
        %3081 = vdwg.mxu0
        %s3082 = scalar_lea.vmem [#allocation3], 16
        %v3083 = vld [vmem:[%s3082] sm:$0xff]
        %v3084 = vld [vmem:[%s3082 + $0x8] sm:$0xff]
        %v3085 = vld [vmem:[%s3082 + $0x10] sm:$0xff]
        %v3086 = vld [vmem:[%s3082 + $0x18] sm:$0xff]
        %v3087 = vld [vmem:[%s3082 + $0x20] sm:$0xff]
        %v3088 = vld [vmem:[%s3082 + $0x28] sm:$0xff]
        %v3089 = vld [vmem:[%s3082 + $0x30] sm:$0xff]
        %v3090 = vld [vmem:[%s3082 + $0x38] sm:$0xff]
        %v3091 = vld [vmem:[%s3082 + $0x60] sm:$0xff]
        %v3092 = vld [vmem:[%s3082 + $0x68] sm:$0xff]
        %v3093 = vld [vmem:[%s3082 + $0x70] sm:$0xff]
        %v3094 = vld [vmem:[%s3082 + $0x78] sm:$0xff]
        %v3095 = vld [vmem:[%s3082 + $0x80] sm:$0xff]
        %v3096 = vld [vmem:[%s3082 + $0x88] sm:$0xff]
        %v3097 = vld [vmem:[%s3082 + $0x90] sm:$0xff]
        %v3098 = vld [vmem:[%s3082 + $0x98] sm:$0xff]
        %s3099 = scalar_lea.vmem %s3, 1280
        %v3100 = vld [vmem:[%s3099] sm:$0xff]
        %v3101 = vld [vmem:[%s3099 + $0x8] sm:$0xff]
        %v3102 = vld [vmem:[%s3099 + $0x10] sm:$0xff]
        %v3103 = vld [vmem:[%s3099 + $0x18] sm:$0xff]
        %v3104 = vld [vmem:[%s3099 + $0x20] sm:$0xff]
        %v3105 = vld [vmem:[%s3099 + $0x28] sm:$0xff]
        %v3106 = vld [vmem:[%s3099 + $0x30] sm:$0xff]
        %v3107 = vld [vmem:[%s3099 + $0x38] sm:$0xff]
        %v3108 = vld [vmem:[%s3099 + $0x40] sm:$0xff]
        %v3109 = vld [vmem:[%s3099 + $0x48] sm:$0xff]
        %v3110 = vld [vmem:[%s3099 + $0x50] sm:$0xff]
        %v3111 = vld [vmem:[%s3099 + $0x58] sm:$0xff]
        %v3112 = vld [vmem:[%s3099 + $0x60] sm:$0xff]
        %v3113 = vld [vmem:[%s3099 + $0x68] sm:$0xff]
        %v3114 = vld [vmem:[%s3099 + $0x70] sm:$0xff]
        %v3115 = vld [vmem:[%s3099 + $0x78] sm:$0xff]
        %3116 = vmatprep.subr.mxu0 0.0
        %3117 = vmatpush1.msra.mxu0 %v3100
        %3118 = vmatprep.subr.mxu0 0.0
        %3119 = vmatpush1.msra.mxu0 %v3101
        %3120 = vmatprep.subr.mxu0 0.0
        %3121 = vmatpush1.msra.mxu0 %v3102
        %3122 = vmatprep.subr.mxu0 0.0
        %3123 = vmatpush1.msra.mxu0 %v3103
        %3124 = vmatprep.subr.mxu0 0.0
        %3125 = vmatpush1.msra.mxu0 %v3104
        %3126 = vmatprep.subr.mxu0 0.0
        %3127 = vmatpush1.msra.mxu0 %v3105
        %3128 = vmatprep.subr.mxu0 0.0
        %3129 = vmatpush1.msra.mxu0 %v3106
        %3130 = vmatprep.subr.mxu0 0.0
        %3131 = vmatpush1.msra.mxu0 %v3107
        %3132 = vmatprep.subr.mxu0 0.0
        %3133 = vmatpush1.msra.mxu0 %v3108
        %3134 = vmatprep.subr.mxu0 0.0
        %3135 = vmatpush1.msra.mxu0 %v3109
        %3136 = vmatprep.subr.mxu0 0.0
        %3137 = vmatpush1.msra.mxu0 %v3110
        %3138 = vmatprep.subr.mxu0 0.0
        %3139 = vmatpush1.msra.mxu0 %v3111
        %3140 = vmatprep.subr.mxu0 0.0
        %3141 = vmatpush1.msra.mxu0 %v3112
        %3142 = vmatprep.subr.mxu0 0.0
        %3143 = vmatpush1.msra.mxu0 %v3113
        %3144 = vmatprep.subr.mxu0 0.0
        %3145 = vmatpush1.msra.mxu0 %v3114
        %3146 = vmatprep.subr.mxu0 0.0
        %3147 = vmatpush1.msra.mxu0 %v3115
        %3148 = vmatprep.subr.mxu0 0.0
        %3149 = vmatpush1.msra.mxu0 0.0
        %3150 = vmatprep.subr.mxu0 0.0
        %3151 = vmatpush1.msra.mxu0 0.0
        %3152 = vmatprep.subr.mxu0 0.0
        %3153 = vmatpush1.msra.mxu0 0.0
        %3154 = vmatprep.subr.mxu0 0.0
        %3155 = vmatpush1.msra.mxu0 0.0
        %3156 = vmatprep.subr.mxu0 0.0
        %3157 = vmatpush1.msra.mxu0 0.0
        %3158 = vmatprep.subr.mxu0 0.0
        %3159 = vmatpush1.msra.mxu0 0.0
        %3160 = vmatprep.subr.mxu0 0.0
        %3161 = vmatpush1.msra.mxu0 0.0
        %3162 = vmatprep.subr.mxu0 0.0
        %3163 = vmatpush1.msra.mxu0 0.0
        %3164 = vmatprep.subr.mxu0 0.0
        %3165 = vmatpush1.msra.mxu0 0.0
        %3166 = vmatprep.subr.mxu0 0.0
        %3167 = vmatpush1.msra.mxu0 0.0
        %3168 = vmatprep.subr.mxu0 0.0
        %3169 = vmatpush1.msra.mxu0 0.0
        %3170 = vmatprep.subr.mxu0 0.0
        %3171 = vmatpush1.msra.mxu0 0.0
        %3172 = vmatprep.subr.mxu0 0.0
        %3173 = vmatpush1.msra.mxu0 0.0
        %3174 = vmatprep.subr.mxu0 0.0
        %3175 = vmatpush1.msra.mxu0 0.0
        %3176 = vmatprep.subr.mxu0 0.0
        %3177 = vmatpush1.msra.mxu0 0.0
        %3178 = vmatprep.subr.mxu0 0.0
        %3179 = vmatpush1.msra.mxu0 0.0
        %3180 = vmatprep.mubr.f32.mxu0 0.0
        %3181 = vmatmul.mubr.f32.gmra.mrb[0].mxu0 %v3083
        %v3182 = vpop.f32.mrb[0].mxu0
        %v3183 = vadd.f32 0.0, %v3182
        %v3184 = vpop.f32.mrb[0].mxu0
        %3185 = vmatprep.mubr.f32.mxu0 0.0
        %3186 = vmatmul.mubr.f32.gmra.mrb[0].mxu0 %v3084
        %v3187 = vpop.f32.mrb[0].mxu0
        %v3188 = vadd.f32 0.0, %v3187
        %v3189 = vpop.f32.mrb[0].mxu0
        %3190 = vmatprep.mubr.f32.mxu0 0.0
        %3191 = vmatmul.mubr.f32.gmra.mrb[0].mxu0 %v3085
        %v3192 = vpop.f32.mrb[0].mxu0
        %v3193 = vadd.f32 0.0, %v3192
        %v3194 = vpop.f32.mrb[0].mxu0
        %3195 = vmatprep.mubr.f32.mxu0 0.0
        %3196 = vmatmul.mubr.f32.gmra.mrb[0].mxu0 %v3086
        %v3197 = vpop.f32.mrb[0].mxu0
        %v3198 = vadd.f32 0.0, %v3197
        %v3199 = vpop.f32.mrb[0].mxu0
        %3200 = vmatprep.mubr.f32.mxu0 0.0
        %3201 = vmatmul.mubr.f32.gmra.mrb[0].mxu0 %v3087
        %v3202 = vpop.f32.mrb[0].mxu0
        %v3203 = vadd.f32 0.0, %v3202
        %v3204 = vpop.f32.mrb[0].mxu0
        %3205 = vmatprep.mubr.f32.mxu0 0.0
        %3206 = vmatmul.mubr.f32.gmra.mrb[0].mxu0 %v3088
        %v3207 = vpop.f32.mrb[0].mxu0
        %v3208 = vadd.f32 0.0, %v3207
        %v3209 = vpop.f32.mrb[0].mxu0
        %3210 = vmatprep.mubr.f32.mxu0 0.0
        %3211 = vmatmul.mubr.f32.gmra.mrb[0].mxu0 %v3089
        %v3212 = vpop.f32.mrb[0].mxu0
        %v3213 = vadd.f32 0.0, %v3212
        %v3214 = vpop.f32.mrb[0].mxu0
        %3215 = vmatprep.mubr.f32.mxu0 0.0
        %3216 = vmatmul.mubr.f32.gmra.mrb[0].mxu0 %v3090
        %v3217 = vpop.f32.mrb[0].mxu0
        %v3218 = vadd.f32 0.0, %v3217
        %v3219 = vpop.f32.mrb[0].mxu0
        %3220 = vmatprep.mubr.f32.mxu0 0.0
        %3221 = vmatmul.mubr.f32.gmra.mrb[0].mxu0 %v3091
        %v3222 = vpop.f32.mrb[0].mxu0
        %v3223 = vadd.f32 0.0, %v3222
        %v3224 = vpop.f32.mrb[0].mxu0
        %3225 = vmatprep.mubr.f32.mxu0 0.0
        %3226 = vmatmul.mubr.f32.gmra.mrb[0].mxu0 %v3092
        %v3227 = vpop.f32.mrb[0].mxu0
        %v3228 = vadd.f32 0.0, %v3227
        %v3229 = vpop.f32.mrb[0].mxu0
        %3230 = vmatprep.mubr.f32.mxu0 0.0
        %3231 = vmatmul.mubr.f32.gmra.mrb[0].mxu0 %v3093
        %v3232 = vpop.f32.mrb[0].mxu0
        %v3233 = vadd.f32 0.0, %v3232
        %v3234 = vpop.f32.mrb[0].mxu0
        %3235 = vmatprep.mubr.f32.mxu0 0.0
        %3236 = vmatmul.mubr.f32.gmra.mrb[0].mxu0 %v3094
        %v3237 = vpop.f32.mrb[0].mxu0
        %v3238 = vadd.f32 0.0, %v3237
        %v3239 = vpop.f32.mrb[0].mxu0
        %3240 = vmatprep.mubr.f32.mxu0 0.0
        %3241 = vmatmul.mubr.f32.gmra.mrb[0].mxu0 %v3095
        %v3242 = vpop.f32.mrb[0].mxu0
        %v3243 = vadd.f32 0.0, %v3242
        %v3244 = vpop.f32.mrb[0].mxu0
        %3245 = vmatprep.mubr.f32.mxu0 0.0
        %3246 = vmatmul.mubr.f32.gmra.mrb[0].mxu0 %v3096
        %v3247 = vpop.f32.mrb[0].mxu0
        %v3248 = vadd.f32 0.0, %v3247
        %v3249 = vpop.f32.mrb[0].mxu0
        %3250 = vmatprep.mubr.f32.mxu0 0.0
        %3251 = vmatmul.mubr.f32.gmra.mrb[0].mxu0 %v3097
        %v3252 = vpop.f32.mrb[0].mxu0
        %v3253 = vadd.f32 0.0, %v3252
        %v3254 = vpop.f32.mrb[0].mxu0
        %3255 = vmatprep.mubr.f32.mxu0 0.0
        %3256 = vmatmul.mubr.f32.gmra.mrb[0].mxu0 %v3098
        %v3257 = vpop.f32.mrb[0].mxu0
        %v3258 = vadd.f32 0.0, %v3257
        %v3259 = vpop.f32.mrb[0].mxu0
        %3260 = vdwg.mxu0
        %v3261 = vadd.f32 %v3004, %v3183
        %v3262 = vadd.f32 %v3009, %v3188
        %v3263 = vadd.f32 %v3014, %v3193
        %v3264 = vadd.f32 %v3019, %v3198
        %v3265 = vadd.f32 %v3024, %v3203
        %v3266 = vadd.f32 %v3029, %v3208
        %v3267 = vadd.f32 %v3034, %v3213
        %v3268 = vadd.f32 %v3039, %v3218
        %v3269 = vadd.f32 %v3044, %v3223
        %v3270 = vadd.f32 %v3049, %v3228
        %v3271 = vadd.f32 %v3054, %v3233
        %v3272 = vadd.f32 %v3059, %v3238
        %v3273 = vadd.f32 %v3064, %v3243
        %v3274 = vadd.f32 %v3069, %v3248
        %v3275 = vadd.f32 %v3074, %v3253
        %v3276 = vadd.f32 %v3079, %v3258
        %s3277 = scalar_lea.vmem [#allocation3], 24
        %v3278 = vld [vmem:[%s3277] sm:$0xff]
        %v3279 = vld [vmem:[%s3277 + $0x8] sm:$0xff]
        %v3280 = vld [vmem:[%s3277 + $0x10] sm:$0xff]
        %v3281 = vld [vmem:[%s3277 + $0x18] sm:$0xff]
        %v3282 = vld [vmem:[%s3277 + $0x20] sm:$0xff]
        %v3283 = vld [vmem:[%s3277 + $0x28] sm:$0xff]
        %v3284 = vld [vmem:[%s3277 + $0x30] sm:$0xff]
        %v3285 = vld [vmem:[%s3277 + $0x38] sm:$0xff]
        %v3286 = vld [vmem:[%s3277 + $0x60] sm:$0xff]
        %v3287 = vld [vmem:[%s3277 + $0x68] sm:$0xff]
        %v3288 = vld [vmem:[%s3277 + $0x70] sm:$0xff]
        %v3289 = vld [vmem:[%s3277 + $0x78] sm:$0xff]
        %v3290 = vld [vmem:[%s3277 + $0x80] sm:$0xff]
        %v3291 = vld [vmem:[%s3277 + $0x88] sm:$0xff]
        %v3292 = vld [vmem:[%s3277 + $0x90] sm:$0xff]
        %v3293 = vld [vmem:[%s3277 + $0x98] sm:$0xff]
        %s3294 = scalar_lea.vmem %s3, 1920
        %v3295 = vld [vmem:[%s3294] sm:$0xff]
        %v3296 = vld [vmem:[%s3294 + $0x8] sm:$0xff]
        %v3297 = vld [vmem:[%s3294 + $0x10] sm:$0xff]
        %v3298 = vld [vmem:[%s3294 + $0x18] sm:$0xff]
        %v3299 = vld [vmem:[%s3294 + $0x20] sm:$0xff]
        %v3300 = vld [vmem:[%s3294 + $0x28] sm:$0xff]
        %v3301 = vld [vmem:[%s3294 + $0x30] sm:$0xff]
        %v3302 = vld [vmem:[%s3294 + $0x38] sm:$0xff]
        %v3303 = vld [vmem:[%s3294 + $0x40] sm:$0xff]
        %v3304 = vld [vmem:[%s3294 + $0x48] sm:$0xff]
        %v3305 = vld [vmem:[%s3294 + $0x50] sm:$0xff]
        %v3306 = vld [vmem:[%s3294 + $0x58] sm:$0xff]
        %v3307 = vld [vmem:[%s3294 + $0x60] sm:$0xff]
        %v3308 = vld [vmem:[%s3294 + $0x68] sm:$0xff]
        %v3309 = vld [vmem:[%s3294 + $0x70] sm:$0xff]
        %v3310 = vld [vmem:[%s3294 + $0x78] sm:$0xff]
        %3311 = vmatprep.subr.mxu0 0.0
        %3312 = vmatpush1.msra.mxu0 %v3295
        %3313 = vmatprep.subr.mxu0 0.0
        %3314 = vmatpush1.msra.mxu0 %v3296
        %3315 = vmatprep.subr.mxu0 0.0
        %3316 = vmatpush1.msra.mxu0 %v3297
        %3317 = vmatprep.subr.mxu0 0.0
        %3318 = vmatpush1.msra.mxu0 %v3298
        %3319 = vmatprep.subr.mxu0 0.0
        %3320 = vmatpush1.msra.mxu0 %v3299
        %3321 = vmatprep.subr.mxu0 0.0
        %3322 = vmatpush1.msra.mxu0 %v3300
        %3323 = vmatprep.subr.mxu0 0.0
        %3324 = vmatpush1.msra.mxu0 %v3301
        %3325 = vmatprep.subr.mxu0 0.0
        %3326 = vmatpush1.msra.mxu0 %v3302
        %3327 = vmatprep.subr.mxu0 0.0
        %3328 = vmatpush1.msra.mxu0 %v3303
        %3329 = vmatprep.subr.mxu0 0.0
        %3330 = vmatpush1.msra.mxu0 %v3304
        %3331 = vmatprep.subr.mxu0 0.0
        %3332 = vmatpush1.msra.mxu0 %v3305
        %3333 = vmatprep.subr.mxu0 0.0
        %3334 = vmatpush1.msra.mxu0 %v3306
        %3335 = vmatprep.subr.mxu0 0.0
        %3336 = vmatpush1.msra.mxu0 %v3307
        %3337 = vmatprep.subr.mxu0 0.0
        %3338 = vmatpush1.msra.mxu0 %v3308
        %3339 = vmatprep.subr.mxu0 0.0
        %3340 = vmatpush1.msra.mxu0 %v3309
        %3341 = vmatprep.subr.mxu0 0.0
        %3342 = vmatpush1.msra.mxu0 %v3310
        %3343 = vmatprep.subr.mxu0 0.0
        %3344 = vmatpush1.msra.mxu0 0.0
        %3345 = vmatprep.subr.mxu0 0.0
        %3346 = vmatpush1.msra.mxu0 0.0
        %3347 = vmatprep.subr.mxu0 0.0
        %3348 = vmatpush1.msra.mxu0 0.0
        %3349 = vmatprep.subr.mxu0 0.0
        %3350 = vmatpush1.msra.mxu0 0.0
        %3351 = vmatprep.subr.mxu0 0.0
        %3352 = vmatpush1.msra.mxu0 0.0
        %3353 = vmatprep.subr.mxu0 0.0
        %3354 = vmatpush1.msra.mxu0 0.0
        %3355 = vmatprep.subr.mxu0 0.0
        %3356 = vmatpush1.msra.mxu0 0.0
        %3357 = vmatprep.subr.mxu0 0.0
        %3358 = vmatpush1.msra.mxu0 0.0
        %3359 = vmatprep.subr.mxu0 0.0
        %3360 = vmatpush1.msra.mxu0 0.0
        %3361 = vmatprep.subr.mxu0 0.0
        %3362 = vmatpush1.msra.mxu0 0.0
        %3363 = vmatprep.subr.mxu0 0.0
        %3364 = vmatpush1.msra.mxu0 0.0
        %3365 = vmatprep.subr.mxu0 0.0
        %3366 = vmatpush1.msra.mxu0 0.0
        %3367 = vmatprep.subr.mxu0 0.0
        %3368 = vmatpush1.msra.mxu0 0.0
        %3369 = vmatprep.subr.mxu0 0.0
        %3370 = vmatpush1.msra.mxu0 0.0
        %3371 = vmatprep.subr.mxu0 0.0
        %3372 = vmatpush1.msra.mxu0 0.0
        %3373 = vmatprep.subr.mxu0 0.0
        %3374 = vmatpush1.msra.mxu0 0.0
        %3375 = vmatprep.mubr.f32.mxu0 0.0
        %3376 = vmatmul.mubr.f32.gmra.mrb[0].mxu0 %v3278
        %v3377 = vpop.f32.mrb[0].mxu0
        %v3378 = vadd.f32 0.0, %v3377
        %v3379 = vpop.f32.mrb[0].mxu0
        %3380 = vmatprep.mubr.f32.mxu0 0.0
        %3381 = vmatmul.mubr.f32.gmra.mrb[0].mxu0 %v3279
        %v3382 = vpop.f32.mrb[0].mxu0
        %v3383 = vadd.f32 0.0, %v3382
        %v3384 = vpop.f32.mrb[0].mxu0
        %3385 = vmatprep.mubr.f32.mxu0 0.0
        %3386 = vmatmul.mubr.f32.gmra.mrb[0].mxu0 %v3280
        %v3387 = vpop.f32.mrb[0].mxu0
        %v3388 = vadd.f32 0.0, %v3387
        %v3389 = vpop.f32.mrb[0].mxu0
        %3390 = vmatprep.mubr.f32.mxu0 0.0
        %3391 = vmatmul.mubr.f32.gmra.mrb[0].mxu0 %v3281
        %v3392 = vpop.f32.mrb[0].mxu0
        %v3393 = vadd.f32 0.0, %v3392
        %v3394 = vpop.f32.mrb[0].mxu0
        %3395 = vmatprep.mubr.f32.mxu0 0.0
        %3396 = vmatmul.mubr.f32.gmra.mrb[0].mxu0 %v3282
        %v3397 = vpop.f32.mrb[0].mxu0
        %v3398 = vadd.f32 0.0, %v3397
        %v3399 = vpop.f32.mrb[0].mxu0
        %3400 = vmatprep.mubr.f32.mxu0 0.0
        %3401 = vmatmul.mubr.f32.gmra.mrb[0].mxu0 %v3283
        %v3402 = vpop.f32.mrb[0].mxu0
        %v3403 = vadd.f32 0.0, %v3402
        %v3404 = vpop.f32.mrb[0].mxu0
        %3405 = vmatprep.mubr.f32.mxu0 0.0
        %3406 = vmatmul.mubr.f32.gmra.mrb[0].mxu0 %v3284
        %v3407 = vpop.f32.mrb[0].mxu0
        %v3408 = vadd.f32 0.0, %v3407
        %v3409 = vpop.f32.mrb[0].mxu0
        %3410 = vmatprep.mubr.f32.mxu0 0.0
        %3411 = vmatmul.mubr.f32.gmra.mrb[0].mxu0 %v3285
        %v3412 = vpop.f32.mrb[0].mxu0
        %v3413 = vadd.f32 0.0, %v3412
        %v3414 = vpop.f32.mrb[0].mxu0
        %3415 = vmatprep.mubr.f32.mxu0 0.0
        %3416 = vmatmul.mubr.f32.gmra.mrb[0].mxu0 %v3286
        %v3417 = vpop.f32.mrb[0].mxu0
        %v3418 = vadd.f32 0.0, %v3417
        %v3419 = vpop.f32.mrb[0].mxu0
        %3420 = vmatprep.mubr.f32.mxu0 0.0
        %3421 = vmatmul.mubr.f32.gmra.mrb[0].mxu0 %v3287
        %v3422 = vpop.f32.mrb[0].mxu0
        %v3423 = vadd.f32 0.0, %v3422
        %v3424 = vpop.f32.mrb[0].mxu0
        %3425 = vmatprep.mubr.f32.mxu0 0.0
        %3426 = vmatmul.mubr.f32.gmra.mrb[0].mxu0 %v3288
        %v3427 = vpop.f32.mrb[0].mxu0
        %v3428 = vadd.f32 0.0, %v3427
        %v3429 = vpop.f32.mrb[0].mxu0
        %3430 = vmatprep.mubr.f32.mxu0 0.0
        %3431 = vmatmul.mubr.f32.gmra.mrb[0].mxu0 %v3289
        %v3432 = vpop.f32.mrb[0].mxu0
        %v3433 = vadd.f32 0.0, %v3432
        %v3434 = vpop.f32.mrb[0].mxu0
        %3435 = vmatprep.mubr.f32.mxu0 0.0
        %3436 = vmatmul.mubr.f32.gmra.mrb[0].mxu0 %v3290
        %v3437 = vpop.f32.mrb[0].mxu0
        %v3438 = vadd.f32 0.0, %v3437
        %v3439 = vpop.f32.mrb[0].mxu0
        %3440 = vmatprep.mubr.f32.mxu0 0.0
        %3441 = vmatmul.mubr.f32.gmra.mrb[0].mxu0 %v3291
        %v3442 = vpop.f32.mrb[0].mxu0
        %v3443 = vadd.f32 0.0, %v3442
        %v3444 = vpop.f32.mrb[0].mxu0
        %3445 = vmatprep.mubr.f32.mxu0 0.0
        %3446 = vmatmul.mubr.f32.gmra.mrb[0].mxu0 %v3292
        %v3447 = vpop.f32.mrb[0].mxu0
        %v3448 = vadd.f32 0.0, %v3447
        %v3449 = vpop.f32.mrb[0].mxu0
        %3450 = vmatprep.mubr.f32.mxu0 0.0
        %3451 = vmatmul.mubr.f32.gmra.mrb[0].mxu0 %v3293
        %v3452 = vpop.f32.mrb[0].mxu0
        %v3453 = vadd.f32 0.0, %v3452
        %v3454 = vpop.f32.mrb[0].mxu0
        %3455 = vdwg.mxu0
        %v3456 = vadd.f32 %v3261, %v3378
        %v3457 = vadd.f32 %v3262, %v3383
        %v3458 = vadd.f32 %v3263, %v3388
        %v3459 = vadd.f32 %v3264, %v3393
        %v3460 = vadd.f32 %v3265, %v3398
        %v3461 = vadd.f32 %v3266, %v3403
        %v3462 = vadd.f32 %v3267, %v3408
        %v3463 = vadd.f32 %v3268, %v3413
        %v3464 = vadd.f32 %v3269, %v3418
        %v3465 = vadd.f32 %v3270, %v3423
        %v3466 = vadd.f32 %v3271, %v3428
        %v3467 = vadd.f32 %v3272, %v3433
        %v3468 = vadd.f32 %v3273, %v3438
        %v3469 = vadd.f32 %v3274, %v3443
        %v3470 = vadd.f32 %v3275, %v3448
        %v3471 = vadd.f32 %v3276, %v3453
        %s3472 = scalar_lea.vmem [#allocation3], 32
        %v3473 = vld [vmem:[%s3472] sm:$0xff]
        %v3474 = vld [vmem:[%s3472 + $0x8] sm:$0xff]
        %v3475 = vld [vmem:[%s3472 + $0x10] sm:$0xff]
        %v3476 = vld [vmem:[%s3472 + $0x18] sm:$0xff]
        %v3477 = vld [vmem:[%s3472 + $0x20] sm:$0xff]
        %v3478 = vld [vmem:[%s3472 + $0x28] sm:$0xff]
        %v3479 = vld [vmem:[%s3472 + $0x30] sm:$0xff]
        %v3480 = vld [vmem:[%s3472 + $0x38] sm:$0xff]
        %v3481 = vld [vmem:[%s3472 + $0x60] sm:$0xff]
        %v3482 = vld [vmem:[%s3472 + $0x68] sm:$0xff]
        %v3483 = vld [vmem:[%s3472 + $0x70] sm:$0xff]
        %v3484 = vld [vmem:[%s3472 + $0x78] sm:$0xff]
        %v3485 = vld [vmem:[%s3472 + $0x80] sm:$0xff]
        %v3486 = vld [vmem:[%s3472 + $0x88] sm:$0xff]
        %v3487 = vld [vmem:[%s3472 + $0x90] sm:$0xff]
        %v3488 = vld [vmem:[%s3472 + $0x98] sm:$0xff]
        %s3489 = scalar_lea.vmem %s3, 2560
        %v3490 = vld [vmem:[%s3489] sm:$0xff]
        %v3491 = vld [vmem:[%s3489 + $0x8] sm:$0xff]
        %v3492 = vld [vmem:[%s3489 + $0x10] sm:$0xff]
        %v3493 = vld [vmem:[%s3489 + $0x18] sm:$0xff]
        %v3494 = vld [vmem:[%s3489 + $0x20] sm:$0xff]
        %v3495 = vld [vmem:[%s3489 + $0x28] sm:$0xff]
        %v3496 = vld [vmem:[%s3489 + $0x30] sm:$0xff]
        %v3497 = vld [vmem:[%s3489 + $0x38] sm:$0xff]
        %v3498 = vld [vmem:[%s3489 + $0x40] sm:$0xff]
        %v3499 = vld [vmem:[%s3489 + $0x48] sm:$0xff]
        %v3500 = vld [vmem:[%s3489 + $0x50] sm:$0xff]
        %v3501 = vld [vmem:[%s3489 + $0x58] sm:$0xff]
        %v3502 = vld [vmem:[%s3489 + $0x60] sm:$0xff]
        %v3503 = vld [vmem:[%s3489 + $0x68] sm:$0xff]
        %v3504 = vld [vmem:[%s3489 + $0x70] sm:$0xff]
        %v3505 = vld [vmem:[%s3489 + $0x78] sm:$0xff]
        %3506 = vmatprep.subr.mxu0 0.0
        %3507 = vmatpush1.msra.mxu0 %v3490
        %3508 = vmatprep.subr.mxu0 0.0
        %3509 = vmatpush1.msra.mxu0 %v3491
        %3510 = vmatprep.subr.mxu0 0.0
        %3511 = vmatpush1.msra.mxu0 %v3492
        %3512 = vmatprep.subr.mxu0 0.0
        %3513 = vmatpush1.msra.mxu0 %v3493
        %3514 = vmatprep.subr.mxu0 0.0
        %3515 = vmatpush1.msra.mxu0 %v3494
        %3516 = vmatprep.subr.mxu0 0.0
        %3517 = vmatpush1.msra.mxu0 %v3495
        %3518 = vmatprep.subr.mxu0 0.0
        %3519 = vmatpush1.msra.mxu0 %v3496
        %3520 = vmatprep.subr.mxu0 0.0
        %3521 = vmatpush1.msra.mxu0 %v3497
        %3522 = vmatprep.subr.mxu0 0.0
        %3523 = vmatpush1.msra.mxu0 %v3498
        %3524 = vmatprep.subr.mxu0 0.0
        %3525 = vmatpush1.msra.mxu0 %v3499
        %3526 = vmatprep.subr.mxu0 0.0
        %3527 = vmatpush1.msra.mxu0 %v3500
        %3528 = vmatprep.subr.mxu0 0.0
        %3529 = vmatpush1.msra.mxu0 %v3501
        %3530 = vmatprep.subr.mxu0 0.0
        %3531 = vmatpush1.msra.mxu0 %v3502
        %3532 = vmatprep.subr.mxu0 0.0
        %3533 = vmatpush1.msra.mxu0 %v3503
        %3534 = vmatprep.subr.mxu0 0.0
        %3535 = vmatpush1.msra.mxu0 %v3504
        %3536 = vmatprep.subr.mxu0 0.0
        %3537 = vmatpush1.msra.mxu0 %v3505
        %3538 = vmatprep.subr.mxu0 0.0
        %3539 = vmatpush1.msra.mxu0 0.0
        %3540 = vmatprep.subr.mxu0 0.0
        %3541 = vmatpush1.msra.mxu0 0.0
        %3542 = vmatprep.subr.mxu0 0.0
        %3543 = vmatpush1.msra.mxu0 0.0
        %3544 = vmatprep.subr.mxu0 0.0
        %3545 = vmatpush1.msra.mxu0 0.0
        %3546 = vmatprep.subr.mxu0 0.0
        %3547 = vmatpush1.msra.mxu0 0.0
        %3548 = vmatprep.subr.mxu0 0.0
        %3549 = vmatpush1.msra.mxu0 0.0
        %3550 = vmatprep.subr.mxu0 0.0
        %3551 = vmatpush1.msra.mxu0 0.0
        %3552 = vmatprep.subr.mxu0 0.0
        %3553 = vmatpush1.msra.mxu0 0.0
        %3554 = vmatprep.subr.mxu0 0.0
        %3555 = vmatpush1.msra.mxu0 0.0
        %3556 = vmatprep.subr.mxu0 0.0
        %3557 = vmatpush1.msra.mxu0 0.0
        %3558 = vmatprep.subr.mxu0 0.0
        %3559 = vmatpush1.msra.mxu0 0.0
        %3560 = vmatprep.subr.mxu0 0.0
        %3561 = vmatpush1.msra.mxu0 0.0
        %3562 = vmatprep.subr.mxu0 0.0
        %3563 = vmatpush1.msra.mxu0 0.0
        %3564 = vmatprep.subr.mxu0 0.0
        %3565 = vmatpush1.msra.mxu0 0.0
        %3566 = vmatprep.subr.mxu0 0.0
        %3567 = vmatpush1.msra.mxu0 0.0
        %3568 = vmatprep.subr.mxu0 0.0
        %3569 = vmatpush1.msra.mxu0 0.0
        %3570 = vmatprep.mubr.f32.mxu0 0.0
        %3571 = vmatmul.mubr.f32.gmra.mrb[0].mxu0 %v3473
        %v3572 = vpop.f32.mrb[0].mxu0
        %v3573 = vadd.f32 0.0, %v3572
        %v3574 = vpop.f32.mrb[0].mxu0
        %3575 = vmatprep.mubr.f32.mxu0 0.0
        %3576 = vmatmul.mubr.f32.gmra.mrb[0].mxu0 %v3474
        %v3577 = vpop.f32.mrb[0].mxu0
        %v3578 = vadd.f32 0.0, %v3577
        %v3579 = vpop.f32.mrb[0].mxu0
        %3580 = vmatprep.mubr.f32.mxu0 0.0
        %3581 = vmatmul.mubr.f32.gmra.mrb[0].mxu0 %v3475
        %v3582 = vpop.f32.mrb[0].mxu0
        %v3583 = vadd.f32 0.0, %v3582
        %v3584 = vpop.f32.mrb[0].mxu0
        %3585 = vmatprep.mubr.f32.mxu0 0.0
        %3586 = vmatmul.mubr.f32.gmra.mrb[0].mxu0 %v3476
        %v3587 = vpop.f32.mrb[0].mxu0
        %v3588 = vadd.f32 0.0, %v3587
        %v3589 = vpop.f32.mrb[0].mxu0
        %3590 = vmatprep.mubr.f32.mxu0 0.0
        %3591 = vmatmul.mubr.f32.gmra.mrb[0].mxu0 %v3477
        %v3592 = vpop.f32.mrb[0].mxu0
        %v3593 = vadd.f32 0.0, %v3592
        %v3594 = vpop.f32.mrb[0].mxu0
        %3595 = vmatprep.mubr.f32.mxu0 0.0
        %3596 = vmatmul.mubr.f32.gmra.mrb[0].mxu0 %v3478
        %v3597 = vpop.f32.mrb[0].mxu0
        %v3598 = vadd.f32 0.0, %v3597
        %v3599 = vpop.f32.mrb[0].mxu0
        %3600 = vmatprep.mubr.f32.mxu0 0.0
        %3601 = vmatmul.mubr.f32.gmra.mrb[0].mxu0 %v3479
        %v3602 = vpop.f32.mrb[0].mxu0
        %v3603 = vadd.f32 0.0, %v3602
        %v3604 = vpop.f32.mrb[0].mxu0
        %3605 = vmatprep.mubr.f32.mxu0 0.0
        %3606 = vmatmul.mubr.f32.gmra.mrb[0].mxu0 %v3480
        %v3607 = vpop.f32.mrb[0].mxu0
        %v3608 = vadd.f32 0.0, %v3607
        %v3609 = vpop.f32.mrb[0].mxu0
        %3610 = vmatprep.mubr.f32.mxu0 0.0
        %3611 = vmatmul.mubr.f32.gmra.mrb[0].mxu0 %v3481
        %v3612 = vpop.f32.mrb[0].mxu0
        %v3613 = vadd.f32 0.0, %v3612
        %v3614 = vpop.f32.mrb[0].mxu0
        %3615 = vmatprep.mubr.f32.mxu0 0.0
        %3616 = vmatmul.mubr.f32.gmra.mrb[0].mxu0 %v3482
        %v3617 = vpop.f32.mrb[0].mxu0
        %v3618 = vadd.f32 0.0, %v3617
        %v3619 = vpop.f32.mrb[0].mxu0
        %3620 = vmatprep.mubr.f32.mxu0 0.0
        %3621 = vmatmul.mubr.f32.gmra.mrb[0].mxu0 %v3483
        %v3622 = vpop.f32.mrb[0].mxu0
        %v3623 = vadd.f32 0.0, %v3622
        %v3624 = vpop.f32.mrb[0].mxu0
        %3625 = vmatprep.mubr.f32.mxu0 0.0
        %3626 = vmatmul.mubr.f32.gmra.mrb[0].mxu0 %v3484
        %v3627 = vpop.f32.mrb[0].mxu0
        %v3628 = vadd.f32 0.0, %v3627
        %v3629 = vpop.f32.mrb[0].mxu0
        %3630 = vmatprep.mubr.f32.mxu0 0.0
        %3631 = vmatmul.mubr.f32.gmra.mrb[0].mxu0 %v3485
        %v3632 = vpop.f32.mrb[0].mxu0
        %v3633 = vadd.f32 0.0, %v3632
        %v3634 = vpop.f32.mrb[0].mxu0
        %3635 = vmatprep.mubr.f32.mxu0 0.0
        %3636 = vmatmul.mubr.f32.gmra.mrb[0].mxu0 %v3486
        %v3637 = vpop.f32.mrb[0].mxu0
        %v3638 = vadd.f32 0.0, %v3637
        %v3639 = vpop.f32.mrb[0].mxu0
        %3640 = vmatprep.mubr.f32.mxu0 0.0
        %3641 = vmatmul.mubr.f32.gmra.mrb[0].mxu0 %v3487
        %v3642 = vpop.f32.mrb[0].mxu0
        %v3643 = vadd.f32 0.0, %v3642
        %v3644 = vpop.f32.mrb[0].mxu0
        %3645 = vmatprep.mubr.f32.mxu0 0.0
        %3646 = vmatmul.mubr.f32.gmra.mrb[0].mxu0 %v3488
        %v3647 = vpop.f32.mrb[0].mxu0
        %v3648 = vadd.f32 0.0, %v3647
        %v3649 = vpop.f32.mrb[0].mxu0
        %3650 = vdwg.mxu0
        %v3651 = vadd.f32 %v3456, %v3573
        %v3652 = vadd.f32 %v3457, %v3578
        %v3653 = vadd.f32 %v3458, %v3583
        %v3654 = vadd.f32 %v3459, %v3588
        %v3655 = vadd.f32 %v3460, %v3593
        %v3656 = vadd.f32 %v3461, %v3598
        %v3657 = vadd.f32 %v3462, %v3603
        %v3658 = vadd.f32 %v3463, %v3608
        %v3659 = vadd.f32 %v3464, %v3613
        %v3660 = vadd.f32 %v3465, %v3618
        %v3661 = vadd.f32 %v3466, %v3623
        %v3662 = vadd.f32 %v3467, %v3628
        %v3663 = vadd.f32 %v3468, %v3633
        %v3664 = vadd.f32 %v3469, %v3638
        %v3665 = vadd.f32 %v3470, %v3643
        %v3666 = vadd.f32 %v3471, %v3648
        %v3667 = vld [vmem:[#allocation2 + $0x1] sm:$0xff]
        %v3668 = vld [vmem:[#allocation2 + $0x11] sm:$0xff]
        %v3669 = vld [vmem:[#allocation2 + $0x21] sm:$0xff]
        %v3670 = vld [vmem:[#allocation2 + $0x31] sm:$0xff]
        %v3671 = vld [vmem:[#allocation2 + $0x41] sm:$0xff]
        %v3672 = vld [vmem:[#allocation2 + $0x51] sm:$0xff]
        %v3673 = vld [vmem:[#allocation2 + $0x61] sm:$0xff]
        %v3674 = vld [vmem:[#allocation2 + $0x71] sm:$0xff]
        %v3675 = vld [vmem:[#allocation2 + $0x81] sm:$0xff]
        %v3676 = vld [vmem:[#allocation2 + $0x91] sm:$0xff]
        %v3677 = vld [vmem:[#allocation2 + $0xa1] sm:$0xff]
        %v3678 = vld [vmem:[#allocation2 + $0xb1] sm:$0xff]
        %v3679 = vld [vmem:[#allocation2 + $0xc1] sm:$0xff]
        %v3680 = vld [vmem:[#allocation2 + $0xd1] sm:$0xff]
        %v3681 = vld [vmem:[#allocation2 + $0xe1] sm:$0xff]
        %v3682 = vld [vmem:[#allocation2 + $0xf1] sm:$0xff]
        %v3683 = vld [vmem:[#allocation2 + $0x101] sm:$0xff]
        %v3684 = vld [vmem:[#allocation2 + $0x111] sm:$0xff]
        %v3685 = vld [vmem:[#allocation2 + $0x121] sm:$0xff]
        %v3686 = vld [vmem:[#allocation2 + $0x131] sm:$0xff]
        %v3687 = vld [vmem:[#allocation2 + $0x141] sm:$0xff]
        %v3688 = vld [vmem:[#allocation2 + $0x151] sm:$0xff]
        %v3689 = vld [vmem:[#allocation2 + $0x161] sm:$0xff]
        %v3690 = vld [vmem:[#allocation2 + $0x171] sm:$0xff]
        %3691 = vst [vmem:[#allocation3] sm:$0xff] %v3667
        %3692 = vst [vmem:[#allocation3 + $0x8] sm:$0xff] %v3668
        %3693 = vst [vmem:[#allocation3 + $0x10] sm:$0xff] %v3669
        %3694 = vst [vmem:[#allocation3 + $0x18] sm:$0xff] %v3670
        %3695 = vst [vmem:[#allocation3 + $0x20] sm:$0xff] %v3671
        %3696 = vst [vmem:[#allocation3 + $0x28] sm:$0xff] %v3672
        %3697 = vst [vmem:[#allocation3 + $0x30] sm:$0xff] %v3673
        %3698 = vst [vmem:[#allocation3 + $0x38] sm:$0xff] %v3674
        %3699 = vst [vmem:[#allocation3 + $0x40] sm:$0xff] %v3675
        %3700 = vst [vmem:[#allocation3 + $0x48] sm:$0xff] %v3676
        %3701 = vst [vmem:[#allocation3 + $0x50] sm:$0xff] %v3677
        %3702 = vst [vmem:[#allocation3 + $0x58] sm:$0xff] %v3678
        %3703 = vst [vmem:[#allocation3 + $0x60] sm:$0xff] %v3679
        %3704 = vst [vmem:[#allocation3 + $0x68] sm:$0xff] %v3680
        %3705 = vst [vmem:[#allocation3 + $0x70] sm:$0xff] %v3681
        %3706 = vst [vmem:[#allocation3 + $0x78] sm:$0xff] %v3682
        %3707 = vst [vmem:[#allocation3 + $0x80] sm:$0xff] %v3683
        %3708 = vst [vmem:[#allocation3 + $0x88] sm:$0xff] %v3684
        %3709 = vst [vmem:[#allocation3 + $0x90] sm:$0xff] %v3685
        %3710 = vst [vmem:[#allocation3 + $0x98] sm:$0xff] %v3686
        %3711 = vst [vmem:[#allocation3 + $0xa0] sm:$0xff] %v3687
        %3712 = vst [vmem:[#allocation3 + $0xa8] sm:$0xff] %v3688
        %3713 = vst [vmem:[#allocation3 + $0xb0] sm:$0xff] %v3689
        %3714 = vst [vmem:[#allocation3 + $0xb8] sm:$0xff] %v3690
        %v3715 = vld [vmem:[#allocation3] sm:$0xff]
        %v3716 = vld [vmem:[#allocation3 + $0x8] sm:$0xff]
        %v3717 = vld [vmem:[#allocation3 + $0x10] sm:$0xff]
        %v3718 = vld [vmem:[#allocation3 + $0x18] sm:$0xff]
        %v3719 = vld [vmem:[#allocation3 + $0x20] sm:$0xff]
        %v3720 = vld [vmem:[#allocation3 + $0x28] sm:$0xff]
        %v3721 = vld [vmem:[#allocation3 + $0x30] sm:$0xff]
        %v3722 = vld [vmem:[#allocation3 + $0x38] sm:$0xff]
        %v3723 = vld [vmem:[#allocation3 + $0x60] sm:$0xff]
        %v3724 = vld [vmem:[#allocation3 + $0x68] sm:$0xff]
        %v3725 = vld [vmem:[#allocation3 + $0x70] sm:$0xff]
        %v3726 = vld [vmem:[#allocation3 + $0x78] sm:$0xff]
        %v3727 = vld [vmem:[#allocation3 + $0x80] sm:$0xff]
        %v3728 = vld [vmem:[#allocation3 + $0x88] sm:$0xff]
        %v3729 = vld [vmem:[#allocation3 + $0x90] sm:$0xff]
        %v3730 = vld [vmem:[#allocation3 + $0x98] sm:$0xff]
        %s3731 = scalar_lea.vmem %s3, 128
        %v3732 = vld [vmem:[%s3731] sm:$0xff]
        %v3733 = vld [vmem:[%s3731 + $0x8] sm:$0xff]
        %v3734 = vld [vmem:[%s3731 + $0x10] sm:$0xff]
        %v3735 = vld [vmem:[%s3731 + $0x18] sm:$0xff]
        %v3736 = vld [vmem:[%s3731 + $0x20] sm:$0xff]
        %v3737 = vld [vmem:[%s3731 + $0x28] sm:$0xff]
        %v3738 = vld [vmem:[%s3731 + $0x30] sm:$0xff]
        %v3739 = vld [vmem:[%s3731 + $0x38] sm:$0xff]
        %v3740 = vld [vmem:[%s3731 + $0x40] sm:$0xff]
        %v3741 = vld [vmem:[%s3731 + $0x48] sm:$0xff]
        %v3742 = vld [vmem:[%s3731 + $0x50] sm:$0xff]
        %v3743 = vld [vmem:[%s3731 + $0x58] sm:$0xff]
        %v3744 = vld [vmem:[%s3731 + $0x60] sm:$0xff]
        %v3745 = vld [vmem:[%s3731 + $0x68] sm:$0xff]
        %v3746 = vld [vmem:[%s3731 + $0x70] sm:$0xff]
        %v3747 = vld [vmem:[%s3731 + $0x78] sm:$0xff]
        %3748 = vmatprep.subr.mxu0 0.0
        %3749 = vmatpush1.msra.mxu0 %v3732
        %3750 = vmatprep.subr.mxu0 0.0
        %3751 = vmatpush1.msra.mxu0 %v3733
        %3752 = vmatprep.subr.mxu0 0.0
        %3753 = vmatpush1.msra.mxu0 %v3734
        %3754 = vmatprep.subr.mxu0 0.0
        %3755 = vmatpush1.msra.mxu0 %v3735
        %3756 = vmatprep.subr.mxu0 0.0
        %3757 = vmatpush1.msra.mxu0 %v3736
        %3758 = vmatprep.subr.mxu0 0.0
        %3759 = vmatpush1.msra.mxu0 %v3737
        %3760 = vmatprep.subr.mxu0 0.0
        %3761 = vmatpush1.msra.mxu0 %v3738
        %3762 = vmatprep.subr.mxu0 0.0
        %3763 = vmatpush1.msra.mxu0 %v3739
        %3764 = vmatprep.subr.mxu0 0.0
        %3765 = vmatpush1.msra.mxu0 %v3740
        %3766 = vmatprep.subr.mxu0 0.0
        %3767 = vmatpush1.msra.mxu0 %v3741
        %3768 = vmatprep.subr.mxu0 0.0
        %3769 = vmatpush1.msra.mxu0 %v3742
        %3770 = vmatprep.subr.mxu0 0.0
        %3771 = vmatpush1.msra.mxu0 %v3743
        %3772 = vmatprep.subr.mxu0 0.0
        %3773 = vmatpush1.msra.mxu0 %v3744
        %3774 = vmatprep.subr.mxu0 0.0
        %3775 = vmatpush1.msra.mxu0 %v3745
        %3776 = vmatprep.subr.mxu0 0.0
        %3777 = vmatpush1.msra.mxu0 %v3746
        %3778 = vmatprep.subr.mxu0 0.0
        %3779 = vmatpush1.msra.mxu0 %v3747
        %3780 = vmatprep.subr.mxu0 0.0
        %3781 = vmatpush1.msra.mxu0 0.0
        %3782 = vmatprep.subr.mxu0 0.0
        %3783 = vmatpush1.msra.mxu0 0.0
        %3784 = vmatprep.subr.mxu0 0.0
        %3785 = vmatpush1.msra.mxu0 0.0
        %3786 = vmatprep.subr.mxu0 0.0
        %3787 = vmatpush1.msra.mxu0 0.0
        %3788 = vmatprep.subr.mxu0 0.0
        %3789 = vmatpush1.msra.mxu0 0.0
        %3790 = vmatprep.subr.mxu0 0.0
        %3791 = vmatpush1.msra.mxu0 0.0
        %3792 = vmatprep.subr.mxu0 0.0
        %3793 = vmatpush1.msra.mxu0 0.0
        %3794 = vmatprep.subr.mxu0 0.0
        %3795 = vmatpush1.msra.mxu0 0.0
        %3796 = vmatprep.subr.mxu0 0.0
        %3797 = vmatpush1.msra.mxu0 0.0
        %3798 = vmatprep.subr.mxu0 0.0
        %3799 = vmatpush1.msra.mxu0 0.0
        %3800 = vmatprep.subr.mxu0 0.0
        %3801 = vmatpush1.msra.mxu0 0.0
        %3802 = vmatprep.subr.mxu0 0.0
        %3803 = vmatpush1.msra.mxu0 0.0
        %3804 = vmatprep.subr.mxu0 0.0
        %3805 = vmatpush1.msra.mxu0 0.0
        %3806 = vmatprep.subr.mxu0 0.0
        %3807 = vmatpush1.msra.mxu0 0.0
        %3808 = vmatprep.subr.mxu0 0.0
        %3809 = vmatpush1.msra.mxu0 0.0
        %3810 = vmatprep.subr.mxu0 0.0
        %3811 = vmatpush1.msra.mxu0 0.0
        %3812 = vmatprep.mubr.f32.mxu0 0.0
        %3813 = vmatmul.mubr.f32.gmra.mrb[0].mxu0 %v3715
        %v3814 = vpop.f32.mrb[0].mxu0
        %v3815 = vadd.f32 0.0, %v3814
        %v3816 = vpop.f32.mrb[0].mxu0
        %3817 = vmatprep.mubr.f32.mxu0 0.0
        %3818 = vmatmul.mubr.f32.gmra.mrb[0].mxu0 %v3716
        %v3819 = vpop.f32.mrb[0].mxu0
        %v3820 = vadd.f32 0.0, %v3819
        %v3821 = vpop.f32.mrb[0].mxu0
        %3822 = vmatprep.mubr.f32.mxu0 0.0
        %3823 = vmatmul.mubr.f32.gmra.mrb[0].mxu0 %v3717
        %v3824 = vpop.f32.mrb[0].mxu0
        %v3825 = vadd.f32 0.0, %v3824
        %v3826 = vpop.f32.mrb[0].mxu0
        %3827 = vmatprep.mubr.f32.mxu0 0.0
        %3828 = vmatmul.mubr.f32.gmra.mrb[0].mxu0 %v3718
        %v3829 = vpop.f32.mrb[0].mxu0
        %v3830 = vadd.f32 0.0, %v3829
        %v3831 = vpop.f32.mrb[0].mxu0
        %3832 = vmatprep.mubr.f32.mxu0 0.0
        %3833 = vmatmul.mubr.f32.gmra.mrb[0].mxu0 %v3719
        %v3834 = vpop.f32.mrb[0].mxu0
        %v3835 = vadd.f32 0.0, %v3834
        %v3836 = vpop.f32.mrb[0].mxu0
        %3837 = vmatprep.mubr.f32.mxu0 0.0
        %3838 = vmatmul.mubr.f32.gmra.mrb[0].mxu0 %v3720
        %v3839 = vpop.f32.mrb[0].mxu0
        %v3840 = vadd.f32 0.0, %v3839
        %v3841 = vpop.f32.mrb[0].mxu0
        %3842 = vmatprep.mubr.f32.mxu0 0.0
        %3843 = vmatmul.mubr.f32.gmra.mrb[0].mxu0 %v3721
        %v3844 = vpop.f32.mrb[0].mxu0
        %v3845 = vadd.f32 0.0, %v3844
        %v3846 = vpop.f32.mrb[0].mxu0
        %3847 = vmatprep.mubr.f32.mxu0 0.0
        %3848 = vmatmul.mubr.f32.gmra.mrb[0].mxu0 %v3722
        %v3849 = vpop.f32.mrb[0].mxu0
        %v3850 = vadd.f32 0.0, %v3849
        %v3851 = vpop.f32.mrb[0].mxu0
        %3852 = vmatprep.mubr.f32.mxu0 0.0
        %3853 = vmatmul.mubr.f32.gmra.mrb[0].mxu0 %v3723
        %v3854 = vpop.f32.mrb[0].mxu0
        %v3855 = vadd.f32 0.0, %v3854
        %v3856 = vpop.f32.mrb[0].mxu0
        %3857 = vmatprep.mubr.f32.mxu0 0.0
        %3858 = vmatmul.mubr.f32.gmra.mrb[0].mxu0 %v3724
        %v3859 = vpop.f32.mrb[0].mxu0
        %v3860 = vadd.f32 0.0, %v3859
        %v3861 = vpop.f32.mrb[0].mxu0
        %3862 = vmatprep.mubr.f32.mxu0 0.0
        %3863 = vmatmul.mubr.f32.gmra.mrb[0].mxu0 %v3725
        %v3864 = vpop.f32.mrb[0].mxu0
        %v3865 = vadd.f32 0.0, %v3864
        %v3866 = vpop.f32.mrb[0].mxu0
        %3867 = vmatprep.mubr.f32.mxu0 0.0
        %3868 = vmatmul.mubr.f32.gmra.mrb[0].mxu0 %v3726
        %v3869 = vpop.f32.mrb[0].mxu0
        %v3870 = vadd.f32 0.0, %v3869
        %v3871 = vpop.f32.mrb[0].mxu0
        %3872 = vmatprep.mubr.f32.mxu0 0.0
        %3873 = vmatmul.mubr.f32.gmra.mrb[0].mxu0 %v3727
        %v3874 = vpop.f32.mrb[0].mxu0
        %v3875 = vadd.f32 0.0, %v3874
        %v3876 = vpop.f32.mrb[0].mxu0
        %3877 = vmatprep.mubr.f32.mxu0 0.0
        %3878 = vmatmul.mubr.f32.gmra.mrb[0].mxu0 %v3728
        %v3879 = vpop.f32.mrb[0].mxu0
        %v3880 = vadd.f32 0.0, %v3879
        %v3881 = vpop.f32.mrb[0].mxu0
        %3882 = vmatprep.mubr.f32.mxu0 0.0
        %3883 = vmatmul.mubr.f32.gmra.mrb[0].mxu0 %v3729
        %v3884 = vpop.f32.mrb[0].mxu0
        %v3885 = vadd.f32 0.0, %v3884
        %v3886 = vpop.f32.mrb[0].mxu0
        %3887 = vmatprep.mubr.f32.mxu0 0.0
        %3888 = vmatmul.mubr.f32.gmra.mrb[0].mxu0 %v3730
        %v3889 = vpop.f32.mrb[0].mxu0
        %v3890 = vadd.f32 0.0, %v3889
        %v3891 = vpop.f32.mrb[0].mxu0
        %3892 = vdwg.mxu0
        %v3893 = vadd.f32 %v3651, %v3815
        %v3894 = vadd.f32 %v3652, %v3820
        %v3895 = vadd.f32 %v3653, %v3825
        %v3896 = vadd.f32 %v3654, %v3830
        %v3897 = vadd.f32 %v3655, %v3835
        %v3898 = vadd.f32 %v3656, %v3840
        %v3899 = vadd.f32 %v3657, %v3845
        %v3900 = vadd.f32 %v3658, %v3850
        %v3901 = vadd.f32 %v3659, %v3855
        %v3902 = vadd.f32 %v3660, %v3860
        %v3903 = vadd.f32 %v3661, %v3865
        %v3904 = vadd.f32 %v3662, %v3870
        %v3905 = vadd.f32 %v3663, %v3875
        %v3906 = vadd.f32 %v3664, %v3880
        %v3907 = vadd.f32 %v3665, %v3885
        %v3908 = vadd.f32 %v3666, %v3890
        %v3909 = vld [vmem:[%s2758] sm:$0xff]
        %v3910 = vld [vmem:[%s2758 + $0x8] sm:$0xff]
        %v3911 = vld [vmem:[%s2758 + $0x10] sm:$0xff]
        %v3912 = vld [vmem:[%s2758 + $0x18] sm:$0xff]
        %v3913 = vld [vmem:[%s2758 + $0x20] sm:$0xff]
        %v3914 = vld [vmem:[%s2758 + $0x28] sm:$0xff]
        %v3915 = vld [vmem:[%s2758 + $0x30] sm:$0xff]
        %v3916 = vld [vmem:[%s2758 + $0x38] sm:$0xff]
        %v3917 = vld [vmem:[%s2758 + $0x60] sm:$0xff]
        %v3918 = vld [vmem:[%s2758 + $0x68] sm:$0xff]
        %v3919 = vld [vmem:[%s2758 + $0x70] sm:$0xff]
        %v3920 = vld [vmem:[%s2758 + $0x78] sm:$0xff]
        %v3921 = vld [vmem:[%s2758 + $0x80] sm:$0xff]
        %v3922 = vld [vmem:[%s2758 + $0x88] sm:$0xff]
        %v3923 = vld [vmem:[%s2758 + $0x90] sm:$0xff]
        %v3924 = vld [vmem:[%s2758 + $0x98] sm:$0xff]
        %s3925 = scalar_lea.vmem %s3, 768
        %v3926 = vld [vmem:[%s3925] sm:$0xff]
        %v3927 = vld [vmem:[%s3925 + $0x8] sm:$0xff]
        %v3928 = vld [vmem:[%s3925 + $0x10] sm:$0xff]
        %v3929 = vld [vmem:[%s3925 + $0x18] sm:$0xff]
        %v3930 = vld [vmem:[%s3925 + $0x20] sm:$0xff]
        %v3931 = vld [vmem:[%s3925 + $0x28] sm:$0xff]
        %v3932 = vld [vmem:[%s3925 + $0x30] sm:$0xff]
        %v3933 = vld [vmem:[%s3925 + $0x38] sm:$0xff]
        %v3934 = vld [vmem:[%s3925 + $0x40] sm:$0xff]
        %v3935 = vld [vmem:[%s3925 + $0x48] sm:$0xff]
        %v3936 = vld [vmem:[%s3925 + $0x50] sm:$0xff]
        %v3937 = vld [vmem:[%s3925 + $0x58] sm:$0xff]
        %v3938 = vld [vmem:[%s3925 + $0x60] sm:$0xff]
        %v3939 = vld [vmem:[%s3925 + $0x68] sm:$0xff]
        %v3940 = vld [vmem:[%s3925 + $0x70] sm:$0xff]
        %v3941 = vld [vmem:[%s3925 + $0x78] sm:$0xff]
        %3942 = vmatprep.subr.mxu0 0.0
        %3943 = vmatpush1.msra.mxu0 %v3926
        %3944 = vmatprep.subr.mxu0 0.0
        %3945 = vmatpush1.msra.mxu0 %v3927
        %3946 = vmatprep.subr.mxu0 0.0
        %3947 = vmatpush1.msra.mxu0 %v3928
        %3948 = vmatprep.subr.mxu0 0.0
        %3949 = vmatpush1.msra.mxu0 %v3929
        %3950 = vmatprep.subr.mxu0 0.0
        %3951 = vmatpush1.msra.mxu0 %v3930
        %3952 = vmatprep.subr.mxu0 0.0
        %3953 = vmatpush1.msra.mxu0 %v3931
        %3954 = vmatprep.subr.mxu0 0.0
        %3955 = vmatpush1.msra.mxu0 %v3932
        %3956 = vmatprep.subr.mxu0 0.0
        %3957 = vmatpush1.msra.mxu0 %v3933
        %3958 = vmatprep.subr.mxu0 0.0
        %3959 = vmatpush1.msra.mxu0 %v3934
        %3960 = vmatprep.subr.mxu0 0.0
        %3961 = vmatpush1.msra.mxu0 %v3935
        %3962 = vmatprep.subr.mxu0 0.0
        %3963 = vmatpush1.msra.mxu0 %v3936
        %3964 = vmatprep.subr.mxu0 0.0
        %3965 = vmatpush1.msra.mxu0 %v3937
        %3966 = vmatprep.subr.mxu0 0.0
        %3967 = vmatpush1.msra.mxu0 %v3938
        %3968 = vmatprep.subr.mxu0 0.0
        %3969 = vmatpush1.msra.mxu0 %v3939
        %3970 = vmatprep.subr.mxu0 0.0
        %3971 = vmatpush1.msra.mxu0 %v3940
        %3972 = vmatprep.subr.mxu0 0.0
        %3973 = vmatpush1.msra.mxu0 %v3941
        %3974 = vmatprep.subr.mxu0 0.0
        %3975 = vmatpush1.msra.mxu0 0.0
        %3976 = vmatprep.subr.mxu0 0.0
        %3977 = vmatpush1.msra.mxu0 0.0
        %3978 = vmatprep.subr.mxu0 0.0
        %3979 = vmatpush1.msra.mxu0 0.0
        %3980 = vmatprep.subr.mxu0 0.0
        %3981 = vmatpush1.msra.mxu0 0.0
        %3982 = vmatprep.subr.mxu0 0.0
        %3983 = vmatpush1.msra.mxu0 0.0
        %3984 = vmatprep.subr.mxu0 0.0
        %3985 = vmatpush1.msra.mxu0 0.0
        %3986 = vmatprep.subr.mxu0 0.0
        %3987 = vmatpush1.msra.mxu0 0.0
        %3988 = vmatprep.subr.mxu0 0.0
        %3989 = vmatpush1.msra.mxu0 0.0
        %3990 = vmatprep.subr.mxu0 0.0
        %3991 = vmatpush1.msra.mxu0 0.0
        %3992 = vmatprep.subr.mxu0 0.0
        %3993 = vmatpush1.msra.mxu0 0.0
        %3994 = vmatprep.subr.mxu0 0.0
        %3995 = vmatpush1.msra.mxu0 0.0
        %3996 = vmatprep.subr.mxu0 0.0
        %3997 = vmatpush1.msra.mxu0 0.0
        %3998 = vmatprep.subr.mxu0 0.0
        %3999 = vmatpush1.msra.mxu0 0.0
        %4000 = vmatprep.subr.mxu0 0.0
        %4001 = vmatpush1.msra.mxu0 0.0
        %4002 = vmatprep.subr.mxu0 0.0
        %4003 = vmatpush1.msra.mxu0 0.0
        %4004 = vmatprep.subr.mxu0 0.0
        %4005 = vmatpush1.msra.mxu0 0.0
        %4006 = vmatprep.mubr.f32.mxu0 0.0
        %4007 = vmatmul.mubr.f32.gmra.mrb[0].mxu0 %v3909
        %v4008 = vpop.f32.mrb[0].mxu0
        %v4009 = vadd.f32 0.0, %v4008
        %v4010 = vpop.f32.mrb[0].mxu0
        %4011 = vmatprep.mubr.f32.mxu0 0.0
        %4012 = vmatmul.mubr.f32.gmra.mrb[0].mxu0 %v3910
        %v4013 = vpop.f32.mrb[0].mxu0
        %v4014 = vadd.f32 0.0, %v4013
        %v4015 = vpop.f32.mrb[0].mxu0
        %4016 = vmatprep.mubr.f32.mxu0 0.0
        %4017 = vmatmul.mubr.f32.gmra.mrb[0].mxu0 %v3911
        %v4018 = vpop.f32.mrb[0].mxu0
        %v4019 = vadd.f32 0.0, %v4018
        %v4020 = vpop.f32.mrb[0].mxu0
        %4021 = vmatprep.mubr.f32.mxu0 0.0
        %4022 = vmatmul.mubr.f32.gmra.mrb[0].mxu0 %v3912
        %v4023 = vpop.f32.mrb[0].mxu0
        %v4024 = vadd.f32 0.0, %v4023
        %v4025 = vpop.f32.mrb[0].mxu0
        %4026 = vmatprep.mubr.f32.mxu0 0.0
        %4027 = vmatmul.mubr.f32.gmra.mrb[0].mxu0 %v3913
        %v4028 = vpop.f32.mrb[0].mxu0
        %v4029 = vadd.f32 0.0, %v4028
        %v4030 = vpop.f32.mrb[0].mxu0
        %4031 = vmatprep.mubr.f32.mxu0 0.0
        %4032 = vmatmul.mubr.f32.gmra.mrb[0].mxu0 %v3914
        %v4033 = vpop.f32.mrb[0].mxu0
        %v4034 = vadd.f32 0.0, %v4033
        %v4035 = vpop.f32.mrb[0].mxu0
        %4036 = vmatprep.mubr.f32.mxu0 0.0
        %4037 = vmatmul.mubr.f32.gmra.mrb[0].mxu0 %v3915
        %v4038 = vpop.f32.mrb[0].mxu0
        %v4039 = vadd.f32 0.0, %v4038
        %v4040 = vpop.f32.mrb[0].mxu0
        %4041 = vmatprep.mubr.f32.mxu0 0.0
        %4042 = vmatmul.mubr.f32.gmra.mrb[0].mxu0 %v3916
        %v4043 = vpop.f32.mrb[0].mxu0
        %v4044 = vadd.f32 0.0, %v4043
        %v4045 = vpop.f32.mrb[0].mxu0
        %4046 = vmatprep.mubr.f32.mxu0 0.0
        %4047 = vmatmul.mubr.f32.gmra.mrb[0].mxu0 %v3917
        %v4048 = vpop.f32.mrb[0].mxu0
        %v4049 = vadd.f32 0.0, %v4048
        %v4050 = vpop.f32.mrb[0].mxu0
        %4051 = vmatprep.mubr.f32.mxu0 0.0
        %4052 = vmatmul.mubr.f32.gmra.mrb[0].mxu0 %v3918
        %v4053 = vpop.f32.mrb[0].mxu0
        %v4054 = vadd.f32 0.0, %v4053
        %v4055 = vpop.f32.mrb[0].mxu0
        %4056 = vmatprep.mubr.f32.mxu0 0.0
        %4057 = vmatmul.mubr.f32.gmra.mrb[0].mxu0 %v3919
        %v4058 = vpop.f32.mrb[0].mxu0
        %v4059 = vadd.f32 0.0, %v4058
        %v4060 = vpop.f32.mrb[0].mxu0
        %4061 = vmatprep.mubr.f32.mxu0 0.0
        %4062 = vmatmul.mubr.f32.gmra.mrb[0].mxu0 %v3920
        %v4063 = vpop.f32.mrb[0].mxu0
        %v4064 = vadd.f32 0.0, %v4063
        %v4065 = vpop.f32.mrb[0].mxu0
        %4066 = vmatprep.mubr.f32.mxu0 0.0
        %4067 = vmatmul.mubr.f32.gmra.mrb[0].mxu0 %v3921
        %v4068 = vpop.f32.mrb[0].mxu0
        %v4069 = vadd.f32 0.0, %v4068
        %v4070 = vpop.f32.mrb[0].mxu0
        %4071 = vmatprep.mubr.f32.mxu0 0.0
        %4072 = vmatmul.mubr.f32.gmra.mrb[0].mxu0 %v3922
        %v4073 = vpop.f32.mrb[0].mxu0
        %v4074 = vadd.f32 0.0, %v4073
        %v4075 = vpop.f32.mrb[0].mxu0
        %4076 = vmatprep.mubr.f32.mxu0 0.0
        %4077 = vmatmul.mubr.f32.gmra.mrb[0].mxu0 %v3923
        %v4078 = vpop.f32.mrb[0].mxu0
        %v4079 = vadd.f32 0.0, %v4078
        %v4080 = vpop.f32.mrb[0].mxu0
        %4081 = vmatprep.mubr.f32.mxu0 0.0
        %4082 = vmatmul.mubr.f32.gmra.mrb[0].mxu0 %v3924
        %v4083 = vpop.f32.mrb[0].mxu0
        %v4084 = vadd.f32 0.0, %v4083
        %v4085 = vpop.f32.mrb[0].mxu0
        %4086 = vdwg.mxu0
        %v4087 = vadd.f32 %v3893, %v4009
        %v4088 = vadd.f32 %v3894, %v4014
        %v4089 = vadd.f32 %v3895, %v4019
        %v4090 = vadd.f32 %v3896, %v4024
        %v4091 = vadd.f32 %v3897, %v4029
        %v4092 = vadd.f32 %v3898, %v4034
        %v4093 = vadd.f32 %v3899, %v4039
        %v4094 = vadd.f32 %v3900, %v4044
        %v4095 = vadd.f32 %v3901, %v4049
        %v4096 = vadd.f32 %v3902, %v4054
        %v4097 = vadd.f32 %v3903, %v4059
        %v4098 = vadd.f32 %v3904, %v4064
        %v4099 = vadd.f32 %v3905, %v4069
        %v4100 = vadd.f32 %v3906, %v4074
        %v4101 = vadd.f32 %v3907, %v4079
        %v4102 = vadd.f32 %v3908, %v4084
        %v4103 = vld [vmem:[%s3082] sm:$0xff]
        %v4104 = vld [vmem:[%s3082 + $0x8] sm:$0xff]
        %v4105 = vld [vmem:[%s3082 + $0x10] sm:$0xff]
        %v4106 = vld [vmem:[%s3082 + $0x18] sm:$0xff]
        %v4107 = vld [vmem:[%s3082 + $0x20] sm:$0xff]
        %v4108 = vld [vmem:[%s3082 + $0x28] sm:$0xff]
        %v4109 = vld [vmem:[%s3082 + $0x30] sm:$0xff]
        %v4110 = vld [vmem:[%s3082 + $0x38] sm:$0xff]
        %v4111 = vld [vmem:[%s3082 + $0x60] sm:$0xff]
        %v4112 = vld [vmem:[%s3082 + $0x68] sm:$0xff]
        %v4113 = vld [vmem:[%s3082 + $0x70] sm:$0xff]
        %v4114 = vld [vmem:[%s3082 + $0x78] sm:$0xff]
        %v4115 = vld [vmem:[%s3082 + $0x80] sm:$0xff]
        %v4116 = vld [vmem:[%s3082 + $0x88] sm:$0xff]
        %v4117 = vld [vmem:[%s3082 + $0x90] sm:$0xff]
        %v4118 = vld [vmem:[%s3082 + $0x98] sm:$0xff]
        %s4119 = scalar_lea.vmem %s3, 1408
        %v4120 = vld [vmem:[%s4119] sm:$0xff]
        %v4121 = vld [vmem:[%s4119 + $0x8] sm:$0xff]
        %v4122 = vld [vmem:[%s4119 + $0x10] sm:$0xff]
        %v4123 = vld [vmem:[%s4119 + $0x18] sm:$0xff]
        %v4124 = vld [vmem:[%s4119 + $0x20] sm:$0xff]
        %v4125 = vld [vmem:[%s4119 + $0x28] sm:$0xff]
        %v4126 = vld [vmem:[%s4119 + $0x30] sm:$0xff]
        %v4127 = vld [vmem:[%s4119 + $0x38] sm:$0xff]
        %v4128 = vld [vmem:[%s4119 + $0x40] sm:$0xff]
        %v4129 = vld [vmem:[%s4119 + $0x48] sm:$0xff]
        %v4130 = vld [vmem:[%s4119 + $0x50] sm:$0xff]
        %v4131 = vld [vmem:[%s4119 + $0x58] sm:$0xff]
        %v4132 = vld [vmem:[%s4119 + $0x60] sm:$0xff]
        %v4133 = vld [vmem:[%s4119 + $0x68] sm:$0xff]
        %v4134 = vld [vmem:[%s4119 + $0x70] sm:$0xff]
        %v4135 = vld [vmem:[%s4119 + $0x78] sm:$0xff]
        %4136 = vmatprep.subr.mxu0 0.0
        %4137 = vmatpush1.msra.mxu0 %v4120
        %4138 = vmatprep.subr.mxu0 0.0
        %4139 = vmatpush1.msra.mxu0 %v4121
        %4140 = vmatprep.subr.mxu0 0.0
        %4141 = vmatpush1.msra.mxu0 %v4122
        %4142 = vmatprep.subr.mxu0 0.0
        %4143 = vmatpush1.msra.mxu0 %v4123
        %4144 = vmatprep.subr.mxu0 0.0
        %4145 = vmatpush1.msra.mxu0 %v4124
        %4146 = vmatprep.subr.mxu0 0.0
        %4147 = vmatpush1.msra.mxu0 %v4125
        %4148 = vmatprep.subr.mxu0 0.0
        %4149 = vmatpush1.msra.mxu0 %v4126
        %4150 = vmatprep.subr.mxu0 0.0
        %4151 = vmatpush1.msra.mxu0 %v4127
        %4152 = vmatprep.subr.mxu0 0.0
        %4153 = vmatpush1.msra.mxu0 %v4128
        %4154 = vmatprep.subr.mxu0 0.0
        %4155 = vmatpush1.msra.mxu0 %v4129
        %4156 = vmatprep.subr.mxu0 0.0
        %4157 = vmatpush1.msra.mxu0 %v4130
        %4158 = vmatprep.subr.mxu0 0.0
        %4159 = vmatpush1.msra.mxu0 %v4131
        %4160 = vmatprep.subr.mxu0 0.0
        %4161 = vmatpush1.msra.mxu0 %v4132
        %4162 = vmatprep.subr.mxu0 0.0
        %4163 = vmatpush1.msra.mxu0 %v4133
        %4164 = vmatprep.subr.mxu0 0.0
        %4165 = vmatpush1.msra.mxu0 %v4134
        %4166 = vmatprep.subr.mxu0 0.0
        %4167 = vmatpush1.msra.mxu0 %v4135
        %4168 = vmatprep.subr.mxu0 0.0
        %4169 = vmatpush1.msra.mxu0 0.0
        %4170 = vmatprep.subr.mxu0 0.0
        %4171 = vmatpush1.msra.mxu0 0.0
        %4172 = vmatprep.subr.mxu0 0.0
        %4173 = vmatpush1.msra.mxu0 0.0
        %4174 = vmatprep.subr.mxu0 0.0
        %4175 = vmatpush1.msra.mxu0 0.0
        %4176 = vmatprep.subr.mxu0 0.0
        %4177 = vmatpush1.msra.mxu0 0.0
        %4178 = vmatprep.subr.mxu0 0.0
        %4179 = vmatpush1.msra.mxu0 0.0
        %4180 = vmatprep.subr.mxu0 0.0
        %4181 = vmatpush1.msra.mxu0 0.0
        %4182 = vmatprep.subr.mxu0 0.0
        %4183 = vmatpush1.msra.mxu0 0.0
        %4184 = vmatprep.subr.mxu0 0.0
        %4185 = vmatpush1.msra.mxu0 0.0
        %4186 = vmatprep.subr.mxu0 0.0
        %4187 = vmatpush1.msra.mxu0 0.0
        %4188 = vmatprep.subr.mxu0 0.0
        %4189 = vmatpush1.msra.mxu0 0.0
        %4190 = vmatprep.subr.mxu0 0.0
        %4191 = vmatpush1.msra.mxu0 0.0
        %4192 = vmatprep.subr.mxu0 0.0
        %4193 = vmatpush1.msra.mxu0 0.0
        %4194 = vmatprep.subr.mxu0 0.0
        %4195 = vmatpush1.msra.mxu0 0.0
        %4196 = vmatprep.subr.mxu0 0.0
        %4197 = vmatpush1.msra.mxu0 0.0
        %4198 = vmatprep.subr.mxu0 0.0
        %4199 = vmatpush1.msra.mxu0 0.0
        %4200 = vmatprep.mubr.f32.mxu0 0.0
        %4201 = vmatmul.mubr.f32.gmra.mrb[0].mxu0 %v4103
        %v4202 = vpop.f32.mrb[0].mxu0
        %v4203 = vadd.f32 0.0, %v4202
        %v4204 = vpop.f32.mrb[0].mxu0
        %4205 = vmatprep.mubr.f32.mxu0 0.0
        %4206 = vmatmul.mubr.f32.gmra.mrb[0].mxu0 %v4104
        %v4207 = vpop.f32.mrb[0].mxu0
        %v4208 = vadd.f32 0.0, %v4207
        %v4209 = vpop.f32.mrb[0].mxu0
        %4210 = vmatprep.mubr.f32.mxu0 0.0
        %4211 = vmatmul.mubr.f32.gmra.mrb[0].mxu0 %v4105
        %v4212 = vpop.f32.mrb[0].mxu0
        %v4213 = vadd.f32 0.0, %v4212
        %v4214 = vpop.f32.mrb[0].mxu0
        %4215 = vmatprep.mubr.f32.mxu0 0.0
        %4216 = vmatmul.mubr.f32.gmra.mrb[0].mxu0 %v4106
        %v4217 = vpop.f32.mrb[0].mxu0
        %v4218 = vadd.f32 0.0, %v4217
        %v4219 = vpop.f32.mrb[0].mxu0
        %4220 = vmatprep.mubr.f32.mxu0 0.0
        %4221 = vmatmul.mubr.f32.gmra.mrb[0].mxu0 %v4107
        %v4222 = vpop.f32.mrb[0].mxu0
        %v4223 = vadd.f32 0.0, %v4222
        %v4224 = vpop.f32.mrb[0].mxu0
        %4225 = vmatprep.mubr.f32.mxu0 0.0
        %4226 = vmatmul.mubr.f32.gmra.mrb[0].mxu0 %v4108
        %v4227 = vpop.f32.mrb[0].mxu0
        %v4228 = vadd.f32 0.0, %v4227
        %v4229 = vpop.f32.mrb[0].mxu0
        %4230 = vmatprep.mubr.f32.mxu0 0.0
        %4231 = vmatmul.mubr.f32.gmra.mrb[0].mxu0 %v4109
        %v4232 = vpop.f32.mrb[0].mxu0
        %v4233 = vadd.f32 0.0, %v4232
        %v4234 = vpop.f32.mrb[0].mxu0
        %4235 = vmatprep.mubr.f32.mxu0 0.0
        %4236 = vmatmul.mubr.f32.gmra.mrb[0].mxu0 %v4110
        %v4237 = vpop.f32.mrb[0].mxu0
        %v4238 = vadd.f32 0.0, %v4237
        %v4239 = vpop.f32.mrb[0].mxu0
        %4240 = vmatprep.mubr.f32.mxu0 0.0
        %4241 = vmatmul.mubr.f32.gmra.mrb[0].mxu0 %v4111
        %v4242 = vpop.f32.mrb[0].mxu0
        %v4243 = vadd.f32 0.0, %v4242
        %v4244 = vpop.f32.mrb[0].mxu0
        %4245 = vmatprep.mubr.f32.mxu0 0.0
        %4246 = vmatmul.mubr.f32.gmra.mrb[0].mxu0 %v4112
        %v4247 = vpop.f32.mrb[0].mxu0
        %v4248 = vadd.f32 0.0, %v4247
        %v4249 = vpop.f32.mrb[0].mxu0
        %4250 = vmatprep.mubr.f32.mxu0 0.0
        %4251 = vmatmul.mubr.f32.gmra.mrb[0].mxu0 %v4113
        %v4252 = vpop.f32.mrb[0].mxu0
        %v4253 = vadd.f32 0.0, %v4252
        %v4254 = vpop.f32.mrb[0].mxu0
        %4255 = vmatprep.mubr.f32.mxu0 0.0
        %4256 = vmatmul.mubr.f32.gmra.mrb[0].mxu0 %v4114
        %v4257 = vpop.f32.mrb[0].mxu0
        %v4258 = vadd.f32 0.0, %v4257
        %v4259 = vpop.f32.mrb[0].mxu0
        %4260 = vmatprep.mubr.f32.mxu0 0.0
        %4261 = vmatmul.mubr.f32.gmra.mrb[0].mxu0 %v4115
        %v4262 = vpop.f32.mrb[0].mxu0
        %v4263 = vadd.f32 0.0, %v4262
        %v4264 = vpop.f32.mrb[0].mxu0
        %4265 = vmatprep.mubr.f32.mxu0 0.0
        %4266 = vmatmul.mubr.f32.gmra.mrb[0].mxu0 %v4116
        %v4267 = vpop.f32.mrb[0].mxu0
        %v4268 = vadd.f32 0.0, %v4267
        %v4269 = vpop.f32.mrb[0].mxu0
        %4270 = vmatprep.mubr.f32.mxu0 0.0
        %4271 = vmatmul.mubr.f32.gmra.mrb[0].mxu0 %v4117
        %v4272 = vpop.f32.mrb[0].mxu0
        %v4273 = vadd.f32 0.0, %v4272
        %v4274 = vpop.f32.mrb[0].mxu0
        %4275 = vmatprep.mubr.f32.mxu0 0.0
        %4276 = vmatmul.mubr.f32.gmra.mrb[0].mxu0 %v4118
        %v4277 = vpop.f32.mrb[0].mxu0
        %v4278 = vadd.f32 0.0, %v4277
        %v4279 = vpop.f32.mrb[0].mxu0
        %4280 = vdwg.mxu0
        %v4281 = vadd.f32 %v4087, %v4203
        %v4282 = vadd.f32 %v4088, %v4208
        %v4283 = vadd.f32 %v4089, %v4213
        %v4284 = vadd.f32 %v4090, %v4218
        %v4285 = vadd.f32 %v4091, %v4223
        %v4286 = vadd.f32 %v4092, %v4228
        %v4287 = vadd.f32 %v4093, %v4233
        %v4288 = vadd.f32 %v4094, %v4238
        %v4289 = vadd.f32 %v4095, %v4243
        %v4290 = vadd.f32 %v4096, %v4248
        %v4291 = vadd.f32 %v4097, %v4253
        %v4292 = vadd.f32 %v4098, %v4258
        %v4293 = vadd.f32 %v4099, %v4263
        %v4294 = vadd.f32 %v4100, %v4268
        %v4295 = vadd.f32 %v4101, %v4273
        %v4296 = vadd.f32 %v4102, %v4278
        %v4297 = vld [vmem:[%s3277] sm:$0xff]
        %v4298 = vld [vmem:[%s3277 + $0x8] sm:$0xff]
        %v4299 = vld [vmem:[%s3277 + $0x10] sm:$0xff]
        %v4300 = vld [vmem:[%s3277 + $0x18] sm:$0xff]
        %v4301 = vld [vmem:[%s3277 + $0x20] sm:$0xff]
        %v4302 = vld [vmem:[%s3277 + $0x28] sm:$0xff]
        %v4303 = vld [vmem:[%s3277 + $0x30] sm:$0xff]
        %v4304 = vld [vmem:[%s3277 + $0x38] sm:$0xff]
        %v4305 = vld [vmem:[%s3277 + $0x60] sm:$0xff]
        %v4306 = vld [vmem:[%s3277 + $0x68] sm:$0xff]
        %v4307 = vld [vmem:[%s3277 + $0x70] sm:$0xff]
        %v4308 = vld [vmem:[%s3277 + $0x78] sm:$0xff]
        %v4309 = vld [vmem:[%s3277 + $0x80] sm:$0xff]
        %v4310 = vld [vmem:[%s3277 + $0x88] sm:$0xff]
        %v4311 = vld [vmem:[%s3277 + $0x90] sm:$0xff]
        %v4312 = vld [vmem:[%s3277 + $0x98] sm:$0xff]
        %s4313 = scalar_lea.vmem %s3, 2048
        %v4314 = vld [vmem:[%s4313] sm:$0xff]
        %v4315 = vld [vmem:[%s4313 + $0x8] sm:$0xff]
        %v4316 = vld [vmem:[%s4313 + $0x10] sm:$0xff]
        %v4317 = vld [vmem:[%s4313 + $0x18] sm:$0xff]
        %v4318 = vld [vmem:[%s4313 + $0x20] sm:$0xff]
        %v4319 = vld [vmem:[%s4313 + $0x28] sm:$0xff]
        %v4320 = vld [vmem:[%s4313 + $0x30] sm:$0xff]
        %v4321 = vld [vmem:[%s4313 + $0x38] sm:$0xff]
        %v4322 = vld [vmem:[%s4313 + $0x40] sm:$0xff]
        %v4323 = vld [vmem:[%s4313 + $0x48] sm:$0xff]
        %v4324 = vld [vmem:[%s4313 + $0x50] sm:$0xff]
        %v4325 = vld [vmem:[%s4313 + $0x58] sm:$0xff]
        %v4326 = vld [vmem:[%s4313 + $0x60] sm:$0xff]
        %v4327 = vld [vmem:[%s4313 + $0x68] sm:$0xff]
        %v4328 = vld [vmem:[%s4313 + $0x70] sm:$0xff]
        %v4329 = vld [vmem:[%s4313 + $0x78] sm:$0xff]
        %4330 = vmatprep.subr.mxu0 0.0
        %4331 = vmatpush1.msra.mxu0 %v4314
        %4332 = vmatprep.subr.mxu0 0.0
        %4333 = vmatpush1.msra.mxu0 %v4315
        %4334 = vmatprep.subr.mxu0 0.0
        %4335 = vmatpush1.msra.mxu0 %v4316
        %4336 = vmatprep.subr.mxu0 0.0
        %4337 = vmatpush1.msra.mxu0 %v4317
        %4338 = vmatprep.subr.mxu0 0.0
        %4339 = vmatpush1.msra.mxu0 %v4318
        %4340 = vmatprep.subr.mxu0 0.0
        %4341 = vmatpush1.msra.mxu0 %v4319
        %4342 = vmatprep.subr.mxu0 0.0
        %4343 = vmatpush1.msra.mxu0 %v4320
        %4344 = vmatprep.subr.mxu0 0.0
        %4345 = vmatpush1.msra.mxu0 %v4321
        %4346 = vmatprep.subr.mxu0 0.0
        %4347 = vmatpush1.msra.mxu0 %v4322
        %4348 = vmatprep.subr.mxu0 0.0
        %4349 = vmatpush1.msra.mxu0 %v4323
        %4350 = vmatprep.subr.mxu0 0.0
        %4351 = vmatpush1.msra.mxu0 %v4324
        %4352 = vmatprep.subr.mxu0 0.0
        %4353 = vmatpush1.msra.mxu0 %v4325
        %4354 = vmatprep.subr.mxu0 0.0
        %4355 = vmatpush1.msra.mxu0 %v4326
        %4356 = vmatprep.subr.mxu0 0.0
        %4357 = vmatpush1.msra.mxu0 %v4327
        %4358 = vmatprep.subr.mxu0 0.0
        %4359 = vmatpush1.msra.mxu0 %v4328
        %4360 = vmatprep.subr.mxu0 0.0
        %4361 = vmatpush1.msra.mxu0 %v4329
        %4362 = vmatprep.subr.mxu0 0.0
        %4363 = vmatpush1.msra.mxu0 0.0
        %4364 = vmatprep.subr.mxu0 0.0
        %4365 = vmatpush1.msra.mxu0 0.0
        %4366 = vmatprep.subr.mxu0 0.0
        %4367 = vmatpush1.msra.mxu0 0.0
        %4368 = vmatprep.subr.mxu0 0.0
        %4369 = vmatpush1.msra.mxu0 0.0
        %4370 = vmatprep.subr.mxu0 0.0
        %4371 = vmatpush1.msra.mxu0 0.0
        %4372 = vmatprep.subr.mxu0 0.0
        %4373 = vmatpush1.msra.mxu0 0.0
        %4374 = vmatprep.subr.mxu0 0.0
        %4375 = vmatpush1.msra.mxu0 0.0
        %4376 = vmatprep.subr.mxu0 0.0
        %4377 = vmatpush1.msra.mxu0 0.0
        %4378 = vmatprep.subr.mxu0 0.0
        %4379 = vmatpush1.msra.mxu0 0.0
        %4380 = vmatprep.subr.mxu0 0.0
        %4381 = vmatpush1.msra.mxu0 0.0
        %4382 = vmatprep.subr.mxu0 0.0
        %4383 = vmatpush1.msra.mxu0 0.0
        %4384 = vmatprep.subr.mxu0 0.0
        %4385 = vmatpush1.msra.mxu0 0.0
        %4386 = vmatprep.subr.mxu0 0.0
        %4387 = vmatpush1.msra.mxu0 0.0
        %4388 = vmatprep.subr.mxu0 0.0
        %4389 = vmatpush1.msra.mxu0 0.0
        %4390 = vmatprep.subr.mxu0 0.0
        %4391 = vmatpush1.msra.mxu0 0.0
        %4392 = vmatprep.subr.mxu0 0.0
        %4393 = vmatpush1.msra.mxu0 0.0
        %4394 = vmatprep.mubr.f32.mxu0 0.0
        %4395 = vmatmul.mubr.f32.gmra.mrb[0].mxu0 %v4297
        %v4396 = vpop.f32.mrb[0].mxu0
        %v4397 = vadd.f32 0.0, %v4396
        %v4398 = vpop.f32.mrb[0].mxu0
        %4399 = vmatprep.mubr.f32.mxu0 0.0
        %4400 = vmatmul.mubr.f32.gmra.mrb[0].mxu0 %v4298
        %v4401 = vpop.f32.mrb[0].mxu0
        %v4402 = vadd.f32 0.0, %v4401
        %v4403 = vpop.f32.mrb[0].mxu0
        %4404 = vmatprep.mubr.f32.mxu0 0.0
        %4405 = vmatmul.mubr.f32.gmra.mrb[0].mxu0 %v4299
        %v4406 = vpop.f32.mrb[0].mxu0
        %v4407 = vadd.f32 0.0, %v4406
        %v4408 = vpop.f32.mrb[0].mxu0
        %4409 = vmatprep.mubr.f32.mxu0 0.0
        %4410 = vmatmul.mubr.f32.gmra.mrb[0].mxu0 %v4300
        %v4411 = vpop.f32.mrb[0].mxu0
        %v4412 = vadd.f32 0.0, %v4411
        %v4413 = vpop.f32.mrb[0].mxu0
        %4414 = vmatprep.mubr.f32.mxu0 0.0
        %4415 = vmatmul.mubr.f32.gmra.mrb[0].mxu0 %v4301
        %v4416 = vpop.f32.mrb[0].mxu0
        %v4417 = vadd.f32 0.0, %v4416
        %v4418 = vpop.f32.mrb[0].mxu0
        %4419 = vmatprep.mubr.f32.mxu0 0.0
        %4420 = vmatmul.mubr.f32.gmra.mrb[0].mxu0 %v4302
        %v4421 = vpop.f32.mrb[0].mxu0
        %v4422 = vadd.f32 0.0, %v4421
        %v4423 = vpop.f32.mrb[0].mxu0
        %4424 = vmatprep.mubr.f32.mxu0 0.0
        %4425 = vmatmul.mubr.f32.gmra.mrb[0].mxu0 %v4303
        %v4426 = vpop.f32.mrb[0].mxu0
        %v4427 = vadd.f32 0.0, %v4426
        %v4428 = vpop.f32.mrb[0].mxu0
        %4429 = vmatprep.mubr.f32.mxu0 0.0
        %4430 = vmatmul.mubr.f32.gmra.mrb[0].mxu0 %v4304
        %v4431 = vpop.f32.mrb[0].mxu0
        %v4432 = vadd.f32 0.0, %v4431
        %v4433 = vpop.f32.mrb[0].mxu0
        %4434 = vmatprep.mubr.f32.mxu0 0.0
        %4435 = vmatmul.mubr.f32.gmra.mrb[0].mxu0 %v4305
        %v4436 = vpop.f32.mrb[0].mxu0
        %v4437 = vadd.f32 0.0, %v4436
        %v4438 = vpop.f32.mrb[0].mxu0
        %4439 = vmatprep.mubr.f32.mxu0 0.0
        %4440 = vmatmul.mubr.f32.gmra.mrb[0].mxu0 %v4306
        %v4441 = vpop.f32.mrb[0].mxu0
        %v4442 = vadd.f32 0.0, %v4441
        %v4443 = vpop.f32.mrb[0].mxu0
        %4444 = vmatprep.mubr.f32.mxu0 0.0
        %4445 = vmatmul.mubr.f32.gmra.mrb[0].mxu0 %v4307
        %v4446 = vpop.f32.mrb[0].mxu0
        %v4447 = vadd.f32 0.0, %v4446
        %v4448 = vpop.f32.mrb[0].mxu0
        %4449 = vmatprep.mubr.f32.mxu0 0.0
        %4450 = vmatmul.mubr.f32.gmra.mrb[0].mxu0 %v4308
        %v4451 = vpop.f32.mrb[0].mxu0
        %v4452 = vadd.f32 0.0, %v4451
        %v4453 = vpop.f32.mrb[0].mxu0
        %4454 = vmatprep.mubr.f32.mxu0 0.0
        %4455 = vmatmul.mubr.f32.gmra.mrb[0].mxu0 %v4309
        %v4456 = vpop.f32.mrb[0].mxu0
        %v4457 = vadd.f32 0.0, %v4456
        %v4458 = vpop.f32.mrb[0].mxu0
        %4459 = vmatprep.mubr.f32.mxu0 0.0
        %4460 = vmatmul.mubr.f32.gmra.mrb[0].mxu0 %v4310
        %v4461 = vpop.f32.mrb[0].mxu0
        %v4462 = vadd.f32 0.0, %v4461
        %v4463 = vpop.f32.mrb[0].mxu0
        %4464 = vmatprep.mubr.f32.mxu0 0.0
        %4465 = vmatmul.mubr.f32.gmra.mrb[0].mxu0 %v4311
        %v4466 = vpop.f32.mrb[0].mxu0
        %v4467 = vadd.f32 0.0, %v4466
        %v4468 = vpop.f32.mrb[0].mxu0
        %4469 = vmatprep.mubr.f32.mxu0 0.0
        %4470 = vmatmul.mubr.f32.gmra.mrb[0].mxu0 %v4312
        %v4471 = vpop.f32.mrb[0].mxu0
        %v4472 = vadd.f32 0.0, %v4471
        %v4473 = vpop.f32.mrb[0].mxu0
        %4474 = vdwg.mxu0
        %v4475 = vadd.f32 %v4281, %v4397
        %v4476 = vadd.f32 %v4282, %v4402
        %v4477 = vadd.f32 %v4283, %v4407
        %v4478 = vadd.f32 %v4284, %v4412
        %v4479 = vadd.f32 %v4285, %v4417
        %v4480 = vadd.f32 %v4286, %v4422
        %v4481 = vadd.f32 %v4287, %v4427
        %v4482 = vadd.f32 %v4288, %v4432
        %v4483 = vadd.f32 %v4289, %v4437
        %v4484 = vadd.f32 %v4290, %v4442
        %v4485 = vadd.f32 %v4291, %v4447
        %v4486 = vadd.f32 %v4292, %v4452
        %v4487 = vadd.f32 %v4293, %v4457
        %v4488 = vadd.f32 %v4294, %v4462
        %v4489 = vadd.f32 %v4295, %v4467
        %v4490 = vadd.f32 %v4296, %v4472
        %v4491 = vld [vmem:[%s3472] sm:$0xff]
        %v4492 = vld [vmem:[%s3472 + $0x8] sm:$0xff]
        %v4493 = vld [vmem:[%s3472 + $0x10] sm:$0xff]
        %v4494 = vld [vmem:[%s3472 + $0x18] sm:$0xff]
        %v4495 = vld [vmem:[%s3472 + $0x20] sm:$0xff]
        %v4496 = vld [vmem:[%s3472 + $0x28] sm:$0xff]
        %v4497 = vld [vmem:[%s3472 + $0x30] sm:$0xff]
        %v4498 = vld [vmem:[%s3472 + $0x38] sm:$0xff]
        %v4499 = vld [vmem:[%s3472 + $0x60] sm:$0xff]
        %v4500 = vld [vmem:[%s3472 + $0x68] sm:$0xff]
        %v4501 = vld [vmem:[%s3472 + $0x70] sm:$0xff]
        %v4502 = vld [vmem:[%s3472 + $0x78] sm:$0xff]
        %v4503 = vld [vmem:[%s3472 + $0x80] sm:$0xff]
        %v4504 = vld [vmem:[%s3472 + $0x88] sm:$0xff]
        %v4505 = vld [vmem:[%s3472 + $0x90] sm:$0xff]
        %v4506 = vld [vmem:[%s3472 + $0x98] sm:$0xff]
        %s4507 = scalar_lea.vmem %s3, 2688
        %v4508 = vld [vmem:[%s4507] sm:$0xff]
        %v4509 = vld [vmem:[%s4507 + $0x8] sm:$0xff]
        %v4510 = vld [vmem:[%s4507 + $0x10] sm:$0xff]
        %v4511 = vld [vmem:[%s4507 + $0x18] sm:$0xff]
        %v4512 = vld [vmem:[%s4507 + $0x20] sm:$0xff]
        %v4513 = vld [vmem:[%s4507 + $0x28] sm:$0xff]
        %v4514 = vld [vmem:[%s4507 + $0x30] sm:$0xff]
        %v4515 = vld [vmem:[%s4507 + $0x38] sm:$0xff]
        %v4516 = vld [vmem:[%s4507 + $0x40] sm:$0xff]
        %v4517 = vld [vmem:[%s4507 + $0x48] sm:$0xff]
        %v4518 = vld [vmem:[%s4507 + $0x50] sm:$0xff]
        %v4519 = vld [vmem:[%s4507 + $0x58] sm:$0xff]
        %v4520 = vld [vmem:[%s4507 + $0x60] sm:$0xff]
        %v4521 = vld [vmem:[%s4507 + $0x68] sm:$0xff]
        %v4522 = vld [vmem:[%s4507 + $0x70] sm:$0xff]
        %v4523 = vld [vmem:[%s4507 + $0x78] sm:$0xff]
        %4524 = vmatprep.subr.mxu0 0.0
        %4525 = vmatpush1.msra.mxu0 %v4508
        %4526 = vmatprep.subr.mxu0 0.0
        %4527 = vmatpush1.msra.mxu0 %v4509
        %4528 = vmatprep.subr.mxu0 0.0
        %4529 = vmatpush1.msra.mxu0 %v4510
        %4530 = vmatprep.subr.mxu0 0.0
        %4531 = vmatpush1.msra.mxu0 %v4511
        %4532 = vmatprep.subr.mxu0 0.0
        %4533 = vmatpush1.msra.mxu0 %v4512
        %4534 = vmatprep.subr.mxu0 0.0
        %4535 = vmatpush1.msra.mxu0 %v4513
        %4536 = vmatprep.subr.mxu0 0.0
        %4537 = vmatpush1.msra.mxu0 %v4514
        %4538 = vmatprep.subr.mxu0 0.0
        %4539 = vmatpush1.msra.mxu0 %v4515
        %4540 = vmatprep.subr.mxu0 0.0
        %4541 = vmatpush1.msra.mxu0 %v4516
        %4542 = vmatprep.subr.mxu0 0.0
        %4543 = vmatpush1.msra.mxu0 %v4517
        %4544 = vmatprep.subr.mxu0 0.0
        %4545 = vmatpush1.msra.mxu0 %v4518
        %4546 = vmatprep.subr.mxu0 0.0
        %4547 = vmatpush1.msra.mxu0 %v4519
        %4548 = vmatprep.subr.mxu0 0.0
        %4549 = vmatpush1.msra.mxu0 %v4520
        %4550 = vmatprep.subr.mxu0 0.0
        %4551 = vmatpush1.msra.mxu0 %v4521
        %4552 = vmatprep.subr.mxu0 0.0
        %4553 = vmatpush1.msra.mxu0 %v4522
        %4554 = vmatprep.subr.mxu0 0.0
        %4555 = vmatpush1.msra.mxu0 %v4523
        %4556 = vmatprep.subr.mxu0 0.0
        %4557 = vmatpush1.msra.mxu0 0.0
        %4558 = vmatprep.subr.mxu0 0.0
        %4559 = vmatpush1.msra.mxu0 0.0
        %4560 = vmatprep.subr.mxu0 0.0
        %4561 = vmatpush1.msra.mxu0 0.0
        %4562 = vmatprep.subr.mxu0 0.0
        %4563 = vmatpush1.msra.mxu0 0.0
        %4564 = vmatprep.subr.mxu0 0.0
        %4565 = vmatpush1.msra.mxu0 0.0
        %4566 = vmatprep.subr.mxu0 0.0
        %4567 = vmatpush1.msra.mxu0 0.0
        %4568 = vmatprep.subr.mxu0 0.0
        %4569 = vmatpush1.msra.mxu0 0.0
        %4570 = vmatprep.subr.mxu0 0.0
        %4571 = vmatpush1.msra.mxu0 0.0
        %4572 = vmatprep.subr.mxu0 0.0
        %4573 = vmatpush1.msra.mxu0 0.0
        %4574 = vmatprep.subr.mxu0 0.0
        %4575 = vmatpush1.msra.mxu0 0.0
        %4576 = vmatprep.subr.mxu0 0.0
        %4577 = vmatpush1.msra.mxu0 0.0
        %4578 = vmatprep.subr.mxu0 0.0
        %4579 = vmatpush1.msra.mxu0 0.0
        %4580 = vmatprep.subr.mxu0 0.0
        %4581 = vmatpush1.msra.mxu0 0.0
        %4582 = vmatprep.subr.mxu0 0.0
        %4583 = vmatpush1.msra.mxu0 0.0
        %4584 = vmatprep.subr.mxu0 0.0
        %4585 = vmatpush1.msra.mxu0 0.0
        %4586 = vmatprep.subr.mxu0 0.0
        %4587 = vmatpush1.msra.mxu0 0.0
        %4588 = vmatprep.mubr.f32.mxu0 0.0
        %4589 = vmatmul.mubr.f32.gmra.mrb[0].mxu0 %v4491
        %v4590 = vpop.f32.mrb[0].mxu0
        %v4591 = vadd.f32 0.0, %v4590
        %v4592 = vpop.f32.mrb[0].mxu0
        %4593 = vmatprep.mubr.f32.mxu0 0.0
        %4594 = vmatmul.mubr.f32.gmra.mrb[0].mxu0 %v4492
        %v4595 = vpop.f32.mrb[0].mxu0
        %v4596 = vadd.f32 0.0, %v4595
        %v4597 = vpop.f32.mrb[0].mxu0
        %4598 = vmatprep.mubr.f32.mxu0 0.0
        %4599 = vmatmul.mubr.f32.gmra.mrb[0].mxu0 %v4493
        %v4600 = vpop.f32.mrb[0].mxu0
        %v4601 = vadd.f32 0.0, %v4600
        %v4602 = vpop.f32.mrb[0].mxu0
        %4603 = vmatprep.mubr.f32.mxu0 0.0
        %4604 = vmatmul.mubr.f32.gmra.mrb[0].mxu0 %v4494
        %v4605 = vpop.f32.mrb[0].mxu0
        %v4606 = vadd.f32 0.0, %v4605
        %v4607 = vpop.f32.mrb[0].mxu0
        %4608 = vmatprep.mubr.f32.mxu0 0.0
        %4609 = vmatmul.mubr.f32.gmra.mrb[0].mxu0 %v4495
        %v4610 = vpop.f32.mrb[0].mxu0
        %v4611 = vadd.f32 0.0, %v4610
        %v4612 = vpop.f32.mrb[0].mxu0
        %4613 = vmatprep.mubr.f32.mxu0 0.0
        %4614 = vmatmul.mubr.f32.gmra.mrb[0].mxu0 %v4496
        %v4615 = vpop.f32.mrb[0].mxu0
        %v4616 = vadd.f32 0.0, %v4615
        %v4617 = vpop.f32.mrb[0].mxu0
        %4618 = vmatprep.mubr.f32.mxu0 0.0
        %4619 = vmatmul.mubr.f32.gmra.mrb[0].mxu0 %v4497
        %v4620 = vpop.f32.mrb[0].mxu0
        %v4621 = vadd.f32 0.0, %v4620
        %v4622 = vpop.f32.mrb[0].mxu0
        %4623 = vmatprep.mubr.f32.mxu0 0.0
        %4624 = vmatmul.mubr.f32.gmra.mrb[0].mxu0 %v4498
        %v4625 = vpop.f32.mrb[0].mxu0
        %v4626 = vadd.f32 0.0, %v4625
        %v4627 = vpop.f32.mrb[0].mxu0
        %4628 = vmatprep.mubr.f32.mxu0 0.0
        %4629 = vmatmul.mubr.f32.gmra.mrb[0].mxu0 %v4499
        %v4630 = vpop.f32.mrb[0].mxu0
        %v4631 = vadd.f32 0.0, %v4630
        %v4632 = vpop.f32.mrb[0].mxu0
        %4633 = vmatprep.mubr.f32.mxu0 0.0
        %4634 = vmatmul.mubr.f32.gmra.mrb[0].mxu0 %v4500
        %v4635 = vpop.f32.mrb[0].mxu0
        %v4636 = vadd.f32 0.0, %v4635
        %v4637 = vpop.f32.mrb[0].mxu0
        %4638 = vmatprep.mubr.f32.mxu0 0.0
        %4639 = vmatmul.mubr.f32.gmra.mrb[0].mxu0 %v4501
        %v4640 = vpop.f32.mrb[0].mxu0
        %v4641 = vadd.f32 0.0, %v4640
        %v4642 = vpop.f32.mrb[0].mxu0
        %4643 = vmatprep.mubr.f32.mxu0 0.0
        %4644 = vmatmul.mubr.f32.gmra.mrb[0].mxu0 %v4502
        %v4645 = vpop.f32.mrb[0].mxu0
        %v4646 = vadd.f32 0.0, %v4645
        %v4647 = vpop.f32.mrb[0].mxu0
        %4648 = vmatprep.mubr.f32.mxu0 0.0
        %4649 = vmatmul.mubr.f32.gmra.mrb[0].mxu0 %v4503
        %v4650 = vpop.f32.mrb[0].mxu0
        %v4651 = vadd.f32 0.0, %v4650
        %v4652 = vpop.f32.mrb[0].mxu0
        %4653 = vmatprep.mubr.f32.mxu0 0.0
        %4654 = vmatmul.mubr.f32.gmra.mrb[0].mxu0 %v4504
        %v4655 = vpop.f32.mrb[0].mxu0
        %v4656 = vadd.f32 0.0, %v4655
        %v4657 = vpop.f32.mrb[0].mxu0
        %4658 = vmatprep.mubr.f32.mxu0 0.0
        %4659 = vmatmul.mubr.f32.gmra.mrb[0].mxu0 %v4505
        %v4660 = vpop.f32.mrb[0].mxu0
        %v4661 = vadd.f32 0.0, %v4660
        %v4662 = vpop.f32.mrb[0].mxu0
        %4663 = vmatprep.mubr.f32.mxu0 0.0
        %4664 = vmatmul.mubr.f32.gmra.mrb[0].mxu0 %v4506
        %v4665 = vpop.f32.mrb[0].mxu0
        %v4666 = vadd.f32 0.0, %v4665
        %v4667 = vpop.f32.mrb[0].mxu0
        %4668 = vdwg.mxu0
        %v4669 = vadd.f32 %v4475, %v4591
        %v4670 = vadd.f32 %v4476, %v4596
        %v4671 = vadd.f32 %v4477, %v4601
        %v4672 = vadd.f32 %v4478, %v4606
        %v4673 = vadd.f32 %v4479, %v4611
        %v4674 = vadd.f32 %v4480, %v4616
        %v4675 = vadd.f32 %v4481, %v4621
        %v4676 = vadd.f32 %v4482, %v4626
        %v4677 = vadd.f32 %v4483, %v4631
        %v4678 = vadd.f32 %v4484, %v4636
        %v4679 = vadd.f32 %v4485, %v4641
        %v4680 = vadd.f32 %v4486, %v4646
        %v4681 = vadd.f32 %v4487, %v4651
        %v4682 = vadd.f32 %v4488, %v4656
        %v4683 = vadd.f32 %v4489, %v4661
        %v4684 = vadd.f32 %v4490, %v4666
        %v4685 = vld [vmem:[#allocation2 + $0x2] sm:$0xff]
        %v4686 = vld [vmem:[#allocation2 + $0x12] sm:$0xff]
        %v4687 = vld [vmem:[#allocation2 + $0x22] sm:$0xff]
        %v4688 = vld [vmem:[#allocation2 + $0x32] sm:$0xff]
        %v4689 = vld [vmem:[#allocation2 + $0x42] sm:$0xff]
        %v4690 = vld [vmem:[#allocation2 + $0x52] sm:$0xff]
        %v4691 = vld [vmem:[#allocation2 + $0x62] sm:$0xff]
        %v4692 = vld [vmem:[#allocation2 + $0x72] sm:$0xff]
        %v4693 = vld [vmem:[#allocation2 + $0x82] sm:$0xff]
        %v4694 = vld [vmem:[#allocation2 + $0x92] sm:$0xff]
        %v4695 = vld [vmem:[#allocation2 + $0xa2] sm:$0xff]
        %v4696 = vld [vmem:[#allocation2 + $0xb2] sm:$0xff]
        %v4697 = vld [vmem:[#allocation2 + $0xc2] sm:$0xff]
        %v4698 = vld [vmem:[#allocation2 + $0xd2] sm:$0xff]
        %v4699 = vld [vmem:[#allocation2 + $0xe2] sm:$0xff]
        %v4700 = vld [vmem:[#allocation2 + $0xf2] sm:$0xff]
        %v4701 = vld [vmem:[#allocation2 + $0x102] sm:$0xff]
        %v4702 = vld [vmem:[#allocation2 + $0x112] sm:$0xff]
        %v4703 = vld [vmem:[#allocation2 + $0x122] sm:$0xff]
        %v4704 = vld [vmem:[#allocation2 + $0x132] sm:$0xff]
        %v4705 = vld [vmem:[#allocation2 + $0x142] sm:$0xff]
        %v4706 = vld [vmem:[#allocation2 + $0x152] sm:$0xff]
        %v4707 = vld [vmem:[#allocation2 + $0x162] sm:$0xff]
        %v4708 = vld [vmem:[#allocation2 + $0x172] sm:$0xff]
        %4709 = vst [vmem:[#allocation3] sm:$0xff] %v4685
        %4710 = vst [vmem:[#allocation3 + $0x8] sm:$0xff] %v4686
        %4711 = vst [vmem:[#allocation3 + $0x10] sm:$0xff] %v4687
        %4712 = vst [vmem:[#allocation3 + $0x18] sm:$0xff] %v4688
        %4713 = vst [vmem:[#allocation3 + $0x20] sm:$0xff] %v4689
        %4714 = vst [vmem:[#allocation3 + $0x28] sm:$0xff] %v4690
        %4715 = vst [vmem:[#allocation3 + $0x30] sm:$0xff] %v4691
        %4716 = vst [vmem:[#allocation3 + $0x38] sm:$0xff] %v4692
        %4717 = vst [vmem:[#allocation3 + $0x40] sm:$0xff] %v4693
        %4718 = vst [vmem:[#allocation3 + $0x48] sm:$0xff] %v4694
        %4719 = vst [vmem:[#allocation3 + $0x50] sm:$0xff] %v4695
        %4720 = vst [vmem:[#allocation3 + $0x58] sm:$0xff] %v4696
        %4721 = vst [vmem:[#allocation3 + $0x60] sm:$0xff] %v4697
        %4722 = vst [vmem:[#allocation3 + $0x68] sm:$0xff] %v4698
        %4723 = vst [vmem:[#allocation3 + $0x70] sm:$0xff] %v4699
        %4724 = vst [vmem:[#allocation3 + $0x78] sm:$0xff] %v4700
        %4725 = vst [vmem:[#allocation3 + $0x80] sm:$0xff] %v4701
        %4726 = vst [vmem:[#allocation3 + $0x88] sm:$0xff] %v4702
        %4727 = vst [vmem:[#allocation3 + $0x90] sm:$0xff] %v4703
        %4728 = vst [vmem:[#allocation3 + $0x98] sm:$0xff] %v4704
        %4729 = vst [vmem:[#allocation3 + $0xa0] sm:$0xff] %v4705
        %4730 = vst [vmem:[#allocation3 + $0xa8] sm:$0xff] %v4706
        %4731 = vst [vmem:[#allocation3 + $0xb0] sm:$0xff] %v4707
        %4732 = vst [vmem:[#allocation3 + $0xb8] sm:$0xff] %v4708
        %v4733 = vld [vmem:[#allocation3] sm:$0xff]
        %v4734 = vld [vmem:[#allocation3 + $0x8] sm:$0xff]
        %v4735 = vld [vmem:[#allocation3 + $0x10] sm:$0xff]
        %v4736 = vld [vmem:[#allocation3 + $0x18] sm:$0xff]
        %v4737 = vld [vmem:[#allocation3 + $0x20] sm:$0xff]
        %v4738 = vld [vmem:[#allocation3 + $0x28] sm:$0xff]
        %v4739 = vld [vmem:[#allocation3 + $0x30] sm:$0xff]
        %v4740 = vld [vmem:[#allocation3 + $0x38] sm:$0xff]
        %v4741 = vld [vmem:[#allocation3 + $0x60] sm:$0xff]
        %v4742 = vld [vmem:[#allocation3 + $0x68] sm:$0xff]
        %v4743 = vld [vmem:[#allocation3 + $0x70] sm:$0xff]
        %v4744 = vld [vmem:[#allocation3 + $0x78] sm:$0xff]
        %v4745 = vld [vmem:[#allocation3 + $0x80] sm:$0xff]
        %v4746 = vld [vmem:[#allocation3 + $0x88] sm:$0xff]
        %v4747 = vld [vmem:[#allocation3 + $0x90] sm:$0xff]
        %v4748 = vld [vmem:[#allocation3 + $0x98] sm:$0xff]
        %s4749 = scalar_lea.vmem %s3, 256
        %v4750 = vld [vmem:[%s4749] sm:$0xff]
        %v4751 = vld [vmem:[%s4749 + $0x8] sm:$0xff]
        %v4752 = vld [vmem:[%s4749 + $0x10] sm:$0xff]
        %v4753 = vld [vmem:[%s4749 + $0x18] sm:$0xff]
        %v4754 = vld [vmem:[%s4749 + $0x20] sm:$0xff]
        %v4755 = vld [vmem:[%s4749 + $0x28] sm:$0xff]
        %v4756 = vld [vmem:[%s4749 + $0x30] sm:$0xff]
        %v4757 = vld [vmem:[%s4749 + $0x38] sm:$0xff]
        %v4758 = vld [vmem:[%s4749 + $0x40] sm:$0xff]
        %v4759 = vld [vmem:[%s4749 + $0x48] sm:$0xff]
        %v4760 = vld [vmem:[%s4749 + $0x50] sm:$0xff]
        %v4761 = vld [vmem:[%s4749 + $0x58] sm:$0xff]
        %v4762 = vld [vmem:[%s4749 + $0x60] sm:$0xff]
        %v4763 = vld [vmem:[%s4749 + $0x68] sm:$0xff]
        %v4764 = vld [vmem:[%s4749 + $0x70] sm:$0xff]
        %v4765 = vld [vmem:[%s4749 + $0x78] sm:$0xff]
        %4766 = vmatprep.subr.mxu0 0.0
        %4767 = vmatpush1.msra.mxu0 %v4750
        %4768 = vmatprep.subr.mxu0 0.0
        %4769 = vmatpush1.msra.mxu0 %v4751
        %4770 = vmatprep.subr.mxu0 0.0
        %4771 = vmatpush1.msra.mxu0 %v4752
        %4772 = vmatprep.subr.mxu0 0.0
        %4773 = vmatpush1.msra.mxu0 %v4753
        %4774 = vmatprep.subr.mxu0 0.0
        %4775 = vmatpush1.msra.mxu0 %v4754
        %4776 = vmatprep.subr.mxu0 0.0
        %4777 = vmatpush1.msra.mxu0 %v4755
        %4778 = vmatprep.subr.mxu0 0.0
        %4779 = vmatpush1.msra.mxu0 %v4756
        %4780 = vmatprep.subr.mxu0 0.0
        %4781 = vmatpush1.msra.mxu0 %v4757
        %4782 = vmatprep.subr.mxu0 0.0
        %4783 = vmatpush1.msra.mxu0 %v4758
        %4784 = vmatprep.subr.mxu0 0.0
        %4785 = vmatpush1.msra.mxu0 %v4759
        %4786 = vmatprep.subr.mxu0 0.0
        %4787 = vmatpush1.msra.mxu0 %v4760
        %4788 = vmatprep.subr.mxu0 0.0
        %4789 = vmatpush1.msra.mxu0 %v4761
        %4790 = vmatprep.subr.mxu0 0.0
        %4791 = vmatpush1.msra.mxu0 %v4762
        %4792 = vmatprep.subr.mxu0 0.0
        %4793 = vmatpush1.msra.mxu0 %v4763
        %4794 = vmatprep.subr.mxu0 0.0
        %4795 = vmatpush1.msra.mxu0 %v4764
        %4796 = vmatprep.subr.mxu0 0.0
        %4797 = vmatpush1.msra.mxu0 %v4765
        %4798 = vmatprep.subr.mxu0 0.0
        %4799 = vmatpush1.msra.mxu0 0.0
        %4800 = vmatprep.subr.mxu0 0.0
        %4801 = vmatpush1.msra.mxu0 0.0
        %4802 = vmatprep.subr.mxu0 0.0
        %4803 = vmatpush1.msra.mxu0 0.0
        %4804 = vmatprep.subr.mxu0 0.0
        %4805 = vmatpush1.msra.mxu0 0.0
        %4806 = vmatprep.subr.mxu0 0.0
        %4807 = vmatpush1.msra.mxu0 0.0
        %4808 = vmatprep.subr.mxu0 0.0
        %4809 = vmatpush1.msra.mxu0 0.0
        %4810 = vmatprep.subr.mxu0 0.0
        %4811 = vmatpush1.msra.mxu0 0.0
        %4812 = vmatprep.subr.mxu0 0.0
        %4813 = vmatpush1.msra.mxu0 0.0
        %4814 = vmatprep.subr.mxu0 0.0
        %4815 = vmatpush1.msra.mxu0 0.0
        %4816 = vmatprep.subr.mxu0 0.0
        %4817 = vmatpush1.msra.mxu0 0.0
        %4818 = vmatprep.subr.mxu0 0.0
        %4819 = vmatpush1.msra.mxu0 0.0
        %4820 = vmatprep.subr.mxu0 0.0
        %4821 = vmatpush1.msra.mxu0 0.0
        %4822 = vmatprep.subr.mxu0 0.0
        %4823 = vmatpush1.msra.mxu0 0.0
        %4824 = vmatprep.subr.mxu0 0.0
        %4825 = vmatpush1.msra.mxu0 0.0
        %4826 = vmatprep.subr.mxu0 0.0
        %4827 = vmatpush1.msra.mxu0 0.0
        %4828 = vmatprep.subr.mxu0 0.0
        %4829 = vmatpush1.msra.mxu0 0.0
        %4830 = vmatprep.mubr.f32.mxu0 0.0
        %4831 = vmatmul.mubr.f32.gmra.mrb[0].mxu0 %v4733
        %v4832 = vpop.f32.mrb[0].mxu0
        %v4833 = vadd.f32 0.0, %v4832
        %v4834 = vpop.f32.mrb[0].mxu0
        %4835 = vmatprep.mubr.f32.mxu0 0.0
        %4836 = vmatmul.mubr.f32.gmra.mrb[0].mxu0 %v4734
        %v4837 = vpop.f32.mrb[0].mxu0
        %v4838 = vadd.f32 0.0, %v4837
        %v4839 = vpop.f32.mrb[0].mxu0
        %4840 = vmatprep.mubr.f32.mxu0 0.0
        %4841 = vmatmul.mubr.f32.gmra.mrb[0].mxu0 %v4735
        %v4842 = vpop.f32.mrb[0].mxu0
        %v4843 = vadd.f32 0.0, %v4842
        %v4844 = vpop.f32.mrb[0].mxu0
        %4845 = vmatprep.mubr.f32.mxu0 0.0
        %4846 = vmatmul.mubr.f32.gmra.mrb[0].mxu0 %v4736
        %v4847 = vpop.f32.mrb[0].mxu0
        %v4848 = vadd.f32 0.0, %v4847
        %v4849 = vpop.f32.mrb[0].mxu0
        %4850 = vmatprep.mubr.f32.mxu0 0.0
        %4851 = vmatmul.mubr.f32.gmra.mrb[0].mxu0 %v4737
        %v4852 = vpop.f32.mrb[0].mxu0
        %v4853 = vadd.f32 0.0, %v4852
        %v4854 = vpop.f32.mrb[0].mxu0
        %4855 = vmatprep.mubr.f32.mxu0 0.0
        %4856 = vmatmul.mubr.f32.gmra.mrb[0].mxu0 %v4738
        %v4857 = vpop.f32.mrb[0].mxu0
        %v4858 = vadd.f32 0.0, %v4857
        %v4859 = vpop.f32.mrb[0].mxu0
        %4860 = vmatprep.mubr.f32.mxu0 0.0
        %4861 = vmatmul.mubr.f32.gmra.mrb[0].mxu0 %v4739
        %v4862 = vpop.f32.mrb[0].mxu0
        %v4863 = vadd.f32 0.0, %v4862
        %v4864 = vpop.f32.mrb[0].mxu0
        %4865 = vmatprep.mubr.f32.mxu0 0.0
        %4866 = vmatmul.mubr.f32.gmra.mrb[0].mxu0 %v4740
        %v4867 = vpop.f32.mrb[0].mxu0
        %v4868 = vadd.f32 0.0, %v4867
        %v4869 = vpop.f32.mrb[0].mxu0
        %4870 = vmatprep.mubr.f32.mxu0 0.0
        %4871 = vmatmul.mubr.f32.gmra.mrb[0].mxu0 %v4741
        %v4872 = vpop.f32.mrb[0].mxu0
        %v4873 = vadd.f32 0.0, %v4872
        %v4874 = vpop.f32.mrb[0].mxu0
        %4875 = vmatprep.mubr.f32.mxu0 0.0
        %4876 = vmatmul.mubr.f32.gmra.mrb[0].mxu0 %v4742
        %v4877 = vpop.f32.mrb[0].mxu0
        %v4878 = vadd.f32 0.0, %v4877
        %v4879 = vpop.f32.mrb[0].mxu0
        %4880 = vmatprep.mubr.f32.mxu0 0.0
        %4881 = vmatmul.mubr.f32.gmra.mrb[0].mxu0 %v4743
        %v4882 = vpop.f32.mrb[0].mxu0
        %v4883 = vadd.f32 0.0, %v4882
        %v4884 = vpop.f32.mrb[0].mxu0
        %4885 = vmatprep.mubr.f32.mxu0 0.0
        %4886 = vmatmul.mubr.f32.gmra.mrb[0].mxu0 %v4744
        %v4887 = vpop.f32.mrb[0].mxu0
        %v4888 = vadd.f32 0.0, %v4887
        %v4889 = vpop.f32.mrb[0].mxu0
        %4890 = vmatprep.mubr.f32.mxu0 0.0
        %4891 = vmatmul.mubr.f32.gmra.mrb[0].mxu0 %v4745
        %v4892 = vpop.f32.mrb[0].mxu0
        %v4893 = vadd.f32 0.0, %v4892
        %v4894 = vpop.f32.mrb[0].mxu0
        %4895 = vmatprep.mubr.f32.mxu0 0.0
        %4896 = vmatmul.mubr.f32.gmra.mrb[0].mxu0 %v4746
        %v4897 = vpop.f32.mrb[0].mxu0
        %v4898 = vadd.f32 0.0, %v4897
        %v4899 = vpop.f32.mrb[0].mxu0
        %4900 = vmatprep.mubr.f32.mxu0 0.0
        %4901 = vmatmul.mubr.f32.gmra.mrb[0].mxu0 %v4747
        %v4902 = vpop.f32.mrb[0].mxu0
        %v4903 = vadd.f32 0.0, %v4902
        %v4904 = vpop.f32.mrb[0].mxu0
        %4905 = vmatprep.mubr.f32.mxu0 0.0
        %4906 = vmatmul.mubr.f32.gmra.mrb[0].mxu0 %v4748
        %v4907 = vpop.f32.mrb[0].mxu0
        %v4908 = vadd.f32 0.0, %v4907
        %v4909 = vpop.f32.mrb[0].mxu0
        %4910 = vdwg.mxu0
        %v4911 = vadd.f32 %v4669, %v4833
        %v4912 = vadd.f32 %v4670, %v4838
        %v4913 = vadd.f32 %v4671, %v4843
        %v4914 = vadd.f32 %v4672, %v4848
        %v4915 = vadd.f32 %v4673, %v4853
        %v4916 = vadd.f32 %v4674, %v4858
        %v4917 = vadd.f32 %v4675, %v4863
        %v4918 = vadd.f32 %v4676, %v4868
        %v4919 = vadd.f32 %v4677, %v4873
        %v4920 = vadd.f32 %v4678, %v4878
        %v4921 = vadd.f32 %v4679, %v4883
        %v4922 = vadd.f32 %v4680, %v4888
        %v4923 = vadd.f32 %v4681, %v4893
        %v4924 = vadd.f32 %v4682, %v4898
        %v4925 = vadd.f32 %v4683, %v4903
        %v4926 = vadd.f32 %v4684, %v4908
        %v4927 = vld [vmem:[%s2758] sm:$0xff]
        %v4928 = vld [vmem:[%s2758 + $0x8] sm:$0xff]
        %v4929 = vld [vmem:[%s2758 + $0x10] sm:$0xff]
        %v4930 = vld [vmem:[%s2758 + $0x18] sm:$0xff]
        %v4931 = vld [vmem:[%s2758 + $0x20] sm:$0xff]
        %v4932 = vld [vmem:[%s2758 + $0x28] sm:$0xff]
        %v4933 = vld [vmem:[%s2758 + $0x30] sm:$0xff]
        %v4934 = vld [vmem:[%s2758 + $0x38] sm:$0xff]
        %v4935 = vld [vmem:[%s2758 + $0x60] sm:$0xff]
        %v4936 = vld [vmem:[%s2758 + $0x68] sm:$0xff]
        %v4937 = vld [vmem:[%s2758 + $0x70] sm:$0xff]
        %v4938 = vld [vmem:[%s2758 + $0x78] sm:$0xff]
        %v4939 = vld [vmem:[%s2758 + $0x80] sm:$0xff]
        %v4940 = vld [vmem:[%s2758 + $0x88] sm:$0xff]
        %v4941 = vld [vmem:[%s2758 + $0x90] sm:$0xff]
        %v4942 = vld [vmem:[%s2758 + $0x98] sm:$0xff]
        %s4943 = scalar_lea.vmem %s3, 896
        %v4944 = vld [vmem:[%s4943] sm:$0xff]
        %v4945 = vld [vmem:[%s4943 + $0x8] sm:$0xff]
        %v4946 = vld [vmem:[%s4943 + $0x10] sm:$0xff]
        %v4947 = vld [vmem:[%s4943 + $0x18] sm:$0xff]
        %v4948 = vld [vmem:[%s4943 + $0x20] sm:$0xff]
        %v4949 = vld [vmem:[%s4943 + $0x28] sm:$0xff]
        %v4950 = vld [vmem:[%s4943 + $0x30] sm:$0xff]
        %v4951 = vld [vmem:[%s4943 + $0x38] sm:$0xff]
        %v4952 = vld [vmem:[%s4943 + $0x40] sm:$0xff]
        %v4953 = vld [vmem:[%s4943 + $0x48] sm:$0xff]
        %v4954 = vld [vmem:[%s4943 + $0x50] sm:$0xff]
        %v4955 = vld [vmem:[%s4943 + $0x58] sm:$0xff]
        %v4956 = vld [vmem:[%s4943 + $0x60] sm:$0xff]
        %v4957 = vld [vmem:[%s4943 + $0x68] sm:$0xff]
        %v4958 = vld [vmem:[%s4943 + $0x70] sm:$0xff]
        %v4959 = vld [vmem:[%s4943 + $0x78] sm:$0xff]
        %4960 = vmatprep.subr.mxu0 0.0
        %4961 = vmatpush1.msra.mxu0 %v4944
        %4962 = vmatprep.subr.mxu0 0.0
        %4963 = vmatpush1.msra.mxu0 %v4945
        %4964 = vmatprep.subr.mxu0 0.0
        %4965 = vmatpush1.msra.mxu0 %v4946
        %4966 = vmatprep.subr.mxu0 0.0
        %4967 = vmatpush1.msra.mxu0 %v4947
        %4968 = vmatprep.subr.mxu0 0.0
        %4969 = vmatpush1.msra.mxu0 %v4948
        %4970 = vmatprep.subr.mxu0 0.0
        %4971 = vmatpush1.msra.mxu0 %v4949
        %4972 = vmatprep.subr.mxu0 0.0
        %4973 = vmatpush1.msra.mxu0 %v4950
        %4974 = vmatprep.subr.mxu0 0.0
        %4975 = vmatpush1.msra.mxu0 %v4951
        %4976 = vmatprep.subr.mxu0 0.0
        %4977 = vmatpush1.msra.mxu0 %v4952
        %4978 = vmatprep.subr.mxu0 0.0
        %4979 = vmatpush1.msra.mxu0 %v4953
        %4980 = vmatprep.subr.mxu0 0.0
        %4981 = vmatpush1.msra.mxu0 %v4954
        %4982 = vmatprep.subr.mxu0 0.0
        %4983 = vmatpush1.msra.mxu0 %v4955
        %4984 = vmatprep.subr.mxu0 0.0
        %4985 = vmatpush1.msra.mxu0 %v4956
        %4986 = vmatprep.subr.mxu0 0.0
        %4987 = vmatpush1.msra.mxu0 %v4957
        %4988 = vmatprep.subr.mxu0 0.0
        %4989 = vmatpush1.msra.mxu0 %v4958
        %4990 = vmatprep.subr.mxu0 0.0
        %4991 = vmatpush1.msra.mxu0 %v4959
        %4992 = vmatprep.subr.mxu0 0.0
        %4993 = vmatpush1.msra.mxu0 0.0
        %4994 = vmatprep.subr.mxu0 0.0
        %4995 = vmatpush1.msra.mxu0 0.0
        %4996 = vmatprep.subr.mxu0 0.0
        %4997 = vmatpush1.msra.mxu0 0.0
        %4998 = vmatprep.subr.mxu0 0.0
        %4999 = vmatpush1.msra.mxu0 0.0
        %5000 = vmatprep.subr.mxu0 0.0
        %5001 = vmatpush1.msra.mxu0 0.0
        %5002 = vmatprep.subr.mxu0 0.0
        %5003 = vmatpush1.msra.mxu0 0.0
        %5004 = vmatprep.subr.mxu0 0.0
        %5005 = vmatpush1.msra.mxu0 0.0
        %5006 = vmatprep.subr.mxu0 0.0
        %5007 = vmatpush1.msra.mxu0 0.0
        %5008 = vmatprep.subr.mxu0 0.0
        %5009 = vmatpush1.msra.mxu0 0.0
        %5010 = vmatprep.subr.mxu0 0.0
        %5011 = vmatpush1.msra.mxu0 0.0
        %5012 = vmatprep.subr.mxu0 0.0
        %5013 = vmatpush1.msra.mxu0 0.0
        %5014 = vmatprep.subr.mxu0 0.0
        %5015 = vmatpush1.msra.mxu0 0.0
        %5016 = vmatprep.subr.mxu0 0.0
        %5017 = vmatpush1.msra.mxu0 0.0
        %5018 = vmatprep.subr.mxu0 0.0
        %5019 = vmatpush1.msra.mxu0 0.0
        %5020 = vmatprep.subr.mxu0 0.0
        %5021 = vmatpush1.msra.mxu0 0.0
        %5022 = vmatprep.subr.mxu0 0.0
        %5023 = vmatpush1.msra.mxu0 0.0
        %5024 = vmatprep.mubr.f32.mxu0 0.0
        %5025 = vmatmul.mubr.f32.gmra.mrb[0].mxu0 %v4927
        %v5026 = vpop.f32.mrb[0].mxu0
        %v5027 = vadd.f32 0.0, %v5026
        %v5028 = vpop.f32.mrb[0].mxu0
        %5029 = vmatprep.mubr.f32.mxu0 0.0
        %5030 = vmatmul.mubr.f32.gmra.mrb[0].mxu0 %v4928
        %v5031 = vpop.f32.mrb[0].mxu0
        %v5032 = vadd.f32 0.0, %v5031
        %v5033 = vpop.f32.mrb[0].mxu0
        %5034 = vmatprep.mubr.f32.mxu0 0.0
        %5035 = vmatmul.mubr.f32.gmra.mrb[0].mxu0 %v4929
        %v5036 = vpop.f32.mrb[0].mxu0
        %v5037 = vadd.f32 0.0, %v5036
        %v5038 = vpop.f32.mrb[0].mxu0
        %5039 = vmatprep.mubr.f32.mxu0 0.0
        %5040 = vmatmul.mubr.f32.gmra.mrb[0].mxu0 %v4930
        %v5041 = vpop.f32.mrb[0].mxu0
        %v5042 = vadd.f32 0.0, %v5041
        %v5043 = vpop.f32.mrb[0].mxu0
        %5044 = vmatprep.mubr.f32.mxu0 0.0
        %5045 = vmatmul.mubr.f32.gmra.mrb[0].mxu0 %v4931
        %v5046 = vpop.f32.mrb[0].mxu0
        %v5047 = vadd.f32 0.0, %v5046
        %v5048 = vpop.f32.mrb[0].mxu0
        %5049 = vmatprep.mubr.f32.mxu0 0.0
        %5050 = vmatmul.mubr.f32.gmra.mrb[0].mxu0 %v4932
        %v5051 = vpop.f32.mrb[0].mxu0
        %v5052 = vadd.f32 0.0, %v5051
        %v5053 = vpop.f32.mrb[0].mxu0
        %5054 = vmatprep.mubr.f32.mxu0 0.0
        %5055 = vmatmul.mubr.f32.gmra.mrb[0].mxu0 %v4933
        %v5056 = vpop.f32.mrb[0].mxu0
        %v5057 = vadd.f32 0.0, %v5056
        %v5058 = vpop.f32.mrb[0].mxu0
        %5059 = vmatprep.mubr.f32.mxu0 0.0
        %5060 = vmatmul.mubr.f32.gmra.mrb[0].mxu0 %v4934
        %v5061 = vpop.f32.mrb[0].mxu0
        %v5062 = vadd.f32 0.0, %v5061
        %v5063 = vpop.f32.mrb[0].mxu0
        %5064 = vmatprep.mubr.f32.mxu0 0.0
        %5065 = vmatmul.mubr.f32.gmra.mrb[0].mxu0 %v4935
        %v5066 = vpop.f32.mrb[0].mxu0
        %v5067 = vadd.f32 0.0, %v5066
        %v5068 = vpop.f32.mrb[0].mxu0
        %5069 = vmatprep.mubr.f32.mxu0 0.0
        %5070 = vmatmul.mubr.f32.gmra.mrb[0].mxu0 %v4936
        %v5071 = vpop.f32.mrb[0].mxu0
        %v5072 = vadd.f32 0.0, %v5071
        %v5073 = vpop.f32.mrb[0].mxu0
        %5074 = vmatprep.mubr.f32.mxu0 0.0
        %5075 = vmatmul.mubr.f32.gmra.mrb[0].mxu0 %v4937
        %v5076 = vpop.f32.mrb[0].mxu0
        %v5077 = vadd.f32 0.0, %v5076
        %v5078 = vpop.f32.mrb[0].mxu0
        %5079 = vmatprep.mubr.f32.mxu0 0.0
        %5080 = vmatmul.mubr.f32.gmra.mrb[0].mxu0 %v4938
        %v5081 = vpop.f32.mrb[0].mxu0
        %v5082 = vadd.f32 0.0, %v5081
        %v5083 = vpop.f32.mrb[0].mxu0
        %5084 = vmatprep.mubr.f32.mxu0 0.0
        %5085 = vmatmul.mubr.f32.gmra.mrb[0].mxu0 %v4939
        %v5086 = vpop.f32.mrb[0].mxu0
        %v5087 = vadd.f32 0.0, %v5086
        %v5088 = vpop.f32.mrb[0].mxu0
        %5089 = vmatprep.mubr.f32.mxu0 0.0
        %5090 = vmatmul.mubr.f32.gmra.mrb[0].mxu0 %v4940
        %v5091 = vpop.f32.mrb[0].mxu0
        %v5092 = vadd.f32 0.0, %v5091
        %v5093 = vpop.f32.mrb[0].mxu0
        %5094 = vmatprep.mubr.f32.mxu0 0.0
        %5095 = vmatmul.mubr.f32.gmra.mrb[0].mxu0 %v4941
        %v5096 = vpop.f32.mrb[0].mxu0
        %v5097 = vadd.f32 0.0, %v5096
        %v5098 = vpop.f32.mrb[0].mxu0
        %5099 = vmatprep.mubr.f32.mxu0 0.0
        %5100 = vmatmul.mubr.f32.gmra.mrb[0].mxu0 %v4942
        %v5101 = vpop.f32.mrb[0].mxu0
        %v5102 = vadd.f32 0.0, %v5101
        %v5103 = vpop.f32.mrb[0].mxu0
        %5104 = vdwg.mxu0
        %v5105 = vadd.f32 %v4911, %v5027
        %v5106 = vadd.f32 %v4912, %v5032
        %v5107 = vadd.f32 %v4913, %v5037
        %v5108 = vadd.f32 %v4914, %v5042
        %v5109 = vadd.f32 %v4915, %v5047
        %v5110 = vadd.f32 %v4916, %v5052
        %v5111 = vadd.f32 %v4917, %v5057
        %v5112 = vadd.f32 %v4918, %v5062
        %v5113 = vadd.f32 %v4919, %v5067
        %v5114 = vadd.f32 %v4920, %v5072
        %v5115 = vadd.f32 %v4921, %v5077
        %v5116 = vadd.f32 %v4922, %v5082
        %v5117 = vadd.f32 %v4923, %v5087
        %v5118 = vadd.f32 %v4924, %v5092
        %v5119 = vadd.f32 %v4925, %v5097
        %v5120 = vadd.f32 %v4926, %v5102
        %v5121 = vld [vmem:[%s3082] sm:$0xff]
        %v5122 = vld [vmem:[%s3082 + $0x8] sm:$0xff]
        %v5123 = vld [vmem:[%s3082 + $0x10] sm:$0xff]
        %v5124 = vld [vmem:[%s3082 + $0x18] sm:$0xff]
        %v5125 = vld [vmem:[%s3082 + $0x20] sm:$0xff]
        %v5126 = vld [vmem:[%s3082 + $0x28] sm:$0xff]
        %v5127 = vld [vmem:[%s3082 + $0x30] sm:$0xff]
        %v5128 = vld [vmem:[%s3082 + $0x38] sm:$0xff]
        %v5129 = vld [vmem:[%s3082 + $0x60] sm:$0xff]
        %v5130 = vld [vmem:[%s3082 + $0x68] sm:$0xff]
        %v5131 = vld [vmem:[%s3082 + $0x70] sm:$0xff]
        %v5132 = vld [vmem:[%s3082 + $0x78] sm:$0xff]
        %v5133 = vld [vmem:[%s3082 + $0x80] sm:$0xff]
        %v5134 = vld [vmem:[%s3082 + $0x88] sm:$0xff]
        %v5135 = vld [vmem:[%s3082 + $0x90] sm:$0xff]
        %v5136 = vld [vmem:[%s3082 + $0x98] sm:$0xff]
        %s5137 = scalar_lea.vmem %s3, 1536
        %v5138 = vld [vmem:[%s5137] sm:$0xff]
        %v5139 = vld [vmem:[%s5137 + $0x8] sm:$0xff]
        %v5140 = vld [vmem:[%s5137 + $0x10] sm:$0xff]
        %v5141 = vld [vmem:[%s5137 + $0x18] sm:$0xff]
        %v5142 = vld [vmem:[%s5137 + $0x20] sm:$0xff]
        %v5143 = vld [vmem:[%s5137 + $0x28] sm:$0xff]
        %v5144 = vld [vmem:[%s5137 + $0x30] sm:$0xff]
        %v5145 = vld [vmem:[%s5137 + $0x38] sm:$0xff]
        %v5146 = vld [vmem:[%s5137 + $0x40] sm:$0xff]
        %v5147 = vld [vmem:[%s5137 + $0x48] sm:$0xff]
        %v5148 = vld [vmem:[%s5137 + $0x50] sm:$0xff]
        %v5149 = vld [vmem:[%s5137 + $0x58] sm:$0xff]
        %v5150 = vld [vmem:[%s5137 + $0x60] sm:$0xff]
        %v5151 = vld [vmem:[%s5137 + $0x68] sm:$0xff]
        %v5152 = vld [vmem:[%s5137 + $0x70] sm:$0xff]
        %v5153 = vld [vmem:[%s5137 + $0x78] sm:$0xff]
        %5154 = vmatprep.subr.mxu0 0.0
        %5155 = vmatpush1.msra.mxu0 %v5138
        %5156 = vmatprep.subr.mxu0 0.0
        %5157 = vmatpush1.msra.mxu0 %v5139
        %5158 = vmatprep.subr.mxu0 0.0
        %5159 = vmatpush1.msra.mxu0 %v5140
        %5160 = vmatprep.subr.mxu0 0.0
        %5161 = vmatpush1.msra.mxu0 %v5141
        %5162 = vmatprep.subr.mxu0 0.0
        %5163 = vmatpush1.msra.mxu0 %v5142
        %5164 = vmatprep.subr.mxu0 0.0
        %5165 = vmatpush1.msra.mxu0 %v5143
        %5166 = vmatprep.subr.mxu0 0.0
        %5167 = vmatpush1.msra.mxu0 %v5144
        %5168 = vmatprep.subr.mxu0 0.0
        %5169 = vmatpush1.msra.mxu0 %v5145
        %5170 = vmatprep.subr.mxu0 0.0
        %5171 = vmatpush1.msra.mxu0 %v5146
        %5172 = vmatprep.subr.mxu0 0.0
        %5173 = vmatpush1.msra.mxu0 %v5147
        %5174 = vmatprep.subr.mxu0 0.0
        %5175 = vmatpush1.msra.mxu0 %v5148
        %5176 = vmatprep.subr.mxu0 0.0
        %5177 = vmatpush1.msra.mxu0 %v5149
        %5178 = vmatprep.subr.mxu0 0.0
        %5179 = vmatpush1.msra.mxu0 %v5150
        %5180 = vmatprep.subr.mxu0 0.0
        %5181 = vmatpush1.msra.mxu0 %v5151
        %5182 = vmatprep.subr.mxu0 0.0
        %5183 = vmatpush1.msra.mxu0 %v5152
        %5184 = vmatprep.subr.mxu0 0.0
        %5185 = vmatpush1.msra.mxu0 %v5153
        %5186 = vmatprep.subr.mxu0 0.0
        %5187 = vmatpush1.msra.mxu0 0.0
        %5188 = vmatprep.subr.mxu0 0.0
        %5189 = vmatpush1.msra.mxu0 0.0
        %5190 = vmatprep.subr.mxu0 0.0
        %5191 = vmatpush1.msra.mxu0 0.0
        %5192 = vmatprep.subr.mxu0 0.0
        %5193 = vmatpush1.msra.mxu0 0.0
        %5194 = vmatprep.subr.mxu0 0.0
        %5195 = vmatpush1.msra.mxu0 0.0
        %5196 = vmatprep.subr.mxu0 0.0
        %5197 = vmatpush1.msra.mxu0 0.0
        %5198 = vmatprep.subr.mxu0 0.0
        %5199 = vmatpush1.msra.mxu0 0.0
        %5200 = vmatprep.subr.mxu0 0.0
        %5201 = vmatpush1.msra.mxu0 0.0
        %5202 = vmatprep.subr.mxu0 0.0
        %5203 = vmatpush1.msra.mxu0 0.0
        %5204 = vmatprep.subr.mxu0 0.0
        %5205 = vmatpush1.msra.mxu0 0.0
        %5206 = vmatprep.subr.mxu0 0.0
        %5207 = vmatpush1.msra.mxu0 0.0
        %5208 = vmatprep.subr.mxu0 0.0
        %5209 = vmatpush1.msra.mxu0 0.0
        %5210 = vmatprep.subr.mxu0 0.0
        %5211 = vmatpush1.msra.mxu0 0.0
        %5212 = vmatprep.subr.mxu0 0.0
        %5213 = vmatpush1.msra.mxu0 0.0
        %5214 = vmatprep.subr.mxu0 0.0
        %5215 = vmatpush1.msra.mxu0 0.0
        %5216 = vmatprep.subr.mxu0 0.0
        %5217 = vmatpush1.msra.mxu0 0.0
        %5218 = vmatprep.mubr.f32.mxu0 0.0
        %5219 = vmatmul.mubr.f32.gmra.mrb[0].mxu0 %v5121
        %v5220 = vpop.f32.mrb[0].mxu0
        %v5221 = vadd.f32 0.0, %v5220
        %v5222 = vpop.f32.mrb[0].mxu0
        %5223 = vmatprep.mubr.f32.mxu0 0.0
        %5224 = vmatmul.mubr.f32.gmra.mrb[0].mxu0 %v5122
        %v5225 = vpop.f32.mrb[0].mxu0
        %v5226 = vadd.f32 0.0, %v5225
        %v5227 = vpop.f32.mrb[0].mxu0
        %5228 = vmatprep.mubr.f32.mxu0 0.0
        %5229 = vmatmul.mubr.f32.gmra.mrb[0].mxu0 %v5123
        %v5230 = vpop.f32.mrb[0].mxu0
        %v5231 = vadd.f32 0.0, %v5230
        %v5232 = vpop.f32.mrb[0].mxu0
        %5233 = vmatprep.mubr.f32.mxu0 0.0
        %5234 = vmatmul.mubr.f32.gmra.mrb[0].mxu0 %v5124
        %v5235 = vpop.f32.mrb[0].mxu0
        %v5236 = vadd.f32 0.0, %v5235
        %v5237 = vpop.f32.mrb[0].mxu0
        %5238 = vmatprep.mubr.f32.mxu0 0.0
        %5239 = vmatmul.mubr.f32.gmra.mrb[0].mxu0 %v5125
        %v5240 = vpop.f32.mrb[0].mxu0
        %v5241 = vadd.f32 0.0, %v5240
        %v5242 = vpop.f32.mrb[0].mxu0
        %5243 = vmatprep.mubr.f32.mxu0 0.0
        %5244 = vmatmul.mubr.f32.gmra.mrb[0].mxu0 %v5126
        %v5245 = vpop.f32.mrb[0].mxu0
        %v5246 = vadd.f32 0.0, %v5245
        %v5247 = vpop.f32.mrb[0].mxu0
        %5248 = vmatprep.mubr.f32.mxu0 0.0
        %5249 = vmatmul.mubr.f32.gmra.mrb[0].mxu0 %v5127
        %v5250 = vpop.f32.mrb[0].mxu0
        %v5251 = vadd.f32 0.0, %v5250
        %v5252 = vpop.f32.mrb[0].mxu0
        %5253 = vmatprep.mubr.f32.mxu0 0.0
        %5254 = vmatmul.mubr.f32.gmra.mrb[0].mxu0 %v5128
        %v5255 = vpop.f32.mrb[0].mxu0
        %v5256 = vadd.f32 0.0, %v5255
        %v5257 = vpop.f32.mrb[0].mxu0
        %5258 = vmatprep.mubr.f32.mxu0 0.0
        %5259 = vmatmul.mubr.f32.gmra.mrb[0].mxu0 %v5129
        %v5260 = vpop.f32.mrb[0].mxu0
        %v5261 = vadd.f32 0.0, %v5260
        %v5262 = vpop.f32.mrb[0].mxu0
        %5263 = vmatprep.mubr.f32.mxu0 0.0
        %5264 = vmatmul.mubr.f32.gmra.mrb[0].mxu0 %v5130
        %v5265 = vpop.f32.mrb[0].mxu0
        %v5266 = vadd.f32 0.0, %v5265
        %v5267 = vpop.f32.mrb[0].mxu0
        %5268 = vmatprep.mubr.f32.mxu0 0.0
        %5269 = vmatmul.mubr.f32.gmra.mrb[0].mxu0 %v5131
        %v5270 = vpop.f32.mrb[0].mxu0
        %v5271 = vadd.f32 0.0, %v5270
        %v5272 = vpop.f32.mrb[0].mxu0
        %5273 = vmatprep.mubr.f32.mxu0 0.0
        %5274 = vmatmul.mubr.f32.gmra.mrb[0].mxu0 %v5132
        %v5275 = vpop.f32.mrb[0].mxu0
        %v5276 = vadd.f32 0.0, %v5275
        %v5277 = vpop.f32.mrb[0].mxu0
        %5278 = vmatprep.mubr.f32.mxu0 0.0
        %5279 = vmatmul.mubr.f32.gmra.mrb[0].mxu0 %v5133
        %v5280 = vpop.f32.mrb[0].mxu0
        %v5281 = vadd.f32 0.0, %v5280
        %v5282 = vpop.f32.mrb[0].mxu0
        %5283 = vmatprep.mubr.f32.mxu0 0.0
        %5284 = vmatmul.mubr.f32.gmra.mrb[0].mxu0 %v5134
        %v5285 = vpop.f32.mrb[0].mxu0
        %v5286 = vadd.f32 0.0, %v5285
        %v5287 = vpop.f32.mrb[0].mxu0
        %5288 = vmatprep.mubr.f32.mxu0 0.0
        %5289 = vmatmul.mubr.f32.gmra.mrb[0].mxu0 %v5135
        %v5290 = vpop.f32.mrb[0].mxu0
        %v5291 = vadd.f32 0.0, %v5290
        %v5292 = vpop.f32.mrb[0].mxu0
        %5293 = vmatprep.mubr.f32.mxu0 0.0
        %5294 = vmatmul.mubr.f32.gmra.mrb[0].mxu0 %v5136
        %v5295 = vpop.f32.mrb[0].mxu0
        %v5296 = vadd.f32 0.0, %v5295
        %v5297 = vpop.f32.mrb[0].mxu0
        %5298 = vdwg.mxu0
        %v5299 = vadd.f32 %v5105, %v5221
        %v5300 = vadd.f32 %v5106, %v5226
        %v5301 = vadd.f32 %v5107, %v5231
        %v5302 = vadd.f32 %v5108, %v5236
        %v5303 = vadd.f32 %v5109, %v5241
        %v5304 = vadd.f32 %v5110, %v5246
        %v5305 = vadd.f32 %v5111, %v5251
        %v5306 = vadd.f32 %v5112, %v5256
        %v5307 = vadd.f32 %v5113, %v5261
        %v5308 = vadd.f32 %v5114, %v5266
        %v5309 = vadd.f32 %v5115, %v5271
        %v5310 = vadd.f32 %v5116, %v5276
        %v5311 = vadd.f32 %v5117, %v5281
        %v5312 = vadd.f32 %v5118, %v5286
        %v5313 = vadd.f32 %v5119, %v5291
        %v5314 = vadd.f32 %v5120, %v5296
        %v5315 = vld [vmem:[%s3277] sm:$0xff]
        %v5316 = vld [vmem:[%s3277 + $0x8] sm:$0xff]
        %v5317 = vld [vmem:[%s3277 + $0x10] sm:$0xff]
        %v5318 = vld [vmem:[%s3277 + $0x18] sm:$0xff]
        %v5319 = vld [vmem:[%s3277 + $0x20] sm:$0xff]
        %v5320 = vld [vmem:[%s3277 + $0x28] sm:$0xff]
        %v5321 = vld [vmem:[%s3277 + $0x30] sm:$0xff]
        %v5322 = vld [vmem:[%s3277 + $0x38] sm:$0xff]
        %v5323 = vld [vmem:[%s3277 + $0x60] sm:$0xff]
        %v5324 = vld [vmem:[%s3277 + $0x68] sm:$0xff]
        %v5325 = vld [vmem:[%s3277 + $0x70] sm:$0xff]
        %v5326 = vld [vmem:[%s3277 + $0x78] sm:$0xff]
        %v5327 = vld [vmem:[%s3277 + $0x80] sm:$0xff]
        %v5328 = vld [vmem:[%s3277 + $0x88] sm:$0xff]
        %v5329 = vld [vmem:[%s3277 + $0x90] sm:$0xff]
        %v5330 = vld [vmem:[%s3277 + $0x98] sm:$0xff]
        %s5331 = scalar_lea.vmem %s3, 2176
        %v5332 = vld [vmem:[%s5331] sm:$0xff]
        %v5333 = vld [vmem:[%s5331 + $0x8] sm:$0xff]
        %v5334 = vld [vmem:[%s5331 + $0x10] sm:$0xff]
        %v5335 = vld [vmem:[%s5331 + $0x18] sm:$0xff]
        %v5336 = vld [vmem:[%s5331 + $0x20] sm:$0xff]
        %v5337 = vld [vmem:[%s5331 + $0x28] sm:$0xff]
        %v5338 = vld [vmem:[%s5331 + $0x30] sm:$0xff]
        %v5339 = vld [vmem:[%s5331 + $0x38] sm:$0xff]
        %v5340 = vld [vmem:[%s5331 + $0x40] sm:$0xff]
        %v5341 = vld [vmem:[%s5331 + $0x48] sm:$0xff]
        %v5342 = vld [vmem:[%s5331 + $0x50] sm:$0xff]
        %v5343 = vld [vmem:[%s5331 + $0x58] sm:$0xff]
        %v5344 = vld [vmem:[%s5331 + $0x60] sm:$0xff]
        %v5345 = vld [vmem:[%s5331 + $0x68] sm:$0xff]
        %v5346 = vld [vmem:[%s5331 + $0x70] sm:$0xff]
        %v5347 = vld [vmem:[%s5331 + $0x78] sm:$0xff]
        %5348 = vmatprep.subr.mxu0 0.0
        %5349 = vmatpush1.msra.mxu0 %v5332
        %5350 = vmatprep.subr.mxu0 0.0
        %5351 = vmatpush1.msra.mxu0 %v5333
        %5352 = vmatprep.subr.mxu0 0.0
        %5353 = vmatpush1.msra.mxu0 %v5334
        %5354 = vmatprep.subr.mxu0 0.0
        %5355 = vmatpush1.msra.mxu0 %v5335
        %5356 = vmatprep.subr.mxu0 0.0
        %5357 = vmatpush1.msra.mxu0 %v5336
        %5358 = vmatprep.subr.mxu0 0.0
        %5359 = vmatpush1.msra.mxu0 %v5337
        %5360 = vmatprep.subr.mxu0 0.0
        %5361 = vmatpush1.msra.mxu0 %v5338
        %5362 = vmatprep.subr.mxu0 0.0
        %5363 = vmatpush1.msra.mxu0 %v5339
        %5364 = vmatprep.subr.mxu0 0.0
        %5365 = vmatpush1.msra.mxu0 %v5340
        %5366 = vmatprep.subr.mxu0 0.0
        %5367 = vmatpush1.msra.mxu0 %v5341
        %5368 = vmatprep.subr.mxu0 0.0
        %5369 = vmatpush1.msra.mxu0 %v5342
        %5370 = vmatprep.subr.mxu0 0.0
        %5371 = vmatpush1.msra.mxu0 %v5343
        %5372 = vmatprep.subr.mxu0 0.0
        %5373 = vmatpush1.msra.mxu0 %v5344
        %5374 = vmatprep.subr.mxu0 0.0
        %5375 = vmatpush1.msra.mxu0 %v5345
        %5376 = vmatprep.subr.mxu0 0.0
        %5377 = vmatpush1.msra.mxu0 %v5346
        %5378 = vmatprep.subr.mxu0 0.0
        %5379 = vmatpush1.msra.mxu0 %v5347
        %5380 = vmatprep.subr.mxu0 0.0
        %5381 = vmatpush1.msra.mxu0 0.0
        %5382 = vmatprep.subr.mxu0 0.0
        %5383 = vmatpush1.msra.mxu0 0.0
        %5384 = vmatprep.subr.mxu0 0.0
        %5385 = vmatpush1.msra.mxu0 0.0
        %5386 = vmatprep.subr.mxu0 0.0
        %5387 = vmatpush1.msra.mxu0 0.0
        %5388 = vmatprep.subr.mxu0 0.0
        %5389 = vmatpush1.msra.mxu0 0.0
        %5390 = vmatprep.subr.mxu0 0.0
        %5391 = vmatpush1.msra.mxu0 0.0
        %5392 = vmatprep.subr.mxu0 0.0
        %5393 = vmatpush1.msra.mxu0 0.0
        %5394 = vmatprep.subr.mxu0 0.0
        %5395 = vmatpush1.msra.mxu0 0.0
        %5396 = vmatprep.subr.mxu0 0.0
        %5397 = vmatpush1.msra.mxu0 0.0
        %5398 = vmatprep.subr.mxu0 0.0
        %5399 = vmatpush1.msra.mxu0 0.0
        %5400 = vmatprep.subr.mxu0 0.0
        %5401 = vmatpush1.msra.mxu0 0.0
        %5402 = vmatprep.subr.mxu0 0.0
        %5403 = vmatpush1.msra.mxu0 0.0
        %5404 = vmatprep.subr.mxu0 0.0
        %5405 = vmatpush1.msra.mxu0 0.0
        %5406 = vmatprep.subr.mxu0 0.0
        %5407 = vmatpush1.msra.mxu0 0.0
        %5408 = vmatprep.subr.mxu0 0.0
        %5409 = vmatpush1.msra.mxu0 0.0
        %5410 = vmatprep.subr.mxu0 0.0
        %5411 = vmatpush1.msra.mxu0 0.0
        %5412 = vmatprep.mubr.f32.mxu0 0.0
        %5413 = vmatmul.mubr.f32.gmra.mrb[0].mxu0 %v5315
        %v5414 = vpop.f32.mrb[0].mxu0
        %v5415 = vadd.f32 0.0, %v5414
        %v5416 = vpop.f32.mrb[0].mxu0
        %5417 = vmatprep.mubr.f32.mxu0 0.0
        %5418 = vmatmul.mubr.f32.gmra.mrb[0].mxu0 %v5316
        %v5419 = vpop.f32.mrb[0].mxu0
        %v5420 = vadd.f32 0.0, %v5419
        %v5421 = vpop.f32.mrb[0].mxu0
        %5422 = vmatprep.mubr.f32.mxu0 0.0
        %5423 = vmatmul.mubr.f32.gmra.mrb[0].mxu0 %v5317
        %v5424 = vpop.f32.mrb[0].mxu0
        %v5425 = vadd.f32 0.0, %v5424
        %v5426 = vpop.f32.mrb[0].mxu0
        %5427 = vmatprep.mubr.f32.mxu0 0.0
        %5428 = vmatmul.mubr.f32.gmra.mrb[0].mxu0 %v5318
        %v5429 = vpop.f32.mrb[0].mxu0
        %v5430 = vadd.f32 0.0, %v5429
        %v5431 = vpop.f32.mrb[0].mxu0
        %5432 = vmatprep.mubr.f32.mxu0 0.0
        %5433 = vmatmul.mubr.f32.gmra.mrb[0].mxu0 %v5319
        %v5434 = vpop.f32.mrb[0].mxu0
        %v5435 = vadd.f32 0.0, %v5434
        %v5436 = vpop.f32.mrb[0].mxu0
        %5437 = vmatprep.mubr.f32.mxu0 0.0
        %5438 = vmatmul.mubr.f32.gmra.mrb[0].mxu0 %v5320
        %v5439 = vpop.f32.mrb[0].mxu0
        %v5440 = vadd.f32 0.0, %v5439
        %v5441 = vpop.f32.mrb[0].mxu0
        %5442 = vmatprep.mubr.f32.mxu0 0.0
        %5443 = vmatmul.mubr.f32.gmra.mrb[0].mxu0 %v5321
        %v5444 = vpop.f32.mrb[0].mxu0
        %v5445 = vadd.f32 0.0, %v5444
        %v5446 = vpop.f32.mrb[0].mxu0
        %5447 = vmatprep.mubr.f32.mxu0 0.0
        %5448 = vmatmul.mubr.f32.gmra.mrb[0].mxu0 %v5322
        %v5449 = vpop.f32.mrb[0].mxu0
        %v5450 = vadd.f32 0.0, %v5449
        %v5451 = vpop.f32.mrb[0].mxu0
        %5452 = vmatprep.mubr.f32.mxu0 0.0
        %5453 = vmatmul.mubr.f32.gmra.mrb[0].mxu0 %v5323
        %v5454 = vpop.f32.mrb[0].mxu0
        %v5455 = vadd.f32 0.0, %v5454
        %v5456 = vpop.f32.mrb[0].mxu0
        %5457 = vmatprep.mubr.f32.mxu0 0.0
        %5458 = vmatmul.mubr.f32.gmra.mrb[0].mxu0 %v5324
        %v5459 = vpop.f32.mrb[0].mxu0
        %v5460 = vadd.f32 0.0, %v5459
        %v5461 = vpop.f32.mrb[0].mxu0
        %5462 = vmatprep.mubr.f32.mxu0 0.0
        %5463 = vmatmul.mubr.f32.gmra.mrb[0].mxu0 %v5325
        %v5464 = vpop.f32.mrb[0].mxu0
        %v5465 = vadd.f32 0.0, %v5464
        %v5466 = vpop.f32.mrb[0].mxu0
        %5467 = vmatprep.mubr.f32.mxu0 0.0
        %5468 = vmatmul.mubr.f32.gmra.mrb[0].mxu0 %v5326
        %v5469 = vpop.f32.mrb[0].mxu0
        %v5470 = vadd.f32 0.0, %v5469
        %v5471 = vpop.f32.mrb[0].mxu0
        %5472 = vmatprep.mubr.f32.mxu0 0.0
        %5473 = vmatmul.mubr.f32.gmra.mrb[0].mxu0 %v5327
        %v5474 = vpop.f32.mrb[0].mxu0
        %v5475 = vadd.f32 0.0, %v5474
        %v5476 = vpop.f32.mrb[0].mxu0
        %5477 = vmatprep.mubr.f32.mxu0 0.0
        %5478 = vmatmul.mubr.f32.gmra.mrb[0].mxu0 %v5328
        %v5479 = vpop.f32.mrb[0].mxu0
        %v5480 = vadd.f32 0.0, %v5479
        %v5481 = vpop.f32.mrb[0].mxu0
        %5482 = vmatprep.mubr.f32.mxu0 0.0
        %5483 = vmatmul.mubr.f32.gmra.mrb[0].mxu0 %v5329
        %v5484 = vpop.f32.mrb[0].mxu0
        %v5485 = vadd.f32 0.0, %v5484
        %v5486 = vpop.f32.mrb[0].mxu0
        %5487 = vmatprep.mubr.f32.mxu0 0.0
        %5488 = vmatmul.mubr.f32.gmra.mrb[0].mxu0 %v5330
        %v5489 = vpop.f32.mrb[0].mxu0
        %v5490 = vadd.f32 0.0, %v5489
        %v5491 = vpop.f32.mrb[0].mxu0
        %5492 = vdwg.mxu0
        %v5493 = vadd.f32 %v5299, %v5415
        %v5494 = vadd.f32 %v5300, %v5420
        %v5495 = vadd.f32 %v5301, %v5425
        %v5496 = vadd.f32 %v5302, %v5430
        %v5497 = vadd.f32 %v5303, %v5435
        %v5498 = vadd.f32 %v5304, %v5440
        %v5499 = vadd.f32 %v5305, %v5445
        %v5500 = vadd.f32 %v5306, %v5450
        %v5501 = vadd.f32 %v5307, %v5455
        %v5502 = vadd.f32 %v5308, %v5460
        %v5503 = vadd.f32 %v5309, %v5465
        %v5504 = vadd.f32 %v5310, %v5470
        %v5505 = vadd.f32 %v5311, %v5475
        %v5506 = vadd.f32 %v5312, %v5480
        %v5507 = vadd.f32 %v5313, %v5485
        %v5508 = vadd.f32 %v5314, %v5490
        %v5509 = vld [vmem:[%s3472] sm:$0xff]
        %v5510 = vld [vmem:[%s3472 + $0x8] sm:$0xff]
        %v5511 = vld [vmem:[%s3472 + $0x10] sm:$0xff]
        %v5512 = vld [vmem:[%s3472 + $0x18] sm:$0xff]
        %v5513 = vld [vmem:[%s3472 + $0x20] sm:$0xff]
        %v5514 = vld [vmem:[%s3472 + $0x28] sm:$0xff]
        %v5515 = vld [vmem:[%s3472 + $0x30] sm:$0xff]
        %v5516 = vld [vmem:[%s3472 + $0x38] sm:$0xff]
        %v5517 = vld [vmem:[%s3472 + $0x60] sm:$0xff]
        %v5518 = vld [vmem:[%s3472 + $0x68] sm:$0xff]
        %v5519 = vld [vmem:[%s3472 + $0x70] sm:$0xff]
        %v5520 = vld [vmem:[%s3472 + $0x78] sm:$0xff]
        %v5521 = vld [vmem:[%s3472 + $0x80] sm:$0xff]
        %v5522 = vld [vmem:[%s3472 + $0x88] sm:$0xff]
        %v5523 = vld [vmem:[%s3472 + $0x90] sm:$0xff]
        %v5524 = vld [vmem:[%s3472 + $0x98] sm:$0xff]
        %s5525 = scalar_lea.vmem %s3, 2816
        %v5526 = vld [vmem:[%s5525] sm:$0xff]
        %v5527 = vld [vmem:[%s5525 + $0x8] sm:$0xff]
        %v5528 = vld [vmem:[%s5525 + $0x10] sm:$0xff]
        %v5529 = vld [vmem:[%s5525 + $0x18] sm:$0xff]
        %v5530 = vld [vmem:[%s5525 + $0x20] sm:$0xff]
        %v5531 = vld [vmem:[%s5525 + $0x28] sm:$0xff]
        %v5532 = vld [vmem:[%s5525 + $0x30] sm:$0xff]
        %v5533 = vld [vmem:[%s5525 + $0x38] sm:$0xff]
        %v5534 = vld [vmem:[%s5525 + $0x40] sm:$0xff]
        %v5535 = vld [vmem:[%s5525 + $0x48] sm:$0xff]
        %v5536 = vld [vmem:[%s5525 + $0x50] sm:$0xff]
        %v5537 = vld [vmem:[%s5525 + $0x58] sm:$0xff]
        %v5538 = vld [vmem:[%s5525 + $0x60] sm:$0xff]
        %v5539 = vld [vmem:[%s5525 + $0x68] sm:$0xff]
        %v5540 = vld [vmem:[%s5525 + $0x70] sm:$0xff]
        %v5541 = vld [vmem:[%s5525 + $0x78] sm:$0xff]
        %5542 = vmatprep.subr.mxu0 0.0
        %5543 = vmatpush1.msra.mxu0 %v5526
        %5544 = vmatprep.subr.mxu0 0.0
        %5545 = vmatpush1.msra.mxu0 %v5527
        %5546 = vmatprep.subr.mxu0 0.0
        %5547 = vmatpush1.msra.mxu0 %v5528
        %5548 = vmatprep.subr.mxu0 0.0
        %5549 = vmatpush1.msra.mxu0 %v5529
        %5550 = vmatprep.subr.mxu0 0.0
        %5551 = vmatpush1.msra.mxu0 %v5530
        %5552 = vmatprep.subr.mxu0 0.0
        %5553 = vmatpush1.msra.mxu0 %v5531
        %5554 = vmatprep.subr.mxu0 0.0
        %5555 = vmatpush1.msra.mxu0 %v5532
        %5556 = vmatprep.subr.mxu0 0.0
        %5557 = vmatpush1.msra.mxu0 %v5533
        %5558 = vmatprep.subr.mxu0 0.0
        %5559 = vmatpush1.msra.mxu0 %v5534
        %5560 = vmatprep.subr.mxu0 0.0
        %5561 = vmatpush1.msra.mxu0 %v5535
        %5562 = vmatprep.subr.mxu0 0.0
        %5563 = vmatpush1.msra.mxu0 %v5536
        %5564 = vmatprep.subr.mxu0 0.0
        %5565 = vmatpush1.msra.mxu0 %v5537
        %5566 = vmatprep.subr.mxu0 0.0
        %5567 = vmatpush1.msra.mxu0 %v5538
        %5568 = vmatprep.subr.mxu0 0.0
        %5569 = vmatpush1.msra.mxu0 %v5539
        %5570 = vmatprep.subr.mxu0 0.0
        %5571 = vmatpush1.msra.mxu0 %v5540
        %5572 = vmatprep.subr.mxu0 0.0
        %5573 = vmatpush1.msra.mxu0 %v5541
        %5574 = vmatprep.subr.mxu0 0.0
        %5575 = vmatpush1.msra.mxu0 0.0
        %5576 = vmatprep.subr.mxu0 0.0
        %5577 = vmatpush1.msra.mxu0 0.0
        %5578 = vmatprep.subr.mxu0 0.0
        %5579 = vmatpush1.msra.mxu0 0.0
        %5580 = vmatprep.subr.mxu0 0.0
        %5581 = vmatpush1.msra.mxu0 0.0
        %5582 = vmatprep.subr.mxu0 0.0
        %5583 = vmatpush1.msra.mxu0 0.0
        %5584 = vmatprep.subr.mxu0 0.0
        %5585 = vmatpush1.msra.mxu0 0.0
        %5586 = vmatprep.subr.mxu0 0.0
        %5587 = vmatpush1.msra.mxu0 0.0
        %5588 = vmatprep.subr.mxu0 0.0
        %5589 = vmatpush1.msra.mxu0 0.0
        %5590 = vmatprep.subr.mxu0 0.0
        %5591 = vmatpush1.msra.mxu0 0.0
        %5592 = vmatprep.subr.mxu0 0.0
        %5593 = vmatpush1.msra.mxu0 0.0
        %5594 = vmatprep.subr.mxu0 0.0
        %5595 = vmatpush1.msra.mxu0 0.0
        %5596 = vmatprep.subr.mxu0 0.0
        %5597 = vmatpush1.msra.mxu0 0.0
        %5598 = vmatprep.subr.mxu0 0.0
        %5599 = vmatpush1.msra.mxu0 0.0
        %5600 = vmatprep.subr.mxu0 0.0
        %5601 = vmatpush1.msra.mxu0 0.0
        %5602 = vmatprep.subr.mxu0 0.0
        %5603 = vmatpush1.msra.mxu0 0.0
        %5604 = vmatprep.subr.mxu0 0.0
        %5605 = vmatpush1.msra.mxu0 0.0
        %5606 = vmatprep.mubr.f32.mxu0 0.0
        %5607 = vmatmul.mubr.f32.gmra.mrb[0].mxu0 %v5509
        %v5608 = vpop.f32.mrb[0].mxu0
        %v5609 = vadd.f32 0.0, %v5608
        %v5610 = vpop.f32.mrb[0].mxu0
        %5611 = vmatprep.mubr.f32.mxu0 0.0
        %5612 = vmatmul.mubr.f32.gmra.mrb[0].mxu0 %v5510
        %v5613 = vpop.f32.mrb[0].mxu0
        %v5614 = vadd.f32 0.0, %v5613
        %v5615 = vpop.f32.mrb[0].mxu0
        %5616 = vmatprep.mubr.f32.mxu0 0.0
        %5617 = vmatmul.mubr.f32.gmra.mrb[0].mxu0 %v5511
        %v5618 = vpop.f32.mrb[0].mxu0
        %v5619 = vadd.f32 0.0, %v5618
        %v5620 = vpop.f32.mrb[0].mxu0
        %5621 = vmatprep.mubr.f32.mxu0 0.0
        %5622 = vmatmul.mubr.f32.gmra.mrb[0].mxu0 %v5512
        %v5623 = vpop.f32.mrb[0].mxu0
        %v5624 = vadd.f32 0.0, %v5623
        %v5625 = vpop.f32.mrb[0].mxu0
        %5626 = vmatprep.mubr.f32.mxu0 0.0
        %5627 = vmatmul.mubr.f32.gmra.mrb[0].mxu0 %v5513
        %v5628 = vpop.f32.mrb[0].mxu0
        %v5629 = vadd.f32 0.0, %v5628
        %v5630 = vpop.f32.mrb[0].mxu0
        %5631 = vmatprep.mubr.f32.mxu0 0.0
        %5632 = vmatmul.mubr.f32.gmra.mrb[0].mxu0 %v5514
        %v5633 = vpop.f32.mrb[0].mxu0
        %v5634 = vadd.f32 0.0, %v5633
        %v5635 = vpop.f32.mrb[0].mxu0
        %5636 = vmatprep.mubr.f32.mxu0 0.0
        %5637 = vmatmul.mubr.f32.gmra.mrb[0].mxu0 %v5515
        %v5638 = vpop.f32.mrb[0].mxu0
        %v5639 = vadd.f32 0.0, %v5638
        %v5640 = vpop.f32.mrb[0].mxu0
        %5641 = vmatprep.mubr.f32.mxu0 0.0
        %5642 = vmatmul.mubr.f32.gmra.mrb[0].mxu0 %v5516
        %v5643 = vpop.f32.mrb[0].mxu0
        %v5644 = vadd.f32 0.0, %v5643
        %v5645 = vpop.f32.mrb[0].mxu0
        %5646 = vmatprep.mubr.f32.mxu0 0.0
        %5647 = vmatmul.mubr.f32.gmra.mrb[0].mxu0 %v5517
        %v5648 = vpop.f32.mrb[0].mxu0
        %v5649 = vadd.f32 0.0, %v5648
        %v5650 = vpop.f32.mrb[0].mxu0
        %5651 = vmatprep.mubr.f32.mxu0 0.0
        %5652 = vmatmul.mubr.f32.gmra.mrb[0].mxu0 %v5518
        %v5653 = vpop.f32.mrb[0].mxu0
        %v5654 = vadd.f32 0.0, %v5653
        %v5655 = vpop.f32.mrb[0].mxu0
        %5656 = vmatprep.mubr.f32.mxu0 0.0
        %5657 = vmatmul.mubr.f32.gmra.mrb[0].mxu0 %v5519
        %v5658 = vpop.f32.mrb[0].mxu0
        %v5659 = vadd.f32 0.0, %v5658
        %v5660 = vpop.f32.mrb[0].mxu0
        %5661 = vmatprep.mubr.f32.mxu0 0.0
        %5662 = vmatmul.mubr.f32.gmra.mrb[0].mxu0 %v5520
        %v5663 = vpop.f32.mrb[0].mxu0
        %v5664 = vadd.f32 0.0, %v5663
        %v5665 = vpop.f32.mrb[0].mxu0
        %5666 = vmatprep.mubr.f32.mxu0 0.0
        %5667 = vmatmul.mubr.f32.gmra.mrb[0].mxu0 %v5521
        %v5668 = vpop.f32.mrb[0].mxu0
        %v5669 = vadd.f32 0.0, %v5668
        %v5670 = vpop.f32.mrb[0].mxu0
        %5671 = vmatprep.mubr.f32.mxu0 0.0
        %5672 = vmatmul.mubr.f32.gmra.mrb[0].mxu0 %v5522
        %v5673 = vpop.f32.mrb[0].mxu0
        %v5674 = vadd.f32 0.0, %v5673
        %v5675 = vpop.f32.mrb[0].mxu0
        %5676 = vmatprep.mubr.f32.mxu0 0.0
        %5677 = vmatmul.mubr.f32.gmra.mrb[0].mxu0 %v5523
        %v5678 = vpop.f32.mrb[0].mxu0
        %v5679 = vadd.f32 0.0, %v5678
        %v5680 = vpop.f32.mrb[0].mxu0
        %5681 = vmatprep.mubr.f32.mxu0 0.0
        %5682 = vmatmul.mubr.f32.gmra.mrb[0].mxu0 %v5524
        %v5683 = vpop.f32.mrb[0].mxu0
        %v5684 = vadd.f32 0.0, %v5683
        %v5685 = vpop.f32.mrb[0].mxu0
        %5686 = vdwg.mxu0
        %v5687 = vadd.f32 %v5493, %v5609
        %v5688 = vadd.f32 %v5494, %v5614
        %v5689 = vadd.f32 %v5495, %v5619
        %v5690 = vadd.f32 %v5496, %v5624
        %v5691 = vadd.f32 %v5497, %v5629
        %v5692 = vadd.f32 %v5498, %v5634
        %v5693 = vadd.f32 %v5499, %v5639
        %v5694 = vadd.f32 %v5500, %v5644
        %v5695 = vadd.f32 %v5501, %v5649
        %v5696 = vadd.f32 %v5502, %v5654
        %v5697 = vadd.f32 %v5503, %v5659
        %v5698 = vadd.f32 %v5504, %v5664
        %v5699 = vadd.f32 %v5505, %v5669
        %v5700 = vadd.f32 %v5506, %v5674
        %v5701 = vadd.f32 %v5507, %v5679
        %v5702 = vadd.f32 %v5508, %v5684
        %v5703 = vld [vmem:[#allocation2 + $0x3] sm:$0xff]
        %v5704 = vld [vmem:[#allocation2 + $0x13] sm:$0xff]
        %v5705 = vld [vmem:[#allocation2 + $0x23] sm:$0xff]
        %v5706 = vld [vmem:[#allocation2 + $0x33] sm:$0xff]
        %v5707 = vld [vmem:[#allocation2 + $0x43] sm:$0xff]
        %v5708 = vld [vmem:[#allocation2 + $0x53] sm:$0xff]
        %v5709 = vld [vmem:[#allocation2 + $0x63] sm:$0xff]
        %v5710 = vld [vmem:[#allocation2 + $0x73] sm:$0xff]
        %v5711 = vld [vmem:[#allocation2 + $0x83] sm:$0xff]
        %v5712 = vld [vmem:[#allocation2 + $0x93] sm:$0xff]
        %v5713 = vld [vmem:[#allocation2 + $0xa3] sm:$0xff]
        %v5714 = vld [vmem:[#allocation2 + $0xb3] sm:$0xff]
        %v5715 = vld [vmem:[#allocation2 + $0xc3] sm:$0xff]
        %v5716 = vld [vmem:[#allocation2 + $0xd3] sm:$0xff]
        %v5717 = vld [vmem:[#allocation2 + $0xe3] sm:$0xff]
        %v5718 = vld [vmem:[#allocation2 + $0xf3] sm:$0xff]
        %v5719 = vld [vmem:[#allocation2 + $0x103] sm:$0xff]
        %v5720 = vld [vmem:[#allocation2 + $0x113] sm:$0xff]
        %v5721 = vld [vmem:[#allocation2 + $0x123] sm:$0xff]
        %v5722 = vld [vmem:[#allocation2 + $0x133] sm:$0xff]
        %v5723 = vld [vmem:[#allocation2 + $0x143] sm:$0xff]
        %v5724 = vld [vmem:[#allocation2 + $0x153] sm:$0xff]
        %v5725 = vld [vmem:[#allocation2 + $0x163] sm:$0xff]
        %v5726 = vld [vmem:[#allocation2 + $0x173] sm:$0xff]
        %5727 = vst [vmem:[#allocation3] sm:$0xff] %v5703
        %5728 = vst [vmem:[#allocation3 + $0x8] sm:$0xff] %v5704
        %5729 = vst [vmem:[#allocation3 + $0x10] sm:$0xff] %v5705
        %5730 = vst [vmem:[#allocation3 + $0x18] sm:$0xff] %v5706
        %5731 = vst [vmem:[#allocation3 + $0x20] sm:$0xff] %v5707
        %5732 = vst [vmem:[#allocation3 + $0x28] sm:$0xff] %v5708
        %5733 = vst [vmem:[#allocation3 + $0x30] sm:$0xff] %v5709
        %5734 = vst [vmem:[#allocation3 + $0x38] sm:$0xff] %v5710
        %5735 = vst [vmem:[#allocation3 + $0x40] sm:$0xff] %v5711
        %5736 = vst [vmem:[#allocation3 + $0x48] sm:$0xff] %v5712
        %5737 = vst [vmem:[#allocation3 + $0x50] sm:$0xff] %v5713
        %5738 = vst [vmem:[#allocation3 + $0x58] sm:$0xff] %v5714
        %5739 = vst [vmem:[#allocation3 + $0x60] sm:$0xff] %v5715
        %5740 = vst [vmem:[#allocation3 + $0x68] sm:$0xff] %v5716
        %5741 = vst [vmem:[#allocation3 + $0x70] sm:$0xff] %v5717
        %5742 = vst [vmem:[#allocation3 + $0x78] sm:$0xff] %v5718
        %5743 = vst [vmem:[#allocation3 + $0x80] sm:$0xff] %v5719
        %5744 = vst [vmem:[#allocation3 + $0x88] sm:$0xff] %v5720
        %5745 = vst [vmem:[#allocation3 + $0x90] sm:$0xff] %v5721
        %5746 = vst [vmem:[#allocation3 + $0x98] sm:$0xff] %v5722
        %5747 = vst [vmem:[#allocation3 + $0xa0] sm:$0xff] %v5723
        %5748 = vst [vmem:[#allocation3 + $0xa8] sm:$0xff] %v5724
        %5749 = vst [vmem:[#allocation3 + $0xb0] sm:$0xff] %v5725
        %5750 = vst [vmem:[#allocation3 + $0xb8] sm:$0xff] %v5726
        %v5751 = vld [vmem:[#allocation3] sm:$0xff]
        %v5752 = vld [vmem:[#allocation3 + $0x8] sm:$0xff]
        %v5753 = vld [vmem:[#allocation3 + $0x10] sm:$0xff]
        %v5754 = vld [vmem:[#allocation3 + $0x18] sm:$0xff]
        %v5755 = vld [vmem:[#allocation3 + $0x20] sm:$0xff]
        %v5756 = vld [vmem:[#allocation3 + $0x28] sm:$0xff]
        %v5757 = vld [vmem:[#allocation3 + $0x30] sm:$0xff]
        %v5758 = vld [vmem:[#allocation3 + $0x38] sm:$0xff]
        %v5759 = vld [vmem:[#allocation3 + $0x60] sm:$0xff]
        %v5760 = vld [vmem:[#allocation3 + $0x68] sm:$0xff]
        %v5761 = vld [vmem:[#allocation3 + $0x70] sm:$0xff]
        %v5762 = vld [vmem:[#allocation3 + $0x78] sm:$0xff]
        %v5763 = vld [vmem:[#allocation3 + $0x80] sm:$0xff]
        %v5764 = vld [vmem:[#allocation3 + $0x88] sm:$0xff]
        %v5765 = vld [vmem:[#allocation3 + $0x90] sm:$0xff]
        %v5766 = vld [vmem:[#allocation3 + $0x98] sm:$0xff]
        %s5767 = scalar_lea.vmem %s3, 384
        %v5768 = vld [vmem:[%s5767] sm:$0xff]
        %v5769 = vld [vmem:[%s5767 + $0x8] sm:$0xff]
        %v5770 = vld [vmem:[%s5767 + $0x10] sm:$0xff]
        %v5771 = vld [vmem:[%s5767 + $0x18] sm:$0xff]
        %v5772 = vld [vmem:[%s5767 + $0x20] sm:$0xff]
        %v5773 = vld [vmem:[%s5767 + $0x28] sm:$0xff]
        %v5774 = vld [vmem:[%s5767 + $0x30] sm:$0xff]
        %v5775 = vld [vmem:[%s5767 + $0x38] sm:$0xff]
        %v5776 = vld [vmem:[%s5767 + $0x40] sm:$0xff]
        %v5777 = vld [vmem:[%s5767 + $0x48] sm:$0xff]
        %v5778 = vld [vmem:[%s5767 + $0x50] sm:$0xff]
        %v5779 = vld [vmem:[%s5767 + $0x58] sm:$0xff]
        %v5780 = vld [vmem:[%s5767 + $0x60] sm:$0xff]
        %v5781 = vld [vmem:[%s5767 + $0x68] sm:$0xff]
        %v5782 = vld [vmem:[%s5767 + $0x70] sm:$0xff]
        %v5783 = vld [vmem:[%s5767 + $0x78] sm:$0xff]
        %5784 = vmatprep.subr.mxu0 0.0
        %5785 = vmatpush1.msra.mxu0 %v5768
        %5786 = vmatprep.subr.mxu0 0.0
        %5787 = vmatpush1.msra.mxu0 %v5769
        %5788 = vmatprep.subr.mxu0 0.0
        %5789 = vmatpush1.msra.mxu0 %v5770
        %5790 = vmatprep.subr.mxu0 0.0
        %5791 = vmatpush1.msra.mxu0 %v5771
        %5792 = vmatprep.subr.mxu0 0.0
        %5793 = vmatpush1.msra.mxu0 %v5772
        %5794 = vmatprep.subr.mxu0 0.0
        %5795 = vmatpush1.msra.mxu0 %v5773
        %5796 = vmatprep.subr.mxu0 0.0
        %5797 = vmatpush1.msra.mxu0 %v5774
        %5798 = vmatprep.subr.mxu0 0.0
        %5799 = vmatpush1.msra.mxu0 %v5775
        %5800 = vmatprep.subr.mxu0 0.0
        %5801 = vmatpush1.msra.mxu0 %v5776
        %5802 = vmatprep.subr.mxu0 0.0
        %5803 = vmatpush1.msra.mxu0 %v5777
        %5804 = vmatprep.subr.mxu0 0.0
        %5805 = vmatpush1.msra.mxu0 %v5778
        %5806 = vmatprep.subr.mxu0 0.0
        %5807 = vmatpush1.msra.mxu0 %v5779
        %5808 = vmatprep.subr.mxu0 0.0
        %5809 = vmatpush1.msra.mxu0 %v5780
        %5810 = vmatprep.subr.mxu0 0.0
        %5811 = vmatpush1.msra.mxu0 %v5781
        %5812 = vmatprep.subr.mxu0 0.0
        %5813 = vmatpush1.msra.mxu0 %v5782
        %5814 = vmatprep.subr.mxu0 0.0
        %5815 = vmatpush1.msra.mxu0 %v5783
        %5816 = vmatprep.subr.mxu0 0.0
        %5817 = vmatpush1.msra.mxu0 0.0
        %5818 = vmatprep.subr.mxu0 0.0
        %5819 = vmatpush1.msra.mxu0 0.0
        %5820 = vmatprep.subr.mxu0 0.0
        %5821 = vmatpush1.msra.mxu0 0.0
        %5822 = vmatprep.subr.mxu0 0.0
        %5823 = vmatpush1.msra.mxu0 0.0
        %5824 = vmatprep.subr.mxu0 0.0
        %5825 = vmatpush1.msra.mxu0 0.0
        %5826 = vmatprep.subr.mxu0 0.0
        %5827 = vmatpush1.msra.mxu0 0.0
        %5828 = vmatprep.subr.mxu0 0.0
        %5829 = vmatpush1.msra.mxu0 0.0
        %5830 = vmatprep.subr.mxu0 0.0
        %5831 = vmatpush1.msra.mxu0 0.0
        %5832 = vmatprep.subr.mxu0 0.0
        %5833 = vmatpush1.msra.mxu0 0.0
        %5834 = vmatprep.subr.mxu0 0.0
        %5835 = vmatpush1.msra.mxu0 0.0
        %5836 = vmatprep.subr.mxu0 0.0
        %5837 = vmatpush1.msra.mxu0 0.0
        %5838 = vmatprep.subr.mxu0 0.0
        %5839 = vmatpush1.msra.mxu0 0.0
        %5840 = vmatprep.subr.mxu0 0.0
        %5841 = vmatpush1.msra.mxu0 0.0
        %5842 = vmatprep.subr.mxu0 0.0
        %5843 = vmatpush1.msra.mxu0 0.0
        %5844 = vmatprep.subr.mxu0 0.0
        %5845 = vmatpush1.msra.mxu0 0.0
        %5846 = vmatprep.subr.mxu0 0.0
        %5847 = vmatpush1.msra.mxu0 0.0
        %5848 = vmatprep.mubr.f32.mxu0 0.0
        %5849 = vmatmul.mubr.f32.gmra.mrb[0].mxu0 %v5751
        %v5850 = vpop.f32.mrb[0].mxu0
        %v5851 = vadd.f32 0.0, %v5850
        %v5852 = vpop.f32.mrb[0].mxu0
        %5853 = vmatprep.mubr.f32.mxu0 0.0
        %5854 = vmatmul.mubr.f32.gmra.mrb[0].mxu0 %v5752
        %v5855 = vpop.f32.mrb[0].mxu0
        %v5856 = vadd.f32 0.0, %v5855
        %v5857 = vpop.f32.mrb[0].mxu0
        %5858 = vmatprep.mubr.f32.mxu0 0.0
        %5859 = vmatmul.mubr.f32.gmra.mrb[0].mxu0 %v5753
        %v5860 = vpop.f32.mrb[0].mxu0
        %v5861 = vadd.f32 0.0, %v5860
        %v5862 = vpop.f32.mrb[0].mxu0
        %5863 = vmatprep.mubr.f32.mxu0 0.0
        %5864 = vmatmul.mubr.f32.gmra.mrb[0].mxu0 %v5754
        %v5865 = vpop.f32.mrb[0].mxu0
        %v5866 = vadd.f32 0.0, %v5865
        %v5867 = vpop.f32.mrb[0].mxu0
        %5868 = vmatprep.mubr.f32.mxu0 0.0
        %5869 = vmatmul.mubr.f32.gmra.mrb[0].mxu0 %v5755
        %v5870 = vpop.f32.mrb[0].mxu0
        %v5871 = vadd.f32 0.0, %v5870
        %v5872 = vpop.f32.mrb[0].mxu0
        %5873 = vmatprep.mubr.f32.mxu0 0.0
        %5874 = vmatmul.mubr.f32.gmra.mrb[0].mxu0 %v5756
        %v5875 = vpop.f32.mrb[0].mxu0
        %v5876 = vadd.f32 0.0, %v5875
        %v5877 = vpop.f32.mrb[0].mxu0
        %5878 = vmatprep.mubr.f32.mxu0 0.0
        %5879 = vmatmul.mubr.f32.gmra.mrb[0].mxu0 %v5757
        %v5880 = vpop.f32.mrb[0].mxu0
        %v5881 = vadd.f32 0.0, %v5880
        %v5882 = vpop.f32.mrb[0].mxu0
        %5883 = vmatprep.mubr.f32.mxu0 0.0
        %5884 = vmatmul.mubr.f32.gmra.mrb[0].mxu0 %v5758
        %v5885 = vpop.f32.mrb[0].mxu0
        %v5886 = vadd.f32 0.0, %v5885
        %v5887 = vpop.f32.mrb[0].mxu0
        %5888 = vmatprep.mubr.f32.mxu0 0.0
        %5889 = vmatmul.mubr.f32.gmra.mrb[0].mxu0 %v5759
        %v5890 = vpop.f32.mrb[0].mxu0
        %v5891 = vadd.f32 0.0, %v5890
        %v5892 = vpop.f32.mrb[0].mxu0
        %5893 = vmatprep.mubr.f32.mxu0 0.0
        %5894 = vmatmul.mubr.f32.gmra.mrb[0].mxu0 %v5760
        %v5895 = vpop.f32.mrb[0].mxu0
        %v5896 = vadd.f32 0.0, %v5895
        %v5897 = vpop.f32.mrb[0].mxu0
        %5898 = vmatprep.mubr.f32.mxu0 0.0
        %5899 = vmatmul.mubr.f32.gmra.mrb[0].mxu0 %v5761
        %v5900 = vpop.f32.mrb[0].mxu0
        %v5901 = vadd.f32 0.0, %v5900
        %v5902 = vpop.f32.mrb[0].mxu0
        %5903 = vmatprep.mubr.f32.mxu0 0.0
        %5904 = vmatmul.mubr.f32.gmra.mrb[0].mxu0 %v5762
        %v5905 = vpop.f32.mrb[0].mxu0
        %v5906 = vadd.f32 0.0, %v5905
        %v5907 = vpop.f32.mrb[0].mxu0
        %5908 = vmatprep.mubr.f32.mxu0 0.0
        %5909 = vmatmul.mubr.f32.gmra.mrb[0].mxu0 %v5763
        %v5910 = vpop.f32.mrb[0].mxu0
        %v5911 = vadd.f32 0.0, %v5910
        %v5912 = vpop.f32.mrb[0].mxu0
        %5913 = vmatprep.mubr.f32.mxu0 0.0
        %5914 = vmatmul.mubr.f32.gmra.mrb[0].mxu0 %v5764
        %v5915 = vpop.f32.mrb[0].mxu0
        %v5916 = vadd.f32 0.0, %v5915
        %v5917 = vpop.f32.mrb[0].mxu0
        %5918 = vmatprep.mubr.f32.mxu0 0.0
        %5919 = vmatmul.mubr.f32.gmra.mrb[0].mxu0 %v5765
        %v5920 = vpop.f32.mrb[0].mxu0
        %v5921 = vadd.f32 0.0, %v5920
        %v5922 = vpop.f32.mrb[0].mxu0
        %5923 = vmatprep.mubr.f32.mxu0 0.0
        %5924 = vmatmul.mubr.f32.gmra.mrb[0].mxu0 %v5766
        %v5925 = vpop.f32.mrb[0].mxu0
        %v5926 = vadd.f32 0.0, %v5925
        %v5927 = vpop.f32.mrb[0].mxu0
        %5928 = vdwg.mxu0
        %v5929 = vadd.f32 %v5687, %v5851
        %v5930 = vadd.f32 %v5688, %v5856
        %v5931 = vadd.f32 %v5689, %v5861
        %v5932 = vadd.f32 %v5690, %v5866
        %v5933 = vadd.f32 %v5691, %v5871
        %v5934 = vadd.f32 %v5692, %v5876
        %v5935 = vadd.f32 %v5693, %v5881
        %v5936 = vadd.f32 %v5694, %v5886
        %v5937 = vadd.f32 %v5695, %v5891
        %v5938 = vadd.f32 %v5696, %v5896
        %v5939 = vadd.f32 %v5697, %v5901
        %v5940 = vadd.f32 %v5698, %v5906
        %v5941 = vadd.f32 %v5699, %v5911
        %v5942 = vadd.f32 %v5700, %v5916
        %v5943 = vadd.f32 %v5701, %v5921
        %v5944 = vadd.f32 %v5702, %v5926
        %v5945 = vld [vmem:[%s2758] sm:$0xff]
        %v5946 = vld [vmem:[%s2758 + $0x8] sm:$0xff]
        %v5947 = vld [vmem:[%s2758 + $0x10] sm:$0xff]
        %v5948 = vld [vmem:[%s2758 + $0x18] sm:$0xff]
        %v5949 = vld [vmem:[%s2758 + $0x20] sm:$0xff]
        %v5950 = vld [vmem:[%s2758 + $0x28] sm:$0xff]
        %v5951 = vld [vmem:[%s2758 + $0x30] sm:$0xff]
        %v5952 = vld [vmem:[%s2758 + $0x38] sm:$0xff]
        %v5953 = vld [vmem:[%s2758 + $0x60] sm:$0xff]
        %v5954 = vld [vmem:[%s2758 + $0x68] sm:$0xff]
        %v5955 = vld [vmem:[%s2758 + $0x70] sm:$0xff]
        %v5956 = vld [vmem:[%s2758 + $0x78] sm:$0xff]
        %v5957 = vld [vmem:[%s2758 + $0x80] sm:$0xff]
        %v5958 = vld [vmem:[%s2758 + $0x88] sm:$0xff]
        %v5959 = vld [vmem:[%s2758 + $0x90] sm:$0xff]
        %v5960 = vld [vmem:[%s2758 + $0x98] sm:$0xff]
        %s5961 = scalar_lea.vmem %s3, 1024
        %v5962 = vld [vmem:[%s5961] sm:$0xff]
        %v5963 = vld [vmem:[%s5961 + $0x8] sm:$0xff]
        %v5964 = vld [vmem:[%s5961 + $0x10] sm:$0xff]
        %v5965 = vld [vmem:[%s5961 + $0x18] sm:$0xff]
        %v5966 = vld [vmem:[%s5961 + $0x20] sm:$0xff]
        %v5967 = vld [vmem:[%s5961 + $0x28] sm:$0xff]
        %v5968 = vld [vmem:[%s5961 + $0x30] sm:$0xff]
        %v5969 = vld [vmem:[%s5961 + $0x38] sm:$0xff]
        %v5970 = vld [vmem:[%s5961 + $0x40] sm:$0xff]
        %v5971 = vld [vmem:[%s5961 + $0x48] sm:$0xff]
        %v5972 = vld [vmem:[%s5961 + $0x50] sm:$0xff]
        %v5973 = vld [vmem:[%s5961 + $0x58] sm:$0xff]
        %v5974 = vld [vmem:[%s5961 + $0x60] sm:$0xff]
        %v5975 = vld [vmem:[%s5961 + $0x68] sm:$0xff]
        %v5976 = vld [vmem:[%s5961 + $0x70] sm:$0xff]
        %v5977 = vld [vmem:[%s5961 + $0x78] sm:$0xff]
        %5978 = vmatprep.subr.mxu0 0.0
        %5979 = vmatpush1.msra.mxu0 %v5962
        %5980 = vmatprep.subr.mxu0 0.0
        %5981 = vmatpush1.msra.mxu0 %v5963
        %5982 = vmatprep.subr.mxu0 0.0
        %5983 = vmatpush1.msra.mxu0 %v5964
        %5984 = vmatprep.subr.mxu0 0.0
        %5985 = vmatpush1.msra.mxu0 %v5965
        %5986 = vmatprep.subr.mxu0 0.0
        %5987 = vmatpush1.msra.mxu0 %v5966
        %5988 = vmatprep.subr.mxu0 0.0
        %5989 = vmatpush1.msra.mxu0 %v5967
        %5990 = vmatprep.subr.mxu0 0.0
        %5991 = vmatpush1.msra.mxu0 %v5968
        %5992 = vmatprep.subr.mxu0 0.0
        %5993 = vmatpush1.msra.mxu0 %v5969
        %5994 = vmatprep.subr.mxu0 0.0
        %5995 = vmatpush1.msra.mxu0 %v5970
        %5996 = vmatprep.subr.mxu0 0.0
        %5997 = vmatpush1.msra.mxu0 %v5971
        %5998 = vmatprep.subr.mxu0 0.0
        %5999 = vmatpush1.msra.mxu0 %v5972
        %6000 = vmatprep.subr.mxu0 0.0
        %6001 = vmatpush1.msra.mxu0 %v5973
        %6002 = vmatprep.subr.mxu0 0.0
        %6003 = vmatpush1.msra.mxu0 %v5974
        %6004 = vmatprep.subr.mxu0 0.0
        %6005 = vmatpush1.msra.mxu0 %v5975
        %6006 = vmatprep.subr.mxu0 0.0
        %6007 = vmatpush1.msra.mxu0 %v5976
        %6008 = vmatprep.subr.mxu0 0.0
        %6009 = vmatpush1.msra.mxu0 %v5977
        %6010 = vmatprep.subr.mxu0 0.0
        %6011 = vmatpush1.msra.mxu0 0.0
        %6012 = vmatprep.subr.mxu0 0.0
        %6013 = vmatpush1.msra.mxu0 0.0
        %6014 = vmatprep.subr.mxu0 0.0
        %6015 = vmatpush1.msra.mxu0 0.0
        %6016 = vmatprep.subr.mxu0 0.0
        %6017 = vmatpush1.msra.mxu0 0.0
        %6018 = vmatprep.subr.mxu0 0.0
        %6019 = vmatpush1.msra.mxu0 0.0
        %6020 = vmatprep.subr.mxu0 0.0
        %6021 = vmatpush1.msra.mxu0 0.0
        %6022 = vmatprep.subr.mxu0 0.0
        %6023 = vmatpush1.msra.mxu0 0.0
        %6024 = vmatprep.subr.mxu0 0.0
        %6025 = vmatpush1.msra.mxu0 0.0
        %6026 = vmatprep.subr.mxu0 0.0
        %6027 = vmatpush1.msra.mxu0 0.0
        %6028 = vmatprep.subr.mxu0 0.0
        %6029 = vmatpush1.msra.mxu0 0.0
        %6030 = vmatprep.subr.mxu0 0.0
        %6031 = vmatpush1.msra.mxu0 0.0
        %6032 = vmatprep.subr.mxu0 0.0
        %6033 = vmatpush1.msra.mxu0 0.0
        %6034 = vmatprep.subr.mxu0 0.0
        %6035 = vmatpush1.msra.mxu0 0.0
        %6036 = vmatprep.subr.mxu0 0.0
        %6037 = vmatpush1.msra.mxu0 0.0
        %6038 = vmatprep.subr.mxu0 0.0
        %6039 = vmatpush1.msra.mxu0 0.0
        %6040 = vmatprep.subr.mxu0 0.0
        %6041 = vmatpush1.msra.mxu0 0.0
        %6042 = vmatprep.mubr.f32.mxu0 0.0
        %6043 = vmatmul.mubr.f32.gmra.mrb[0].mxu0 %v5945
        %v6044 = vpop.f32.mrb[0].mxu0
        %v6045 = vadd.f32 0.0, %v6044
        %v6046 = vpop.f32.mrb[0].mxu0
        %6047 = vmatprep.mubr.f32.mxu0 0.0
        %6048 = vmatmul.mubr.f32.gmra.mrb[0].mxu0 %v5946
        %v6049 = vpop.f32.mrb[0].mxu0
        %v6050 = vadd.f32 0.0, %v6049
        %v6051 = vpop.f32.mrb[0].mxu0
        %6052 = vmatprep.mubr.f32.mxu0 0.0
        %6053 = vmatmul.mubr.f32.gmra.mrb[0].mxu0 %v5947
        %v6054 = vpop.f32.mrb[0].mxu0
        %v6055 = vadd.f32 0.0, %v6054
        %v6056 = vpop.f32.mrb[0].mxu0
        %6057 = vmatprep.mubr.f32.mxu0 0.0
        %6058 = vmatmul.mubr.f32.gmra.mrb[0].mxu0 %v5948
        %v6059 = vpop.f32.mrb[0].mxu0
        %v6060 = vadd.f32 0.0, %v6059
        %v6061 = vpop.f32.mrb[0].mxu0
        %6062 = vmatprep.mubr.f32.mxu0 0.0
        %6063 = vmatmul.mubr.f32.gmra.mrb[0].mxu0 %v5949
        %v6064 = vpop.f32.mrb[0].mxu0
        %v6065 = vadd.f32 0.0, %v6064
        %v6066 = vpop.f32.mrb[0].mxu0
        %6067 = vmatprep.mubr.f32.mxu0 0.0
        %6068 = vmatmul.mubr.f32.gmra.mrb[0].mxu0 %v5950
        %v6069 = vpop.f32.mrb[0].mxu0
        %v6070 = vadd.f32 0.0, %v6069
        %v6071 = vpop.f32.mrb[0].mxu0
        %6072 = vmatprep.mubr.f32.mxu0 0.0
        %6073 = vmatmul.mubr.f32.gmra.mrb[0].mxu0 %v5951
        %v6074 = vpop.f32.mrb[0].mxu0
        %v6075 = vadd.f32 0.0, %v6074
        %v6076 = vpop.f32.mrb[0].mxu0
        %6077 = vmatprep.mubr.f32.mxu0 0.0
        %6078 = vmatmul.mubr.f32.gmra.mrb[0].mxu0 %v5952
        %v6079 = vpop.f32.mrb[0].mxu0
        %v6080 = vadd.f32 0.0, %v6079
        %v6081 = vpop.f32.mrb[0].mxu0
        %6082 = vmatprep.mubr.f32.mxu0 0.0
        %6083 = vmatmul.mubr.f32.gmra.mrb[0].mxu0 %v5953
        %v6084 = vpop.f32.mrb[0].mxu0
        %v6085 = vadd.f32 0.0, %v6084
        %v6086 = vpop.f32.mrb[0].mxu0
        %6087 = vmatprep.mubr.f32.mxu0 0.0
        %6088 = vmatmul.mubr.f32.gmra.mrb[0].mxu0 %v5954
        %v6089 = vpop.f32.mrb[0].mxu0
        %v6090 = vadd.f32 0.0, %v6089
        %v6091 = vpop.f32.mrb[0].mxu0
        %6092 = vmatprep.mubr.f32.mxu0 0.0
        %6093 = vmatmul.mubr.f32.gmra.mrb[0].mxu0 %v5955
        %v6094 = vpop.f32.mrb[0].mxu0
        %v6095 = vadd.f32 0.0, %v6094
        %v6096 = vpop.f32.mrb[0].mxu0
        %6097 = vmatprep.mubr.f32.mxu0 0.0
        %6098 = vmatmul.mubr.f32.gmra.mrb[0].mxu0 %v5956
        %v6099 = vpop.f32.mrb[0].mxu0
        %v6100 = vadd.f32 0.0, %v6099
        %v6101 = vpop.f32.mrb[0].mxu0
        %6102 = vmatprep.mubr.f32.mxu0 0.0
        %6103 = vmatmul.mubr.f32.gmra.mrb[0].mxu0 %v5957
        %v6104 = vpop.f32.mrb[0].mxu0
        %v6105 = vadd.f32 0.0, %v6104
        %v6106 = vpop.f32.mrb[0].mxu0
        %6107 = vmatprep.mubr.f32.mxu0 0.0
        %6108 = vmatmul.mubr.f32.gmra.mrb[0].mxu0 %v5958
        %v6109 = vpop.f32.mrb[0].mxu0
        %v6110 = vadd.f32 0.0, %v6109
        %v6111 = vpop.f32.mrb[0].mxu0
        %6112 = vmatprep.mubr.f32.mxu0 0.0
        %6113 = vmatmul.mubr.f32.gmra.mrb[0].mxu0 %v5959
        %v6114 = vpop.f32.mrb[0].mxu0
        %v6115 = vadd.f32 0.0, %v6114
        %v6116 = vpop.f32.mrb[0].mxu0
        %6117 = vmatprep.mubr.f32.mxu0 0.0
        %6118 = vmatmul.mubr.f32.gmra.mrb[0].mxu0 %v5960
        %v6119 = vpop.f32.mrb[0].mxu0
        %v6120 = vadd.f32 0.0, %v6119
        %v6121 = vpop.f32.mrb[0].mxu0
        %6122 = vdwg.mxu0
        %v6123 = vadd.f32 %v5929, %v6045
        %v6124 = vadd.f32 %v5930, %v6050
        %v6125 = vadd.f32 %v5931, %v6055
        %v6126 = vadd.f32 %v5932, %v6060
        %v6127 = vadd.f32 %v5933, %v6065
        %v6128 = vadd.f32 %v5934, %v6070
        %v6129 = vadd.f32 %v5935, %v6075
        %v6130 = vadd.f32 %v5936, %v6080
        %v6131 = vadd.f32 %v5937, %v6085
        %v6132 = vadd.f32 %v5938, %v6090
        %v6133 = vadd.f32 %v5939, %v6095
        %v6134 = vadd.f32 %v5940, %v6100
        %v6135 = vadd.f32 %v5941, %v6105
        %v6136 = vadd.f32 %v5942, %v6110
        %v6137 = vadd.f32 %v5943, %v6115
        %v6138 = vadd.f32 %v5944, %v6120
        %v6139 = vld [vmem:[%s3082] sm:$0xff]
        %v6140 = vld [vmem:[%s3082 + $0x8] sm:$0xff]
        %v6141 = vld [vmem:[%s3082 + $0x10] sm:$0xff]
        %v6142 = vld [vmem:[%s3082 + $0x18] sm:$0xff]
        %v6143 = vld [vmem:[%s3082 + $0x20] sm:$0xff]
        %v6144 = vld [vmem:[%s3082 + $0x28] sm:$0xff]
        %v6145 = vld [vmem:[%s3082 + $0x30] sm:$0xff]
        %v6146 = vld [vmem:[%s3082 + $0x38] sm:$0xff]
        %v6147 = vld [vmem:[%s3082 + $0x60] sm:$0xff]
        %v6148 = vld [vmem:[%s3082 + $0x68] sm:$0xff]
        %v6149 = vld [vmem:[%s3082 + $0x70] sm:$0xff]
        %v6150 = vld [vmem:[%s3082 + $0x78] sm:$0xff]
        %v6151 = vld [vmem:[%s3082 + $0x80] sm:$0xff]
        %v6152 = vld [vmem:[%s3082 + $0x88] sm:$0xff]
        %v6153 = vld [vmem:[%s3082 + $0x90] sm:$0xff]
        %v6154 = vld [vmem:[%s3082 + $0x98] sm:$0xff]
        %s6155 = scalar_lea.vmem %s3, 1664
        %v6156 = vld [vmem:[%s6155] sm:$0xff]
        %v6157 = vld [vmem:[%s6155 + $0x8] sm:$0xff]
        %v6158 = vld [vmem:[%s6155 + $0x10] sm:$0xff]
        %v6159 = vld [vmem:[%s6155 + $0x18] sm:$0xff]
        %v6160 = vld [vmem:[%s6155 + $0x20] sm:$0xff]
        %v6161 = vld [vmem:[%s6155 + $0x28] sm:$0xff]
        %v6162 = vld [vmem:[%s6155 + $0x30] sm:$0xff]
        %v6163 = vld [vmem:[%s6155 + $0x38] sm:$0xff]
        %v6164 = vld [vmem:[%s6155 + $0x40] sm:$0xff]
        %v6165 = vld [vmem:[%s6155 + $0x48] sm:$0xff]
        %v6166 = vld [vmem:[%s6155 + $0x50] sm:$0xff]
        %v6167 = vld [vmem:[%s6155 + $0x58] sm:$0xff]
        %v6168 = vld [vmem:[%s6155 + $0x60] sm:$0xff]
        %v6169 = vld [vmem:[%s6155 + $0x68] sm:$0xff]
        %v6170 = vld [vmem:[%s6155 + $0x70] sm:$0xff]
        %v6171 = vld [vmem:[%s6155 + $0x78] sm:$0xff]
        %6172 = vmatprep.subr.mxu0 0.0
        %6173 = vmatpush1.msra.mxu0 %v6156
        %6174 = vmatprep.subr.mxu0 0.0
        %6175 = vmatpush1.msra.mxu0 %v6157
        %6176 = vmatprep.subr.mxu0 0.0
        %6177 = vmatpush1.msra.mxu0 %v6158
        %6178 = vmatprep.subr.mxu0 0.0
        %6179 = vmatpush1.msra.mxu0 %v6159
        %6180 = vmatprep.subr.mxu0 0.0
        %6181 = vmatpush1.msra.mxu0 %v6160
        %6182 = vmatprep.subr.mxu0 0.0
        %6183 = vmatpush1.msra.mxu0 %v6161
        %6184 = vmatprep.subr.mxu0 0.0
        %6185 = vmatpush1.msra.mxu0 %v6162
        %6186 = vmatprep.subr.mxu0 0.0
        %6187 = vmatpush1.msra.mxu0 %v6163
        %6188 = vmatprep.subr.mxu0 0.0
        %6189 = vmatpush1.msra.mxu0 %v6164
        %6190 = vmatprep.subr.mxu0 0.0
        %6191 = vmatpush1.msra.mxu0 %v6165
        %6192 = vmatprep.subr.mxu0 0.0
        %6193 = vmatpush1.msra.mxu0 %v6166
        %6194 = vmatprep.subr.mxu0 0.0
        %6195 = vmatpush1.msra.mxu0 %v6167
        %6196 = vmatprep.subr.mxu0 0.0
        %6197 = vmatpush1.msra.mxu0 %v6168
        %6198 = vmatprep.subr.mxu0 0.0
        %6199 = vmatpush1.msra.mxu0 %v6169
        %6200 = vmatprep.subr.mxu0 0.0
        %6201 = vmatpush1.msra.mxu0 %v6170
        %6202 = vmatprep.subr.mxu0 0.0
        %6203 = vmatpush1.msra.mxu0 %v6171
        %6204 = vmatprep.subr.mxu0 0.0
        %6205 = vmatpush1.msra.mxu0 0.0
        %6206 = vmatprep.subr.mxu0 0.0
        %6207 = vmatpush1.msra.mxu0 0.0
        %6208 = vmatprep.subr.mxu0 0.0
        %6209 = vmatpush1.msra.mxu0 0.0
        %6210 = vmatprep.subr.mxu0 0.0
        %6211 = vmatpush1.msra.mxu0 0.0
        %6212 = vmatprep.subr.mxu0 0.0
        %6213 = vmatpush1.msra.mxu0 0.0
        %6214 = vmatprep.subr.mxu0 0.0
        %6215 = vmatpush1.msra.mxu0 0.0
        %6216 = vmatprep.subr.mxu0 0.0
        %6217 = vmatpush1.msra.mxu0 0.0
        %6218 = vmatprep.subr.mxu0 0.0
        %6219 = vmatpush1.msra.mxu0 0.0
        %6220 = vmatprep.subr.mxu0 0.0
        %6221 = vmatpush1.msra.mxu0 0.0
        %6222 = vmatprep.subr.mxu0 0.0
        %6223 = vmatpush1.msra.mxu0 0.0
        %6224 = vmatprep.subr.mxu0 0.0
        %6225 = vmatpush1.msra.mxu0 0.0
        %6226 = vmatprep.subr.mxu0 0.0
        %6227 = vmatpush1.msra.mxu0 0.0
        %6228 = vmatprep.subr.mxu0 0.0
        %6229 = vmatpush1.msra.mxu0 0.0
        %6230 = vmatprep.subr.mxu0 0.0
        %6231 = vmatpush1.msra.mxu0 0.0
        %6232 = vmatprep.subr.mxu0 0.0
        %6233 = vmatpush1.msra.mxu0 0.0
        %6234 = vmatprep.subr.mxu0 0.0
        %6235 = vmatpush1.msra.mxu0 0.0
        %6236 = vmatprep.mubr.f32.mxu0 0.0
        %6237 = vmatmul.mubr.f32.gmra.mrb[0].mxu0 %v6139
        %v6238 = vpop.f32.mrb[0].mxu0
        %v6239 = vadd.f32 0.0, %v6238
        %v6240 = vpop.f32.mrb[0].mxu0
        %6241 = vmatprep.mubr.f32.mxu0 0.0
        %6242 = vmatmul.mubr.f32.gmra.mrb[0].mxu0 %v6140
        %v6243 = vpop.f32.mrb[0].mxu0
        %v6244 = vadd.f32 0.0, %v6243
        %v6245 = vpop.f32.mrb[0].mxu0
        %6246 = vmatprep.mubr.f32.mxu0 0.0
        %6247 = vmatmul.mubr.f32.gmra.mrb[0].mxu0 %v6141
        %v6248 = vpop.f32.mrb[0].mxu0
        %v6249 = vadd.f32 0.0, %v6248
        %v6250 = vpop.f32.mrb[0].mxu0
        %6251 = vmatprep.mubr.f32.mxu0 0.0
        %6252 = vmatmul.mubr.f32.gmra.mrb[0].mxu0 %v6142
        %v6253 = vpop.f32.mrb[0].mxu0
        %v6254 = vadd.f32 0.0, %v6253
        %v6255 = vpop.f32.mrb[0].mxu0
        %6256 = vmatprep.mubr.f32.mxu0 0.0
        %6257 = vmatmul.mubr.f32.gmra.mrb[0].mxu0 %v6143
        %v6258 = vpop.f32.mrb[0].mxu0
        %v6259 = vadd.f32 0.0, %v6258
        %v6260 = vpop.f32.mrb[0].mxu0
        %6261 = vmatprep.mubr.f32.mxu0 0.0
        %6262 = vmatmul.mubr.f32.gmra.mrb[0].mxu0 %v6144
        %v6263 = vpop.f32.mrb[0].mxu0
        %v6264 = vadd.f32 0.0, %v6263
        %v6265 = vpop.f32.mrb[0].mxu0
        %6266 = vmatprep.mubr.f32.mxu0 0.0
        %6267 = vmatmul.mubr.f32.gmra.mrb[0].mxu0 %v6145
        %v6268 = vpop.f32.mrb[0].mxu0
        %v6269 = vadd.f32 0.0, %v6268
        %v6270 = vpop.f32.mrb[0].mxu0
        %6271 = vmatprep.mubr.f32.mxu0 0.0
        %6272 = vmatmul.mubr.f32.gmra.mrb[0].mxu0 %v6146
        %v6273 = vpop.f32.mrb[0].mxu0
        %v6274 = vadd.f32 0.0, %v6273
        %v6275 = vpop.f32.mrb[0].mxu0
        %6276 = vmatprep.mubr.f32.mxu0 0.0
        %6277 = vmatmul.mubr.f32.gmra.mrb[0].mxu0 %v6147
        %v6278 = vpop.f32.mrb[0].mxu0
        %v6279 = vadd.f32 0.0, %v6278
        %v6280 = vpop.f32.mrb[0].mxu0
        %6281 = vmatprep.mubr.f32.mxu0 0.0
        %6282 = vmatmul.mubr.f32.gmra.mrb[0].mxu0 %v6148
        %v6283 = vpop.f32.mrb[0].mxu0
        %v6284 = vadd.f32 0.0, %v6283
        %v6285 = vpop.f32.mrb[0].mxu0
        %6286 = vmatprep.mubr.f32.mxu0 0.0
        %6287 = vmatmul.mubr.f32.gmra.mrb[0].mxu0 %v6149
        %v6288 = vpop.f32.mrb[0].mxu0
        %v6289 = vadd.f32 0.0, %v6288
        %v6290 = vpop.f32.mrb[0].mxu0
        %6291 = vmatprep.mubr.f32.mxu0 0.0
        %6292 = vmatmul.mubr.f32.gmra.mrb[0].mxu0 %v6150
        %v6293 = vpop.f32.mrb[0].mxu0
        %v6294 = vadd.f32 0.0, %v6293
        %v6295 = vpop.f32.mrb[0].mxu0
        %6296 = vmatprep.mubr.f32.mxu0 0.0
        %6297 = vmatmul.mubr.f32.gmra.mrb[0].mxu0 %v6151
        %v6298 = vpop.f32.mrb[0].mxu0
        %v6299 = vadd.f32 0.0, %v6298
        %v6300 = vpop.f32.mrb[0].mxu0
        %6301 = vmatprep.mubr.f32.mxu0 0.0
        %6302 = vmatmul.mubr.f32.gmra.mrb[0].mxu0 %v6152
        %v6303 = vpop.f32.mrb[0].mxu0
        %v6304 = vadd.f32 0.0, %v6303
        %v6305 = vpop.f32.mrb[0].mxu0
        %6306 = vmatprep.mubr.f32.mxu0 0.0
        %6307 = vmatmul.mubr.f32.gmra.mrb[0].mxu0 %v6153
        %v6308 = vpop.f32.mrb[0].mxu0
        %v6309 = vadd.f32 0.0, %v6308
        %v6310 = vpop.f32.mrb[0].mxu0
        %6311 = vmatprep.mubr.f32.mxu0 0.0
        %6312 = vmatmul.mubr.f32.gmra.mrb[0].mxu0 %v6154
        %v6313 = vpop.f32.mrb[0].mxu0
        %v6314 = vadd.f32 0.0, %v6313
        %v6315 = vpop.f32.mrb[0].mxu0
        %6316 = vdwg.mxu0
        %v6317 = vadd.f32 %v6123, %v6239
        %v6318 = vadd.f32 %v6124, %v6244
        %v6319 = vadd.f32 %v6125, %v6249
        %v6320 = vadd.f32 %v6126, %v6254
        %v6321 = vadd.f32 %v6127, %v6259
        %v6322 = vadd.f32 %v6128, %v6264
        %v6323 = vadd.f32 %v6129, %v6269
        %v6324 = vadd.f32 %v6130, %v6274
        %v6325 = vadd.f32 %v6131, %v6279
        %v6326 = vadd.f32 %v6132, %v6284
        %v6327 = vadd.f32 %v6133, %v6289
        %v6328 = vadd.f32 %v6134, %v6294
        %v6329 = vadd.f32 %v6135, %v6299
        %v6330 = vadd.f32 %v6136, %v6304
        %v6331 = vadd.f32 %v6137, %v6309
        %v6332 = vadd.f32 %v6138, %v6314
        %v6333 = vld [vmem:[%s3277] sm:$0xff]
        %v6334 = vld [vmem:[%s3277 + $0x8] sm:$0xff]
        %v6335 = vld [vmem:[%s3277 + $0x10] sm:$0xff]
        %v6336 = vld [vmem:[%s3277 + $0x18] sm:$0xff]
        %v6337 = vld [vmem:[%s3277 + $0x20] sm:$0xff]
        %v6338 = vld [vmem:[%s3277 + $0x28] sm:$0xff]
        %v6339 = vld [vmem:[%s3277 + $0x30] sm:$0xff]
        %v6340 = vld [vmem:[%s3277 + $0x38] sm:$0xff]
        %v6341 = vld [vmem:[%s3277 + $0x60] sm:$0xff]
        %v6342 = vld [vmem:[%s3277 + $0x68] sm:$0xff]
        %v6343 = vld [vmem:[%s3277 + $0x70] sm:$0xff]
        %v6344 = vld [vmem:[%s3277 + $0x78] sm:$0xff]
        %v6345 = vld [vmem:[%s3277 + $0x80] sm:$0xff]
        %v6346 = vld [vmem:[%s3277 + $0x88] sm:$0xff]
        %v6347 = vld [vmem:[%s3277 + $0x90] sm:$0xff]
        %v6348 = vld [vmem:[%s3277 + $0x98] sm:$0xff]
        %s6349 = scalar_lea.vmem %s3, 2304
        %v6350 = vld [vmem:[%s6349] sm:$0xff]
        %v6351 = vld [vmem:[%s6349 + $0x8] sm:$0xff]
        %v6352 = vld [vmem:[%s6349 + $0x10] sm:$0xff]
        %v6353 = vld [vmem:[%s6349 + $0x18] sm:$0xff]
        %v6354 = vld [vmem:[%s6349 + $0x20] sm:$0xff]
        %v6355 = vld [vmem:[%s6349 + $0x28] sm:$0xff]
        %v6356 = vld [vmem:[%s6349 + $0x30] sm:$0xff]
        %v6357 = vld [vmem:[%s6349 + $0x38] sm:$0xff]
        %v6358 = vld [vmem:[%s6349 + $0x40] sm:$0xff]
        %v6359 = vld [vmem:[%s6349 + $0x48] sm:$0xff]
        %v6360 = vld [vmem:[%s6349 + $0x50] sm:$0xff]
        %v6361 = vld [vmem:[%s6349 + $0x58] sm:$0xff]
        %v6362 = vld [vmem:[%s6349 + $0x60] sm:$0xff]
        %v6363 = vld [vmem:[%s6349 + $0x68] sm:$0xff]
        %v6364 = vld [vmem:[%s6349 + $0x70] sm:$0xff]
        %v6365 = vld [vmem:[%s6349 + $0x78] sm:$0xff]
        %6366 = vmatprep.subr.mxu0 0.0
        %6367 = vmatpush1.msra.mxu0 %v6350
        %6368 = vmatprep.subr.mxu0 0.0
        %6369 = vmatpush1.msra.mxu0 %v6351
        %6370 = vmatprep.subr.mxu0 0.0
        %6371 = vmatpush1.msra.mxu0 %v6352
        %6372 = vmatprep.subr.mxu0 0.0
        %6373 = vmatpush1.msra.mxu0 %v6353
        %6374 = vmatprep.subr.mxu0 0.0
        %6375 = vmatpush1.msra.mxu0 %v6354
        %6376 = vmatprep.subr.mxu0 0.0
        %6377 = vmatpush1.msra.mxu0 %v6355
        %6378 = vmatprep.subr.mxu0 0.0
        %6379 = vmatpush1.msra.mxu0 %v6356
        %6380 = vmatprep.subr.mxu0 0.0
        %6381 = vmatpush1.msra.mxu0 %v6357
        %6382 = vmatprep.subr.mxu0 0.0
        %6383 = vmatpush1.msra.mxu0 %v6358
        %6384 = vmatprep.subr.mxu0 0.0
        %6385 = vmatpush1.msra.mxu0 %v6359
        %6386 = vmatprep.subr.mxu0 0.0
        %6387 = vmatpush1.msra.mxu0 %v6360
        %6388 = vmatprep.subr.mxu0 0.0
        %6389 = vmatpush1.msra.mxu0 %v6361
        %6390 = vmatprep.subr.mxu0 0.0
        %6391 = vmatpush1.msra.mxu0 %v6362
        %6392 = vmatprep.subr.mxu0 0.0
        %6393 = vmatpush1.msra.mxu0 %v6363
        %6394 = vmatprep.subr.mxu0 0.0
        %6395 = vmatpush1.msra.mxu0 %v6364
        %6396 = vmatprep.subr.mxu0 0.0
        %6397 = vmatpush1.msra.mxu0 %v6365
        %6398 = vmatprep.subr.mxu0 0.0
        %6399 = vmatpush1.msra.mxu0 0.0
        %6400 = vmatprep.subr.mxu0 0.0
        %6401 = vmatpush1.msra.mxu0 0.0
        %6402 = vmatprep.subr.mxu0 0.0
        %6403 = vmatpush1.msra.mxu0 0.0
        %6404 = vmatprep.subr.mxu0 0.0
        %6405 = vmatpush1.msra.mxu0 0.0
        %6406 = vmatprep.subr.mxu0 0.0
        %6407 = vmatpush1.msra.mxu0 0.0
        %6408 = vmatprep.subr.mxu0 0.0
        %6409 = vmatpush1.msra.mxu0 0.0
        %6410 = vmatprep.subr.mxu0 0.0
        %6411 = vmatpush1.msra.mxu0 0.0
        %6412 = vmatprep.subr.mxu0 0.0
        %6413 = vmatpush1.msra.mxu0 0.0
        %6414 = vmatprep.subr.mxu0 0.0
        %6415 = vmatpush1.msra.mxu0 0.0
        %6416 = vmatprep.subr.mxu0 0.0
        %6417 = vmatpush1.msra.mxu0 0.0
        %6418 = vmatprep.subr.mxu0 0.0
        %6419 = vmatpush1.msra.mxu0 0.0
        %6420 = vmatprep.subr.mxu0 0.0
        %6421 = vmatpush1.msra.mxu0 0.0
        %6422 = vmatprep.subr.mxu0 0.0
        %6423 = vmatpush1.msra.mxu0 0.0
        %6424 = vmatprep.subr.mxu0 0.0
        %6425 = vmatpush1.msra.mxu0 0.0
        %6426 = vmatprep.subr.mxu0 0.0
        %6427 = vmatpush1.msra.mxu0 0.0
        %6428 = vmatprep.subr.mxu0 0.0
        %6429 = vmatpush1.msra.mxu0 0.0
        %6430 = vmatprep.mubr.f32.mxu0 0.0
        %6431 = vmatmul.mubr.f32.gmra.mrb[0].mxu0 %v6333
        %v6432 = vpop.f32.mrb[0].mxu0
        %v6433 = vadd.f32 0.0, %v6432
        %v6434 = vpop.f32.mrb[0].mxu0
        %6435 = vmatprep.mubr.f32.mxu0 0.0
        %6436 = vmatmul.mubr.f32.gmra.mrb[0].mxu0 %v6334
        %v6437 = vpop.f32.mrb[0].mxu0
        %v6438 = vadd.f32 0.0, %v6437
        %v6439 = vpop.f32.mrb[0].mxu0
        %6440 = vmatprep.mubr.f32.mxu0 0.0
        %6441 = vmatmul.mubr.f32.gmra.mrb[0].mxu0 %v6335
        %v6442 = vpop.f32.mrb[0].mxu0
        %v6443 = vadd.f32 0.0, %v6442
        %v6444 = vpop.f32.mrb[0].mxu0
        %6445 = vmatprep.mubr.f32.mxu0 0.0
        %6446 = vmatmul.mubr.f32.gmra.mrb[0].mxu0 %v6336
        %v6447 = vpop.f32.mrb[0].mxu0
        %v6448 = vadd.f32 0.0, %v6447
        %v6449 = vpop.f32.mrb[0].mxu0
        %6450 = vmatprep.mubr.f32.mxu0 0.0
        %6451 = vmatmul.mubr.f32.gmra.mrb[0].mxu0 %v6337
        %v6452 = vpop.f32.mrb[0].mxu0
        %v6453 = vadd.f32 0.0, %v6452
        %v6454 = vpop.f32.mrb[0].mxu0
        %6455 = vmatprep.mubr.f32.mxu0 0.0
        %6456 = vmatmul.mubr.f32.gmra.mrb[0].mxu0 %v6338
        %v6457 = vpop.f32.mrb[0].mxu0
        %v6458 = vadd.f32 0.0, %v6457
        %v6459 = vpop.f32.mrb[0].mxu0
        %6460 = vmatprep.mubr.f32.mxu0 0.0
        %6461 = vmatmul.mubr.f32.gmra.mrb[0].mxu0 %v6339
        %v6462 = vpop.f32.mrb[0].mxu0
        %v6463 = vadd.f32 0.0, %v6462
        %v6464 = vpop.f32.mrb[0].mxu0
        %6465 = vmatprep.mubr.f32.mxu0 0.0
        %6466 = vmatmul.mubr.f32.gmra.mrb[0].mxu0 %v6340
        %v6467 = vpop.f32.mrb[0].mxu0
        %v6468 = vadd.f32 0.0, %v6467
        %v6469 = vpop.f32.mrb[0].mxu0
        %6470 = vmatprep.mubr.f32.mxu0 0.0
        %6471 = vmatmul.mubr.f32.gmra.mrb[0].mxu0 %v6341
        %v6472 = vpop.f32.mrb[0].mxu0
        %v6473 = vadd.f32 0.0, %v6472
        %v6474 = vpop.f32.mrb[0].mxu0
        %6475 = vmatprep.mubr.f32.mxu0 0.0
        %6476 = vmatmul.mubr.f32.gmra.mrb[0].mxu0 %v6342
        %v6477 = vpop.f32.mrb[0].mxu0
        %v6478 = vadd.f32 0.0, %v6477
        %v6479 = vpop.f32.mrb[0].mxu0
        %6480 = vmatprep.mubr.f32.mxu0 0.0
        %6481 = vmatmul.mubr.f32.gmra.mrb[0].mxu0 %v6343
        %v6482 = vpop.f32.mrb[0].mxu0
        %v6483 = vadd.f32 0.0, %v6482
        %v6484 = vpop.f32.mrb[0].mxu0
        %6485 = vmatprep.mubr.f32.mxu0 0.0
        %6486 = vmatmul.mubr.f32.gmra.mrb[0].mxu0 %v6344
        %v6487 = vpop.f32.mrb[0].mxu0
        %v6488 = vadd.f32 0.0, %v6487
        %v6489 = vpop.f32.mrb[0].mxu0
        %6490 = vmatprep.mubr.f32.mxu0 0.0
        %6491 = vmatmul.mubr.f32.gmra.mrb[0].mxu0 %v6345
        %v6492 = vpop.f32.mrb[0].mxu0
        %v6493 = vadd.f32 0.0, %v6492
        %v6494 = vpop.f32.mrb[0].mxu0
        %6495 = vmatprep.mubr.f32.mxu0 0.0
        %6496 = vmatmul.mubr.f32.gmra.mrb[0].mxu0 %v6346
        %v6497 = vpop.f32.mrb[0].mxu0
        %v6498 = vadd.f32 0.0, %v6497
        %v6499 = vpop.f32.mrb[0].mxu0
        %6500 = vmatprep.mubr.f32.mxu0 0.0
        %6501 = vmatmul.mubr.f32.gmra.mrb[0].mxu0 %v6347
        %v6502 = vpop.f32.mrb[0].mxu0
        %v6503 = vadd.f32 0.0, %v6502
        %v6504 = vpop.f32.mrb[0].mxu0
        %6505 = vmatprep.mubr.f32.mxu0 0.0
        %6506 = vmatmul.mubr.f32.gmra.mrb[0].mxu0 %v6348
        %v6507 = vpop.f32.mrb[0].mxu0
        %v6508 = vadd.f32 0.0, %v6507
        %v6509 = vpop.f32.mrb[0].mxu0
        %6510 = vdwg.mxu0
        %v6511 = vadd.f32 %v6317, %v6433
        %v6512 = vadd.f32 %v6318, %v6438
        %v6513 = vadd.f32 %v6319, %v6443
        %v6514 = vadd.f32 %v6320, %v6448
        %v6515 = vadd.f32 %v6321, %v6453
        %v6516 = vadd.f32 %v6322, %v6458
        %v6517 = vadd.f32 %v6323, %v6463
        %v6518 = vadd.f32 %v6324, %v6468
        %v6519 = vadd.f32 %v6325, %v6473
        %v6520 = vadd.f32 %v6326, %v6478
        %v6521 = vadd.f32 %v6327, %v6483
        %v6522 = vadd.f32 %v6328, %v6488
        %v6523 = vadd.f32 %v6329, %v6493
        %v6524 = vadd.f32 %v6330, %v6498
        %v6525 = vadd.f32 %v6331, %v6503
        %v6526 = vadd.f32 %v6332, %v6508
        %v6527 = vld [vmem:[%s3472] sm:$0xff]
        %v6528 = vld [vmem:[%s3472 + $0x8] sm:$0xff]
        %v6529 = vld [vmem:[%s3472 + $0x10] sm:$0xff]
        %v6530 = vld [vmem:[%s3472 + $0x18] sm:$0xff]
        %v6531 = vld [vmem:[%s3472 + $0x20] sm:$0xff]
        %v6532 = vld [vmem:[%s3472 + $0x28] sm:$0xff]
        %v6533 = vld [vmem:[%s3472 + $0x30] sm:$0xff]
        %v6534 = vld [vmem:[%s3472 + $0x38] sm:$0xff]
        %v6535 = vld [vmem:[%s3472 + $0x60] sm:$0xff]
        %v6536 = vld [vmem:[%s3472 + $0x68] sm:$0xff]
        %v6537 = vld [vmem:[%s3472 + $0x70] sm:$0xff]
        %v6538 = vld [vmem:[%s3472 + $0x78] sm:$0xff]
        %v6539 = vld [vmem:[%s3472 + $0x80] sm:$0xff]
        %v6540 = vld [vmem:[%s3472 + $0x88] sm:$0xff]
        %v6541 = vld [vmem:[%s3472 + $0x90] sm:$0xff]
        %v6542 = vld [vmem:[%s3472 + $0x98] sm:$0xff]
        %s6543 = scalar_lea.vmem %s3, 2944
        %v6544 = vld [vmem:[%s6543] sm:$0xff]
        %v6545 = vld [vmem:[%s6543 + $0x8] sm:$0xff]
        %v6546 = vld [vmem:[%s6543 + $0x10] sm:$0xff]
        %v6547 = vld [vmem:[%s6543 + $0x18] sm:$0xff]
        %v6548 = vld [vmem:[%s6543 + $0x20] sm:$0xff]
        %v6549 = vld [vmem:[%s6543 + $0x28] sm:$0xff]
        %v6550 = vld [vmem:[%s6543 + $0x30] sm:$0xff]
        %v6551 = vld [vmem:[%s6543 + $0x38] sm:$0xff]
        %v6552 = vld [vmem:[%s6543 + $0x40] sm:$0xff]
        %v6553 = vld [vmem:[%s6543 + $0x48] sm:$0xff]
        %v6554 = vld [vmem:[%s6543 + $0x50] sm:$0xff]
        %v6555 = vld [vmem:[%s6543 + $0x58] sm:$0xff]
        %v6556 = vld [vmem:[%s6543 + $0x60] sm:$0xff]
        %v6557 = vld [vmem:[%s6543 + $0x68] sm:$0xff]
        %v6558 = vld [vmem:[%s6543 + $0x70] sm:$0xff]
        %v6559 = vld [vmem:[%s6543 + $0x78] sm:$0xff]
        %6560 = vmatprep.subr.mxu0 0.0
        %6561 = vmatpush1.msra.mxu0 %v6544
        %6562 = vmatprep.subr.mxu0 0.0
        %6563 = vmatpush1.msra.mxu0 %v6545
        %6564 = vmatprep.subr.mxu0 0.0
        %6565 = vmatpush1.msra.mxu0 %v6546
        %6566 = vmatprep.subr.mxu0 0.0
        %6567 = vmatpush1.msra.mxu0 %v6547
        %6568 = vmatprep.subr.mxu0 0.0
        %6569 = vmatpush1.msra.mxu0 %v6548
        %6570 = vmatprep.subr.mxu0 0.0
        %6571 = vmatpush1.msra.mxu0 %v6549
        %6572 = vmatprep.subr.mxu0 0.0
        %6573 = vmatpush1.msra.mxu0 %v6550
        %6574 = vmatprep.subr.mxu0 0.0
        %6575 = vmatpush1.msra.mxu0 %v6551
        %6576 = vmatprep.subr.mxu0 0.0
        %6577 = vmatpush1.msra.mxu0 %v6552
        %6578 = vmatprep.subr.mxu0 0.0
        %6579 = vmatpush1.msra.mxu0 %v6553
        %6580 = vmatprep.subr.mxu0 0.0
        %6581 = vmatpush1.msra.mxu0 %v6554
        %6582 = vmatprep.subr.mxu0 0.0
        %6583 = vmatpush1.msra.mxu0 %v6555
        %6584 = vmatprep.subr.mxu0 0.0
        %6585 = vmatpush1.msra.mxu0 %v6556
        %6586 = vmatprep.subr.mxu0 0.0
        %6587 = vmatpush1.msra.mxu0 %v6557
        %6588 = vmatprep.subr.mxu0 0.0
        %6589 = vmatpush1.msra.mxu0 %v6558
        %6590 = vmatprep.subr.mxu0 0.0
        %6591 = vmatpush1.msra.mxu0 %v6559
        %6592 = vmatprep.subr.mxu0 0.0
        %6593 = vmatpush1.msra.mxu0 0.0
        %6594 = vmatprep.subr.mxu0 0.0
        %6595 = vmatpush1.msra.mxu0 0.0
        %6596 = vmatprep.subr.mxu0 0.0
        %6597 = vmatpush1.msra.mxu0 0.0
        %6598 = vmatprep.subr.mxu0 0.0
        %6599 = vmatpush1.msra.mxu0 0.0
        %6600 = vmatprep.subr.mxu0 0.0
        %6601 = vmatpush1.msra.mxu0 0.0
        %6602 = vmatprep.subr.mxu0 0.0
        %6603 = vmatpush1.msra.mxu0 0.0
        %6604 = vmatprep.subr.mxu0 0.0
        %6605 = vmatpush1.msra.mxu0 0.0
        %6606 = vmatprep.subr.mxu0 0.0
        %6607 = vmatpush1.msra.mxu0 0.0
        %6608 = vmatprep.subr.mxu0 0.0
        %6609 = vmatpush1.msra.mxu0 0.0
        %6610 = vmatprep.subr.mxu0 0.0
        %6611 = vmatpush1.msra.mxu0 0.0
        %6612 = vmatprep.subr.mxu0 0.0
        %6613 = vmatpush1.msra.mxu0 0.0
        %6614 = vmatprep.subr.mxu0 0.0
        %6615 = vmatpush1.msra.mxu0 0.0
        %6616 = vmatprep.subr.mxu0 0.0
        %6617 = vmatpush1.msra.mxu0 0.0
        %6618 = vmatprep.subr.mxu0 0.0
        %6619 = vmatpush1.msra.mxu0 0.0
        %6620 = vmatprep.subr.mxu0 0.0
        %6621 = vmatpush1.msra.mxu0 0.0
        %6622 = vmatprep.subr.mxu0 0.0
        %6623 = vmatpush1.msra.mxu0 0.0
        %6624 = vmatprep.mubr.f32.mxu0 0.0
        %6625 = vmatmul.mubr.f32.gmra.mrb[0].mxu0 %v6527
        %v6626 = vpop.f32.mrb[0].mxu0
        %v6627 = vadd.f32 0.0, %v6626
        %v6628 = vpop.f32.mrb[0].mxu0
        %6629 = vmatprep.mubr.f32.mxu0 0.0
        %6630 = vmatmul.mubr.f32.gmra.mrb[0].mxu0 %v6528
        %v6631 = vpop.f32.mrb[0].mxu0
        %v6632 = vadd.f32 0.0, %v6631
        %v6633 = vpop.f32.mrb[0].mxu0
        %6634 = vmatprep.mubr.f32.mxu0 0.0
        %6635 = vmatmul.mubr.f32.gmra.mrb[0].mxu0 %v6529
        %v6636 = vpop.f32.mrb[0].mxu0
        %v6637 = vadd.f32 0.0, %v6636
        %v6638 = vpop.f32.mrb[0].mxu0
        %6639 = vmatprep.mubr.f32.mxu0 0.0
        %6640 = vmatmul.mubr.f32.gmra.mrb[0].mxu0 %v6530
        %v6641 = vpop.f32.mrb[0].mxu0
        %v6642 = vadd.f32 0.0, %v6641
        %v6643 = vpop.f32.mrb[0].mxu0
        %6644 = vmatprep.mubr.f32.mxu0 0.0
        %6645 = vmatmul.mubr.f32.gmra.mrb[0].mxu0 %v6531
        %v6646 = vpop.f32.mrb[0].mxu0
        %v6647 = vadd.f32 0.0, %v6646
        %v6648 = vpop.f32.mrb[0].mxu0
        %6649 = vmatprep.mubr.f32.mxu0 0.0
        %6650 = vmatmul.mubr.f32.gmra.mrb[0].mxu0 %v6532
        %v6651 = vpop.f32.mrb[0].mxu0
        %v6652 = vadd.f32 0.0, %v6651
        %v6653 = vpop.f32.mrb[0].mxu0
        %6654 = vmatprep.mubr.f32.mxu0 0.0
        %6655 = vmatmul.mubr.f32.gmra.mrb[0].mxu0 %v6533
        %v6656 = vpop.f32.mrb[0].mxu0
        %v6657 = vadd.f32 0.0, %v6656
        %v6658 = vpop.f32.mrb[0].mxu0
        %6659 = vmatprep.mubr.f32.mxu0 0.0
        %6660 = vmatmul.mubr.f32.gmra.mrb[0].mxu0 %v6534
        %v6661 = vpop.f32.mrb[0].mxu0
        %v6662 = vadd.f32 0.0, %v6661
        %v6663 = vpop.f32.mrb[0].mxu0
        %6664 = vmatprep.mubr.f32.mxu0 0.0
        %6665 = vmatmul.mubr.f32.gmra.mrb[0].mxu0 %v6535
        %v6666 = vpop.f32.mrb[0].mxu0
        %v6667 = vadd.f32 0.0, %v6666
        %v6668 = vpop.f32.mrb[0].mxu0
        %6669 = vmatprep.mubr.f32.mxu0 0.0
        %6670 = vmatmul.mubr.f32.gmra.mrb[0].mxu0 %v6536
        %v6671 = vpop.f32.mrb[0].mxu0
        %v6672 = vadd.f32 0.0, %v6671
        %v6673 = vpop.f32.mrb[0].mxu0
        %6674 = vmatprep.mubr.f32.mxu0 0.0
        %6675 = vmatmul.mubr.f32.gmra.mrb[0].mxu0 %v6537
        %v6676 = vpop.f32.mrb[0].mxu0
        %v6677 = vadd.f32 0.0, %v6676
        %v6678 = vpop.f32.mrb[0].mxu0
        %6679 = vmatprep.mubr.f32.mxu0 0.0
        %6680 = vmatmul.mubr.f32.gmra.mrb[0].mxu0 %v6538
        %v6681 = vpop.f32.mrb[0].mxu0
        %v6682 = vadd.f32 0.0, %v6681
        %v6683 = vpop.f32.mrb[0].mxu0
        %6684 = vmatprep.mubr.f32.mxu0 0.0
        %6685 = vmatmul.mubr.f32.gmra.mrb[0].mxu0 %v6539
        %v6686 = vpop.f32.mrb[0].mxu0
        %v6687 = vadd.f32 0.0, %v6686
        %v6688 = vpop.f32.mrb[0].mxu0
        %6689 = vmatprep.mubr.f32.mxu0 0.0
        %6690 = vmatmul.mubr.f32.gmra.mrb[0].mxu0 %v6540
        %v6691 = vpop.f32.mrb[0].mxu0
        %v6692 = vadd.f32 0.0, %v6691
        %v6693 = vpop.f32.mrb[0].mxu0
        %6694 = vmatprep.mubr.f32.mxu0 0.0
        %6695 = vmatmul.mubr.f32.gmra.mrb[0].mxu0 %v6541
        %v6696 = vpop.f32.mrb[0].mxu0
        %v6697 = vadd.f32 0.0, %v6696
        %v6698 = vpop.f32.mrb[0].mxu0
        %6699 = vmatprep.mubr.f32.mxu0 0.0
        %6700 = vmatmul.mubr.f32.gmra.mrb[0].mxu0 %v6542
        %v6701 = vpop.f32.mrb[0].mxu0
        %v6702 = vadd.f32 0.0, %v6701
        %v6703 = vpop.f32.mrb[0].mxu0
        %6704 = vdwg.mxu0
        %v6705 = vadd.f32 %v6511, %v6627
        %v6706 = vadd.f32 %v6512, %v6632
        %v6707 = vadd.f32 %v6513, %v6637
        %v6708 = vadd.f32 %v6514, %v6642
        %v6709 = vadd.f32 %v6515, %v6647
        %v6710 = vadd.f32 %v6516, %v6652
        %v6711 = vadd.f32 %v6517, %v6657
        %v6712 = vadd.f32 %v6518, %v6662
        %v6713 = vadd.f32 %v6519, %v6667
        %v6714 = vadd.f32 %v6520, %v6672
        %v6715 = vadd.f32 %v6521, %v6677
        %v6716 = vadd.f32 %v6522, %v6682
        %v6717 = vadd.f32 %v6523, %v6687
        %v6718 = vadd.f32 %v6524, %v6692
        %v6719 = vadd.f32 %v6525, %v6697
        %v6720 = vadd.f32 %v6526, %v6702
        %v6721 = vld [vmem:[#allocation2 + $0x4] sm:$0xff]
        %v6722 = vld [vmem:[#allocation2 + $0x14] sm:$0xff]
        %v6723 = vld [vmem:[#allocation2 + $0x24] sm:$0xff]
        %v6724 = vld [vmem:[#allocation2 + $0x34] sm:$0xff]
        %v6725 = vld [vmem:[#allocation2 + $0x44] sm:$0xff]
        %v6726 = vld [vmem:[#allocation2 + $0x54] sm:$0xff]
        %v6727 = vld [vmem:[#allocation2 + $0x64] sm:$0xff]
        %v6728 = vld [vmem:[#allocation2 + $0x74] sm:$0xff]
        %v6729 = vld [vmem:[#allocation2 + $0x84] sm:$0xff]
        %v6730 = vld [vmem:[#allocation2 + $0x94] sm:$0xff]
        %v6731 = vld [vmem:[#allocation2 + $0xa4] sm:$0xff]
        %v6732 = vld [vmem:[#allocation2 + $0xb4] sm:$0xff]
        %v6733 = vld [vmem:[#allocation2 + $0xc4] sm:$0xff]
        %v6734 = vld [vmem:[#allocation2 + $0xd4] sm:$0xff]
        %v6735 = vld [vmem:[#allocation2 + $0xe4] sm:$0xff]
        %v6736 = vld [vmem:[#allocation2 + $0xf4] sm:$0xff]
        %v6737 = vld [vmem:[#allocation2 + $0x104] sm:$0xff]
        %v6738 = vld [vmem:[#allocation2 + $0x114] sm:$0xff]
        %v6739 = vld [vmem:[#allocation2 + $0x124] sm:$0xff]
        %v6740 = vld [vmem:[#allocation2 + $0x134] sm:$0xff]
        %v6741 = vld [vmem:[#allocation2 + $0x144] sm:$0xff]
        %v6742 = vld [vmem:[#allocation2 + $0x154] sm:$0xff]
        %v6743 = vld [vmem:[#allocation2 + $0x164] sm:$0xff]
        %v6744 = vld [vmem:[#allocation2 + $0x174] sm:$0xff]
        %6745 = vst [vmem:[#allocation3] sm:$0xff] %v6721
        %6746 = vst [vmem:[#allocation3 + $0x8] sm:$0xff] %v6722
        %6747 = vst [vmem:[#allocation3 + $0x10] sm:$0xff] %v6723
        %6748 = vst [vmem:[#allocation3 + $0x18] sm:$0xff] %v6724
        %6749 = vst [vmem:[#allocation3 + $0x20] sm:$0xff] %v6725
        %6750 = vst [vmem:[#allocation3 + $0x28] sm:$0xff] %v6726
        %6751 = vst [vmem:[#allocation3 + $0x30] sm:$0xff] %v6727
        %6752 = vst [vmem:[#allocation3 + $0x38] sm:$0xff] %v6728
        %6753 = vst [vmem:[#allocation3 + $0x40] sm:$0xff] %v6729
        %6754 = vst [vmem:[#allocation3 + $0x48] sm:$0xff] %v6730
        %6755 = vst [vmem:[#allocation3 + $0x50] sm:$0xff] %v6731
        %6756 = vst [vmem:[#allocation3 + $0x58] sm:$0xff] %v6732
        %6757 = vst [vmem:[#allocation3 + $0x60] sm:$0xff] %v6733
        %6758 = vst [vmem:[#allocation3 + $0x68] sm:$0xff] %v6734
        %6759 = vst [vmem:[#allocation3 + $0x70] sm:$0xff] %v6735
        %6760 = vst [vmem:[#allocation3 + $0x78] sm:$0xff] %v6736
        %6761 = vst [vmem:[#allocation3 + $0x80] sm:$0xff] %v6737
        %6762 = vst [vmem:[#allocation3 + $0x88] sm:$0xff] %v6738
        %6763 = vst [vmem:[#allocation3 + $0x90] sm:$0xff] %v6739
        %6764 = vst [vmem:[#allocation3 + $0x98] sm:$0xff] %v6740
        %6765 = vst [vmem:[#allocation3 + $0xa0] sm:$0xff] %v6741
        %6766 = vst [vmem:[#allocation3 + $0xa8] sm:$0xff] %v6742
        %6767 = vst [vmem:[#allocation3 + $0xb0] sm:$0xff] %v6743
        %6768 = vst [vmem:[#allocation3 + $0xb8] sm:$0xff] %v6744
        %v6769 = vld [vmem:[#allocation3] sm:$0xff]
        %v6770 = vld [vmem:[#allocation3 + $0x8] sm:$0xff]
        %v6771 = vld [vmem:[#allocation3 + $0x10] sm:$0xff]
        %v6772 = vld [vmem:[#allocation3 + $0x18] sm:$0xff]
        %v6773 = vld [vmem:[#allocation3 + $0x20] sm:$0xff]
        %v6774 = vld [vmem:[#allocation3 + $0x28] sm:$0xff]
        %v6775 = vld [vmem:[#allocation3 + $0x30] sm:$0xff]
        %v6776 = vld [vmem:[#allocation3 + $0x38] sm:$0xff]
        %v6777 = vld [vmem:[#allocation3 + $0x60] sm:$0xff]
        %v6778 = vld [vmem:[#allocation3 + $0x68] sm:$0xff]
        %v6779 = vld [vmem:[#allocation3 + $0x70] sm:$0xff]
        %v6780 = vld [vmem:[#allocation3 + $0x78] sm:$0xff]
        %v6781 = vld [vmem:[#allocation3 + $0x80] sm:$0xff]
        %v6782 = vld [vmem:[#allocation3 + $0x88] sm:$0xff]
        %v6783 = vld [vmem:[#allocation3 + $0x90] sm:$0xff]
        %v6784 = vld [vmem:[#allocation3 + $0x98] sm:$0xff]
        %s6785 = scalar_lea.vmem %s3, 512
        %v6786 = vld [vmem:[%s6785] sm:$0xff]
        %v6787 = vld [vmem:[%s6785 + $0x8] sm:$0xff]
        %v6788 = vld [vmem:[%s6785 + $0x10] sm:$0xff]
        %v6789 = vld [vmem:[%s6785 + $0x18] sm:$0xff]
        %v6790 = vld [vmem:[%s6785 + $0x20] sm:$0xff]
        %v6791 = vld [vmem:[%s6785 + $0x28] sm:$0xff]
        %v6792 = vld [vmem:[%s6785 + $0x30] sm:$0xff]
        %v6793 = vld [vmem:[%s6785 + $0x38] sm:$0xff]
        %v6794 = vld [vmem:[%s6785 + $0x40] sm:$0xff]
        %v6795 = vld [vmem:[%s6785 + $0x48] sm:$0xff]
        %v6796 = vld [vmem:[%s6785 + $0x50] sm:$0xff]
        %v6797 = vld [vmem:[%s6785 + $0x58] sm:$0xff]
        %v6798 = vld [vmem:[%s6785 + $0x60] sm:$0xff]
        %v6799 = vld [vmem:[%s6785 + $0x68] sm:$0xff]
        %v6800 = vld [vmem:[%s6785 + $0x70] sm:$0xff]
        %v6801 = vld [vmem:[%s6785 + $0x78] sm:$0xff]
        %6802 = vmatprep.subr.mxu0 0.0
        %6803 = vmatpush1.msra.mxu0 %v6786
        %6804 = vmatprep.subr.mxu0 0.0
        %6805 = vmatpush1.msra.mxu0 %v6787
        %6806 = vmatprep.subr.mxu0 0.0
        %6807 = vmatpush1.msra.mxu0 %v6788
        %6808 = vmatprep.subr.mxu0 0.0
        %6809 = vmatpush1.msra.mxu0 %v6789
        %6810 = vmatprep.subr.mxu0 0.0
        %6811 = vmatpush1.msra.mxu0 %v6790
        %6812 = vmatprep.subr.mxu0 0.0
        %6813 = vmatpush1.msra.mxu0 %v6791
        %6814 = vmatprep.subr.mxu0 0.0
        %6815 = vmatpush1.msra.mxu0 %v6792
        %6816 = vmatprep.subr.mxu0 0.0
        %6817 = vmatpush1.msra.mxu0 %v6793
        %6818 = vmatprep.subr.mxu0 0.0
        %6819 = vmatpush1.msra.mxu0 %v6794
        %6820 = vmatprep.subr.mxu0 0.0
        %6821 = vmatpush1.msra.mxu0 %v6795
        %6822 = vmatprep.subr.mxu0 0.0
        %6823 = vmatpush1.msra.mxu0 %v6796
        %6824 = vmatprep.subr.mxu0 0.0
        %6825 = vmatpush1.msra.mxu0 %v6797
        %6826 = vmatprep.subr.mxu0 0.0
        %6827 = vmatpush1.msra.mxu0 %v6798
        %6828 = vmatprep.subr.mxu0 0.0
        %6829 = vmatpush1.msra.mxu0 %v6799
        %6830 = vmatprep.subr.mxu0 0.0
        %6831 = vmatpush1.msra.mxu0 %v6800
        %6832 = vmatprep.subr.mxu0 0.0
        %6833 = vmatpush1.msra.mxu0 %v6801
        %6834 = vmatprep.subr.mxu0 0.0
        %6835 = vmatpush1.msra.mxu0 0.0
        %6836 = vmatprep.subr.mxu0 0.0
        %6837 = vmatpush1.msra.mxu0 0.0
        %6838 = vmatprep.subr.mxu0 0.0
        %6839 = vmatpush1.msra.mxu0 0.0
        %6840 = vmatprep.subr.mxu0 0.0
        %6841 = vmatpush1.msra.mxu0 0.0
        %6842 = vmatprep.subr.mxu0 0.0
        %6843 = vmatpush1.msra.mxu0 0.0
        %6844 = vmatprep.subr.mxu0 0.0
        %6845 = vmatpush1.msra.mxu0 0.0
        %6846 = vmatprep.subr.mxu0 0.0
        %6847 = vmatpush1.msra.mxu0 0.0
        %6848 = vmatprep.subr.mxu0 0.0
        %6849 = vmatpush1.msra.mxu0 0.0
        %6850 = vmatprep.subr.mxu0 0.0
        %6851 = vmatpush1.msra.mxu0 0.0
        %6852 = vmatprep.subr.mxu0 0.0
        %6853 = vmatpush1.msra.mxu0 0.0
        %6854 = vmatprep.subr.mxu0 0.0
        %6855 = vmatpush1.msra.mxu0 0.0
        %6856 = vmatprep.subr.mxu0 0.0
        %6857 = vmatpush1.msra.mxu0 0.0
        %6858 = vmatprep.subr.mxu0 0.0
        %6859 = vmatpush1.msra.mxu0 0.0
        %6860 = vmatprep.subr.mxu0 0.0
        %6861 = vmatpush1.msra.mxu0 0.0
        %6862 = vmatprep.subr.mxu0 0.0
        %6863 = vmatpush1.msra.mxu0 0.0
        %6864 = vmatprep.subr.mxu0 0.0
        %6865 = vmatpush1.msra.mxu0 0.0
        %6866 = vmatprep.mubr.f32.mxu0 0.0
        %6867 = vmatmul.mubr.f32.gmra.mrb[0].mxu0 %v6769
        %v6868 = vpop.f32.mrb[0].mxu0
        %v6869 = vadd.f32 0.0, %v6868
        %v6870 = vpop.f32.mrb[0].mxu0
        %6871 = vmatprep.mubr.f32.mxu0 0.0
        %6872 = vmatmul.mubr.f32.gmra.mrb[0].mxu0 %v6770
        %v6873 = vpop.f32.mrb[0].mxu0
        %v6874 = vadd.f32 0.0, %v6873
        %v6875 = vpop.f32.mrb[0].mxu0
        %6876 = vmatprep.mubr.f32.mxu0 0.0
        %6877 = vmatmul.mubr.f32.gmra.mrb[0].mxu0 %v6771
        %v6878 = vpop.f32.mrb[0].mxu0
        %v6879 = vadd.f32 0.0, %v6878
        %v6880 = vpop.f32.mrb[0].mxu0
        %6881 = vmatprep.mubr.f32.mxu0 0.0
        %6882 = vmatmul.mubr.f32.gmra.mrb[0].mxu0 %v6772
        %v6883 = vpop.f32.mrb[0].mxu0
        %v6884 = vadd.f32 0.0, %v6883
        %v6885 = vpop.f32.mrb[0].mxu0
        %6886 = vmatprep.mubr.f32.mxu0 0.0
        %6887 = vmatmul.mubr.f32.gmra.mrb[0].mxu0 %v6773
        %v6888 = vpop.f32.mrb[0].mxu0
        %v6889 = vadd.f32 0.0, %v6888
        %v6890 = vpop.f32.mrb[0].mxu0
        %6891 = vmatprep.mubr.f32.mxu0 0.0
        %6892 = vmatmul.mubr.f32.gmra.mrb[0].mxu0 %v6774
        %v6893 = vpop.f32.mrb[0].mxu0
        %v6894 = vadd.f32 0.0, %v6893
        %v6895 = vpop.f32.mrb[0].mxu0
        %6896 = vmatprep.mubr.f32.mxu0 0.0
        %6897 = vmatmul.mubr.f32.gmra.mrb[0].mxu0 %v6775
        %v6898 = vpop.f32.mrb[0].mxu0
        %v6899 = vadd.f32 0.0, %v6898
        %v6900 = vpop.f32.mrb[0].mxu0
        %6901 = vmatprep.mubr.f32.mxu0 0.0
        %6902 = vmatmul.mubr.f32.gmra.mrb[0].mxu0 %v6776
        %v6903 = vpop.f32.mrb[0].mxu0
        %v6904 = vadd.f32 0.0, %v6903
        %v6905 = vpop.f32.mrb[0].mxu0
        %6906 = vmatprep.mubr.f32.mxu0 0.0
        %6907 = vmatmul.mubr.f32.gmra.mrb[0].mxu0 %v6777
        %v6908 = vpop.f32.mrb[0].mxu0
        %v6909 = vadd.f32 0.0, %v6908
        %v6910 = vpop.f32.mrb[0].mxu0
        %6911 = vmatprep.mubr.f32.mxu0 0.0
        %6912 = vmatmul.mubr.f32.gmra.mrb[0].mxu0 %v6778
        %v6913 = vpop.f32.mrb[0].mxu0
        %v6914 = vadd.f32 0.0, %v6913
        %v6915 = vpop.f32.mrb[0].mxu0
        %6916 = vmatprep.mubr.f32.mxu0 0.0
        %6917 = vmatmul.mubr.f32.gmra.mrb[0].mxu0 %v6779
        %v6918 = vpop.f32.mrb[0].mxu0
        %v6919 = vadd.f32 0.0, %v6918
        %v6920 = vpop.f32.mrb[0].mxu0
        %6921 = vmatprep.mubr.f32.mxu0 0.0
        %6922 = vmatmul.mubr.f32.gmra.mrb[0].mxu0 %v6780
        %v6923 = vpop.f32.mrb[0].mxu0
        %v6924 = vadd.f32 0.0, %v6923
        %v6925 = vpop.f32.mrb[0].mxu0
        %6926 = vmatprep.mubr.f32.mxu0 0.0
        %6927 = vmatmul.mubr.f32.gmra.mrb[0].mxu0 %v6781
        %v6928 = vpop.f32.mrb[0].mxu0
        %v6929 = vadd.f32 0.0, %v6928
        %v6930 = vpop.f32.mrb[0].mxu0
        %6931 = vmatprep.mubr.f32.mxu0 0.0
        %6932 = vmatmul.mubr.f32.gmra.mrb[0].mxu0 %v6782
        %v6933 = vpop.f32.mrb[0].mxu0
        %v6934 = vadd.f32 0.0, %v6933
        %v6935 = vpop.f32.mrb[0].mxu0
        %6936 = vmatprep.mubr.f32.mxu0 0.0
        %6937 = vmatmul.mubr.f32.gmra.mrb[0].mxu0 %v6783
        %v6938 = vpop.f32.mrb[0].mxu0
        %v6939 = vadd.f32 0.0, %v6938
        %v6940 = vpop.f32.mrb[0].mxu0
        %6941 = vmatprep.mubr.f32.mxu0 0.0
        %6942 = vmatmul.mubr.f32.gmra.mrb[0].mxu0 %v6784
        %v6943 = vpop.f32.mrb[0].mxu0
        %v6944 = vadd.f32 0.0, %v6943
        %v6945 = vpop.f32.mrb[0].mxu0
        %6946 = vdwg.mxu0
        %v6947 = vadd.f32 %v6705, %v6869
        %v6948 = vadd.f32 %v6706, %v6874
        %v6949 = vadd.f32 %v6707, %v6879
        %v6950 = vadd.f32 %v6708, %v6884
        %v6951 = vadd.f32 %v6709, %v6889
        %v6952 = vadd.f32 %v6710, %v6894
        %v6953 = vadd.f32 %v6711, %v6899
        %v6954 = vadd.f32 %v6712, %v6904
        %v6955 = vadd.f32 %v6713, %v6909
        %v6956 = vadd.f32 %v6714, %v6914
        %v6957 = vadd.f32 %v6715, %v6919
        %v6958 = vadd.f32 %v6716, %v6924
        %v6959 = vadd.f32 %v6717, %v6929
        %v6960 = vadd.f32 %v6718, %v6934
        %v6961 = vadd.f32 %v6719, %v6939
        %v6962 = vadd.f32 %v6720, %v6944
        %v6963 = vld [vmem:[%s2758] sm:$0xff]
        %v6964 = vld [vmem:[%s2758 + $0x8] sm:$0xff]
        %v6965 = vld [vmem:[%s2758 + $0x10] sm:$0xff]
        %v6966 = vld [vmem:[%s2758 + $0x18] sm:$0xff]
        %v6967 = vld [vmem:[%s2758 + $0x20] sm:$0xff]
        %v6968 = vld [vmem:[%s2758 + $0x28] sm:$0xff]
        %v6969 = vld [vmem:[%s2758 + $0x30] sm:$0xff]
        %v6970 = vld [vmem:[%s2758 + $0x38] sm:$0xff]
        %v6971 = vld [vmem:[%s2758 + $0x60] sm:$0xff]
        %v6972 = vld [vmem:[%s2758 + $0x68] sm:$0xff]
        %v6973 = vld [vmem:[%s2758 + $0x70] sm:$0xff]
        %v6974 = vld [vmem:[%s2758 + $0x78] sm:$0xff]
        %v6975 = vld [vmem:[%s2758 + $0x80] sm:$0xff]
        %v6976 = vld [vmem:[%s2758 + $0x88] sm:$0xff]
        %v6977 = vld [vmem:[%s2758 + $0x90] sm:$0xff]
        %v6978 = vld [vmem:[%s2758 + $0x98] sm:$0xff]
        %s6979 = scalar_lea.vmem %s3, 1152
        %v6980 = vld [vmem:[%s6979] sm:$0xff]
        %v6981 = vld [vmem:[%s6979 + $0x8] sm:$0xff]
        %v6982 = vld [vmem:[%s6979 + $0x10] sm:$0xff]
        %v6983 = vld [vmem:[%s6979 + $0x18] sm:$0xff]
        %v6984 = vld [vmem:[%s6979 + $0x20] sm:$0xff]
        %v6985 = vld [vmem:[%s6979 + $0x28] sm:$0xff]
        %v6986 = vld [vmem:[%s6979 + $0x30] sm:$0xff]
        %v6987 = vld [vmem:[%s6979 + $0x38] sm:$0xff]
        %v6988 = vld [vmem:[%s6979 + $0x40] sm:$0xff]
        %v6989 = vld [vmem:[%s6979 + $0x48] sm:$0xff]
        %v6990 = vld [vmem:[%s6979 + $0x50] sm:$0xff]
        %v6991 = vld [vmem:[%s6979 + $0x58] sm:$0xff]
        %v6992 = vld [vmem:[%s6979 + $0x60] sm:$0xff]
        %v6993 = vld [vmem:[%s6979 + $0x68] sm:$0xff]
        %v6994 = vld [vmem:[%s6979 + $0x70] sm:$0xff]
        %v6995 = vld [vmem:[%s6979 + $0x78] sm:$0xff]
        %6996 = vmatprep.subr.mxu0 0.0
        %6997 = vmatpush1.msra.mxu0 %v6980
        %6998 = vmatprep.subr.mxu0 0.0
        %6999 = vmatpush1.msra.mxu0 %v6981
        %7000 = vmatprep.subr.mxu0 0.0
        %7001 = vmatpush1.msra.mxu0 %v6982
        %7002 = vmatprep.subr.mxu0 0.0
        %7003 = vmatpush1.msra.mxu0 %v6983
        %7004 = vmatprep.subr.mxu0 0.0
        %7005 = vmatpush1.msra.mxu0 %v6984
        %7006 = vmatprep.subr.mxu0 0.0
        %7007 = vmatpush1.msra.mxu0 %v6985
        %7008 = vmatprep.subr.mxu0 0.0
        %7009 = vmatpush1.msra.mxu0 %v6986
        %7010 = vmatprep.subr.mxu0 0.0
        %7011 = vmatpush1.msra.mxu0 %v6987
        %7012 = vmatprep.subr.mxu0 0.0
        %7013 = vmatpush1.msra.mxu0 %v6988
        %7014 = vmatprep.subr.mxu0 0.0
        %7015 = vmatpush1.msra.mxu0 %v6989
        %7016 = vmatprep.subr.mxu0 0.0
        %7017 = vmatpush1.msra.mxu0 %v6990
        %7018 = vmatprep.subr.mxu0 0.0
        %7019 = vmatpush1.msra.mxu0 %v6991
        %7020 = vmatprep.subr.mxu0 0.0
        %7021 = vmatpush1.msra.mxu0 %v6992
        %7022 = vmatprep.subr.mxu0 0.0
        %7023 = vmatpush1.msra.mxu0 %v6993
        %7024 = vmatprep.subr.mxu0 0.0
        %7025 = vmatpush1.msra.mxu0 %v6994
        %7026 = vmatprep.subr.mxu0 0.0
        %7027 = vmatpush1.msra.mxu0 %v6995
        %7028 = vmatprep.subr.mxu0 0.0
        %7029 = vmatpush1.msra.mxu0 0.0
        %7030 = vmatprep.subr.mxu0 0.0
        %7031 = vmatpush1.msra.mxu0 0.0
        %7032 = vmatprep.subr.mxu0 0.0
        %7033 = vmatpush1.msra.mxu0 0.0
        %7034 = vmatprep.subr.mxu0 0.0
        %7035 = vmatpush1.msra.mxu0 0.0
        %7036 = vmatprep.subr.mxu0 0.0
        %7037 = vmatpush1.msra.mxu0 0.0
        %7038 = vmatprep.subr.mxu0 0.0
        %7039 = vmatpush1.msra.mxu0 0.0
        %7040 = vmatprep.subr.mxu0 0.0
        %7041 = vmatpush1.msra.mxu0 0.0
        %7042 = vmatprep.subr.mxu0 0.0
        %7043 = vmatpush1.msra.mxu0 0.0
        %7044 = vmatprep.subr.mxu0 0.0
        %7045 = vmatpush1.msra.mxu0 0.0
        %7046 = vmatprep.subr.mxu0 0.0
        %7047 = vmatpush1.msra.mxu0 0.0
        %7048 = vmatprep.subr.mxu0 0.0
        %7049 = vmatpush1.msra.mxu0 0.0
        %7050 = vmatprep.subr.mxu0 0.0
        %7051 = vmatpush1.msra.mxu0 0.0
        %7052 = vmatprep.subr.mxu0 0.0
        %7053 = vmatpush1.msra.mxu0 0.0
        %7054 = vmatprep.subr.mxu0 0.0
        %7055 = vmatpush1.msra.mxu0 0.0
        %7056 = vmatprep.subr.mxu0 0.0
        %7057 = vmatpush1.msra.mxu0 0.0
        %7058 = vmatprep.subr.mxu0 0.0
        %7059 = vmatpush1.msra.mxu0 0.0
        %7060 = vmatprep.mubr.f32.mxu0 0.0
        %7061 = vmatmul.mubr.f32.gmra.mrb[0].mxu0 %v6963
        %v7062 = vpop.f32.mrb[0].mxu0
        %v7063 = vadd.f32 0.0, %v7062
        %v7064 = vpop.f32.mrb[0].mxu0
        %7065 = vmatprep.mubr.f32.mxu0 0.0
        %7066 = vmatmul.mubr.f32.gmra.mrb[0].mxu0 %v6964
        %v7067 = vpop.f32.mrb[0].mxu0
        %v7068 = vadd.f32 0.0, %v7067
        %v7069 = vpop.f32.mrb[0].mxu0
        %7070 = vmatprep.mubr.f32.mxu0 0.0
        %7071 = vmatmul.mubr.f32.gmra.mrb[0].mxu0 %v6965
        %v7072 = vpop.f32.mrb[0].mxu0
        %v7073 = vadd.f32 0.0, %v7072
        %v7074 = vpop.f32.mrb[0].mxu0
        %7075 = vmatprep.mubr.f32.mxu0 0.0
        %7076 = vmatmul.mubr.f32.gmra.mrb[0].mxu0 %v6966
        %v7077 = vpop.f32.mrb[0].mxu0
        %v7078 = vadd.f32 0.0, %v7077
        %v7079 = vpop.f32.mrb[0].mxu0
        %7080 = vmatprep.mubr.f32.mxu0 0.0
        %7081 = vmatmul.mubr.f32.gmra.mrb[0].mxu0 %v6967
        %v7082 = vpop.f32.mrb[0].mxu0
        %v7083 = vadd.f32 0.0, %v7082
        %v7084 = vpop.f32.mrb[0].mxu0
        %7085 = vmatprep.mubr.f32.mxu0 0.0
        %7086 = vmatmul.mubr.f32.gmra.mrb[0].mxu0 %v6968
        %v7087 = vpop.f32.mrb[0].mxu0
        %v7088 = vadd.f32 0.0, %v7087
        %v7089 = vpop.f32.mrb[0].mxu0
        %7090 = vmatprep.mubr.f32.mxu0 0.0
        %7091 = vmatmul.mubr.f32.gmra.mrb[0].mxu0 %v6969
        %v7092 = vpop.f32.mrb[0].mxu0
        %v7093 = vadd.f32 0.0, %v7092
        %v7094 = vpop.f32.mrb[0].mxu0
        %7095 = vmatprep.mubr.f32.mxu0 0.0
        %7096 = vmatmul.mubr.f32.gmra.mrb[0].mxu0 %v6970
        %v7097 = vpop.f32.mrb[0].mxu0
        %v7098 = vadd.f32 0.0, %v7097
        %v7099 = vpop.f32.mrb[0].mxu0
        %7100 = vmatprep.mubr.f32.mxu0 0.0
        %7101 = vmatmul.mubr.f32.gmra.mrb[0].mxu0 %v6971
        %v7102 = vpop.f32.mrb[0].mxu0
        %v7103 = vadd.f32 0.0, %v7102
        %v7104 = vpop.f32.mrb[0].mxu0
        %7105 = vmatprep.mubr.f32.mxu0 0.0
        %7106 = vmatmul.mubr.f32.gmra.mrb[0].mxu0 %v6972
        %v7107 = vpop.f32.mrb[0].mxu0
        %v7108 = vadd.f32 0.0, %v7107
        %v7109 = vpop.f32.mrb[0].mxu0
        %7110 = vmatprep.mubr.f32.mxu0 0.0
        %7111 = vmatmul.mubr.f32.gmra.mrb[0].mxu0 %v6973
        %v7112 = vpop.f32.mrb[0].mxu0
        %v7113 = vadd.f32 0.0, %v7112
        %v7114 = vpop.f32.mrb[0].mxu0
        %7115 = vmatprep.mubr.f32.mxu0 0.0
        %7116 = vmatmul.mubr.f32.gmra.mrb[0].mxu0 %v6974
        %v7117 = vpop.f32.mrb[0].mxu0
        %v7118 = vadd.f32 0.0, %v7117
        %v7119 = vpop.f32.mrb[0].mxu0
        %7120 = vmatprep.mubr.f32.mxu0 0.0
        %7121 = vmatmul.mubr.f32.gmra.mrb[0].mxu0 %v6975
        %v7122 = vpop.f32.mrb[0].mxu0
        %v7123 = vadd.f32 0.0, %v7122
        %v7124 = vpop.f32.mrb[0].mxu0
        %7125 = vmatprep.mubr.f32.mxu0 0.0
        %7126 = vmatmul.mubr.f32.gmra.mrb[0].mxu0 %v6976
        %v7127 = vpop.f32.mrb[0].mxu0
        %v7128 = vadd.f32 0.0, %v7127
        %v7129 = vpop.f32.mrb[0].mxu0
        %7130 = vmatprep.mubr.f32.mxu0 0.0
        %7131 = vmatmul.mubr.f32.gmra.mrb[0].mxu0 %v6977
        %v7132 = vpop.f32.mrb[0].mxu0
        %v7133 = vadd.f32 0.0, %v7132
        %v7134 = vpop.f32.mrb[0].mxu0
        %7135 = vmatprep.mubr.f32.mxu0 0.0
        %7136 = vmatmul.mubr.f32.gmra.mrb[0].mxu0 %v6978
        %v7137 = vpop.f32.mrb[0].mxu0
        %v7138 = vadd.f32 0.0, %v7137
        %v7139 = vpop.f32.mrb[0].mxu0
        %7140 = vdwg.mxu0
        %v7141 = vadd.f32 %v6947, %v7063
        %v7142 = vadd.f32 %v6948, %v7068
        %v7143 = vadd.f32 %v6949, %v7073
        %v7144 = vadd.f32 %v6950, %v7078
        %v7145 = vadd.f32 %v6951, %v7083
        %v7146 = vadd.f32 %v6952, %v7088
        %v7147 = vadd.f32 %v6953, %v7093
        %v7148 = vadd.f32 %v6954, %v7098
        %v7149 = vadd.f32 %v6955, %v7103
        %v7150 = vadd.f32 %v6956, %v7108
        %v7151 = vadd.f32 %v6957, %v7113
        %v7152 = vadd.f32 %v6958, %v7118
        %v7153 = vadd.f32 %v6959, %v7123
        %v7154 = vadd.f32 %v6960, %v7128
        %v7155 = vadd.f32 %v6961, %v7133
        %v7156 = vadd.f32 %v6962, %v7138
        %v7157 = vld [vmem:[%s3082] sm:$0xff]
        %v7158 = vld [vmem:[%s3082 + $0x8] sm:$0xff]
        %v7159 = vld [vmem:[%s3082 + $0x10] sm:$0xff]
        %v7160 = vld [vmem:[%s3082 + $0x18] sm:$0xff]
        %v7161 = vld [vmem:[%s3082 + $0x20] sm:$0xff]
        %v7162 = vld [vmem:[%s3082 + $0x28] sm:$0xff]
        %v7163 = vld [vmem:[%s3082 + $0x30] sm:$0xff]
        %v7164 = vld [vmem:[%s3082 + $0x38] sm:$0xff]
        %v7165 = vld [vmem:[%s3082 + $0x60] sm:$0xff]
        %v7166 = vld [vmem:[%s3082 + $0x68] sm:$0xff]
        %v7167 = vld [vmem:[%s3082 + $0x70] sm:$0xff]
        %v7168 = vld [vmem:[%s3082 + $0x78] sm:$0xff]
        %v7169 = vld [vmem:[%s3082 + $0x80] sm:$0xff]
        %v7170 = vld [vmem:[%s3082 + $0x88] sm:$0xff]
        %v7171 = vld [vmem:[%s3082 + $0x90] sm:$0xff]
        %v7172 = vld [vmem:[%s3082 + $0x98] sm:$0xff]
        %s7173 = scalar_lea.vmem %s3, 1792
        %v7174 = vld [vmem:[%s7173] sm:$0xff]
        %v7175 = vld [vmem:[%s7173 + $0x8] sm:$0xff]
        %v7176 = vld [vmem:[%s7173 + $0x10] sm:$0xff]
        %v7177 = vld [vmem:[%s7173 + $0x18] sm:$0xff]
        %v7178 = vld [vmem:[%s7173 + $0x20] sm:$0xff]
        %v7179 = vld [vmem:[%s7173 + $0x28] sm:$0xff]
        %v7180 = vld [vmem:[%s7173 + $0x30] sm:$0xff]
        %v7181 = vld [vmem:[%s7173 + $0x38] sm:$0xff]
        %v7182 = vld [vmem:[%s7173 + $0x40] sm:$0xff]
        %v7183 = vld [vmem:[%s7173 + $0x48] sm:$0xff]
        %v7184 = vld [vmem:[%s7173 + $0x50] sm:$0xff]
        %v7185 = vld [vmem:[%s7173 + $0x58] sm:$0xff]
        %v7186 = vld [vmem:[%s7173 + $0x60] sm:$0xff]
        %v7187 = vld [vmem:[%s7173 + $0x68] sm:$0xff]
        %v7188 = vld [vmem:[%s7173 + $0x70] sm:$0xff]
        %v7189 = vld [vmem:[%s7173 + $0x78] sm:$0xff]
        %7190 = vmatprep.subr.mxu0 0.0
        %7191 = vmatpush1.msra.mxu0 %v7174
        %7192 = vmatprep.subr.mxu0 0.0
        %7193 = vmatpush1.msra.mxu0 %v7175
        %7194 = vmatprep.subr.mxu0 0.0
        %7195 = vmatpush1.msra.mxu0 %v7176
        %7196 = vmatprep.subr.mxu0 0.0
        %7197 = vmatpush1.msra.mxu0 %v7177
        %7198 = vmatprep.subr.mxu0 0.0
        %7199 = vmatpush1.msra.mxu0 %v7178
        %7200 = vmatprep.subr.mxu0 0.0
        %7201 = vmatpush1.msra.mxu0 %v7179
        %7202 = vmatprep.subr.mxu0 0.0
        %7203 = vmatpush1.msra.mxu0 %v7180
        %7204 = vmatprep.subr.mxu0 0.0
        %7205 = vmatpush1.msra.mxu0 %v7181
        %7206 = vmatprep.subr.mxu0 0.0
        %7207 = vmatpush1.msra.mxu0 %v7182
        %7208 = vmatprep.subr.mxu0 0.0
        %7209 = vmatpush1.msra.mxu0 %v7183
        %7210 = vmatprep.subr.mxu0 0.0
        %7211 = vmatpush1.msra.mxu0 %v7184
        %7212 = vmatprep.subr.mxu0 0.0
        %7213 = vmatpush1.msra.mxu0 %v7185
        %7214 = vmatprep.subr.mxu0 0.0
        %7215 = vmatpush1.msra.mxu0 %v7186
        %7216 = vmatprep.subr.mxu0 0.0
        %7217 = vmatpush1.msra.mxu0 %v7187
        %7218 = vmatprep.subr.mxu0 0.0
        %7219 = vmatpush1.msra.mxu0 %v7188
        %7220 = vmatprep.subr.mxu0 0.0
        %7221 = vmatpush1.msra.mxu0 %v7189
        %7222 = vmatprep.subr.mxu0 0.0
        %7223 = vmatpush1.msra.mxu0 0.0
        %7224 = vmatprep.subr.mxu0 0.0
        %7225 = vmatpush1.msra.mxu0 0.0
        %7226 = vmatprep.subr.mxu0 0.0
        %7227 = vmatpush1.msra.mxu0 0.0
        %7228 = vmatprep.subr.mxu0 0.0
        %7229 = vmatpush1.msra.mxu0 0.0
        %7230 = vmatprep.subr.mxu0 0.0
        %7231 = vmatpush1.msra.mxu0 0.0
        %7232 = vmatprep.subr.mxu0 0.0
        %7233 = vmatpush1.msra.mxu0 0.0
        %7234 = vmatprep.subr.mxu0 0.0
        %7235 = vmatpush1.msra.mxu0 0.0
        %7236 = vmatprep.subr.mxu0 0.0
        %7237 = vmatpush1.msra.mxu0 0.0
        %7238 = vmatprep.subr.mxu0 0.0
        %7239 = vmatpush1.msra.mxu0 0.0
        %7240 = vmatprep.subr.mxu0 0.0
        %7241 = vmatpush1.msra.mxu0 0.0
        %7242 = vmatprep.subr.mxu0 0.0
        %7243 = vmatpush1.msra.mxu0 0.0
        %7244 = vmatprep.subr.mxu0 0.0
        %7245 = vmatpush1.msra.mxu0 0.0
        %7246 = vmatprep.subr.mxu0 0.0
        %7247 = vmatpush1.msra.mxu0 0.0
        %7248 = vmatprep.subr.mxu0 0.0
        %7249 = vmatpush1.msra.mxu0 0.0
        %7250 = vmatprep.subr.mxu0 0.0
        %7251 = vmatpush1.msra.mxu0 0.0
        %7252 = vmatprep.subr.mxu0 0.0
        %7253 = vmatpush1.msra.mxu0 0.0
        %7254 = vmatprep.mubr.f32.mxu0 0.0
        %7255 = vmatmul.mubr.f32.gmra.mrb[0].mxu0 %v7157
        %v7256 = vpop.f32.mrb[0].mxu0
        %v7257 = vadd.f32 0.0, %v7256
        %v7258 = vpop.f32.mrb[0].mxu0
        %7259 = vmatprep.mubr.f32.mxu0 0.0
        %7260 = vmatmul.mubr.f32.gmra.mrb[0].mxu0 %v7158
        %v7261 = vpop.f32.mrb[0].mxu0
        %v7262 = vadd.f32 0.0, %v7261
        %v7263 = vpop.f32.mrb[0].mxu0
        %7264 = vmatprep.mubr.f32.mxu0 0.0
        %7265 = vmatmul.mubr.f32.gmra.mrb[0].mxu0 %v7159
        %v7266 = vpop.f32.mrb[0].mxu0
        %v7267 = vadd.f32 0.0, %v7266
        %v7268 = vpop.f32.mrb[0].mxu0
        %7269 = vmatprep.mubr.f32.mxu0 0.0
        %7270 = vmatmul.mubr.f32.gmra.mrb[0].mxu0 %v7160
        %v7271 = vpop.f32.mrb[0].mxu0
        %v7272 = vadd.f32 0.0, %v7271
        %v7273 = vpop.f32.mrb[0].mxu0
        %7274 = vmatprep.mubr.f32.mxu0 0.0
        %7275 = vmatmul.mubr.f32.gmra.mrb[0].mxu0 %v7161
        %v7276 = vpop.f32.mrb[0].mxu0
        %v7277 = vadd.f32 0.0, %v7276
        %v7278 = vpop.f32.mrb[0].mxu0
        %7279 = vmatprep.mubr.f32.mxu0 0.0
        %7280 = vmatmul.mubr.f32.gmra.mrb[0].mxu0 %v7162
        %v7281 = vpop.f32.mrb[0].mxu0
        %v7282 = vadd.f32 0.0, %v7281
        %v7283 = vpop.f32.mrb[0].mxu0
        %7284 = vmatprep.mubr.f32.mxu0 0.0
        %7285 = vmatmul.mubr.f32.gmra.mrb[0].mxu0 %v7163
        %v7286 = vpop.f32.mrb[0].mxu0
        %v7287 = vadd.f32 0.0, %v7286
        %v7288 = vpop.f32.mrb[0].mxu0
        %7289 = vmatprep.mubr.f32.mxu0 0.0
        %7290 = vmatmul.mubr.f32.gmra.mrb[0].mxu0 %v7164
        %v7291 = vpop.f32.mrb[0].mxu0
        %v7292 = vadd.f32 0.0, %v7291
        %v7293 = vpop.f32.mrb[0].mxu0
        %7294 = vmatprep.mubr.f32.mxu0 0.0
        %7295 = vmatmul.mubr.f32.gmra.mrb[0].mxu0 %v7165
        %v7296 = vpop.f32.mrb[0].mxu0
        %v7297 = vadd.f32 0.0, %v7296
        %v7298 = vpop.f32.mrb[0].mxu0
        %7299 = vmatprep.mubr.f32.mxu0 0.0
        %7300 = vmatmul.mubr.f32.gmra.mrb[0].mxu0 %v7166
        %v7301 = vpop.f32.mrb[0].mxu0
        %v7302 = vadd.f32 0.0, %v7301
        %v7303 = vpop.f32.mrb[0].mxu0
        %7304 = vmatprep.mubr.f32.mxu0 0.0
        %7305 = vmatmul.mubr.f32.gmra.mrb[0].mxu0 %v7167
        %v7306 = vpop.f32.mrb[0].mxu0
        %v7307 = vadd.f32 0.0, %v7306
        %v7308 = vpop.f32.mrb[0].mxu0
        %7309 = vmatprep.mubr.f32.mxu0 0.0
        %7310 = vmatmul.mubr.f32.gmra.mrb[0].mxu0 %v7168
        %v7311 = vpop.f32.mrb[0].mxu0
        %v7312 = vadd.f32 0.0, %v7311
        %v7313 = vpop.f32.mrb[0].mxu0
        %7314 = vmatprep.mubr.f32.mxu0 0.0
        %7315 = vmatmul.mubr.f32.gmra.mrb[0].mxu0 %v7169
        %v7316 = vpop.f32.mrb[0].mxu0
        %v7317 = vadd.f32 0.0, %v7316
        %v7318 = vpop.f32.mrb[0].mxu0
        %7319 = vmatprep.mubr.f32.mxu0 0.0
        %7320 = vmatmul.mubr.f32.gmra.mrb[0].mxu0 %v7170
        %v7321 = vpop.f32.mrb[0].mxu0
        %v7322 = vadd.f32 0.0, %v7321
        %v7323 = vpop.f32.mrb[0].mxu0
        %7324 = vmatprep.mubr.f32.mxu0 0.0
        %7325 = vmatmul.mubr.f32.gmra.mrb[0].mxu0 %v7171
        %v7326 = vpop.f32.mrb[0].mxu0
        %v7327 = vadd.f32 0.0, %v7326
        %v7328 = vpop.f32.mrb[0].mxu0
        %7329 = vmatprep.mubr.f32.mxu0 0.0
        %7330 = vmatmul.mubr.f32.gmra.mrb[0].mxu0 %v7172
        %v7331 = vpop.f32.mrb[0].mxu0
        %v7332 = vadd.f32 0.0, %v7331
        %v7333 = vpop.f32.mrb[0].mxu0
        %7334 = vdwg.mxu0
        %v7335 = vadd.f32 %v7141, %v7257
        %v7336 = vadd.f32 %v7142, %v7262
        %v7337 = vadd.f32 %v7143, %v7267
        %v7338 = vadd.f32 %v7144, %v7272
        %v7339 = vadd.f32 %v7145, %v7277
        %v7340 = vadd.f32 %v7146, %v7282
        %v7341 = vadd.f32 %v7147, %v7287
        %v7342 = vadd.f32 %v7148, %v7292
        %v7343 = vadd.f32 %v7149, %v7297
        %v7344 = vadd.f32 %v7150, %v7302
        %v7345 = vadd.f32 %v7151, %v7307
        %v7346 = vadd.f32 %v7152, %v7312
        %v7347 = vadd.f32 %v7153, %v7317
        %v7348 = vadd.f32 %v7154, %v7322
        %v7349 = vadd.f32 %v7155, %v7327
        %v7350 = vadd.f32 %v7156, %v7332
        %v7351 = vld [vmem:[%s3277] sm:$0xff]
        %v7352 = vld [vmem:[%s3277 + $0x8] sm:$0xff]
        %v7353 = vld [vmem:[%s3277 + $0x10] sm:$0xff]
        %v7354 = vld [vmem:[%s3277 + $0x18] sm:$0xff]
        %v7355 = vld [vmem:[%s3277 + $0x20] sm:$0xff]
        %v7356 = vld [vmem:[%s3277 + $0x28] sm:$0xff]
        %v7357 = vld [vmem:[%s3277 + $0x30] sm:$0xff]
        %v7358 = vld [vmem:[%s3277 + $0x38] sm:$0xff]
        %v7359 = vld [vmem:[%s3277 + $0x60] sm:$0xff]
        %v7360 = vld [vmem:[%s3277 + $0x68] sm:$0xff]
        %v7361 = vld [vmem:[%s3277 + $0x70] sm:$0xff]
        %v7362 = vld [vmem:[%s3277 + $0x78] sm:$0xff]
        %v7363 = vld [vmem:[%s3277 + $0x80] sm:$0xff]
        %v7364 = vld [vmem:[%s3277 + $0x88] sm:$0xff]
        %v7365 = vld [vmem:[%s3277 + $0x90] sm:$0xff]
        %v7366 = vld [vmem:[%s3277 + $0x98] sm:$0xff]
        %s7367 = scalar_lea.vmem %s3, 2432
        %v7368 = vld [vmem:[%s7367] sm:$0xff]
        %v7369 = vld [vmem:[%s7367 + $0x8] sm:$0xff]
        %v7370 = vld [vmem:[%s7367 + $0x10] sm:$0xff]
        %v7371 = vld [vmem:[%s7367 + $0x18] sm:$0xff]
        %v7372 = vld [vmem:[%s7367 + $0x20] sm:$0xff]
        %v7373 = vld [vmem:[%s7367 + $0x28] sm:$0xff]
        %v7374 = vld [vmem:[%s7367 + $0x30] sm:$0xff]
        %v7375 = vld [vmem:[%s7367 + $0x38] sm:$0xff]
        %v7376 = vld [vmem:[%s7367 + $0x40] sm:$0xff]
        %v7377 = vld [vmem:[%s7367 + $0x48] sm:$0xff]
        %v7378 = vld [vmem:[%s7367 + $0x50] sm:$0xff]
        %v7379 = vld [vmem:[%s7367 + $0x58] sm:$0xff]
        %v7380 = vld [vmem:[%s7367 + $0x60] sm:$0xff]
        %v7381 = vld [vmem:[%s7367 + $0x68] sm:$0xff]
        %v7382 = vld [vmem:[%s7367 + $0x70] sm:$0xff]
        %v7383 = vld [vmem:[%s7367 + $0x78] sm:$0xff]
        %7384 = vmatprep.subr.mxu0 0.0
        %7385 = vmatpush1.msra.mxu0 %v7368
        %7386 = vmatprep.subr.mxu0 0.0
        %7387 = vmatpush1.msra.mxu0 %v7369
        %7388 = vmatprep.subr.mxu0 0.0
        %7389 = vmatpush1.msra.mxu0 %v7370
        %7390 = vmatprep.subr.mxu0 0.0
        %7391 = vmatpush1.msra.mxu0 %v7371
        %7392 = vmatprep.subr.mxu0 0.0
        %7393 = vmatpush1.msra.mxu0 %v7372
        %7394 = vmatprep.subr.mxu0 0.0
        %7395 = vmatpush1.msra.mxu0 %v7373
        %7396 = vmatprep.subr.mxu0 0.0
        %7397 = vmatpush1.msra.mxu0 %v7374
        %7398 = vmatprep.subr.mxu0 0.0
        %7399 = vmatpush1.msra.mxu0 %v7375
        %7400 = vmatprep.subr.mxu0 0.0
        %7401 = vmatpush1.msra.mxu0 %v7376
        %7402 = vmatprep.subr.mxu0 0.0
        %7403 = vmatpush1.msra.mxu0 %v7377
        %7404 = vmatprep.subr.mxu0 0.0
        %7405 = vmatpush1.msra.mxu0 %v7378
        %7406 = vmatprep.subr.mxu0 0.0
        %7407 = vmatpush1.msra.mxu0 %v7379
        %7408 = vmatprep.subr.mxu0 0.0
        %7409 = vmatpush1.msra.mxu0 %v7380
        %7410 = vmatprep.subr.mxu0 0.0
        %7411 = vmatpush1.msra.mxu0 %v7381
        %7412 = vmatprep.subr.mxu0 0.0
        %7413 = vmatpush1.msra.mxu0 %v7382
        %7414 = vmatprep.subr.mxu0 0.0
        %7415 = vmatpush1.msra.mxu0 %v7383
        %7416 = vmatprep.subr.mxu0 0.0
        %7417 = vmatpush1.msra.mxu0 0.0
        %7418 = vmatprep.subr.mxu0 0.0
        %7419 = vmatpush1.msra.mxu0 0.0
        %7420 = vmatprep.subr.mxu0 0.0
        %7421 = vmatpush1.msra.mxu0 0.0
        %7422 = vmatprep.subr.mxu0 0.0
        %7423 = vmatpush1.msra.mxu0 0.0
        %7424 = vmatprep.subr.mxu0 0.0
        %7425 = vmatpush1.msra.mxu0 0.0
        %7426 = vmatprep.subr.mxu0 0.0
        %7427 = vmatpush1.msra.mxu0 0.0
        %7428 = vmatprep.subr.mxu0 0.0
        %7429 = vmatpush1.msra.mxu0 0.0
        %7430 = vmatprep.subr.mxu0 0.0
        %7431 = vmatpush1.msra.mxu0 0.0
        %7432 = vmatprep.subr.mxu0 0.0
        %7433 = vmatpush1.msra.mxu0 0.0
        %7434 = vmatprep.subr.mxu0 0.0
        %7435 = vmatpush1.msra.mxu0 0.0
        %7436 = vmatprep.subr.mxu0 0.0
        %7437 = vmatpush1.msra.mxu0 0.0
        %7438 = vmatprep.subr.mxu0 0.0
        %7439 = vmatpush1.msra.mxu0 0.0
        %7440 = vmatprep.subr.mxu0 0.0
        %7441 = vmatpush1.msra.mxu0 0.0
        %7442 = vmatprep.subr.mxu0 0.0
        %7443 = vmatpush1.msra.mxu0 0.0
        %7444 = vmatprep.subr.mxu0 0.0
        %7445 = vmatpush1.msra.mxu0 0.0
        %7446 = vmatprep.subr.mxu0 0.0
        %7447 = vmatpush1.msra.mxu0 0.0
        %7448 = vmatprep.mubr.f32.mxu0 0.0
        %7449 = vmatmul.mubr.f32.gmra.mrb[0].mxu0 %v7351
        %v7450 = vpop.f32.mrb[0].mxu0
        %v7451 = vadd.f32 0.0, %v7450
        %v7452 = vpop.f32.mrb[0].mxu0
        %7453 = vmatprep.mubr.f32.mxu0 0.0
        %7454 = vmatmul.mubr.f32.gmra.mrb[0].mxu0 %v7352
        %v7455 = vpop.f32.mrb[0].mxu0
        %v7456 = vadd.f32 0.0, %v7455
        %v7457 = vpop.f32.mrb[0].mxu0
        %7458 = vmatprep.mubr.f32.mxu0 0.0
        %7459 = vmatmul.mubr.f32.gmra.mrb[0].mxu0 %v7353
        %v7460 = vpop.f32.mrb[0].mxu0
        %v7461 = vadd.f32 0.0, %v7460
        %v7462 = vpop.f32.mrb[0].mxu0
        %7463 = vmatprep.mubr.f32.mxu0 0.0
        %7464 = vmatmul.mubr.f32.gmra.mrb[0].mxu0 %v7354
        %v7465 = vpop.f32.mrb[0].mxu0
        %v7466 = vadd.f32 0.0, %v7465
        %v7467 = vpop.f32.mrb[0].mxu0
        %7468 = vmatprep.mubr.f32.mxu0 0.0
        %7469 = vmatmul.mubr.f32.gmra.mrb[0].mxu0 %v7355
        %v7470 = vpop.f32.mrb[0].mxu0
        %v7471 = vadd.f32 0.0, %v7470
        %v7472 = vpop.f32.mrb[0].mxu0
        %7473 = vmatprep.mubr.f32.mxu0 0.0
        %7474 = vmatmul.mubr.f32.gmra.mrb[0].mxu0 %v7356
        %v7475 = vpop.f32.mrb[0].mxu0
        %v7476 = vadd.f32 0.0, %v7475
        %v7477 = vpop.f32.mrb[0].mxu0
        %7478 = vmatprep.mubr.f32.mxu0 0.0
        %7479 = vmatmul.mubr.f32.gmra.mrb[0].mxu0 %v7357
        %v7480 = vpop.f32.mrb[0].mxu0
        %v7481 = vadd.f32 0.0, %v7480
        %v7482 = vpop.f32.mrb[0].mxu0
        %7483 = vmatprep.mubr.f32.mxu0 0.0
        %7484 = vmatmul.mubr.f32.gmra.mrb[0].mxu0 %v7358
        %v7485 = vpop.f32.mrb[0].mxu0
        %v7486 = vadd.f32 0.0, %v7485
        %v7487 = vpop.f32.mrb[0].mxu0
        %7488 = vmatprep.mubr.f32.mxu0 0.0
        %7489 = vmatmul.mubr.f32.gmra.mrb[0].mxu0 %v7359
        %v7490 = vpop.f32.mrb[0].mxu0
        %v7491 = vadd.f32 0.0, %v7490
        %v7492 = vpop.f32.mrb[0].mxu0
        %7493 = vmatprep.mubr.f32.mxu0 0.0
        %7494 = vmatmul.mubr.f32.gmra.mrb[0].mxu0 %v7360
        %v7495 = vpop.f32.mrb[0].mxu0
        %v7496 = vadd.f32 0.0, %v7495
        %v7497 = vpop.f32.mrb[0].mxu0
        %7498 = vmatprep.mubr.f32.mxu0 0.0
        %7499 = vmatmul.mubr.f32.gmra.mrb[0].mxu0 %v7361
        %v7500 = vpop.f32.mrb[0].mxu0
        %v7501 = vadd.f32 0.0, %v7500
        %v7502 = vpop.f32.mrb[0].mxu0
        %7503 = vmatprep.mubr.f32.mxu0 0.0
        %7504 = vmatmul.mubr.f32.gmra.mrb[0].mxu0 %v7362
        %v7505 = vpop.f32.mrb[0].mxu0
        %v7506 = vadd.f32 0.0, %v7505
        %v7507 = vpop.f32.mrb[0].mxu0
        %7508 = vmatprep.mubr.f32.mxu0 0.0
        %7509 = vmatmul.mubr.f32.gmra.mrb[0].mxu0 %v7363
        %v7510 = vpop.f32.mrb[0].mxu0
        %v7511 = vadd.f32 0.0, %v7510
        %v7512 = vpop.f32.mrb[0].mxu0
        %7513 = vmatprep.mubr.f32.mxu0 0.0
        %7514 = vmatmul.mubr.f32.gmra.mrb[0].mxu0 %v7364
        %v7515 = vpop.f32.mrb[0].mxu0
        %v7516 = vadd.f32 0.0, %v7515
        %v7517 = vpop.f32.mrb[0].mxu0
        %7518 = vmatprep.mubr.f32.mxu0 0.0
        %7519 = vmatmul.mubr.f32.gmra.mrb[0].mxu0 %v7365
        %v7520 = vpop.f32.mrb[0].mxu0
        %v7521 = vadd.f32 0.0, %v7520
        %v7522 = vpop.f32.mrb[0].mxu0
        %7523 = vmatprep.mubr.f32.mxu0 0.0
        %7524 = vmatmul.mubr.f32.gmra.mrb[0].mxu0 %v7366
        %v7525 = vpop.f32.mrb[0].mxu0
        %v7526 = vadd.f32 0.0, %v7525
        %v7527 = vpop.f32.mrb[0].mxu0
        %7528 = vdwg.mxu0
        %v7529 = vadd.f32 %v7335, %v7451
        %v7530 = vadd.f32 %v7336, %v7456
        %v7531 = vadd.f32 %v7337, %v7461
        %v7532 = vadd.f32 %v7338, %v7466
        %v7533 = vadd.f32 %v7339, %v7471
        %v7534 = vadd.f32 %v7340, %v7476
        %v7535 = vadd.f32 %v7341, %v7481
        %v7536 = vadd.f32 %v7342, %v7486
        %v7537 = vadd.f32 %v7343, %v7491
        %v7538 = vadd.f32 %v7344, %v7496
        %v7539 = vadd.f32 %v7345, %v7501
        %v7540 = vadd.f32 %v7346, %v7506
        %v7541 = vadd.f32 %v7347, %v7511
        %v7542 = vadd.f32 %v7348, %v7516
        %v7543 = vadd.f32 %v7349, %v7521
        %v7544 = vadd.f32 %v7350, %v7526
        %v7545 = vld [vmem:[%s3472] sm:$0xff]
        %v7546 = vld [vmem:[%s3472 + $0x8] sm:$0xff]
        %v7547 = vld [vmem:[%s3472 + $0x10] sm:$0xff]
        %v7548 = vld [vmem:[%s3472 + $0x18] sm:$0xff]
        %v7549 = vld [vmem:[%s3472 + $0x20] sm:$0xff]
        %v7550 = vld [vmem:[%s3472 + $0x28] sm:$0xff]
        %v7551 = vld [vmem:[%s3472 + $0x30] sm:$0xff]
        %v7552 = vld [vmem:[%s3472 + $0x38] sm:$0xff]
        %v7553 = vld [vmem:[%s3472 + $0x60] sm:$0xff]
        %v7554 = vld [vmem:[%s3472 + $0x68] sm:$0xff]
        %v7555 = vld [vmem:[%s3472 + $0x70] sm:$0xff]
        %v7556 = vld [vmem:[%s3472 + $0x78] sm:$0xff]
        %v7557 = vld [vmem:[%s3472 + $0x80] sm:$0xff]
        %v7558 = vld [vmem:[%s3472 + $0x88] sm:$0xff]
        %v7559 = vld [vmem:[%s3472 + $0x90] sm:$0xff]
        %v7560 = vld [vmem:[%s3472 + $0x98] sm:$0xff]
        %s7561 = scalar_lea.vmem %s3, 3072
        %v7562 = vld [vmem:[%s7561] sm:$0xff]
        %v7563 = vld [vmem:[%s7561 + $0x8] sm:$0xff]
        %v7564 = vld [vmem:[%s7561 + $0x10] sm:$0xff]
        %v7565 = vld [vmem:[%s7561 + $0x18] sm:$0xff]
        %v7566 = vld [vmem:[%s7561 + $0x20] sm:$0xff]
        %v7567 = vld [vmem:[%s7561 + $0x28] sm:$0xff]
        %v7568 = vld [vmem:[%s7561 + $0x30] sm:$0xff]
        %v7569 = vld [vmem:[%s7561 + $0x38] sm:$0xff]
        %v7570 = vld [vmem:[%s7561 + $0x40] sm:$0xff]
        %v7571 = vld [vmem:[%s7561 + $0x48] sm:$0xff]
        %v7572 = vld [vmem:[%s7561 + $0x50] sm:$0xff]
        %v7573 = vld [vmem:[%s7561 + $0x58] sm:$0xff]
        %v7574 = vld [vmem:[%s7561 + $0x60] sm:$0xff]
        %v7575 = vld [vmem:[%s7561 + $0x68] sm:$0xff]
        %v7576 = vld [vmem:[%s7561 + $0x70] sm:$0xff]
        %v7577 = vld [vmem:[%s7561 + $0x78] sm:$0xff]
        %7578 = vmatprep.subr.mxu0 0.0
        %7579 = vmatpush1.msra.mxu0 %v7562
        %7580 = vmatprep.subr.mxu0 0.0
        %7581 = vmatpush1.msra.mxu0 %v7563
        %7582 = vmatprep.subr.mxu0 0.0
        %7583 = vmatpush1.msra.mxu0 %v7564
        %7584 = vmatprep.subr.mxu0 0.0
        %7585 = vmatpush1.msra.mxu0 %v7565
        %7586 = vmatprep.subr.mxu0 0.0
        %7587 = vmatpush1.msra.mxu0 %v7566
        %7588 = vmatprep.subr.mxu0 0.0
        %7589 = vmatpush1.msra.mxu0 %v7567
        %7590 = vmatprep.subr.mxu0 0.0
        %7591 = vmatpush1.msra.mxu0 %v7568
        %7592 = vmatprep.subr.mxu0 0.0
        %7593 = vmatpush1.msra.mxu0 %v7569
        %7594 = vmatprep.subr.mxu0 0.0
        %7595 = vmatpush1.msra.mxu0 %v7570
        %7596 = vmatprep.subr.mxu0 0.0
        %7597 = vmatpush1.msra.mxu0 %v7571
        %7598 = vmatprep.subr.mxu0 0.0
        %7599 = vmatpush1.msra.mxu0 %v7572
        %7600 = vmatprep.subr.mxu0 0.0
        %7601 = vmatpush1.msra.mxu0 %v7573
        %7602 = vmatprep.subr.mxu0 0.0
        %7603 = vmatpush1.msra.mxu0 %v7574
        %7604 = vmatprep.subr.mxu0 0.0
        %7605 = vmatpush1.msra.mxu0 %v7575
        %7606 = vmatprep.subr.mxu0 0.0
        %7607 = vmatpush1.msra.mxu0 %v7576
        %7608 = vmatprep.subr.mxu0 0.0
        %7609 = vmatpush1.msra.mxu0 %v7577
        %7610 = vmatprep.subr.mxu0 0.0
        %7611 = vmatpush1.msra.mxu0 0.0
        %7612 = vmatprep.subr.mxu0 0.0
        %7613 = vmatpush1.msra.mxu0 0.0
        %7614 = vmatprep.subr.mxu0 0.0
        %7615 = vmatpush1.msra.mxu0 0.0
        %7616 = vmatprep.subr.mxu0 0.0
        %7617 = vmatpush1.msra.mxu0 0.0
        %7618 = vmatprep.subr.mxu0 0.0
        %7619 = vmatpush1.msra.mxu0 0.0
        %7620 = vmatprep.subr.mxu0 0.0
        %7621 = vmatpush1.msra.mxu0 0.0
        %7622 = vmatprep.subr.mxu0 0.0
        %7623 = vmatpush1.msra.mxu0 0.0
        %7624 = vmatprep.subr.mxu0 0.0
        %7625 = vmatpush1.msra.mxu0 0.0
        %7626 = vmatprep.subr.mxu0 0.0
        %7627 = vmatpush1.msra.mxu0 0.0
        %7628 = vmatprep.subr.mxu0 0.0
        %7629 = vmatpush1.msra.mxu0 0.0
        %7630 = vmatprep.subr.mxu0 0.0
        %7631 = vmatpush1.msra.mxu0 0.0
        %7632 = vmatprep.subr.mxu0 0.0
        %7633 = vmatpush1.msra.mxu0 0.0
        %7634 = vmatprep.subr.mxu0 0.0
        %7635 = vmatpush1.msra.mxu0 0.0
        %7636 = vmatprep.subr.mxu0 0.0
        %7637 = vmatpush1.msra.mxu0 0.0
        %7638 = vmatprep.subr.mxu0 0.0
        %7639 = vmatpush1.msra.mxu0 0.0
        %7640 = vmatprep.subr.mxu0 0.0
        %7641 = vmatpush1.msra.mxu0 0.0
        %7642 = vmatprep.mubr.f32.mxu0 0.0
        %7643 = vmatmul.mubr.f32.gmra.mrb[0].mxu0 %v7545
        %v7644 = vpop.f32.mrb[0].mxu0
        %v7645 = vadd.f32 0.0, %v7644
        %v7646 = vpop.f32.mrb[0].mxu0
        %7647 = vmatprep.mubr.f32.mxu0 0.0
        %7648 = vmatmul.mubr.f32.gmra.mrb[0].mxu0 %v7546
        %v7649 = vpop.f32.mrb[0].mxu0
        %v7650 = vadd.f32 0.0, %v7649
        %v7651 = vpop.f32.mrb[0].mxu0
        %7652 = vmatprep.mubr.f32.mxu0 0.0
        %7653 = vmatmul.mubr.f32.gmra.mrb[0].mxu0 %v7547
        %v7654 = vpop.f32.mrb[0].mxu0
        %v7655 = vadd.f32 0.0, %v7654
        %v7656 = vpop.f32.mrb[0].mxu0
        %7657 = vmatprep.mubr.f32.mxu0 0.0
        %7658 = vmatmul.mubr.f32.gmra.mrb[0].mxu0 %v7548
        %v7659 = vpop.f32.mrb[0].mxu0
        %v7660 = vadd.f32 0.0, %v7659
        %v7661 = vpop.f32.mrb[0].mxu0
        %7662 = vmatprep.mubr.f32.mxu0 0.0
        %7663 = vmatmul.mubr.f32.gmra.mrb[0].mxu0 %v7549
        %v7664 = vpop.f32.mrb[0].mxu0
        %v7665 = vadd.f32 0.0, %v7664
        %v7666 = vpop.f32.mrb[0].mxu0
        %7667 = vmatprep.mubr.f32.mxu0 0.0
        %7668 = vmatmul.mubr.f32.gmra.mrb[0].mxu0 %v7550
        %v7669 = vpop.f32.mrb[0].mxu0
        %v7670 = vadd.f32 0.0, %v7669
        %v7671 = vpop.f32.mrb[0].mxu0
        %7672 = vmatprep.mubr.f32.mxu0 0.0
        %7673 = vmatmul.mubr.f32.gmra.mrb[0].mxu0 %v7551
        %v7674 = vpop.f32.mrb[0].mxu0
        %v7675 = vadd.f32 0.0, %v7674
        %v7676 = vpop.f32.mrb[0].mxu0
        %7677 = vmatprep.mubr.f32.mxu0 0.0
        %7678 = vmatmul.mubr.f32.gmra.mrb[0].mxu0 %v7552
        %v7679 = vpop.f32.mrb[0].mxu0
        %v7680 = vadd.f32 0.0, %v7679
        %v7681 = vpop.f32.mrb[0].mxu0
        %7682 = vmatprep.mubr.f32.mxu0 0.0
        %7683 = vmatmul.mubr.f32.gmra.mrb[0].mxu0 %v7553
        %v7684 = vpop.f32.mrb[0].mxu0
        %v7685 = vadd.f32 0.0, %v7684
        %v7686 = vpop.f32.mrb[0].mxu0
        %7687 = vmatprep.mubr.f32.mxu0 0.0
        %7688 = vmatmul.mubr.f32.gmra.mrb[0].mxu0 %v7554
        %v7689 = vpop.f32.mrb[0].mxu0
        %v7690 = vadd.f32 0.0, %v7689
        %v7691 = vpop.f32.mrb[0].mxu0
        %7692 = vmatprep.mubr.f32.mxu0 0.0
        %7693 = vmatmul.mubr.f32.gmra.mrb[0].mxu0 %v7555
        %v7694 = vpop.f32.mrb[0].mxu0
        %v7695 = vadd.f32 0.0, %v7694
        %v7696 = vpop.f32.mrb[0].mxu0
        %7697 = vmatprep.mubr.f32.mxu0 0.0
        %7698 = vmatmul.mubr.f32.gmra.mrb[0].mxu0 %v7556
        %v7699 = vpop.f32.mrb[0].mxu0
        %v7700 = vadd.f32 0.0, %v7699
        %v7701 = vpop.f32.mrb[0].mxu0
        %7702 = vmatprep.mubr.f32.mxu0 0.0
        %7703 = vmatmul.mubr.f32.gmra.mrb[0].mxu0 %v7557
        %v7704 = vpop.f32.mrb[0].mxu0
        %v7705 = vadd.f32 0.0, %v7704
        %v7706 = vpop.f32.mrb[0].mxu0
        %7707 = vmatprep.mubr.f32.mxu0 0.0
        %7708 = vmatmul.mubr.f32.gmra.mrb[0].mxu0 %v7558
        %v7709 = vpop.f32.mrb[0].mxu0
        %v7710 = vadd.f32 0.0, %v7709
        %v7711 = vpop.f32.mrb[0].mxu0
        %7712 = vmatprep.mubr.f32.mxu0 0.0
        %7713 = vmatmul.mubr.f32.gmra.mrb[0].mxu0 %v7559
        %v7714 = vpop.f32.mrb[0].mxu0
        %v7715 = vadd.f32 0.0, %v7714
        %v7716 = vpop.f32.mrb[0].mxu0
        %7717 = vmatprep.mubr.f32.mxu0 0.0
        %7718 = vmatmul.mubr.f32.gmra.mrb[0].mxu0 %v7560
        %v7719 = vpop.f32.mrb[0].mxu0
        %v7720 = vadd.f32 0.0, %v7719
        %v7721 = vpop.f32.mrb[0].mxu0
        %7722 = vdwg.mxu0
        %v7723 = vadd.f32 %v7529, %v7645
        %v7724 = vadd.f32 %v7530, %v7650
        %v7725 = vadd.f32 %v7531, %v7655
        %v7726 = vadd.f32 %v7532, %v7660
        %v7727 = vadd.f32 %v7533, %v7665
        %v7728 = vadd.f32 %v7534, %v7670
        %v7729 = vadd.f32 %v7535, %v7675
        %v7730 = vadd.f32 %v7536, %v7680
        %v7731 = vadd.f32 %v7537, %v7685
        %v7732 = vadd.f32 %v7538, %v7690
        %v7733 = vadd.f32 %v7539, %v7695
        %v7734 = vadd.f32 %v7540, %v7700
        %v7735 = vadd.f32 %v7541, %v7705
        %v7736 = vadd.f32 %v7542, %v7710
        %v7737 = vadd.f32 %v7543, %v7715
        %v7738 = vadd.f32 %v7544, %v7720
        %v7739 = vld [vmem:[%s4] sm:$0x1]
        %v7741 = vlaneseq
        %v7742 = vshrl.u32 %v7741, 7
        %v7743 = vsub.s32 0, %v7742
        %v7744 = vrot.slane %v7739, %v7743
        %v7746 = vadd.f32 %v7723, %v7744
        %v7747 = vadd.f32 %v7724, %v7744
        %v7748 = vadd.f32 %v7725, %v7744
        %v7749 = vadd.f32 %v7726, %v7744
        %v7750 = vadd.f32 %v7727, %v7744
        %v7751 = vadd.f32 %v7728, %v7744
        %v7752 = vadd.f32 %v7729, %v7744
        %v7753 = vadd.f32 %v7730, %v7744
        %v7754 = vadd.f32 %v7731, %v7744
        %v7755 = vadd.f32 %v7732, %v7744
        %v7756 = vadd.f32 %v7733, %v7744
        %v7757 = vadd.f32 %v7734, %v7744
        %v7758 = vadd.f32 %v7735, %v7744
        %v7759 = vadd.f32 %v7736, %v7744
        %v7760 = vadd.f32 %v7737, %v7744
        %v7761 = vadd.f32 %v7738, %v7744
        %v7762 = vmax.f32 %v7746, 0.0
        %v7763 = vmax.f32 %v7747, 0.0
        %v7764 = vmax.f32 %v7748, 0.0
        %v7765 = vmax.f32 %v7749, 0.0
        %v7766 = vmax.f32 %v7750, 0.0
        %v7767 = vmax.f32 %v7751, 0.0
        %v7768 = vmax.f32 %v7752, 0.0
        %v7769 = vmax.f32 %v7753, 0.0
        %v7770 = vmax.f32 %v7754, 0.0
        %v7771 = vmax.f32 %v7755, 0.0
        %v7772 = vmax.f32 %v7756, 0.0
        %v7773 = vmax.f32 %v7757, 0.0
        %v7774 = vmax.f32 %v7758, 0.0
        %v7775 = vmax.f32 %v7759, 0.0
        %v7776 = vmax.f32 %v7760, 0.0
        %v7777 = vmax.f32 %v7761, 0.0
        %v7778 = vmax.f32 %v7762, %v7763
        %v7779 = vmax.f32 %v7770, %v7771
        %v7782 = vrot.slane %v7778, 1
        %v7783 = vrot.slane %v7779, 1
        %v7786 = vmax.f32 %v7778, %v7782
        %v7787 = vmax.f32 %v7779, %v7783
        %v7788 = vld [vmem:[%s5] sm:$0xff]
        %v7789 = vld [vmem:[%s5 + $0x8] sm:$0xff]
        %v7790 = vld [vmem:[%s5 + $0x10] sm:$0xff]
        %v7791 = vld [vmem:[%s5 + $0x18] sm:$0xff]
        %v7792 = vld [vmem:[%s5 + $0x20] sm:$0xff]
        %v7793 = vld [vmem:[%s5 + $0x28] sm:$0xff]
        %v7794 = vld [vmem:[%s5 + $0x30] sm:$0xff]
        %v7795 = vld [vmem:[%s5 + $0x38] sm:$0xff]
        %v7796 = vld [vmem:[%s5 + $0x40] sm:$0xff]
        %v7797 = vld [vmem:[%s5 + $0x48] sm:$0xff]
        %v7798 = vld [vmem:[%s5 + $0x50] sm:$0xff]
        %v7799 = vld [vmem:[%s5 + $0x58] sm:$0xff]
        %v7800 = vld [vmem:[%s5 + $0x60] sm:$0xff]
        %v7801 = vld [vmem:[%s5 + $0x68] sm:$0xff]
        %v7802 = vld [vmem:[%s5 + $0x70] sm:$0xff]
        %v7803 = vld [vmem:[%s5 + $0x78] sm:$0xff]
        %s7804 = scalar_lea.vmem %s5, 128
        %v7805 = vld [vmem:[%s7804] sm:$0xff]
        %v7806 = vld [vmem:[%s7804 + $0x8] sm:$0xff]
        %v7807 = vld [vmem:[%s7804 + $0x10] sm:$0xff]
        %v7808 = vld [vmem:[%s7804 + $0x18] sm:$0xff]
        %v7809 = vld [vmem:[%s7804 + $0x20] sm:$0xff]
        %v7810 = vld [vmem:[%s7804 + $0x28] sm:$0xff]
        %v7811 = vld [vmem:[%s7804 + $0x30] sm:$0xff]
        %v7812 = vld [vmem:[%s7804 + $0x38] sm:$0xff]
        %v7813 = vld [vmem:[%s7804 + $0x40] sm:$0xff]
        %v7814 = vld [vmem:[%s7804 + $0x48] sm:$0xff]
        %v7815 = vld [vmem:[%s7804 + $0x50] sm:$0xff]
        %v7816 = vld [vmem:[%s7804 + $0x58] sm:$0xff]
        %v7817 = vld [vmem:[%s7804 + $0x60] sm:$0xff]
        %v7818 = vld [vmem:[%s7804 + $0x68] sm:$0xff]
        %v7819 = vld [vmem:[%s7804 + $0x70] sm:$0xff]
        %v7820 = vld [vmem:[%s7804 + $0x78] sm:$0xff]
        %v7823 = vrot.slane %v7786, 2
        %v7824 = vrot.slane %v7787, 1
        %vm7825 = vcmask 1041409
        %v7826 = vsel %vm7825, %v7824, %v7823
        %7828 = vmatprep.subr.mxu0 0.0
        %7829 = vmatpush1.msra.mxu0 %v7805
        %7830 = vmatprep.subr.mxu0 0.0
        %7831 = vmatpush1.msra.mxu0 %v7806
        %7832 = vmatprep.subr.mxu0 0.0
        %7833 = vmatpush1.msra.mxu0 %v7807
        %7834 = vmatprep.subr.mxu0 0.0
        %7835 = vmatpush1.msra.mxu0 %v7808
        %7836 = vmatprep.subr.mxu0 0.0
        %7837 = vmatpush1.msra.mxu0 %v7809
        %7838 = vmatprep.subr.mxu0 0.0
        %7839 = vmatpush1.msra.mxu0 %v7810
        %7840 = vmatprep.subr.mxu0 0.0
        %7841 = vmatpush1.msra.mxu0 %v7811
        %7842 = vmatprep.subr.mxu0 0.0
        %7843 = vmatpush1.msra.mxu0 %v7812
        %7844 = vmatprep.subr.mxu0 0.0
        %7845 = vmatpush1.msra.mxu0 %v7813
        %7846 = vmatprep.subr.mxu0 0.0
        %7847 = vmatpush1.msra.mxu0 %v7814
        %7848 = vmatprep.subr.mxu0 0.0
        %7849 = vmatpush1.msra.mxu0 %v7815
        %7850 = vmatprep.subr.mxu0 0.0
        %7851 = vmatpush1.msra.mxu0 %v7816
        %7852 = vmatprep.subr.mxu0 0.0
        %7853 = vmatpush1.msra.mxu0 %v7817
        %7854 = vmatprep.subr.mxu0 0.0
        %7855 = vmatpush1.msra.mxu0 %v7818
        %7856 = vmatprep.subr.mxu0 0.0
        %7857 = vmatpush1.msra.mxu0 %v7819
        %7858 = vmatprep.subr.mxu0 0.0
        %7859 = vmatpush1.msra.mxu0 %v7820
        %7860 = vmatprep.subr.mxu0 0.0
        %7861 = vmatpush1.msra.mxu0 0.0
        %7862 = vmatprep.subr.mxu0 0.0
        %7863 = vmatpush1.msra.mxu0 0.0
        %7864 = vmatprep.subr.mxu0 0.0
        %7865 = vmatpush1.msra.mxu0 0.0
        %7866 = vmatprep.subr.mxu0 0.0
        %7867 = vmatpush1.msra.mxu0 0.0
        %7868 = vmatprep.subr.mxu0 0.0
        %7869 = vmatpush1.msra.mxu0 0.0
        %7870 = vmatprep.subr.mxu0 0.0
        %7871 = vmatpush1.msra.mxu0 0.0
        %7872 = vmatprep.subr.mxu0 0.0
        %7873 = vmatpush1.msra.mxu0 0.0
        %7874 = vmatprep.subr.mxu0 0.0
        %7875 = vmatpush1.msra.mxu0 0.0
        %7876 = vmatprep.subr.mxu0 0.0
        %7877 = vmatpush1.msra.mxu0 0.0
        %7878 = vmatprep.subr.mxu0 0.0
        %7879 = vmatpush1.msra.mxu0 0.0
        %7880 = vmatprep.subr.mxu0 0.0
        %7881 = vmatpush1.msra.mxu0 0.0
        %7882 = vmatprep.subr.mxu0 0.0
        %7883 = vmatpush1.msra.mxu0 0.0
        %7884 = vmatprep.subr.mxu0 0.0
        %7885 = vmatpush1.msra.mxu0 0.0
        %7886 = vmatprep.subr.mxu0 0.0
        %7887 = vmatpush1.msra.mxu0 0.0
        %7888 = vmatprep.subr.mxu0 0.0
        %7889 = vmatpush1.msra.mxu0 0.0
        %7890 = vmatprep.subr.mxu0 0.0
        %7891 = vmatpush1.msra.mxu0 0.0
        %7892 = vmatprep.mubr.f32.mxu0 0.0
        %7893 = vmatmul.mubr.f32.gmra.mrb[0].mxu0 %v7826
        %v7894 = vpop.f32.mrb[0].mxu0
        %v7895 = vadd.f32 0.0, %v7894
        %v7896 = vpop.f32.mrb[0].mxu0
        %7897 = vdwg.mxu0
        %v7898 = vrot.slane %v7787, 7
        %v7899 = vsel %vm7825, %v7898, %v7786
        %7901 = vmatprep.subr.mxu0 0.0
        %7902 = vmatpush1.msra.mxu0 %v7788
        %7903 = vmatprep.subr.mxu0 0.0
        %7904 = vmatpush1.msra.mxu0 %v7789
        %7905 = vmatprep.subr.mxu0 0.0
        %7906 = vmatpush1.msra.mxu0 %v7790
        %7907 = vmatprep.subr.mxu0 0.0
        %7908 = vmatpush1.msra.mxu0 %v7791
        %7909 = vmatprep.subr.mxu0 0.0
        %7910 = vmatpush1.msra.mxu0 %v7792
        %7911 = vmatprep.subr.mxu0 0.0
        %7912 = vmatpush1.msra.mxu0 %v7793
        %7913 = vmatprep.subr.mxu0 0.0
        %7914 = vmatpush1.msra.mxu0 %v7794
        %7915 = vmatprep.subr.mxu0 0.0
        %7916 = vmatpush1.msra.mxu0 %v7795
        %7917 = vmatprep.subr.mxu0 0.0
        %7918 = vmatpush1.msra.mxu0 %v7796
        %7919 = vmatprep.subr.mxu0 0.0
        %7920 = vmatpush1.msra.mxu0 %v7797
        %7921 = vmatprep.subr.mxu0 0.0
        %7922 = vmatpush1.msra.mxu0 %v7798
        %7923 = vmatprep.subr.mxu0 0.0
        %7924 = vmatpush1.msra.mxu0 %v7799
        %7925 = vmatprep.subr.mxu0 0.0
        %7926 = vmatpush1.msra.mxu0 %v7800
        %7927 = vmatprep.subr.mxu0 0.0
        %7928 = vmatpush1.msra.mxu0 %v7801
        %7929 = vmatprep.subr.mxu0 0.0
        %7930 = vmatpush1.msra.mxu0 %v7802
        %7931 = vmatprep.subr.mxu0 0.0
        %7932 = vmatpush1.msra.mxu0 %v7803
        %7933 = vmatprep.subr.mxu0 0.0
        %7934 = vmatpush1.msra.mxu0 0.0
        %7935 = vmatprep.subr.mxu0 0.0
        %7936 = vmatpush1.msra.mxu0 0.0
        %7937 = vmatprep.subr.mxu0 0.0
        %7938 = vmatpush1.msra.mxu0 0.0
        %7939 = vmatprep.subr.mxu0 0.0
        %7940 = vmatpush1.msra.mxu0 0.0
        %7941 = vmatprep.subr.mxu0 0.0
        %7942 = vmatpush1.msra.mxu0 0.0
        %7943 = vmatprep.subr.mxu0 0.0
        %7944 = vmatpush1.msra.mxu0 0.0
        %7945 = vmatprep.subr.mxu0 0.0
        %7946 = vmatpush1.msra.mxu0 0.0
        %7947 = vmatprep.subr.mxu0 0.0
        %7948 = vmatpush1.msra.mxu0 0.0
        %7949 = vmatprep.subr.mxu0 0.0
        %7950 = vmatpush1.msra.mxu0 0.0
        %7951 = vmatprep.subr.mxu0 0.0
        %7952 = vmatpush1.msra.mxu0 0.0
        %7953 = vmatprep.subr.mxu0 0.0
        %7954 = vmatpush1.msra.mxu0 0.0
        %7955 = vmatprep.subr.mxu0 0.0
        %7956 = vmatpush1.msra.mxu0 0.0
        %7957 = vmatprep.subr.mxu0 0.0
        %7958 = vmatpush1.msra.mxu0 0.0
        %7959 = vmatprep.subr.mxu0 0.0
        %7960 = vmatpush1.msra.mxu0 0.0
        %7961 = vmatprep.subr.mxu0 0.0
        %7962 = vmatpush1.msra.mxu0 0.0
        %7963 = vmatprep.subr.mxu0 0.0
        %7964 = vmatpush1.msra.mxu0 0.0
        %7965 = vmatprep.mubr.f32.mxu0 0.0
        %7966 = vmatmul.mubr.f32.gmra.mrb[0].mxu0 %v7899
        %v7967 = vpop.f32.mrb[0].mxu0
        %v7968 = vadd.f32 %v7895, %v7967
        %v7969 = vpop.f32.mrb[0].mxu0
        %7970 = vdwg.mxu0
        %s7971 = scalar_lea.vmem %s5, 256
        %v7972 = vld [vmem:[%s7971] sm:$0xff]
        %v7973 = vld [vmem:[%s7971 + $0x8] sm:$0xff]
        %v7974 = vld [vmem:[%s7971 + $0x10] sm:$0xff]
        %v7975 = vld [vmem:[%s7971 + $0x18] sm:$0xff]
        %v7976 = vld [vmem:[%s7971 + $0x20] sm:$0xff]
        %v7977 = vld [vmem:[%s7971 + $0x28] sm:$0xff]
        %v7978 = vld [vmem:[%s7971 + $0x30] sm:$0xff]
        %v7979 = vld [vmem:[%s7971 + $0x38] sm:$0xff]
        %v7980 = vld [vmem:[%s7971 + $0x40] sm:$0xff]
        %v7981 = vld [vmem:[%s7971 + $0x48] sm:$0xff]
        %v7982 = vld [vmem:[%s7971 + $0x50] sm:$0xff]
        %v7983 = vld [vmem:[%s7971 + $0x58] sm:$0xff]
        %v7984 = vld [vmem:[%s7971 + $0x60] sm:$0xff]
        %v7985 = vld [vmem:[%s7971 + $0x68] sm:$0xff]
        %v7986 = vld [vmem:[%s7971 + $0x70] sm:$0xff]
        %v7987 = vld [vmem:[%s7971 + $0x78] sm:$0xff]
        %v7988 = vrot.slane %v7786, 4
        %v7989 = vrot.slane %v7787, 3
        %v7990 = vsel %vm7825, %v7989, %v7988
        %7992 = vmatprep.subr.mxu0 0.0
        %7993 = vmatpush1.msra.mxu0 %v7972
        %7994 = vmatprep.subr.mxu0 0.0
        %7995 = vmatpush1.msra.mxu0 %v7973
        %7996 = vmatprep.subr.mxu0 0.0
        %7997 = vmatpush1.msra.mxu0 %v7974
        %7998 = vmatprep.subr.mxu0 0.0
        %7999 = vmatpush1.msra.mxu0 %v7975
        %8000 = vmatprep.subr.mxu0 0.0
        %8001 = vmatpush1.msra.mxu0 %v7976
        %8002 = vmatprep.subr.mxu0 0.0
        %8003 = vmatpush1.msra.mxu0 %v7977
        %8004 = vmatprep.subr.mxu0 0.0
        %8005 = vmatpush1.msra.mxu0 %v7978
        %8006 = vmatprep.subr.mxu0 0.0
        %8007 = vmatpush1.msra.mxu0 %v7979
        %8008 = vmatprep.subr.mxu0 0.0
        %8009 = vmatpush1.msra.mxu0 %v7980
        %8010 = vmatprep.subr.mxu0 0.0
        %8011 = vmatpush1.msra.mxu0 %v7981
        %8012 = vmatprep.subr.mxu0 0.0
        %8013 = vmatpush1.msra.mxu0 %v7982
        %8014 = vmatprep.subr.mxu0 0.0
        %8015 = vmatpush1.msra.mxu0 %v7983
        %8016 = vmatprep.subr.mxu0 0.0
        %8017 = vmatpush1.msra.mxu0 %v7984
        %8018 = vmatprep.subr.mxu0 0.0
        %8019 = vmatpush1.msra.mxu0 %v7985
        %8020 = vmatprep.subr.mxu0 0.0
        %8021 = vmatpush1.msra.mxu0 %v7986
        %8022 = vmatprep.subr.mxu0 0.0
        %8023 = vmatpush1.msra.mxu0 %v7987
        %8024 = vmatprep.subr.mxu0 0.0
        %8025 = vmatpush1.msra.mxu0 0.0
        %8026 = vmatprep.subr.mxu0 0.0
        %8027 = vmatpush1.msra.mxu0 0.0
        %8028 = vmatprep.subr.mxu0 0.0
        %8029 = vmatpush1.msra.mxu0 0.0
        %8030 = vmatprep.subr.mxu0 0.0
        %8031 = vmatpush1.msra.mxu0 0.0
        %8032 = vmatprep.subr.mxu0 0.0
        %8033 = vmatpush1.msra.mxu0 0.0
        %8034 = vmatprep.subr.mxu0 0.0
        %8035 = vmatpush1.msra.mxu0 0.0
        %8036 = vmatprep.subr.mxu0 0.0
        %8037 = vmatpush1.msra.mxu0 0.0
        %8038 = vmatprep.subr.mxu0 0.0
        %8039 = vmatpush1.msra.mxu0 0.0
        %8040 = vmatprep.subr.mxu0 0.0
        %8041 = vmatpush1.msra.mxu0 0.0
        %8042 = vmatprep.subr.mxu0 0.0
        %8043 = vmatpush1.msra.mxu0 0.0
        %8044 = vmatprep.subr.mxu0 0.0
        %8045 = vmatpush1.msra.mxu0 0.0
        %8046 = vmatprep.subr.mxu0 0.0
        %8047 = vmatpush1.msra.mxu0 0.0
        %8048 = vmatprep.subr.mxu0 0.0
        %8049 = vmatpush1.msra.mxu0 0.0
        %8050 = vmatprep.subr.mxu0 0.0
        %8051 = vmatpush1.msra.mxu0 0.0
        %8052 = vmatprep.subr.mxu0 0.0
        %8053 = vmatpush1.msra.mxu0 0.0
        %8054 = vmatprep.subr.mxu0 0.0
        %8055 = vmatpush1.msra.mxu0 0.0
        %8056 = vmatprep.mubr.f32.mxu0 0.0
        %8057 = vmatmul.mubr.f32.gmra.mrb[0].mxu0 %v7990
        %v8058 = vpop.f32.mrb[0].mxu0
        %v8059 = vadd.f32 0.0, %v8058
        %v8060 = vpop.f32.mrb[0].mxu0
        %8061 = vdwg.mxu0
        %v8062 = vadd.f32 %v7968, %v8059
        %s8063 = scalar_lea.vmem %s5, 384
        %v8064 = vld [vmem:[%s8063] sm:$0xff]
        %v8065 = vld [vmem:[%s8063 + $0x8] sm:$0xff]
        %v8066 = vld [vmem:[%s8063 + $0x10] sm:$0xff]
        %v8067 = vld [vmem:[%s8063 + $0x18] sm:$0xff]
        %v8068 = vld [vmem:[%s8063 + $0x20] sm:$0xff]
        %v8069 = vld [vmem:[%s8063 + $0x28] sm:$0xff]
        %v8070 = vld [vmem:[%s8063 + $0x30] sm:$0xff]
        %v8071 = vld [vmem:[%s8063 + $0x38] sm:$0xff]
        %v8072 = vld [vmem:[%s8063 + $0x40] sm:$0xff]
        %v8073 = vld [vmem:[%s8063 + $0x48] sm:$0xff]
        %v8074 = vld [vmem:[%s8063 + $0x50] sm:$0xff]
        %v8075 = vld [vmem:[%s8063 + $0x58] sm:$0xff]
        %v8076 = vld [vmem:[%s8063 + $0x60] sm:$0xff]
        %v8077 = vld [vmem:[%s8063 + $0x68] sm:$0xff]
        %v8078 = vld [vmem:[%s8063 + $0x70] sm:$0xff]
        %v8079 = vld [vmem:[%s8063 + $0x78] sm:$0xff]
        %v8080 = vrot.slane %v7786, 6
        %v8081 = vrot.slane %v7787, 5
        %v8082 = vsel %vm7825, %v8081, %v8080
        %8084 = vmatprep.subr.mxu0 0.0
        %8085 = vmatpush1.msra.mxu0 %v8064
        %8086 = vmatprep.subr.mxu0 0.0
        %8087 = vmatpush1.msra.mxu0 %v8065
        %8088 = vmatprep.subr.mxu0 0.0
        %8089 = vmatpush1.msra.mxu0 %v8066
        %8090 = vmatprep.subr.mxu0 0.0
        %8091 = vmatpush1.msra.mxu0 %v8067
        %8092 = vmatprep.subr.mxu0 0.0
        %8093 = vmatpush1.msra.mxu0 %v8068
        %8094 = vmatprep.subr.mxu0 0.0
        %8095 = vmatpush1.msra.mxu0 %v8069
        %8096 = vmatprep.subr.mxu0 0.0
        %8097 = vmatpush1.msra.mxu0 %v8070
        %8098 = vmatprep.subr.mxu0 0.0
        %8099 = vmatpush1.msra.mxu0 %v8071
        %8100 = vmatprep.subr.mxu0 0.0
        %8101 = vmatpush1.msra.mxu0 %v8072
        %8102 = vmatprep.subr.mxu0 0.0
        %8103 = vmatpush1.msra.mxu0 %v8073
        %8104 = vmatprep.subr.mxu0 0.0
        %8105 = vmatpush1.msra.mxu0 %v8074
        %8106 = vmatprep.subr.mxu0 0.0
        %8107 = vmatpush1.msra.mxu0 %v8075
        %8108 = vmatprep.subr.mxu0 0.0
        %8109 = vmatpush1.msra.mxu0 %v8076
        %8110 = vmatprep.subr.mxu0 0.0
        %8111 = vmatpush1.msra.mxu0 %v8077
        %8112 = vmatprep.subr.mxu0 0.0
        %8113 = vmatpush1.msra.mxu0 %v8078
        %8114 = vmatprep.subr.mxu0 0.0
        %8115 = vmatpush1.msra.mxu0 %v8079
        %8116 = vmatprep.subr.mxu0 0.0
        %8117 = vmatpush1.msra.mxu0 0.0
        %8118 = vmatprep.subr.mxu0 0.0
        %8119 = vmatpush1.msra.mxu0 0.0
        %8120 = vmatprep.subr.mxu0 0.0
        %8121 = vmatpush1.msra.mxu0 0.0
        %8122 = vmatprep.subr.mxu0 0.0
        %8123 = vmatpush1.msra.mxu0 0.0
        %8124 = vmatprep.subr.mxu0 0.0
        %8125 = vmatpush1.msra.mxu0 0.0
        %8126 = vmatprep.subr.mxu0 0.0
        %8127 = vmatpush1.msra.mxu0 0.0
        %8128 = vmatprep.subr.mxu0 0.0
        %8129 = vmatpush1.msra.mxu0 0.0
        %8130 = vmatprep.subr.mxu0 0.0
        %8131 = vmatpush1.msra.mxu0 0.0
        %8132 = vmatprep.subr.mxu0 0.0
        %8133 = vmatpush1.msra.mxu0 0.0
        %8134 = vmatprep.subr.mxu0 0.0
        %8135 = vmatpush1.msra.mxu0 0.0
        %8136 = vmatprep.subr.mxu0 0.0
        %8137 = vmatpush1.msra.mxu0 0.0
        %8138 = vmatprep.subr.mxu0 0.0
        %8139 = vmatpush1.msra.mxu0 0.0
        %8140 = vmatprep.subr.mxu0 0.0
        %8141 = vmatpush1.msra.mxu0 0.0
        %8142 = vmatprep.subr.mxu0 0.0
        %8143 = vmatpush1.msra.mxu0 0.0
        %8144 = vmatprep.subr.mxu0 0.0
        %8145 = vmatpush1.msra.mxu0 0.0
        %8146 = vmatprep.subr.mxu0 0.0
        %8147 = vmatpush1.msra.mxu0 0.0
        %8148 = vmatprep.mubr.f32.mxu0 0.0
        %8149 = vmatmul.mubr.f32.gmra.mrb[0].mxu0 %v8082
        %v8150 = vpop.f32.mrb[0].mxu0
        %v8151 = vadd.f32 0.0, %v8150
        %v8152 = vpop.f32.mrb[0].mxu0
        %8153 = vdwg.mxu0
        %v8154 = vadd.f32 %v8062, %v8151
        %v8155 = vmax.f32 %v7764, %v7765
        %v8156 = vmax.f32 %v7772, %v7773
        %v8159 = vrot.slane %v8155, 1
        %v8160 = vrot.slane %v8156, 1
        %v8163 = vmax.f32 %v8155, %v8159
        %v8164 = vmax.f32 %v8156, %v8160
        %s8165 = scalar_lea.vmem %s5, 512
        %v8166 = vld [vmem:[%s8165] sm:$0xff]
        %v8167 = vld [vmem:[%s8165 + $0x8] sm:$0xff]
        %v8168 = vld [vmem:[%s8165 + $0x10] sm:$0xff]
        %v8169 = vld [vmem:[%s8165 + $0x18] sm:$0xff]
        %v8170 = vld [vmem:[%s8165 + $0x20] sm:$0xff]
        %v8171 = vld [vmem:[%s8165 + $0x28] sm:$0xff]
        %v8172 = vld [vmem:[%s8165 + $0x30] sm:$0xff]
        %v8173 = vld [vmem:[%s8165 + $0x38] sm:$0xff]
        %v8174 = vld [vmem:[%s8165 + $0x40] sm:$0xff]
        %v8175 = vld [vmem:[%s8165 + $0x48] sm:$0xff]
        %v8176 = vld [vmem:[%s8165 + $0x50] sm:$0xff]
        %v8177 = vld [vmem:[%s8165 + $0x58] sm:$0xff]
        %v8178 = vld [vmem:[%s8165 + $0x60] sm:$0xff]
        %v8179 = vld [vmem:[%s8165 + $0x68] sm:$0xff]
        %v8180 = vld [vmem:[%s8165 + $0x70] sm:$0xff]
        %v8181 = vld [vmem:[%s8165 + $0x78] sm:$0xff]
        %v8184 = vrot.slane %v8164, 7
        %v8185 = vsel %vm7825, %v8184, %v8163
        %8187 = vmatprep.subr.mxu0 0.0
        %8188 = vmatpush1.msra.mxu0 %v8166
        %8189 = vmatprep.subr.mxu0 0.0
        %8190 = vmatpush1.msra.mxu0 %v8167
        %8191 = vmatprep.subr.mxu0 0.0
        %8192 = vmatpush1.msra.mxu0 %v8168
        %8193 = vmatprep.subr.mxu0 0.0
        %8194 = vmatpush1.msra.mxu0 %v8169
        %8195 = vmatprep.subr.mxu0 0.0
        %8196 = vmatpush1.msra.mxu0 %v8170
        %8197 = vmatprep.subr.mxu0 0.0
        %8198 = vmatpush1.msra.mxu0 %v8171
        %8199 = vmatprep.subr.mxu0 0.0
        %8200 = vmatpush1.msra.mxu0 %v8172
        %8201 = vmatprep.subr.mxu0 0.0
        %8202 = vmatpush1.msra.mxu0 %v8173
        %8203 = vmatprep.subr.mxu0 0.0
        %8204 = vmatpush1.msra.mxu0 %v8174
        %8205 = vmatprep.subr.mxu0 0.0
        %8206 = vmatpush1.msra.mxu0 %v8175
        %8207 = vmatprep.subr.mxu0 0.0
        %8208 = vmatpush1.msra.mxu0 %v8176
        %8209 = vmatprep.subr.mxu0 0.0
        %8210 = vmatpush1.msra.mxu0 %v8177
        %8211 = vmatprep.subr.mxu0 0.0
        %8212 = vmatpush1.msra.mxu0 %v8178
        %8213 = vmatprep.subr.mxu0 0.0
        %8214 = vmatpush1.msra.mxu0 %v8179
        %8215 = vmatprep.subr.mxu0 0.0
        %8216 = vmatpush1.msra.mxu0 %v8180
        %8217 = vmatprep.subr.mxu0 0.0
        %8218 = vmatpush1.msra.mxu0 %v8181
        %8219 = vmatprep.subr.mxu0 0.0
        %8220 = vmatpush1.msra.mxu0 0.0
        %8221 = vmatprep.subr.mxu0 0.0
        %8222 = vmatpush1.msra.mxu0 0.0
        %8223 = vmatprep.subr.mxu0 0.0
        %8224 = vmatpush1.msra.mxu0 0.0
        %8225 = vmatprep.subr.mxu0 0.0
        %8226 = vmatpush1.msra.mxu0 0.0
        %8227 = vmatprep.subr.mxu0 0.0
        %8228 = vmatpush1.msra.mxu0 0.0
        %8229 = vmatprep.subr.mxu0 0.0
        %8230 = vmatpush1.msra.mxu0 0.0
        %8231 = vmatprep.subr.mxu0 0.0
        %8232 = vmatpush1.msra.mxu0 0.0
        %8233 = vmatprep.subr.mxu0 0.0
        %8234 = vmatpush1.msra.mxu0 0.0
        %8235 = vmatprep.subr.mxu0 0.0
        %8236 = vmatpush1.msra.mxu0 0.0
        %8237 = vmatprep.subr.mxu0 0.0
        %8238 = vmatpush1.msra.mxu0 0.0
        %8239 = vmatprep.subr.mxu0 0.0
        %8240 = vmatpush1.msra.mxu0 0.0
        %8241 = vmatprep.subr.mxu0 0.0
        %8242 = vmatpush1.msra.mxu0 0.0
        %8243 = vmatprep.subr.mxu0 0.0
        %8244 = vmatpush1.msra.mxu0 0.0
        %8245 = vmatprep.subr.mxu0 0.0
        %8246 = vmatpush1.msra.mxu0 0.0
        %8247 = vmatprep.subr.mxu0 0.0
        %8248 = vmatpush1.msra.mxu0 0.0
        %8249 = vmatprep.subr.mxu0 0.0
        %8250 = vmatpush1.msra.mxu0 0.0
        %8251 = vmatprep.mubr.f32.mxu0 0.0
        %8252 = vmatmul.mubr.f32.gmra.mrb[0].mxu0 %v8185
        %v8253 = vpop.f32.mrb[0].mxu0
        %v8254 = vadd.f32 0.0, %v8253
        %v8255 = vpop.f32.mrb[0].mxu0
        %8256 = vdwg.mxu0
        %v8257 = vadd.f32 %v8154, %v8254
        %s8258 = scalar_lea.vmem %s5, 640
        %v8259 = vld [vmem:[%s8258] sm:$0xff]
        %v8260 = vld [vmem:[%s8258 + $0x8] sm:$0xff]
        %v8261 = vld [vmem:[%s8258 + $0x10] sm:$0xff]
        %v8262 = vld [vmem:[%s8258 + $0x18] sm:$0xff]
        %v8263 = vld [vmem:[%s8258 + $0x20] sm:$0xff]
        %v8264 = vld [vmem:[%s8258 + $0x28] sm:$0xff]
        %v8265 = vld [vmem:[%s8258 + $0x30] sm:$0xff]
        %v8266 = vld [vmem:[%s8258 + $0x38] sm:$0xff]
        %v8267 = vld [vmem:[%s8258 + $0x40] sm:$0xff]
        %v8268 = vld [vmem:[%s8258 + $0x48] sm:$0xff]
        %v8269 = vld [vmem:[%s8258 + $0x50] sm:$0xff]
        %v8270 = vld [vmem:[%s8258 + $0x58] sm:$0xff]
        %v8271 = vld [vmem:[%s8258 + $0x60] sm:$0xff]
        %v8272 = vld [vmem:[%s8258 + $0x68] sm:$0xff]
        %v8273 = vld [vmem:[%s8258 + $0x70] sm:$0xff]
        %v8274 = vld [vmem:[%s8258 + $0x78] sm:$0xff]
        %v8275 = vrot.slane %v8163, 2
        %v8276 = vrot.slane %v8164, 1
        %v8277 = vsel %vm7825, %v8276, %v8275
        %8279 = vmatprep.subr.mxu0 0.0
        %8280 = vmatpush1.msra.mxu0 %v8259
        %8281 = vmatprep.subr.mxu0 0.0
        %8282 = vmatpush1.msra.mxu0 %v8260
        %8283 = vmatprep.subr.mxu0 0.0
        %8284 = vmatpush1.msra.mxu0 %v8261
        %8285 = vmatprep.subr.mxu0 0.0
        %8286 = vmatpush1.msra.mxu0 %v8262
        %8287 = vmatprep.subr.mxu0 0.0
        %8288 = vmatpush1.msra.mxu0 %v8263
        %8289 = vmatprep.subr.mxu0 0.0
        %8290 = vmatpush1.msra.mxu0 %v8264
        %8291 = vmatprep.subr.mxu0 0.0
        %8292 = vmatpush1.msra.mxu0 %v8265
        %8293 = vmatprep.subr.mxu0 0.0
        %8294 = vmatpush1.msra.mxu0 %v8266
        %8295 = vmatprep.subr.mxu0 0.0
        %8296 = vmatpush1.msra.mxu0 %v8267
        %8297 = vmatprep.subr.mxu0 0.0
        %8298 = vmatpush1.msra.mxu0 %v8268
        %8299 = vmatprep.subr.mxu0 0.0
        %8300 = vmatpush1.msra.mxu0 %v8269
        %8301 = vmatprep.subr.mxu0 0.0
        %8302 = vmatpush1.msra.mxu0 %v8270
        %8303 = vmatprep.subr.mxu0 0.0
        %8304 = vmatpush1.msra.mxu0 %v8271
        %8305 = vmatprep.subr.mxu0 0.0
        %8306 = vmatpush1.msra.mxu0 %v8272
        %8307 = vmatprep.subr.mxu0 0.0
        %8308 = vmatpush1.msra.mxu0 %v8273
        %8309 = vmatprep.subr.mxu0 0.0
        %8310 = vmatpush1.msra.mxu0 %v8274
        %8311 = vmatprep.subr.mxu0 0.0
        %8312 = vmatpush1.msra.mxu0 0.0
        %8313 = vmatprep.subr.mxu0 0.0
        %8314 = vmatpush1.msra.mxu0 0.0
        %8315 = vmatprep.subr.mxu0 0.0
        %8316 = vmatpush1.msra.mxu0 0.0
        %8317 = vmatprep.subr.mxu0 0.0
        %8318 = vmatpush1.msra.mxu0 0.0
        %8319 = vmatprep.subr.mxu0 0.0
        %8320 = vmatpush1.msra.mxu0 0.0
        %8321 = vmatprep.subr.mxu0 0.0
        %8322 = vmatpush1.msra.mxu0 0.0
        %8323 = vmatprep.subr.mxu0 0.0
        %8324 = vmatpush1.msra.mxu0 0.0
        %8325 = vmatprep.subr.mxu0 0.0
        %8326 = vmatpush1.msra.mxu0 0.0
        %8327 = vmatprep.subr.mxu0 0.0
        %8328 = vmatpush1.msra.mxu0 0.0
        %8329 = vmatprep.subr.mxu0 0.0
        %8330 = vmatpush1.msra.mxu0 0.0
        %8331 = vmatprep.subr.mxu0 0.0
        %8332 = vmatpush1.msra.mxu0 0.0
        %8333 = vmatprep.subr.mxu0 0.0
        %8334 = vmatpush1.msra.mxu0 0.0
        %8335 = vmatprep.subr.mxu0 0.0
        %8336 = vmatpush1.msra.mxu0 0.0
        %8337 = vmatprep.subr.mxu0 0.0
        %8338 = vmatpush1.msra.mxu0 0.0
        %8339 = vmatprep.subr.mxu0 0.0
        %8340 = vmatpush1.msra.mxu0 0.0
        %8341 = vmatprep.subr.mxu0 0.0
        %8342 = vmatpush1.msra.mxu0 0.0
        %8343 = vmatprep.mubr.f32.mxu0 0.0
        %8344 = vmatmul.mubr.f32.gmra.mrb[0].mxu0 %v8277
        %v8345 = vpop.f32.mrb[0].mxu0
        %v8346 = vadd.f32 0.0, %v8345
        %v8347 = vpop.f32.mrb[0].mxu0
        %8348 = vdwg.mxu0
        %v8349 = vadd.f32 %v8257, %v8346
        %s8350 = scalar_lea.vmem %s5, 768
        %v8351 = vld [vmem:[%s8350] sm:$0xff]
        %v8352 = vld [vmem:[%s8350 + $0x8] sm:$0xff]
        %v8353 = vld [vmem:[%s8350 + $0x10] sm:$0xff]
        %v8354 = vld [vmem:[%s8350 + $0x18] sm:$0xff]
        %v8355 = vld [vmem:[%s8350 + $0x20] sm:$0xff]
        %v8356 = vld [vmem:[%s8350 + $0x28] sm:$0xff]
        %v8357 = vld [vmem:[%s8350 + $0x30] sm:$0xff]
        %v8358 = vld [vmem:[%s8350 + $0x38] sm:$0xff]
        %v8359 = vld [vmem:[%s8350 + $0x40] sm:$0xff]
        %v8360 = vld [vmem:[%s8350 + $0x48] sm:$0xff]
        %v8361 = vld [vmem:[%s8350 + $0x50] sm:$0xff]
        %v8362 = vld [vmem:[%s8350 + $0x58] sm:$0xff]
        %v8363 = vld [vmem:[%s8350 + $0x60] sm:$0xff]
        %v8364 = vld [vmem:[%s8350 + $0x68] sm:$0xff]
        %v8365 = vld [vmem:[%s8350 + $0x70] sm:$0xff]
        %v8366 = vld [vmem:[%s8350 + $0x78] sm:$0xff]
        %v8367 = vrot.slane %v8163, 4
        %v8368 = vrot.slane %v8164, 3
        %v8369 = vsel %vm7825, %v8368, %v8367
        %8371 = vmatprep.subr.mxu0 0.0
        %8372 = vmatpush1.msra.mxu0 %v8351
        %8373 = vmatprep.subr.mxu0 0.0
        %8374 = vmatpush1.msra.mxu0 %v8352
        %8375 = vmatprep.subr.mxu0 0.0
        %8376 = vmatpush1.msra.mxu0 %v8353
        %8377 = vmatprep.subr.mxu0 0.0
        %8378 = vmatpush1.msra.mxu0 %v8354
        %8379 = vmatprep.subr.mxu0 0.0
        %8380 = vmatpush1.msra.mxu0 %v8355
        %8381 = vmatprep.subr.mxu0 0.0
        %8382 = vmatpush1.msra.mxu0 %v8356
        %8383 = vmatprep.subr.mxu0 0.0
        %8384 = vmatpush1.msra.mxu0 %v8357
        %8385 = vmatprep.subr.mxu0 0.0
        %8386 = vmatpush1.msra.mxu0 %v8358
        %8387 = vmatprep.subr.mxu0 0.0
        %8388 = vmatpush1.msra.mxu0 %v8359
        %8389 = vmatprep.subr.mxu0 0.0
        %8390 = vmatpush1.msra.mxu0 %v8360
        %8391 = vmatprep.subr.mxu0 0.0
        %8392 = vmatpush1.msra.mxu0 %v8361
        %8393 = vmatprep.subr.mxu0 0.0
        %8394 = vmatpush1.msra.mxu0 %v8362
        %8395 = vmatprep.subr.mxu0 0.0
        %8396 = vmatpush1.msra.mxu0 %v8363
        %8397 = vmatprep.subr.mxu0 0.0
        %8398 = vmatpush1.msra.mxu0 %v8364
        %8399 = vmatprep.subr.mxu0 0.0
        %8400 = vmatpush1.msra.mxu0 %v8365
        %8401 = vmatprep.subr.mxu0 0.0
        %8402 = vmatpush1.msra.mxu0 %v8366
        %8403 = vmatprep.subr.mxu0 0.0
        %8404 = vmatpush1.msra.mxu0 0.0
        %8405 = vmatprep.subr.mxu0 0.0
        %8406 = vmatpush1.msra.mxu0 0.0
        %8407 = vmatprep.subr.mxu0 0.0
        %8408 = vmatpush1.msra.mxu0 0.0
        %8409 = vmatprep.subr.mxu0 0.0
        %8410 = vmatpush1.msra.mxu0 0.0
        %8411 = vmatprep.subr.mxu0 0.0
        %8412 = vmatpush1.msra.mxu0 0.0
        %8413 = vmatprep.subr.mxu0 0.0
        %8414 = vmatpush1.msra.mxu0 0.0
        %8415 = vmatprep.subr.mxu0 0.0
        %8416 = vmatpush1.msra.mxu0 0.0
        %8417 = vmatprep.subr.mxu0 0.0
        %8418 = vmatpush1.msra.mxu0 0.0
        %8419 = vmatprep.subr.mxu0 0.0
        %8420 = vmatpush1.msra.mxu0 0.0
        %8421 = vmatprep.subr.mxu0 0.0
        %8422 = vmatpush1.msra.mxu0 0.0
        %8423 = vmatprep.subr.mxu0 0.0
        %8424 = vmatpush1.msra.mxu0 0.0
        %8425 = vmatprep.subr.mxu0 0.0
        %8426 = vmatpush1.msra.mxu0 0.0
        %8427 = vmatprep.subr.mxu0 0.0
        %8428 = vmatpush1.msra.mxu0 0.0
        %8429 = vmatprep.subr.mxu0 0.0
        %8430 = vmatpush1.msra.mxu0 0.0
        %8431 = vmatprep.subr.mxu0 0.0
        %8432 = vmatpush1.msra.mxu0 0.0
        %8433 = vmatprep.subr.mxu0 0.0
        %8434 = vmatpush1.msra.mxu0 0.0
        %8435 = vmatprep.mubr.f32.mxu0 0.0
        %8436 = vmatmul.mubr.f32.gmra.mrb[0].mxu0 %v8369
        %v8437 = vpop.f32.mrb[0].mxu0
        %v8438 = vadd.f32 0.0, %v8437
        %v8439 = vpop.f32.mrb[0].mxu0
        %8440 = vdwg.mxu0
        %v8441 = vadd.f32 %v8349, %v8438
        %s8442 = scalar_lea.vmem %s5, 896
        %v8443 = vld [vmem:[%s8442] sm:$0xff]
        %v8444 = vld [vmem:[%s8442 + $0x8] sm:$0xff]
        %v8445 = vld [vmem:[%s8442 + $0x10] sm:$0xff]
        %v8446 = vld [vmem:[%s8442 + $0x18] sm:$0xff]
        %v8447 = vld [vmem:[%s8442 + $0x20] sm:$0xff]
        %v8448 = vld [vmem:[%s8442 + $0x28] sm:$0xff]
        %v8449 = vld [vmem:[%s8442 + $0x30] sm:$0xff]
        %v8450 = vld [vmem:[%s8442 + $0x38] sm:$0xff]
        %v8451 = vld [vmem:[%s8442 + $0x40] sm:$0xff]
        %v8452 = vld [vmem:[%s8442 + $0x48] sm:$0xff]
        %v8453 = vld [vmem:[%s8442 + $0x50] sm:$0xff]
        %v8454 = vld [vmem:[%s8442 + $0x58] sm:$0xff]
        %v8455 = vld [vmem:[%s8442 + $0x60] sm:$0xff]
        %v8456 = vld [vmem:[%s8442 + $0x68] sm:$0xff]
        %v8457 = vld [vmem:[%s8442 + $0x70] sm:$0xff]
        %v8458 = vld [vmem:[%s8442 + $0x78] sm:$0xff]
        %v8459 = vrot.slane %v8163, 6
        %v8460 = vrot.slane %v8164, 5
        %v8461 = vsel %vm7825, %v8460, %v8459
        %8463 = vmatprep.subr.mxu0 0.0
        %8464 = vmatpush1.msra.mxu0 %v8443
        %8465 = vmatprep.subr.mxu0 0.0
        %8466 = vmatpush1.msra.mxu0 %v8444
        %8467 = vmatprep.subr.mxu0 0.0
        %8468 = vmatpush1.msra.mxu0 %v8445
        %8469 = vmatprep.subr.mxu0 0.0
        %8470 = vmatpush1.msra.mxu0 %v8446
        %8471 = vmatprep.subr.mxu0 0.0
        %8472 = vmatpush1.msra.mxu0 %v8447
        %8473 = vmatprep.subr.mxu0 0.0
        %8474 = vmatpush1.msra.mxu0 %v8448
        %8475 = vmatprep.subr.mxu0 0.0
        %8476 = vmatpush1.msra.mxu0 %v8449
        %8477 = vmatprep.subr.mxu0 0.0
        %8478 = vmatpush1.msra.mxu0 %v8450
        %8479 = vmatprep.subr.mxu0 0.0
        %8480 = vmatpush1.msra.mxu0 %v8451
        %8481 = vmatprep.subr.mxu0 0.0
        %8482 = vmatpush1.msra.mxu0 %v8452
        %8483 = vmatprep.subr.mxu0 0.0
        %8484 = vmatpush1.msra.mxu0 %v8453
        %8485 = vmatprep.subr.mxu0 0.0
        %8486 = vmatpush1.msra.mxu0 %v8454
        %8487 = vmatprep.subr.mxu0 0.0
        %8488 = vmatpush1.msra.mxu0 %v8455
        %8489 = vmatprep.subr.mxu0 0.0
        %8490 = vmatpush1.msra.mxu0 %v8456
        %8491 = vmatprep.subr.mxu0 0.0
        %8492 = vmatpush1.msra.mxu0 %v8457
        %8493 = vmatprep.subr.mxu0 0.0
        %8494 = vmatpush1.msra.mxu0 %v8458
        %8495 = vmatprep.subr.mxu0 0.0
        %8496 = vmatpush1.msra.mxu0 0.0
        %8497 = vmatprep.subr.mxu0 0.0
        %8498 = vmatpush1.msra.mxu0 0.0
        %8499 = vmatprep.subr.mxu0 0.0
        %8500 = vmatpush1.msra.mxu0 0.0
        %8501 = vmatprep.subr.mxu0 0.0
        %8502 = vmatpush1.msra.mxu0 0.0
        %8503 = vmatprep.subr.mxu0 0.0
        %8504 = vmatpush1.msra.mxu0 0.0
        %8505 = vmatprep.subr.mxu0 0.0
        %8506 = vmatpush1.msra.mxu0 0.0
        %8507 = vmatprep.subr.mxu0 0.0
        %8508 = vmatpush1.msra.mxu0 0.0
        %8509 = vmatprep.subr.mxu0 0.0
        %8510 = vmatpush1.msra.mxu0 0.0
        %8511 = vmatprep.subr.mxu0 0.0
        %8512 = vmatpush1.msra.mxu0 0.0
        %8513 = vmatprep.subr.mxu0 0.0
        %8514 = vmatpush1.msra.mxu0 0.0
        %8515 = vmatprep.subr.mxu0 0.0
        %8516 = vmatpush1.msra.mxu0 0.0
        %8517 = vmatprep.subr.mxu0 0.0
        %8518 = vmatpush1.msra.mxu0 0.0
        %8519 = vmatprep.subr.mxu0 0.0
        %8520 = vmatpush1.msra.mxu0 0.0
        %8521 = vmatprep.subr.mxu0 0.0
        %8522 = vmatpush1.msra.mxu0 0.0
        %8523 = vmatprep.subr.mxu0 0.0
        %8524 = vmatpush1.msra.mxu0 0.0
        %8525 = vmatprep.subr.mxu0 0.0
        %8526 = vmatpush1.msra.mxu0 0.0
        %8527 = vmatprep.mubr.f32.mxu0 0.0
        %8528 = vmatmul.mubr.f32.gmra.mrb[0].mxu0 %v8461
        %v8529 = vpop.f32.mrb[0].mxu0
        %v8530 = vadd.f32 0.0, %v8529
        %v8531 = vpop.f32.mrb[0].mxu0
        %8532 = vdwg.mxu0
        %v8533 = vadd.f32 %v8441, %v8530
        %v8534 = vmax.f32 %v7766, %v7767
        %v8535 = vmax.f32 %v7774, %v7775
        %v8538 = vrot.slane %v8534, 1
        %v8539 = vrot.slane %v8535, 1
        %v8542 = vmax.f32 %v8534, %v8538
        %v8543 = vmax.f32 %v8535, %v8539
        %s8544 = scalar_lea.vmem %s5, 1024
        %v8545 = vld [vmem:[%s8544] sm:$0xff]
        %v8546 = vld [vmem:[%s8544 + $0x8] sm:$0xff]
        %v8547 = vld [vmem:[%s8544 + $0x10] sm:$0xff]
        %v8548 = vld [vmem:[%s8544 + $0x18] sm:$0xff]
        %v8549 = vld [vmem:[%s8544 + $0x20] sm:$0xff]
        %v8550 = vld [vmem:[%s8544 + $0x28] sm:$0xff]
        %v8551 = vld [vmem:[%s8544 + $0x30] sm:$0xff]
        %v8552 = vld [vmem:[%s8544 + $0x38] sm:$0xff]
        %v8553 = vld [vmem:[%s8544 + $0x40] sm:$0xff]
        %v8554 = vld [vmem:[%s8544 + $0x48] sm:$0xff]
        %v8555 = vld [vmem:[%s8544 + $0x50] sm:$0xff]
        %v8556 = vld [vmem:[%s8544 + $0x58] sm:$0xff]
        %v8557 = vld [vmem:[%s8544 + $0x60] sm:$0xff]
        %v8558 = vld [vmem:[%s8544 + $0x68] sm:$0xff]
        %v8559 = vld [vmem:[%s8544 + $0x70] sm:$0xff]
        %v8560 = vld [vmem:[%s8544 + $0x78] sm:$0xff]
        %v8563 = vrot.slane %v8543, 7
        %v8564 = vsel %vm7825, %v8563, %v8542
        %8566 = vmatprep.subr.mxu0 0.0
        %8567 = vmatpush1.msra.mxu0 %v8545
        %8568 = vmatprep.subr.mxu0 0.0
        %8569 = vmatpush1.msra.mxu0 %v8546
        %8570 = vmatprep.subr.mxu0 0.0
        %8571 = vmatpush1.msra.mxu0 %v8547
        %8572 = vmatprep.subr.mxu0 0.0
        %8573 = vmatpush1.msra.mxu0 %v8548
        %8574 = vmatprep.subr.mxu0 0.0
        %8575 = vmatpush1.msra.mxu0 %v8549
        %8576 = vmatprep.subr.mxu0 0.0
        %8577 = vmatpush1.msra.mxu0 %v8550
        %8578 = vmatprep.subr.mxu0 0.0
        %8579 = vmatpush1.msra.mxu0 %v8551
        %8580 = vmatprep.subr.mxu0 0.0
        %8581 = vmatpush1.msra.mxu0 %v8552
        %8582 = vmatprep.subr.mxu0 0.0
        %8583 = vmatpush1.msra.mxu0 %v8553
        %8584 = vmatprep.subr.mxu0 0.0
        %8585 = vmatpush1.msra.mxu0 %v8554
        %8586 = vmatprep.subr.mxu0 0.0
        %8587 = vmatpush1.msra.mxu0 %v8555
        %8588 = vmatprep.subr.mxu0 0.0
        %8589 = vmatpush1.msra.mxu0 %v8556
        %8590 = vmatprep.subr.mxu0 0.0
        %8591 = vmatpush1.msra.mxu0 %v8557
        %8592 = vmatprep.subr.mxu0 0.0
        %8593 = vmatpush1.msra.mxu0 %v8558
        %8594 = vmatprep.subr.mxu0 0.0
        %8595 = vmatpush1.msra.mxu0 %v8559
        %8596 = vmatprep.subr.mxu0 0.0
        %8597 = vmatpush1.msra.mxu0 %v8560
        %8598 = vmatprep.subr.mxu0 0.0
        %8599 = vmatpush1.msra.mxu0 0.0
        %8600 = vmatprep.subr.mxu0 0.0
        %8601 = vmatpush1.msra.mxu0 0.0
        %8602 = vmatprep.subr.mxu0 0.0
        %8603 = vmatpush1.msra.mxu0 0.0
        %8604 = vmatprep.subr.mxu0 0.0
        %8605 = vmatpush1.msra.mxu0 0.0
        %8606 = vmatprep.subr.mxu0 0.0
        %8607 = vmatpush1.msra.mxu0 0.0
        %8608 = vmatprep.subr.mxu0 0.0
        %8609 = vmatpush1.msra.mxu0 0.0
        %8610 = vmatprep.subr.mxu0 0.0
        %8611 = vmatpush1.msra.mxu0 0.0
        %8612 = vmatprep.subr.mxu0 0.0
        %8613 = vmatpush1.msra.mxu0 0.0
        %8614 = vmatprep.subr.mxu0 0.0
        %8615 = vmatpush1.msra.mxu0 0.0
        %8616 = vmatprep.subr.mxu0 0.0
        %8617 = vmatpush1.msra.mxu0 0.0
        %8618 = vmatprep.subr.mxu0 0.0
        %8619 = vmatpush1.msra.mxu0 0.0
        %8620 = vmatprep.subr.mxu0 0.0
        %8621 = vmatpush1.msra.mxu0 0.0
        %8622 = vmatprep.subr.mxu0 0.0
        %8623 = vmatpush1.msra.mxu0 0.0
        %8624 = vmatprep.subr.mxu0 0.0
        %8625 = vmatpush1.msra.mxu0 0.0
        %8626 = vmatprep.subr.mxu0 0.0
        %8627 = vmatpush1.msra.mxu0 0.0
        %8628 = vmatprep.subr.mxu0 0.0
        %8629 = vmatpush1.msra.mxu0 0.0
        %8630 = vmatprep.mubr.f32.mxu0 0.0
        %8631 = vmatmul.mubr.f32.gmra.mrb[0].mxu0 %v8564
        %v8632 = vpop.f32.mrb[0].mxu0
        %v8633 = vadd.f32 0.0, %v8632
        %v8634 = vpop.f32.mrb[0].mxu0
        %8635 = vdwg.mxu0
        %v8636 = vadd.f32 %v8533, %v8633
        %s8637 = scalar_lea.vmem %s5, 1152
        %v8638 = vld [vmem:[%s8637] sm:$0xff]
        %v8639 = vld [vmem:[%s8637 + $0x8] sm:$0xff]
        %v8640 = vld [vmem:[%s8637 + $0x10] sm:$0xff]
        %v8641 = vld [vmem:[%s8637 + $0x18] sm:$0xff]
        %v8642 = vld [vmem:[%s8637 + $0x20] sm:$0xff]
        %v8643 = vld [vmem:[%s8637 + $0x28] sm:$0xff]
        %v8644 = vld [vmem:[%s8637 + $0x30] sm:$0xff]
        %v8645 = vld [vmem:[%s8637 + $0x38] sm:$0xff]
        %v8646 = vld [vmem:[%s8637 + $0x40] sm:$0xff]
        %v8647 = vld [vmem:[%s8637 + $0x48] sm:$0xff]
        %v8648 = vld [vmem:[%s8637 + $0x50] sm:$0xff]
        %v8649 = vld [vmem:[%s8637 + $0x58] sm:$0xff]
        %v8650 = vld [vmem:[%s8637 + $0x60] sm:$0xff]
        %v8651 = vld [vmem:[%s8637 + $0x68] sm:$0xff]
        %v8652 = vld [vmem:[%s8637 + $0x70] sm:$0xff]
        %v8653 = vld [vmem:[%s8637 + $0x78] sm:$0xff]
        %v8654 = vrot.slane %v8542, 2
        %v8655 = vrot.slane %v8543, 1
        %v8656 = vsel %vm7825, %v8655, %v8654
        %8658 = vmatprep.subr.mxu0 0.0
        %8659 = vmatpush1.msra.mxu0 %v8638
        %8660 = vmatprep.subr.mxu0 0.0
        %8661 = vmatpush1.msra.mxu0 %v8639
        %8662 = vmatprep.subr.mxu0 0.0
        %8663 = vmatpush1.msra.mxu0 %v8640
        %8664 = vmatprep.subr.mxu0 0.0
        %8665 = vmatpush1.msra.mxu0 %v8641
        %8666 = vmatprep.subr.mxu0 0.0
        %8667 = vmatpush1.msra.mxu0 %v8642
        %8668 = vmatprep.subr.mxu0 0.0
        %8669 = vmatpush1.msra.mxu0 %v8643
        %8670 = vmatprep.subr.mxu0 0.0
        %8671 = vmatpush1.msra.mxu0 %v8644
        %8672 = vmatprep.subr.mxu0 0.0
        %8673 = vmatpush1.msra.mxu0 %v8645
        %8674 = vmatprep.subr.mxu0 0.0
        %8675 = vmatpush1.msra.mxu0 %v8646
        %8676 = vmatprep.subr.mxu0 0.0
        %8677 = vmatpush1.msra.mxu0 %v8647
        %8678 = vmatprep.subr.mxu0 0.0
        %8679 = vmatpush1.msra.mxu0 %v8648
        %8680 = vmatprep.subr.mxu0 0.0
        %8681 = vmatpush1.msra.mxu0 %v8649
        %8682 = vmatprep.subr.mxu0 0.0
        %8683 = vmatpush1.msra.mxu0 %v8650
        %8684 = vmatprep.subr.mxu0 0.0
        %8685 = vmatpush1.msra.mxu0 %v8651
        %8686 = vmatprep.subr.mxu0 0.0
        %8687 = vmatpush1.msra.mxu0 %v8652
        %8688 = vmatprep.subr.mxu0 0.0
        %8689 = vmatpush1.msra.mxu0 %v8653
        %8690 = vmatprep.subr.mxu0 0.0
        %8691 = vmatpush1.msra.mxu0 0.0
        %8692 = vmatprep.subr.mxu0 0.0
        %8693 = vmatpush1.msra.mxu0 0.0
        %8694 = vmatprep.subr.mxu0 0.0
        %8695 = vmatpush1.msra.mxu0 0.0
        %8696 = vmatprep.subr.mxu0 0.0
        %8697 = vmatpush1.msra.mxu0 0.0
        %8698 = vmatprep.subr.mxu0 0.0
        %8699 = vmatpush1.msra.mxu0 0.0
        %8700 = vmatprep.subr.mxu0 0.0
        %8701 = vmatpush1.msra.mxu0 0.0
        %8702 = vmatprep.subr.mxu0 0.0
        %8703 = vmatpush1.msra.mxu0 0.0
        %8704 = vmatprep.subr.mxu0 0.0
        %8705 = vmatpush1.msra.mxu0 0.0
        %8706 = vmatprep.subr.mxu0 0.0
        %8707 = vmatpush1.msra.mxu0 0.0
        %8708 = vmatprep.subr.mxu0 0.0
        %8709 = vmatpush1.msra.mxu0 0.0
        %8710 = vmatprep.subr.mxu0 0.0
        %8711 = vmatpush1.msra.mxu0 0.0
        %8712 = vmatprep.subr.mxu0 0.0
        %8713 = vmatpush1.msra.mxu0 0.0
        %8714 = vmatprep.subr.mxu0 0.0
        %8715 = vmatpush1.msra.mxu0 0.0
        %8716 = vmatprep.subr.mxu0 0.0
        %8717 = vmatpush1.msra.mxu0 0.0
        %8718 = vmatprep.subr.mxu0 0.0
        %8719 = vmatpush1.msra.mxu0 0.0
        %8720 = vmatprep.subr.mxu0 0.0
        %8721 = vmatpush1.msra.mxu0 0.0
        %8722 = vmatprep.mubr.f32.mxu0 0.0
        %8723 = vmatmul.mubr.f32.gmra.mrb[0].mxu0 %v8656
        %v8724 = vpop.f32.mrb[0].mxu0
        %v8725 = vadd.f32 0.0, %v8724
        %v8726 = vpop.f32.mrb[0].mxu0
        %8727 = vdwg.mxu0
        %v8728 = vadd.f32 %v8636, %v8725
        %s8729 = scalar_lea.vmem %s5, 1280
        %v8730 = vld [vmem:[%s8729] sm:$0xff]
        %v8731 = vld [vmem:[%s8729 + $0x8] sm:$0xff]
        %v8732 = vld [vmem:[%s8729 + $0x10] sm:$0xff]
        %v8733 = vld [vmem:[%s8729 + $0x18] sm:$0xff]
        %v8734 = vld [vmem:[%s8729 + $0x20] sm:$0xff]
        %v8735 = vld [vmem:[%s8729 + $0x28] sm:$0xff]
        %v8736 = vld [vmem:[%s8729 + $0x30] sm:$0xff]
        %v8737 = vld [vmem:[%s8729 + $0x38] sm:$0xff]
        %v8738 = vld [vmem:[%s8729 + $0x40] sm:$0xff]
        %v8739 = vld [vmem:[%s8729 + $0x48] sm:$0xff]
        %v8740 = vld [vmem:[%s8729 + $0x50] sm:$0xff]
        %v8741 = vld [vmem:[%s8729 + $0x58] sm:$0xff]
        %v8742 = vld [vmem:[%s8729 + $0x60] sm:$0xff]
        %v8743 = vld [vmem:[%s8729 + $0x68] sm:$0xff]
        %v8744 = vld [vmem:[%s8729 + $0x70] sm:$0xff]
        %v8745 = vld [vmem:[%s8729 + $0x78] sm:$0xff]
        %v8746 = vrot.slane %v8542, 4
        %v8747 = vrot.slane %v8543, 3
        %v8748 = vsel %vm7825, %v8747, %v8746
        %8750 = vmatprep.subr.mxu0 0.0
        %8751 = vmatpush1.msra.mxu0 %v8730
        %8752 = vmatprep.subr.mxu0 0.0
        %8753 = vmatpush1.msra.mxu0 %v8731
        %8754 = vmatprep.subr.mxu0 0.0
        %8755 = vmatpush1.msra.mxu0 %v8732
        %8756 = vmatprep.subr.mxu0 0.0
        %8757 = vmatpush1.msra.mxu0 %v8733
        %8758 = vmatprep.subr.mxu0 0.0
        %8759 = vmatpush1.msra.mxu0 %v8734
        %8760 = vmatprep.subr.mxu0 0.0
        %8761 = vmatpush1.msra.mxu0 %v8735
        %8762 = vmatprep.subr.mxu0 0.0
        %8763 = vmatpush1.msra.mxu0 %v8736
        %8764 = vmatprep.subr.mxu0 0.0
        %8765 = vmatpush1.msra.mxu0 %v8737
        %8766 = vmatprep.subr.mxu0 0.0
        %8767 = vmatpush1.msra.mxu0 %v8738
        %8768 = vmatprep.subr.mxu0 0.0
        %8769 = vmatpush1.msra.mxu0 %v8739
        %8770 = vmatprep.subr.mxu0 0.0
        %8771 = vmatpush1.msra.mxu0 %v8740
        %8772 = vmatprep.subr.mxu0 0.0
        %8773 = vmatpush1.msra.mxu0 %v8741
        %8774 = vmatprep.subr.mxu0 0.0
        %8775 = vmatpush1.msra.mxu0 %v8742
        %8776 = vmatprep.subr.mxu0 0.0
        %8777 = vmatpush1.msra.mxu0 %v8743
        %8778 = vmatprep.subr.mxu0 0.0
        %8779 = vmatpush1.msra.mxu0 %v8744
        %8780 = vmatprep.subr.mxu0 0.0
        %8781 = vmatpush1.msra.mxu0 %v8745
        %8782 = vmatprep.subr.mxu0 0.0
        %8783 = vmatpush1.msra.mxu0 0.0
        %8784 = vmatprep.subr.mxu0 0.0
        %8785 = vmatpush1.msra.mxu0 0.0
        %8786 = vmatprep.subr.mxu0 0.0
        %8787 = vmatpush1.msra.mxu0 0.0
        %8788 = vmatprep.subr.mxu0 0.0
        %8789 = vmatpush1.msra.mxu0 0.0
        %8790 = vmatprep.subr.mxu0 0.0
        %8791 = vmatpush1.msra.mxu0 0.0
        %8792 = vmatprep.subr.mxu0 0.0
        %8793 = vmatpush1.msra.mxu0 0.0
        %8794 = vmatprep.subr.mxu0 0.0
        %8795 = vmatpush1.msra.mxu0 0.0
        %8796 = vmatprep.subr.mxu0 0.0
        %8797 = vmatpush1.msra.mxu0 0.0
        %8798 = vmatprep.subr.mxu0 0.0
        %8799 = vmatpush1.msra.mxu0 0.0
        %8800 = vmatprep.subr.mxu0 0.0
        %8801 = vmatpush1.msra.mxu0 0.0
        %8802 = vmatprep.subr.mxu0 0.0
        %8803 = vmatpush1.msra.mxu0 0.0
        %8804 = vmatprep.subr.mxu0 0.0
        %8805 = vmatpush1.msra.mxu0 0.0
        %8806 = vmatprep.subr.mxu0 0.0
        %8807 = vmatpush1.msra.mxu0 0.0
        %8808 = vmatprep.subr.mxu0 0.0
        %8809 = vmatpush1.msra.mxu0 0.0
        %8810 = vmatprep.subr.mxu0 0.0
        %8811 = vmatpush1.msra.mxu0 0.0
        %8812 = vmatprep.subr.mxu0 0.0
        %8813 = vmatpush1.msra.mxu0 0.0
        %8814 = vmatprep.mubr.f32.mxu0 0.0
        %8815 = vmatmul.mubr.f32.gmra.mrb[0].mxu0 %v8748
        %v8816 = vpop.f32.mrb[0].mxu0
        %v8817 = vadd.f32 0.0, %v8816
        %v8818 = vpop.f32.mrb[0].mxu0
        %8819 = vdwg.mxu0
        %v8820 = vadd.f32 %v8728, %v8817
        %s8821 = scalar_lea.vmem %s5, 1408
        %v8822 = vld [vmem:[%s8821] sm:$0xff]
        %v8823 = vld [vmem:[%s8821 + $0x8] sm:$0xff]
        %v8824 = vld [vmem:[%s8821 + $0x10] sm:$0xff]
        %v8825 = vld [vmem:[%s8821 + $0x18] sm:$0xff]
        %v8826 = vld [vmem:[%s8821 + $0x20] sm:$0xff]
        %v8827 = vld [vmem:[%s8821 + $0x28] sm:$0xff]
        %v8828 = vld [vmem:[%s8821 + $0x30] sm:$0xff]
        %v8829 = vld [vmem:[%s8821 + $0x38] sm:$0xff]
        %v8830 = vld [vmem:[%s8821 + $0x40] sm:$0xff]
        %v8831 = vld [vmem:[%s8821 + $0x48] sm:$0xff]
        %v8832 = vld [vmem:[%s8821 + $0x50] sm:$0xff]
        %v8833 = vld [vmem:[%s8821 + $0x58] sm:$0xff]
        %v8834 = vld [vmem:[%s8821 + $0x60] sm:$0xff]
        %v8835 = vld [vmem:[%s8821 + $0x68] sm:$0xff]
        %v8836 = vld [vmem:[%s8821 + $0x70] sm:$0xff]
        %v8837 = vld [vmem:[%s8821 + $0x78] sm:$0xff]
        %v8838 = vrot.slane %v8542, 6
        %v8839 = vrot.slane %v8543, 5
        %v8840 = vsel %vm7825, %v8839, %v8838
        %8842 = vmatprep.subr.mxu0 0.0
        %8843 = vmatpush1.msra.mxu0 %v8822
        %8844 = vmatprep.subr.mxu0 0.0
        %8845 = vmatpush1.msra.mxu0 %v8823
        %8846 = vmatprep.subr.mxu0 0.0
        %8847 = vmatpush1.msra.mxu0 %v8824
        %8848 = vmatprep.subr.mxu0 0.0
        %8849 = vmatpush1.msra.mxu0 %v8825
        %8850 = vmatprep.subr.mxu0 0.0
        %8851 = vmatpush1.msra.mxu0 %v8826
        %8852 = vmatprep.subr.mxu0 0.0
        %8853 = vmatpush1.msra.mxu0 %v8827
        %8854 = vmatprep.subr.mxu0 0.0
        %8855 = vmatpush1.msra.mxu0 %v8828
        %8856 = vmatprep.subr.mxu0 0.0
        %8857 = vmatpush1.msra.mxu0 %v8829
        %8858 = vmatprep.subr.mxu0 0.0
        %8859 = vmatpush1.msra.mxu0 %v8830
        %8860 = vmatprep.subr.mxu0 0.0
        %8861 = vmatpush1.msra.mxu0 %v8831
        %8862 = vmatprep.subr.mxu0 0.0
        %8863 = vmatpush1.msra.mxu0 %v8832
        %8864 = vmatprep.subr.mxu0 0.0
        %8865 = vmatpush1.msra.mxu0 %v8833
        %8866 = vmatprep.subr.mxu0 0.0
        %8867 = vmatpush1.msra.mxu0 %v8834
        %8868 = vmatprep.subr.mxu0 0.0
        %8869 = vmatpush1.msra.mxu0 %v8835
        %8870 = vmatprep.subr.mxu0 0.0
        %8871 = vmatpush1.msra.mxu0 %v8836
        %8872 = vmatprep.subr.mxu0 0.0
        %8873 = vmatpush1.msra.mxu0 %v8837
        %8874 = vmatprep.subr.mxu0 0.0
        %8875 = vmatpush1.msra.mxu0 0.0
        %8876 = vmatprep.subr.mxu0 0.0
        %8877 = vmatpush1.msra.mxu0 0.0
        %8878 = vmatprep.subr.mxu0 0.0
        %8879 = vmatpush1.msra.mxu0 0.0
        %8880 = vmatprep.subr.mxu0 0.0
        %8881 = vmatpush1.msra.mxu0 0.0
        %8882 = vmatprep.subr.mxu0 0.0
        %8883 = vmatpush1.msra.mxu0 0.0
        %8884 = vmatprep.subr.mxu0 0.0
        %8885 = vmatpush1.msra.mxu0 0.0
        %8886 = vmatprep.subr.mxu0 0.0
        %8887 = vmatpush1.msra.mxu0 0.0
        %8888 = vmatprep.subr.mxu0 0.0
        %8889 = vmatpush1.msra.mxu0 0.0
        %8890 = vmatprep.subr.mxu0 0.0
        %8891 = vmatpush1.msra.mxu0 0.0
        %8892 = vmatprep.subr.mxu0 0.0
        %8893 = vmatpush1.msra.mxu0 0.0
        %8894 = vmatprep.subr.mxu0 0.0
        %8895 = vmatpush1.msra.mxu0 0.0
        %8896 = vmatprep.subr.mxu0 0.0
        %8897 = vmatpush1.msra.mxu0 0.0
        %8898 = vmatprep.subr.mxu0 0.0
        %8899 = vmatpush1.msra.mxu0 0.0
        %8900 = vmatprep.subr.mxu0 0.0
        %8901 = vmatpush1.msra.mxu0 0.0
        %8902 = vmatprep.subr.mxu0 0.0
        %8903 = vmatpush1.msra.mxu0 0.0
        %8904 = vmatprep.subr.mxu0 0.0
        %8905 = vmatpush1.msra.mxu0 0.0
        %8906 = vmatprep.mubr.f32.mxu0 0.0
        %8907 = vmatmul.mubr.f32.gmra.mrb[0].mxu0 %v8840
        %v8908 = vpop.f32.mrb[0].mxu0
        %v8909 = vadd.f32 0.0, %v8908
        %v8910 = vpop.f32.mrb[0].mxu0
        %8911 = vdwg.mxu0
        %v8912 = vadd.f32 %v8820, %v8909
        %v8913 = vmax.f32 %v7768, %v7769
        %v8914 = vmax.f32 %v7776, %v7777
        %v8917 = vrot.slane %v8913, 1
        %v8918 = vrot.slane %v8914, 1
        %v8921 = vmax.f32 %v8913, %v8917
        %v8922 = vmax.f32 %v8914, %v8918
        %s8923 = scalar_lea.vmem %s5, 1536
        %v8924 = vld [vmem:[%s8923] sm:$0xff]
        %v8925 = vld [vmem:[%s8923 + $0x8] sm:$0xff]
        %v8926 = vld [vmem:[%s8923 + $0x10] sm:$0xff]
        %v8927 = vld [vmem:[%s8923 + $0x18] sm:$0xff]
        %v8928 = vld [vmem:[%s8923 + $0x20] sm:$0xff]
        %v8929 = vld [vmem:[%s8923 + $0x28] sm:$0xff]
        %v8930 = vld [vmem:[%s8923 + $0x30] sm:$0xff]
        %v8931 = vld [vmem:[%s8923 + $0x38] sm:$0xff]
        %v8932 = vld [vmem:[%s8923 + $0x40] sm:$0xff]
        %v8933 = vld [vmem:[%s8923 + $0x48] sm:$0xff]
        %v8934 = vld [vmem:[%s8923 + $0x50] sm:$0xff]
        %v8935 = vld [vmem:[%s8923 + $0x58] sm:$0xff]
        %v8936 = vld [vmem:[%s8923 + $0x60] sm:$0xff]
        %v8937 = vld [vmem:[%s8923 + $0x68] sm:$0xff]
        %v8938 = vld [vmem:[%s8923 + $0x70] sm:$0xff]
        %v8939 = vld [vmem:[%s8923 + $0x78] sm:$0xff]
        %v8942 = vrot.slane %v8922, 7
        %v8943 = vsel %vm7825, %v8942, %v8921
        %8945 = vmatprep.subr.mxu0 0.0
        %8946 = vmatpush1.msra.mxu0 %v8924
        %8947 = vmatprep.subr.mxu0 0.0
        %8948 = vmatpush1.msra.mxu0 %v8925
        %8949 = vmatprep.subr.mxu0 0.0
        %8950 = vmatpush1.msra.mxu0 %v8926
        %8951 = vmatprep.subr.mxu0 0.0
        %8952 = vmatpush1.msra.mxu0 %v8927
        %8953 = vmatprep.subr.mxu0 0.0
        %8954 = vmatpush1.msra.mxu0 %v8928
        %8955 = vmatprep.subr.mxu0 0.0
        %8956 = vmatpush1.msra.mxu0 %v8929
        %8957 = vmatprep.subr.mxu0 0.0
        %8958 = vmatpush1.msra.mxu0 %v8930
        %8959 = vmatprep.subr.mxu0 0.0
        %8960 = vmatpush1.msra.mxu0 %v8931
        %8961 = vmatprep.subr.mxu0 0.0
        %8962 = vmatpush1.msra.mxu0 %v8932
        %8963 = vmatprep.subr.mxu0 0.0
        %8964 = vmatpush1.msra.mxu0 %v8933
        %8965 = vmatprep.subr.mxu0 0.0
        %8966 = vmatpush1.msra.mxu0 %v8934
        %8967 = vmatprep.subr.mxu0 0.0
        %8968 = vmatpush1.msra.mxu0 %v8935
        %8969 = vmatprep.subr.mxu0 0.0
        %8970 = vmatpush1.msra.mxu0 %v8936
        %8971 = vmatprep.subr.mxu0 0.0
        %8972 = vmatpush1.msra.mxu0 %v8937
        %8973 = vmatprep.subr.mxu0 0.0
        %8974 = vmatpush1.msra.mxu0 %v8938
        %8975 = vmatprep.subr.mxu0 0.0
        %8976 = vmatpush1.msra.mxu0 %v8939
        %8977 = vmatprep.subr.mxu0 0.0
        %8978 = vmatpush1.msra.mxu0 0.0
        %8979 = vmatprep.subr.mxu0 0.0
        %8980 = vmatpush1.msra.mxu0 0.0
        %8981 = vmatprep.subr.mxu0 0.0
        %8982 = vmatpush1.msra.mxu0 0.0
        %8983 = vmatprep.subr.mxu0 0.0
        %8984 = vmatpush1.msra.mxu0 0.0
        %8985 = vmatprep.subr.mxu0 0.0
        %8986 = vmatpush1.msra.mxu0 0.0
        %8987 = vmatprep.subr.mxu0 0.0
        %8988 = vmatpush1.msra.mxu0 0.0
        %8989 = vmatprep.subr.mxu0 0.0
        %8990 = vmatpush1.msra.mxu0 0.0
        %8991 = vmatprep.subr.mxu0 0.0
        %8992 = vmatpush1.msra.mxu0 0.0
        %8993 = vmatprep.subr.mxu0 0.0
        %8994 = vmatpush1.msra.mxu0 0.0
        %8995 = vmatprep.subr.mxu0 0.0
        %8996 = vmatpush1.msra.mxu0 0.0
        %8997 = vmatprep.subr.mxu0 0.0
        %8998 = vmatpush1.msra.mxu0 0.0
        %8999 = vmatprep.subr.mxu0 0.0
        %9000 = vmatpush1.msra.mxu0 0.0
        %9001 = vmatprep.subr.mxu0 0.0
        %9002 = vmatpush1.msra.mxu0 0.0
        %9003 = vmatprep.subr.mxu0 0.0
        %9004 = vmatpush1.msra.mxu0 0.0
        %9005 = vmatprep.subr.mxu0 0.0
        %9006 = vmatpush1.msra.mxu0 0.0
        %9007 = vmatprep.subr.mxu0 0.0
        %9008 = vmatpush1.msra.mxu0 0.0
        %9009 = vmatprep.mubr.f32.mxu0 0.0
        %9010 = vmatmul.mubr.f32.gmra.mrb[0].mxu0 %v8943
        %v9011 = vpop.f32.mrb[0].mxu0
        %v9012 = vadd.f32 0.0, %v9011
        %v9013 = vpop.f32.mrb[0].mxu0
        %9014 = vdwg.mxu0
        %v9015 = vadd.f32 %v8912, %v9012
        %s9016 = scalar_lea.vmem %s5, 1664
        %v9017 = vld [vmem:[%s9016] sm:$0xff]
        %v9018 = vld [vmem:[%s9016 + $0x8] sm:$0xff]
        %v9019 = vld [vmem:[%s9016 + $0x10] sm:$0xff]
        %v9020 = vld [vmem:[%s9016 + $0x18] sm:$0xff]
        %v9021 = vld [vmem:[%s9016 + $0x20] sm:$0xff]
        %v9022 = vld [vmem:[%s9016 + $0x28] sm:$0xff]
        %v9023 = vld [vmem:[%s9016 + $0x30] sm:$0xff]
        %v9024 = vld [vmem:[%s9016 + $0x38] sm:$0xff]
        %v9025 = vld [vmem:[%s9016 + $0x40] sm:$0xff]
        %v9026 = vld [vmem:[%s9016 + $0x48] sm:$0xff]
        %v9027 = vld [vmem:[%s9016 + $0x50] sm:$0xff]
        %v9028 = vld [vmem:[%s9016 + $0x58] sm:$0xff]
        %v9029 = vld [vmem:[%s9016 + $0x60] sm:$0xff]
        %v9030 = vld [vmem:[%s9016 + $0x68] sm:$0xff]
        %v9031 = vld [vmem:[%s9016 + $0x70] sm:$0xff]
        %v9032 = vld [vmem:[%s9016 + $0x78] sm:$0xff]
        %v9033 = vrot.slane %v8921, 2
        %v9034 = vrot.slane %v8922, 1
        %v9035 = vsel %vm7825, %v9034, %v9033
        %9037 = vmatprep.subr.mxu0 0.0
        %9038 = vmatpush1.msra.mxu0 %v9017
        %9039 = vmatprep.subr.mxu0 0.0
        %9040 = vmatpush1.msra.mxu0 %v9018
        %9041 = vmatprep.subr.mxu0 0.0
        %9042 = vmatpush1.msra.mxu0 %v9019
        %9043 = vmatprep.subr.mxu0 0.0
        %9044 = vmatpush1.msra.mxu0 %v9020
        %9045 = vmatprep.subr.mxu0 0.0
        %9046 = vmatpush1.msra.mxu0 %v9021
        %9047 = vmatprep.subr.mxu0 0.0
        %9048 = vmatpush1.msra.mxu0 %v9022
        %9049 = vmatprep.subr.mxu0 0.0
        %9050 = vmatpush1.msra.mxu0 %v9023
        %9051 = vmatprep.subr.mxu0 0.0
        %9052 = vmatpush1.msra.mxu0 %v9024
        %9053 = vmatprep.subr.mxu0 0.0
        %9054 = vmatpush1.msra.mxu0 %v9025
        %9055 = vmatprep.subr.mxu0 0.0
        %9056 = vmatpush1.msra.mxu0 %v9026
        %9057 = vmatprep.subr.mxu0 0.0
        %9058 = vmatpush1.msra.mxu0 %v9027
        %9059 = vmatprep.subr.mxu0 0.0
        %9060 = vmatpush1.msra.mxu0 %v9028
        %9061 = vmatprep.subr.mxu0 0.0
        %9062 = vmatpush1.msra.mxu0 %v9029
        %9063 = vmatprep.subr.mxu0 0.0
        %9064 = vmatpush1.msra.mxu0 %v9030
        %9065 = vmatprep.subr.mxu0 0.0
        %9066 = vmatpush1.msra.mxu0 %v9031
        %9067 = vmatprep.subr.mxu0 0.0
        %9068 = vmatpush1.msra.mxu0 %v9032
        %9069 = vmatprep.subr.mxu0 0.0
        %9070 = vmatpush1.msra.mxu0 0.0
        %9071 = vmatprep.subr.mxu0 0.0
        %9072 = vmatpush1.msra.mxu0 0.0
        %9073 = vmatprep.subr.mxu0 0.0
        %9074 = vmatpush1.msra.mxu0 0.0
        %9075 = vmatprep.subr.mxu0 0.0
        %9076 = vmatpush1.msra.mxu0 0.0
        %9077 = vmatprep.subr.mxu0 0.0
        %9078 = vmatpush1.msra.mxu0 0.0
        %9079 = vmatprep.subr.mxu0 0.0
        %9080 = vmatpush1.msra.mxu0 0.0
        %9081 = vmatprep.subr.mxu0 0.0
        %9082 = vmatpush1.msra.mxu0 0.0
        %9083 = vmatprep.subr.mxu0 0.0
        %9084 = vmatpush1.msra.mxu0 0.0
        %9085 = vmatprep.subr.mxu0 0.0
        %9086 = vmatpush1.msra.mxu0 0.0
        %9087 = vmatprep.subr.mxu0 0.0
        %9088 = vmatpush1.msra.mxu0 0.0
        %9089 = vmatprep.subr.mxu0 0.0
        %9090 = vmatpush1.msra.mxu0 0.0
        %9091 = vmatprep.subr.mxu0 0.0
        %9092 = vmatpush1.msra.mxu0 0.0
        %9093 = vmatprep.subr.mxu0 0.0
        %9094 = vmatpush1.msra.mxu0 0.0
        %9095 = vmatprep.subr.mxu0 0.0
        %9096 = vmatpush1.msra.mxu0 0.0
        %9097 = vmatprep.subr.mxu0 0.0
        %9098 = vmatpush1.msra.mxu0 0.0
        %9099 = vmatprep.subr.mxu0 0.0
        %9100 = vmatpush1.msra.mxu0 0.0
        %9101 = vmatprep.mubr.f32.mxu0 0.0
        %9102 = vmatmul.mubr.f32.gmra.mrb[0].mxu0 %v9035
        %v9103 = vpop.f32.mrb[0].mxu0
        %v9104 = vadd.f32 0.0, %v9103
        %v9105 = vpop.f32.mrb[0].mxu0
        %9106 = vdwg.mxu0
        %v9107 = vadd.f32 %v9015, %v9104
        %s9108 = scalar_lea.vmem %s5, 1792
        %v9109 = vld [vmem:[%s9108] sm:$0xff]
        %v9110 = vld [vmem:[%s9108 + $0x8] sm:$0xff]
        %v9111 = vld [vmem:[%s9108 + $0x10] sm:$0xff]
        %v9112 = vld [vmem:[%s9108 + $0x18] sm:$0xff]
        %v9113 = vld [vmem:[%s9108 + $0x20] sm:$0xff]
        %v9114 = vld [vmem:[%s9108 + $0x28] sm:$0xff]
        %v9115 = vld [vmem:[%s9108 + $0x30] sm:$0xff]
        %v9116 = vld [vmem:[%s9108 + $0x38] sm:$0xff]
        %v9117 = vld [vmem:[%s9108 + $0x40] sm:$0xff]
        %v9118 = vld [vmem:[%s9108 + $0x48] sm:$0xff]
        %v9119 = vld [vmem:[%s9108 + $0x50] sm:$0xff]
        %v9120 = vld [vmem:[%s9108 + $0x58] sm:$0xff]
        %v9121 = vld [vmem:[%s9108 + $0x60] sm:$0xff]
        %v9122 = vld [vmem:[%s9108 + $0x68] sm:$0xff]
        %v9123 = vld [vmem:[%s9108 + $0x70] sm:$0xff]
        %v9124 = vld [vmem:[%s9108 + $0x78] sm:$0xff]
        %v9125 = vrot.slane %v8921, 4
        %v9126 = vrot.slane %v8922, 3
        %v9127 = vsel %vm7825, %v9126, %v9125
        %9129 = vmatprep.subr.mxu0 0.0
        %9130 = vmatpush1.msra.mxu0 %v9109
        %9131 = vmatprep.subr.mxu0 0.0
        %9132 = vmatpush1.msra.mxu0 %v9110
        %9133 = vmatprep.subr.mxu0 0.0
        %9134 = vmatpush1.msra.mxu0 %v9111
        %9135 = vmatprep.subr.mxu0 0.0
        %9136 = vmatpush1.msra.mxu0 %v9112
        %9137 = vmatprep.subr.mxu0 0.0
        %9138 = vmatpush1.msra.mxu0 %v9113
        %9139 = vmatprep.subr.mxu0 0.0
        %9140 = vmatpush1.msra.mxu0 %v9114
        %9141 = vmatprep.subr.mxu0 0.0
        %9142 = vmatpush1.msra.mxu0 %v9115
        %9143 = vmatprep.subr.mxu0 0.0
        %9144 = vmatpush1.msra.mxu0 %v9116
        %9145 = vmatprep.subr.mxu0 0.0
        %9146 = vmatpush1.msra.mxu0 %v9117
        %9147 = vmatprep.subr.mxu0 0.0
        %9148 = vmatpush1.msra.mxu0 %v9118
        %9149 = vmatprep.subr.mxu0 0.0
        %9150 = vmatpush1.msra.mxu0 %v9119
        %9151 = vmatprep.subr.mxu0 0.0
        %9152 = vmatpush1.msra.mxu0 %v9120
        %9153 = vmatprep.subr.mxu0 0.0
        %9154 = vmatpush1.msra.mxu0 %v9121
        %9155 = vmatprep.subr.mxu0 0.0
        %9156 = vmatpush1.msra.mxu0 %v9122
        %9157 = vmatprep.subr.mxu0 0.0
        %9158 = vmatpush1.msra.mxu0 %v9123
        %9159 = vmatprep.subr.mxu0 0.0
        %9160 = vmatpush1.msra.mxu0 %v9124
        %9161 = vmatprep.subr.mxu0 0.0
        %9162 = vmatpush1.msra.mxu0 0.0
        %9163 = vmatprep.subr.mxu0 0.0
        %9164 = vmatpush1.msra.mxu0 0.0
        %9165 = vmatprep.subr.mxu0 0.0
        %9166 = vmatpush1.msra.mxu0 0.0
        %9167 = vmatprep.subr.mxu0 0.0
        %9168 = vmatpush1.msra.mxu0 0.0
        %9169 = vmatprep.subr.mxu0 0.0
        %9170 = vmatpush1.msra.mxu0 0.0
        %9171 = vmatprep.subr.mxu0 0.0
        %9172 = vmatpush1.msra.mxu0 0.0
        %9173 = vmatprep.subr.mxu0 0.0
        %9174 = vmatpush1.msra.mxu0 0.0
        %9175 = vmatprep.subr.mxu0 0.0
        %9176 = vmatpush1.msra.mxu0 0.0
        %9177 = vmatprep.subr.mxu0 0.0
        %9178 = vmatpush1.msra.mxu0 0.0
        %9179 = vmatprep.subr.mxu0 0.0
        %9180 = vmatpush1.msra.mxu0 0.0
        %9181 = vmatprep.subr.mxu0 0.0
        %9182 = vmatpush1.msra.mxu0 0.0
        %9183 = vmatprep.subr.mxu0 0.0
        %9184 = vmatpush1.msra.mxu0 0.0
        %9185 = vmatprep.subr.mxu0 0.0
        %9186 = vmatpush1.msra.mxu0 0.0
        %9187 = vmatprep.subr.mxu0 0.0
        %9188 = vmatpush1.msra.mxu0 0.0
        %9189 = vmatprep.subr.mxu0 0.0
        %9190 = vmatpush1.msra.mxu0 0.0
        %9191 = vmatprep.subr.mxu0 0.0
        %9192 = vmatpush1.msra.mxu0 0.0
        %9193 = vmatprep.mubr.f32.mxu0 0.0
        %9194 = vmatmul.mubr.f32.gmra.mrb[0].mxu0 %v9127
        %v9195 = vpop.f32.mrb[0].mxu0
        %v9196 = vadd.f32 0.0, %v9195
        %v9197 = vpop.f32.mrb[0].mxu0
        %9198 = vdwg.mxu0
        %v9199 = vadd.f32 %v9107, %v9196
        %s9200 = scalar_lea.vmem %s5, 1920
        %v9201 = vld [vmem:[%s9200] sm:$0xff]
        %v9202 = vld [vmem:[%s9200 + $0x8] sm:$0xff]
        %v9203 = vld [vmem:[%s9200 + $0x10] sm:$0xff]
        %v9204 = vld [vmem:[%s9200 + $0x18] sm:$0xff]
        %v9205 = vld [vmem:[%s9200 + $0x20] sm:$0xff]
        %v9206 = vld [vmem:[%s9200 + $0x28] sm:$0xff]
        %v9207 = vld [vmem:[%s9200 + $0x30] sm:$0xff]
        %v9208 = vld [vmem:[%s9200 + $0x38] sm:$0xff]
        %v9209 = vld [vmem:[%s9200 + $0x40] sm:$0xff]
        %v9210 = vld [vmem:[%s9200 + $0x48] sm:$0xff]
        %v9211 = vld [vmem:[%s9200 + $0x50] sm:$0xff]
        %v9212 = vld [vmem:[%s9200 + $0x58] sm:$0xff]
        %v9213 = vld [vmem:[%s9200 + $0x60] sm:$0xff]
        %v9214 = vld [vmem:[%s9200 + $0x68] sm:$0xff]
        %v9215 = vld [vmem:[%s9200 + $0x70] sm:$0xff]
        %v9216 = vld [vmem:[%s9200 + $0x78] sm:$0xff]
        %v9217 = vrot.slane %v8921, 6
        %v9218 = vrot.slane %v8922, 5
        %v9219 = vsel %vm7825, %v9218, %v9217
        %9221 = vmatprep.subr.mxu0 0.0
        %9222 = vmatpush1.msra.mxu0 %v9201
        %9223 = vmatprep.subr.mxu0 0.0
        %9224 = vmatpush1.msra.mxu0 %v9202
        %9225 = vmatprep.subr.mxu0 0.0
        %9226 = vmatpush1.msra.mxu0 %v9203
        %9227 = vmatprep.subr.mxu0 0.0
        %9228 = vmatpush1.msra.mxu0 %v9204
        %9229 = vmatprep.subr.mxu0 0.0
        %9230 = vmatpush1.msra.mxu0 %v9205
        %9231 = vmatprep.subr.mxu0 0.0
        %9232 = vmatpush1.msra.mxu0 %v9206
        %9233 = vmatprep.subr.mxu0 0.0
        %9234 = vmatpush1.msra.mxu0 %v9207
        %9235 = vmatprep.subr.mxu0 0.0
        %9236 = vmatpush1.msra.mxu0 %v9208
        %9237 = vmatprep.subr.mxu0 0.0
        %9238 = vmatpush1.msra.mxu0 %v9209
        %9239 = vmatprep.subr.mxu0 0.0
        %9240 = vmatpush1.msra.mxu0 %v9210
        %9241 = vmatprep.subr.mxu0 0.0
        %9242 = vmatpush1.msra.mxu0 %v9211
        %9243 = vmatprep.subr.mxu0 0.0
        %9244 = vmatpush1.msra.mxu0 %v9212
        %9245 = vmatprep.subr.mxu0 0.0
        %9246 = vmatpush1.msra.mxu0 %v9213
        %9247 = vmatprep.subr.mxu0 0.0
        %9248 = vmatpush1.msra.mxu0 %v9214
        %9249 = vmatprep.subr.mxu0 0.0
        %9250 = vmatpush1.msra.mxu0 %v9215
        %9251 = vmatprep.subr.mxu0 0.0
        %9252 = vmatpush1.msra.mxu0 %v9216
        %9253 = vmatprep.subr.mxu0 0.0
        %9254 = vmatpush1.msra.mxu0 0.0
        %9255 = vmatprep.subr.mxu0 0.0
        %9256 = vmatpush1.msra.mxu0 0.0
        %9257 = vmatprep.subr.mxu0 0.0
        %9258 = vmatpush1.msra.mxu0 0.0
        %9259 = vmatprep.subr.mxu0 0.0
        %9260 = vmatpush1.msra.mxu0 0.0
        %9261 = vmatprep.subr.mxu0 0.0
        %9262 = vmatpush1.msra.mxu0 0.0
        %9263 = vmatprep.subr.mxu0 0.0
        %9264 = vmatpush1.msra.mxu0 0.0
        %9265 = vmatprep.subr.mxu0 0.0
        %9266 = vmatpush1.msra.mxu0 0.0
        %9267 = vmatprep.subr.mxu0 0.0
        %9268 = vmatpush1.msra.mxu0 0.0
        %9269 = vmatprep.subr.mxu0 0.0
        %9270 = vmatpush1.msra.mxu0 0.0
        %9271 = vmatprep.subr.mxu0 0.0
        %9272 = vmatpush1.msra.mxu0 0.0
        %9273 = vmatprep.subr.mxu0 0.0
        %9274 = vmatpush1.msra.mxu0 0.0
        %9275 = vmatprep.subr.mxu0 0.0
        %9276 = vmatpush1.msra.mxu0 0.0
        %9277 = vmatprep.subr.mxu0 0.0
        %9278 = vmatpush1.msra.mxu0 0.0
        %9279 = vmatprep.subr.mxu0 0.0
        %9280 = vmatpush1.msra.mxu0 0.0
        %9281 = vmatprep.subr.mxu0 0.0
        %9282 = vmatpush1.msra.mxu0 0.0
        %9283 = vmatprep.subr.mxu0 0.0
        %9284 = vmatpush1.msra.mxu0 0.0
        %9285 = vmatprep.mubr.f32.mxu0 0.0
        %9286 = vmatmul.mubr.f32.gmra.mrb[0].mxu0 %v9219
        %v9287 = vpop.f32.mrb[0].mxu0
        %v9288 = vadd.f32 0.0, %v9287
        %v9289 = vpop.f32.mrb[0].mxu0
        %9290 = vdwg.mxu0
        %v9291 = vadd.f32 %v9199, %v9288
        %v9292 = vld [vmem:[%s6] sm:$0x1]
        %v9294 = vlaneseq
        %v9295 = vshrl.u32 %v9294, 7
        %v9296 = vsub.s32 0, %v9295
        %v9297 = vrot.slane %v9292, %v9296
        %v9299 = vadd.f32 %v9291, %v9297
        %v9300 = vmax.f32 %v9299, 0.0
        %v9301 = vld [vmem:[%s7] sm:$0xff]
        %v9302 = vld [vmem:[%s7 + $0x8] sm:$0xff]
        %v9303 = vld [vmem:[%s7 + $0x10] sm:$0xff]
        %v9304 = vld [vmem:[%s7 + $0x18] sm:$0xff]
        %v9305 = vld [vmem:[%s7 + $0x20] sm:$0xff]
        %v9306 = vld [vmem:[%s7 + $0x28] sm:$0xff]
        %v9307 = vld [vmem:[%s7 + $0x30] sm:$0xff]
        %v9308 = vld [vmem:[%s7 + $0x38] sm:$0xff]
        %v9309 = vld [vmem:[%s7 + $0x40] sm:$0xff]
        %v9310 = vld [vmem:[%s7 + $0x48] sm:$0xff]
        %v9311 = vld [vmem:[%s7 + $0x50] sm:$0xff]
        %v9312 = vld [vmem:[%s7 + $0x58] sm:$0xff]
        %v9313 = vld [vmem:[%s7 + $0x60] sm:$0xff]
        %v9314 = vld [vmem:[%s7 + $0x68] sm:$0xff]
        %v9315 = vld [vmem:[%s7 + $0x70] sm:$0xff]
        %v9316 = vld [vmem:[%s7 + $0x78] sm:$0xff]
        %v9317 = vld [vmem:[%s8] sm:$0x1]
        %v9319 = vlaneseq
        %v9320 = vshrl.u32 %v9319, 7
        %v9321 = vsub.s32 0, %v9320
        %v9322 = vrot.slane %v9317, %v9321
        %9324 = vmatprep.subr.mxu0 0.0
        %9325 = vmatpush1.msra.mxu0 %v9301
        %9326 = vmatprep.subr.mxu0 0.0
        %9327 = vmatpush1.msra.mxu0 %v9302
        %9328 = vmatprep.subr.mxu0 0.0
        %9329 = vmatpush1.msra.mxu0 %v9303
        %9330 = vmatprep.subr.mxu0 0.0
        %9331 = vmatpush1.msra.mxu0 %v9304
        %9332 = vmatprep.subr.mxu0 0.0
        %9333 = vmatpush1.msra.mxu0 %v9305
        %9334 = vmatprep.subr.mxu0 0.0
        %9335 = vmatpush1.msra.mxu0 %v9306
        %9336 = vmatprep.subr.mxu0 0.0
        %9337 = vmatpush1.msra.mxu0 %v9307
        %9338 = vmatprep.subr.mxu0 0.0
        %9339 = vmatpush1.msra.mxu0 %v9308
        %9340 = vmatprep.subr.mxu0 0.0
        %9341 = vmatpush1.msra.mxu0 %v9309
        %9342 = vmatprep.subr.mxu0 0.0
        %9343 = vmatpush1.msra.mxu0 %v9310
        %9344 = vmatprep.subr.mxu0 0.0
        %9345 = vmatpush1.msra.mxu0 %v9311
        %9346 = vmatprep.subr.mxu0 0.0
        %9347 = vmatpush1.msra.mxu0 %v9312
        %9348 = vmatprep.subr.mxu0 0.0
        %9349 = vmatpush1.msra.mxu0 %v9313
        %9350 = vmatprep.subr.mxu0 0.0
        %9351 = vmatpush1.msra.mxu0 %v9314
        %9352 = vmatprep.subr.mxu0 0.0
        %9353 = vmatpush1.msra.mxu0 %v9315
        %9354 = vmatprep.subr.mxu0 0.0
        %9355 = vmatpush1.msra.mxu0 %v9316
        %9356 = vmatprep.subr.mxu0 0.0
        %9357 = vmatpush1.msra.mxu0 0.0
        %9358 = vmatprep.subr.mxu0 0.0
        %9359 = vmatpush1.msra.mxu0 0.0
        %9360 = vmatprep.subr.mxu0 0.0
        %9361 = vmatpush1.msra.mxu0 0.0
        %9362 = vmatprep.subr.mxu0 0.0
        %9363 = vmatpush1.msra.mxu0 0.0
        %9364 = vmatprep.subr.mxu0 0.0
        %9365 = vmatpush1.msra.mxu0 0.0
        %9366 = vmatprep.subr.mxu0 0.0
        %9367 = vmatpush1.msra.mxu0 0.0
        %9368 = vmatprep.subr.mxu0 0.0
        %9369 = vmatpush1.msra.mxu0 0.0
        %9370 = vmatprep.subr.mxu0 0.0
        %9371 = vmatpush1.msra.mxu0 0.0
        %9372 = vmatprep.subr.mxu0 0.0
        %9373 = vmatpush1.msra.mxu0 0.0
        %9374 = vmatprep.subr.mxu0 0.0
        %9375 = vmatpush1.msra.mxu0 0.0
        %9376 = vmatprep.subr.mxu0 0.0
        %9377 = vmatpush1.msra.mxu0 0.0
        %9378 = vmatprep.subr.mxu0 0.0
        %9379 = vmatpush1.msra.mxu0 0.0
        %9380 = vmatprep.subr.mxu0 0.0
        %9381 = vmatpush1.msra.mxu0 0.0
        %9382 = vmatprep.subr.mxu0 0.0
        %9383 = vmatpush1.msra.mxu0 0.0
        %9384 = vmatprep.subr.mxu0 0.0
        %9385 = vmatpush1.msra.mxu0 0.0
        %9386 = vmatprep.subr.mxu0 0.0
        %9387 = vmatpush1.msra.mxu0 0.0
        %9388 = vmatprep.mubr.f32.mxu0 0.0
        %9389 = vmatmul.mubr.f32.gmra.mrb[0].mxu0 %v9300
        %v9390 = vpop.f32.mrb[0].mxu0
        %v9391 = vadd.f32 %v9322, %v9390
        %v9392 = vpop.f32.mrb[0].mxu0
        %9393 = vdwg.mxu0
        %v9394 = vmax.f32 %v9391, 0.0
        %v9395 = vld [vmem:[%s9] sm:$0xff]
        %v9396 = vld [vmem:[%s9 + $0x8] sm:$0xff]
        %v9397 = vld [vmem:[%s9 + $0x10] sm:$0xff]
        %v9398 = vld [vmem:[%s9 + $0x18] sm:$0xff]
        %v9399 = vld [vmem:[%s9 + $0x20] sm:$0xff]
        %v9400 = vld [vmem:[%s9 + $0x28] sm:$0xff]
        %v9401 = vld [vmem:[%s9 + $0x30] sm:$0xff]
        %v9402 = vld [vmem:[%s9 + $0x38] sm:$0xff]
        %v9403 = vld [vmem:[%s9 + $0x40] sm:$0xff]
        %v9404 = vld [vmem:[%s9 + $0x48] sm:$0xff]
        %v9405 = vld [vmem:[%s9 + $0x50] sm:$0xff]
        %v9406 = vld [vmem:[%s9 + $0x58] sm:$0xff]
        %v9407 = vld [vmem:[%s9 + $0x60] sm:$0xff]
        %v9408 = vld [vmem:[%s9 + $0x68] sm:$0xff]
        %v9409 = vld [vmem:[%s9 + $0x70] sm:$0xff]
        %v9410 = vld [vmem:[%s9 + $0x78] sm:$0xff]
        %v9411 = vld [vmem:[%s10] sm:$0x1]
        %v9413 = vlaneseq
        %v9414 = vshrl.u32 %v9413, 7
        %v9415 = vsub.s32 0, %v9414
        %v9416 = vrot.slane %v9411, %v9415
        %9418 = vmatprep.subr.mxu0 0.0
        %9419 = vmatpush1.msra.mxu0 %v9395
        %9420 = vmatprep.subr.mxu0 0.0
        %9421 = vmatpush1.msra.mxu0 %v9396
        %9422 = vmatprep.subr.mxu0 0.0
        %9423 = vmatpush1.msra.mxu0 %v9397
        %9424 = vmatprep.subr.mxu0 0.0
        %9425 = vmatpush1.msra.mxu0 %v9398
        %9426 = vmatprep.subr.mxu0 0.0
        %9427 = vmatpush1.msra.mxu0 %v9399
        %9428 = vmatprep.subr.mxu0 0.0
        %9429 = vmatpush1.msra.mxu0 %v9400
        %9430 = vmatprep.subr.mxu0 0.0
        %9431 = vmatpush1.msra.mxu0 %v9401
        %9432 = vmatprep.subr.mxu0 0.0
        %9433 = vmatpush1.msra.mxu0 %v9402
        %9434 = vmatprep.subr.mxu0 0.0
        %9435 = vmatpush1.msra.mxu0 %v9403
        %9436 = vmatprep.subr.mxu0 0.0
        %9437 = vmatpush1.msra.mxu0 %v9404
        %9438 = vmatprep.subr.mxu0 0.0
        %9439 = vmatpush1.msra.mxu0 %v9405
        %9440 = vmatprep.subr.mxu0 0.0
        %9441 = vmatpush1.msra.mxu0 %v9406
        %9442 = vmatprep.subr.mxu0 0.0
        %9443 = vmatpush1.msra.mxu0 %v9407
        %9444 = vmatprep.subr.mxu0 0.0
        %9445 = vmatpush1.msra.mxu0 %v9408
        %9446 = vmatprep.subr.mxu0 0.0
        %9447 = vmatpush1.msra.mxu0 %v9409
        %9448 = vmatprep.subr.mxu0 0.0
        %9449 = vmatpush1.msra.mxu0 %v9410
        %9450 = vmatprep.subr.mxu0 0.0
        %9451 = vmatpush1.msra.mxu0 0.0
        %9452 = vmatprep.subr.mxu0 0.0
        %9453 = vmatpush1.msra.mxu0 0.0
        %9454 = vmatprep.subr.mxu0 0.0
        %9455 = vmatpush1.msra.mxu0 0.0
        %9456 = vmatprep.subr.mxu0 0.0
        %9457 = vmatpush1.msra.mxu0 0.0
        %9458 = vmatprep.subr.mxu0 0.0
        %9459 = vmatpush1.msra.mxu0 0.0
        %9460 = vmatprep.subr.mxu0 0.0
        %9461 = vmatpush1.msra.mxu0 0.0
        %9462 = vmatprep.subr.mxu0 0.0
        %9463 = vmatpush1.msra.mxu0 0.0
        %9464 = vmatprep.subr.mxu0 0.0
        %9465 = vmatpush1.msra.mxu0 0.0
        %9466 = vmatprep.subr.mxu0 0.0
        %9467 = vmatpush1.msra.mxu0 0.0
        %9468 = vmatprep.subr.mxu0 0.0
        %9469 = vmatpush1.msra.mxu0 0.0
        %9470 = vmatprep.subr.mxu0 0.0
        %9471 = vmatpush1.msra.mxu0 0.0
        %9472 = vmatprep.subr.mxu0 0.0
        %9473 = vmatpush1.msra.mxu0 0.0
        %9474 = vmatprep.subr.mxu0 0.0
        %9475 = vmatpush1.msra.mxu0 0.0
        %9476 = vmatprep.subr.mxu0 0.0
        %9477 = vmatpush1.msra.mxu0 0.0
        %9478 = vmatprep.subr.mxu0 0.0
        %9479 = vmatpush1.msra.mxu0 0.0
        %9480 = vmatprep.subr.mxu0 0.0
        %9481 = vmatpush1.msra.mxu0 0.0
        %9482 = vmatprep.mubr.f32.mxu0 0.0
        %9483 = vmatmul.mubr.f32.gmra.mrb[0].mxu0 %v9394
        %v9484 = vpop.f32.mrb[0].mxu0
        %v9485 = vadd.f32 %v9416, %v9484
        %v9486 = vpop.f32.mrb[0].mxu0
        %9487 = vdwg.mxu0
        %9488 = vst [vmem:[%s382] sm:$0x3] %v9485
        %s9489 = sand.u32 %s269, 1
        %s9490 = scalar_lea.sflag [#allocation5], %s9489
        %s9491 = sand.u32 %s269, 1
        %s9492 = smul.addr %s9491, 2
        %s9493 = scalar_lea.vmem [#allocation4], %s9492
        // Predicated region
        $region65: #{net_forward.1} parent=63 // pred_check
          %p9494 = pneg %p279
        $region66: #{net_forward.1} parent=63 // pred_check_branch
          %9496 = sbr.rel (%p9494) target = $region68
        $region67: #{net_forward.1} parent=63 // pred_region
          %s9498 = ssub.s32 32, 32
          %9499 = vsyncadd %s9490, %s9498
          %s9500 = smul.addr %s25, 32
          %s9501 = scalar_lea.hbm %s11, %s9500
          %s9503 = sshll.u32 %s9493, 4
          %s9504 = int_to_ptr.vmem [resolvable:$true] %s9503
          %9506 = dma.vmem_to_hbm [thread:$0]  %s9504, 32, %s9501, %s9490
        $region68: #{net_forward.1} parent=63 // pred_fallthru
          _
      $region64: #{net_forward.1} parent=5 // pred_fallthru
        _
      %p9507 = scmp.le.s32.totalorder 2, %s20
      // Predicated region
      $region69: #{net_forward.1} parent=5 // pred_check
        %p9508 = pneg %p9507
      $region70: #{net_forward.1} parent=5 // pred_check_branch
        %9510 = sbr.rel (%p9508) target = $region72
      $region71: #{net_forward.1} parent=5 // pred_region
        %s9511 = ssub.s32 %s20, 2
        // Predicated region
        $region73: #{net_forward.1} parent=71 // pred_check
          %p9512 = pneg %p285
        $region74: #{net_forward.1} parent=71 // pred_check_branch
          %9514 = sbr.rel (%p9512) target = $region76
        $region75: #{net_forward.1} parent=71 // pred_region
          %s9515 = sand.u32 %s270, 1
          %s9516 = scalar_lea.sflag [#allocation5], %s9515
          %s9517 = sand.u32 %s270, 1
          %s9518 = smul.addr %s9517, 2
          %s9519 = scalar_lea.vmem [#allocation4], %s9518
          %9520 = dma.done %s9516, 32
        $region76: #{net_forward.1} parent=71 // pred_fallthru
          _
      $region72: #{net_forward.1} parent=5 // pred_fallthru
        _
    $region6: #{net_forward.1} parent=1 // loop_footer
      %s24 = sadd.s32 1, %s20
    $region7: #{net_forward.1} parent=1 // loop_footer_branch
      %19 = sbr.rel target = $region3
    $region8: #{net_forward.1} parent=1 // loop_exit
      _
    %9521 = vsyncpa [#allocation5], 1
    %s9522 = scalar_lea.sflag [#allocation5], 1
    %9523 = vsyncpa %s9522, 1

</llo_original>
